<compile_context>
chip_gen: v7x
topology: tpu7x:2x2x1
jax: 0.10.0
libtpu: 0.0.40
codegen_flags: <defaults>
</compile_context>

<pallas_src>
import jax
import jax.numpy as jnp
from jax import lax
from jax.experimental import pallas as pl
from jax.experimental.pallas import tpu as pltpu

NEG_SLOPE = 0.01   # nn.LeakyReLU default
BN_EPS = 1e-5
PAD_TOP = 8        # aligned top padding (rows) in the row-shift scratch
VMEM_LIMIT = 32 * 1024 * 1024


def _leaky(y):
    return jnp.where(y >= 0, y, y * NEG_SLOPE)


# ----------------------------------------------------------------------------
# Kernels
# ----------------------------------------------------------------------------
def _convt_kernel(x_ref, w_ref, s_ref, o_ref):
    """out = x @ W + shift   (ConvTranspose2d k=2,s=2 in banded-matmul form)."""
    o_ref[...] = jnp.dot(x_ref[...].astype(jnp.bfloat16), w_ref[...],
                         preferred_element_type=jnp.float32) + s_ref[...]


def _convt_call(x_rw, w, shift):
    R, Lin = x_rw.shape
    Lout = w.shape[1]
    return pl.pallas_call(
        _convt_kernel,
        out_shape=jax.ShapeDtypeStruct((R, Lout), jnp.float32),
        grid=(1,),
        in_specs=[pl.BlockSpec((R, Lin), lambda i: (0, 0)),
                  pl.BlockSpec((Lin, Lout), lambda i: (0, 0)),
                  pl.BlockSpec((1, Lout), lambda i: (0, 0))],
        out_specs=pl.BlockSpec((R, Lout), lambda i: (0, 0)),
        compiler_params=pltpu.CompilerParams(
            dimension_semantics=("arbitrary",),
            vmem_limit_bytes=VMEM_LIMIT),
    )(x_rw, w, shift)


def _make_level_kernel(R_blk, H2, has_ds, ds_act, has_next):
    """Fused level kernel: conv3x3+BN+LReLU (x2) + optional 1x1 head
    + optional next-level ConvTranspose, all in the row layout."""

    def kernel(*refs):
        it = iter(refs)
        up_ref = next(it)
        sk_ref = next(it)
        b1u_ref = next(it)
        b1s_ref = next(it)
        sh1_ref = next(it)
        b2_ref = next(it)
        sh2_ref = next(it)
        wds_ref = next(it) if has_ds else None
        if has_next:
            wnx_ref = next(it)
            shnx_ref = next(it)
        e_ref = next(it)
        ds_ref = next(it) if has_ds else None
        un_ref = next(it) if has_next else None
        pad_up = next(it)
        pad_sk = next(it)
        pad_e1 = next(it)

        # row-index masks for the +-1 height shifts (zero padding in H)
        r = lax.broadcasted_iota(jnp.int32, (R_blk, 1), 0)
        h = jnp.bitwise_and(r, H2 - 1)     # H2 is a power of two
        m_dn = h > 0                       # neighbour h-1 exists  (dy = -1)
        m_up = h < (H2 - 1)                # neighbour h+1 exists  (dy = +1)

        def fill(pad_ref, val):
            pad_ref[...] = jnp.zeros(pad_ref.shape, jnp.float32)
            pad_ref[pl.ds(PAD_TOP, R_blk), :] = val

        def conv3(pad_ref, w3_ref):
            acc = None
            for k, dy in enumerate((-1, 0, 1)):
                sl = pad_ref[pl.ds(PAD_TOP + dy, R_blk), :]
                if dy == -1:
                    sl = jnp.where(m_dn, sl, 0.0)
                elif dy == 1:
                    sl = jnp.where(m_up, sl, 0.0)
                t = jnp.dot(sl.astype(jnp.bfloat16), w3_ref[k],
                            preferred_element_type=jnp.float32)
                acc = t if acc is None else acc + t
            return acc

        # expand_*_1 : conv3x3 over concat([up, skip]) (split-weight form)
        fill(pad_up, up_ref[...])
        fill(pad_sk, sk_ref[...])
        y1 = conv3(pad_up, b1u_ref) + conv3(pad_sk, b1s_ref) + sh1_ref[...]
        y1 = _leaky(y1)

        # expand_*_2
        fill(pad_e1, y1)
        y2 = conv3(pad_e1, b2_ref) + sh2_ref[...]
        y2 = _leaky(y2)
        e_ref[...] = y2

        y2b = y2.astype(jnp.bfloat16)
        if has_ds:
            d = jnp.dot(y2b, wds_ref[...], preferred_element_type=jnp.float32)
            if ds_act:
                d = _leaky(d)
            ds_ref[...] = d
        if has_next:
            u = jnp.dot(y2b, wnx_ref[...], preferred_element_type=jnp.float32)
            un_ref[...] = u + shnx_ref[...]

    return kernel


def _level_call(lv, up_rw, skip_rw, H2, W2, ds_act):
    Rtot, L_up = up_rw.shape
    L_sk = skip_rw.shape[1]
    L_mid = lv["b2"].shape[2]
    n_ds = 0 if lv["wds"] is None else lv["wds"].shape[1]
    L_nx = 0 if lv["wnx"] is None else lv["wnx"].shape[1]

    Nb = Rtot // H2
    ipb = 1 if (H2 % 8 == 0 and Nb > 1) else Nb    # images per grid block
    R_blk = ipb * H2
    grid = (Rtot // R_blk,)

    kernel = _make_level_kernel(R_blk, H2, n_ds > 0, ds_act, L_nx > 0)

    rowmap = lambda i: (i, 0)
    fix2 = lambda i: (0, 0)
    fix3 = lambda i: (0, 0, 0)

    inputs = [up_rw, skip_rw, lv["b1u"], lv["b1s"], lv["sh1"],
              lv["b2"], lv["sh2"]]
    in_specs = [
        pl.BlockSpec((R_blk, L_up), rowmap),
        pl.BlockSpec((R_blk, L_sk), rowmap),
        pl.BlockSpec(lv["b1u"].shape, fix3),
        pl.BlockSpec(lv["b1s"].shape, fix3),
        pl.BlockSpec(lv["sh1"].shape, fix2),
        pl.BlockSpec(lv["b2"].shape, fix3),
        pl.BlockSpec(lv["sh2"].shape, fix2),
    ]
    if n_ds:
        inputs.append(lv["wds"])
        in_specs.append(pl.BlockSpec(lv["wds"].shape, fix2))
    if L_nx:
        inputs += [lv["wnx"], lv["shnx"]]
        in_specs += [pl.BlockSpec(lv["wnx"].shape, fix2),
                     pl.BlockSpec(lv["shnx"].shape, fix2)]

    out_shape = [jax.ShapeDtypeStruct((Rtot, L_mid), jnp.float32)]
    out_specs = [pl.BlockSpec((R_blk, L_mid), rowmap)]
    if n_ds:
        out_shape.append(jax.ShapeDtypeStruct((Rtot, n_ds), jnp.float32))
        out_specs.append(pl.BlockSpec((R_blk, n_ds), rowmap))
    if L_nx:
        out_shape.append(jax.ShapeDtypeStruct((Rtot, L_nx), jnp.float32))
        out_specs.append(pl.BlockSpec((R_blk, L_nx), rowmap))

    R_pad = R_blk + 2 * PAD_TOP
    scratch = [pltpu.VMEM((R_pad, L_up), jnp.float32),
               pltpu.VMEM((R_pad, L_sk), jnp.float32),
               pltpu.VMEM((R_pad, L_mid), jnp.float32)]

    return pl.pallas_call(
        kernel,
        out_shape=tuple(out_shape),
        grid=grid,
        in_specs=in_specs,
        out_specs=tuple(out_specs),
        scratch_shapes=scratch,
        compiler_params=pltpu.CompilerParams(
            dimension_semantics=("parallel",),
            vmem_limit_bytes=VMEM_LIMIT),
    )(*inputs)


# ----------------------------------------------------------------------------
# Weight preparation (done once): BN folding + banded / block-diag re-layout
# ----------------------------------------------------------------------------
def _fold_bn(wc, bc, gamma, beta, rm, rv):
    inv = gamma / jnp.sqrt(rv + BN_EPS)
    return wc * inv[:, None, None, None], beta + inv * (bc - rm)


def _banded_conv3(w, W2):
    """w: (Cout, Cin, 3, 3) -> (3, W2*Cin, W2*Cout) bf16, banded over width."""
    per_dy = []
    for ky in range(3):
        m = None
        for kx, off in enumerate((-1, 0, 1)):
            k2d = jnp.transpose(w[:, :, ky, kx])            # (Cin, Cout)
            band = jnp.eye(W2, k=-off, dtype=jnp.float32)   # 1 where p - q == off
            t = jnp.kron(band, k2d)
            m = t if m is None else m + t
        per_dy.append(m)
    return jnp.stack(per_dy).astype(jnp.bfloat16)


def _banded_convt(w, b, W):
    """w: (Cin, Cout, 2, 2) -> U (W*Cin, 4*W*Cout) bf16, shift (1, 4*W*Cout)."""
    idx = jnp.arange(W)
    U = None
    for ky in range(2):
        for kx in range(2):
            sel = jnp.zeros((W, 4 * W), jnp.float32)
            sel = sel.at[idx, ky * 2 * W + 2 * idx + kx].set(1.0)
            t = jnp.kron(sel, w[:, :, ky, kx])
            U = t if U is None else U + t
    shift = jnp.tile(b, 4 * W).reshape(1, -1).astype(jnp.float32)
    return U.astype(jnp.bfloat16), shift


def _banded_1x1(w, W2):
    """w: (Cout, Cin, 1, 1) -> block-diag (W2*Cin, W2*Cout) bf16."""
    w2d = jnp.transpose(w[:, :, 0, 0])                       # (Cin, Cout)
    return jnp.kron(jnp.eye(W2, dtype=jnp.float32), w2d).astype(jnp.bfloat16)


def _prep_expand(p, W2, split_at=None):
    wc, bc, gamma, beta, rm, rv = p
    w_f, shift = _fold_bn(wc, bc, gamma, beta, rm, rv)
    sh = jnp.tile(shift, W2).reshape(1, -1).astype(jnp.float32)
    if split_at is None:
        return _banded_conv3(w_f, W2), sh
    return (_banded_conv3(w_f[:, :split_at], W2),
            _banded_conv3(w_f[:, split_at:], W2), sh)


def prepare_params(params, x_hw):
    """One-time re-layout of module parameters into kernel-ready arrays."""
    H0, W0 = x_hw
    wT5, bT5 = params["upscale5"]
    prep = {"up5_w": None, "up5_s": None, "levels": []}
    prep["up5_w"], prep["up5_s"] = _banded_convt(wT5, bT5, W0)

    level_defs = [
        (2,  "expand_4_1", "expand_4_2", None,   "upscale4"),
        (4,  "expand_3_1", "expand_3_2", "ds32", "upscale3"),
        (8,  "expand_2_1", "expand_2_2", "ds22", "upscale2"),
        (16, "expand_1_1", "expand_1_2", "head", None),
    ]
    prev_cout = wT5.shape[1]                       # channels of the up input
    for mult, e1, e2, ds, nxt in level_defs:
        H2, W2 = H0 * mult, W0 * mult
        assert (H2 & (H2 - 1)) == 0, "H must be a power of two"
        b1u, b1s, sh1 = _prep_expand(params[e1], W2, split_at=prev_cout)
        b2, sh2 = _prep_expand(params[e2], W2)
        lv = dict(b1u=b1u, b1s=b1s, sh1=sh1, b2=b2, sh2=sh2,
                  wds=None, wnx=None, shnx=None)
        if ds is not None:
            lv["wds"] = _banded_1x1(params[ds], W2)
        if nxt is not None:
            wn, bn_ = params[nxt]
            lv["wnx"], lv["shnx"] = _banded_convt(wn, bn_, W2)
            prev_cout = wn.shape[1]
        prep["levels"].append(lv)
    return prep


# ----------------------------------------------------------------------------
# JAX-side glue (tiny, outside kernels)
# ----------------------------------------------------------------------------
def center_crop(layer, th, tw):
    H, W = layer.shape[1], layer.shape[2]
    y1 = (H - th) // 2
    x1 = (W - tw) // 2
    return layer[:, y1:y1 + th, x1:x1 + tw, :]


def _upsample_axis_2x(a, axis):
    L = a.shape[axis]
    o = jnp.arange(2 * L, dtype=jnp.float32)
    coord = jnp.maximum((o + 0.5) * 0.5 - 0.5, 0.0)   # align_corners=False
    i0 = jnp.minimum(jnp.floor(coord).astype(jnp.int32), L - 1)
    i1 = jnp.minimum(i0 + 1, L - 1)
    w1 = coord - i0.astype(jnp.float32)
    w0 = 1.0 - w1
    g0 = jnp.take(a, i0, axis=axis)
    g1 = jnp.take(a, i1, axis=axis)
    shape = [1] * a.ndim
    shape[axis] = 2 * L
    return g0 * w0.reshape(shape) + g1 * w1.reshape(shape)


def upsample_bilinear_2x(x):
    return _upsample_axis_2x(_upsample_axis_2x(x, 1), 2)


# ----------------------------------------------------------------------------
# Synthetic parameters (deterministic)
# ----------------------------------------------------------------------------
def init_params(key, ifs=4, classes=2):
    state = {"key": key}

    def nxt():
        state["key"], sub = jax.random.split(state["key"])
        return sub

    def conv(cout, cin, k):
        w = 0.1 * jax.random.normal(nxt(), (cout, cin, k, k), jnp.float32)
        b = 0.1 * jax.random.normal(nxt(), (cout,), jnp.float32)
        return w, b

    def convT(cin, cout):
        w = 0.1 * jax.random.normal(nxt(), (cin, cout, 2, 2), jnp.float32)
        b = 0.1 * jax.random.normal(nxt(), (cout,), jnp.float32)
        return w, b

    def bn(c):
        gamma = 1.0 + 0.1 * jax.random.normal(nxt(), (c,), jnp.float32)
        beta = 0.1 * jax.random.normal(nxt(), (c,), jnp.float32)
        return gamma, beta, jnp.zeros((c,), jnp.float32), jnp.ones((c,), jnp.float32)

    def expand(cin, cout):
        w, b = conv(cout, cin, 3)
        return (w, b) + bn(cout)

    p = {}
    p["upscale5"] = convT(ifs * 16, ifs * 8)
    p["expand_4_1"] = expand(ifs * 16, ifs * 8)
    p["expand_4_2"] = expand(ifs * 8, ifs * 8)
    p["upscale4"] = convT(ifs * 8, ifs * 4)
    p["expand_3_1"] = expand(ifs * 8, ifs * 4)
    p["expand_3_2"] = expand(ifs * 4, ifs * 4)
    p["upscale3"] = convT(ifs * 4, ifs * 2)
    p["expand_2_1"] = expand(ifs * 4, ifs * 2)
    p["expand_2_2"] = expand(ifs * 2, ifs * 2)
    p["upscale2"] = convT(ifs * 2, ifs)
    p["expand_1_1"] = expand(ifs * 2, ifs)
    p["expand_1_2"] = expand(ifs, ifs)
    p["ds22"] = 0.1 * jax.random.normal(nxt(), (classes, ifs * 2, 1, 1), jnp.float32)
    p["ds32"] = 0.1 * jax.random.normal(nxt(), (classes, ifs * 4, 1, 1), jnp.float32)
    p["head"] = 0.1 * jax.random.normal(nxt(), (classes, ifs, 1, 1), jnp.float32)
    return p


# ----------------------------------------------------------------------------
# Forward pass (mirrors decoder_ds.forward)
# ----------------------------------------------------------------------------
def decoder_ds_forward(prep, x, contr_4, contr_3, contr_2, contr_1):
    to_nhwc = lambda a: jnp.transpose(a, (0, 2, 3, 1))
    to_nchw = lambda a: jnp.transpose(a, (0, 3, 1, 2))
    xh = to_nhwc(x)
    skips = [to_nhwc(c) for c in (contr_4, contr_3, contr_2, contr_1)]
    Nb, H0, W0, Cx = xh.shape

    # upscale5 (pixel shuffle is a free reshape of the banded-matmul output)
    up_raw = _convt_call(xh.reshape(Nb * H0, W0 * Cx), prep["up5_w"], prep["up5_s"])
    Ca = prep["up5_w"].shape[1] // (4 * W0)
    H2, W2 = 2 * H0, 2 * W0
    up_rw = up_raw.reshape(Nb * H2, W2 * Ca)

    levels = prep["levels"]
    e_outs, ds_outs = [], []
    for li, lv in enumerate(levels):
        crop = center_crop(skips[li], H2, W2)
        Cb = crop.shape[-1]
        skip_rw = crop.reshape(Nb * H2, W2 * Cb)
        ds_act = li < len(levels) - 1        # ds32/ds22 have LeakyReLU, head does not
        res = _level_call(lv, up_rw, skip_rw, H2, W2, ds_act)
        k = 0
        e_rw = res[k]; k += 1
        Cm = lv["b2"].shape[2] // W2
        e_outs.append(e_rw.reshape(Nb, H2, W2, Cm))
        if lv["wds"] is not None:
            ds_rw = res[k]; k += 1
            n_cls = lv["wds"].shape[1] // W2
            ds_outs.append(ds_rw.reshape(Nb, H2, W2, n_cls))
        if lv["wnx"] is not None:
            up_raw = res[k]; k += 1
            CoutN = lv["wnx"].shape[1] // (4 * W2)
            H2, W2 = 2 * H2, 2 * W2
            Ca = CoutN
            up_rw = up_raw.reshape(Nb * H2, W2 * Ca)

    out2, out3, out4 = e_outs[0], e_outs[1], e_outs[2]
    ds32, ds22, head = ds_outs

    # deep supervision fusion (tiny 2-channel tensors, kept in JAX)
    ds32_up = upsample_bilinear_2x(ds32)
    ds22 = ds22 + ds32_up
    ds22_up = upsample_bilinear_2x(ds22)
    out = head + ds22_up

    return tuple(map(to_nchw, (out, out2, out3, out4)))


# ----------------------------------------------------------------------------
if __name__ == "__main__":
    ifs, classes, B = 4, 2, 2
    key = jax.random.PRNGKey(0)
    kp, kx, k4, k3, k2, k1 = jax.random.split(key, 6)

    params = init_params(kp, ifs, classes)
    x = jax.random.normal(kx, (B, ifs * 16, 2, 2), jnp.float32)
    contr_4 = jax.random.normal(k4, (B, ifs * 8, 4, 4), jnp.float32)
    contr_3 = jax.random.normal(k3, (B, ifs * 4, 8, 8), jnp.float32)
    contr_2 = jax.random.normal(k2, (B, ifs * 2, 16, 16), jnp.float32)
    contr_1 = jax.random.normal(k1, (B, ifs, 32, 32), jnp.float32)

    prep = prepare_params(params, x_hw=(2, 2))       # one-time weight re-layout
    fwd = jax.jit(decoder_ds_forward)
    out, out2, out3, out4 = fwd(prep, x, contr_4, contr_3, contr_2, contr_1)
    jax.block_until_ready((out, out2, out3, out4))

    assert out.shape == (B, classes, 32, 32), out.shape
    assert out2.shape == (B, ifs * 8, 4, 4), out2.shape
    assert out3.shape == (B, ifs * 4, 8, 8), out3.shape
    assert out4.shape == (B, ifs * 2, 16, 16), out4.shape
    print("KERNEL_OK")
</pallas_src>

<mosaic_0001>
module attributes {stable_mosaic.version = 11 : i64} {
  func.func @_convt_kernel(%arg0: i32, %arg1: memref<4x128xf32, #tpu.memory_space<vmem>>, %arg2: memref<128x256xbf16, #tpu.memory_space<vmem>>, %arg3: memref<1x256xf32, #tpu.memory_space<vmem>>, %arg4: memref<4x256xf32, #tpu.memory_space<vmem>>) attributes {dimension_semantics = [#tpu.dimension_semantics<arbitrary>], iteration_bounds = array<i64: 1>, scalar_prefetch = 0 : i64, scratch_operands = 0 : i64, tpu.core_type = #tpu.core_type<tc>, window_params = [{pipeline_mode = #tpu.pipeline_mode<synchronous>, transform_indices = @transform_0, window_bounds = array<i64: 4, 128>}, {pipeline_mode = #tpu.pipeline_mode<synchronous>, transform_indices = @transform_1, window_bounds = array<i64: 128, 256>}, {pipeline_mode = #tpu.pipeline_mode<synchronous>, transform_indices = @transform_2, window_bounds = array<i64: 1, 256>}, {pipeline_mode = #tpu.pipeline_mode<synchronous>, transform_indices = @transform_3, window_bounds = array<i64: 4, 256>}]} {
    %c0 = arith.constant 0 : index
    %c0_0 = arith.constant 0 : index
    %0 = vector.load %arg1[%c0, %c0_0] : memref<4x128xf32, #tpu.memory_space<vmem>>, vector<4x128xf32>
    %1 = arith.truncf %0 : vector<4x128xf32> to vector<4x128xbf16>
    %c0_1 = arith.constant 0 : index
    %c0_2 = arith.constant 0 : index
    %2 = vector.load %arg2[%c0_1, %c0_2] : memref<128x256xbf16, #tpu.memory_space<vmem>>, vector<128x256xbf16>
    %cst = arith.constant dense<0.000000e+00> : vector<4x256xf32>
    %3 = tpu.matmul %1, %2, %cst {dimension_numbers = #tpu.dot_dimension_numbers<[1], [0], [0], [1], [0, 0, 1, 1], [], []>} : vector<4x128xbf16>, vector<128x256xbf16>, vector<4x256xf32> -> vector<4x256xf32>
    %c0_3 = arith.constant 0 : index
    %c0_4 = arith.constant 0 : index
    %4 = vector.load %arg3[%c0_3, %c0_4] : memref<1x256xf32, #tpu.memory_space<vmem>>, vector<1x256xf32>
    %5 = vector.broadcast %4 : vector<1x256xf32> to vector<4x256xf32>
    %6 = arith.addf %3, %5 : vector<4x256xf32>
    %c0_5 = arith.constant 0 : index
    %c0_6 = arith.constant 0 : index
    %7 = vector.load %arg4[%c0_5, %c0_6] : memref<4x256xf32, #tpu.memory_space<vmem>>, vector<4x256xf32>
    tpu.vector_store %arg4[%c0_5, %c0_6], %6 {strides = array<i32>} : memref<4x256xf32, #tpu.memory_space<vmem>>, vector<4x256xf32>,
    return
  }
  func.func @transform_0(%arg0: i32) -> (i32, i32) {
    %c0_i32 = arith.constant 0 : i32
    %c0_i32_0 = arith.constant 0 : i32
    %c0_i32_1 = arith.constant 0 : i32
    return %c0_i32, %c0_i32_0 : i32, i32
  }
  func.func @transform_1(%arg0: i32) -> (i32, i32) {
    %c0_i32 = arith.constant 0 : i32
    %c0_i32_0 = arith.constant 0 : i32
    %c0_i32_1 = arith.constant 0 : i32
    return %c0_i32, %c0_i32_0 : i32, i32
  }
  func.func @transform_2(%arg0: i32) -> (i32, i32) {
    %c0_i32 = arith.constant 0 : i32
    %c0_i32_0 = arith.constant 0 : i32
    %c0_i32_1 = arith.constant 0 : i32
    return %c0_i32, %c0_i32_0 : i32, i32
  }
  func.func @transform_3(%arg0: i32) -> (i32, i32) {
    %c0_i32 = arith.constant 0 : i32
    %c0_i32_0 = arith.constant 0 : i32
    %c0_i32_1 = arith.constant 0 : i32
    return %c0_i32, %c0_i32_0 : i32, i32
  }
}

module attributes {stable_mosaic.version = 11 : i64} {
  func.func @kernel(%arg0: i32, %arg1: memref<8x128xf32, #tpu.memory_space<vmem>>, %arg2: memref<8x128xf32, #tpu.memory_space<vmem>>, %arg3: memref<3x128x128xbf16, #tpu.memory_space<vmem>>, %arg4: memref<3x128x128xbf16, #tpu.memory_space<vmem>>, %arg5: memref<1x128xf32, #tpu.memory_space<vmem>>, %arg6: memref<3x128x128xbf16, #tpu.memory_space<vmem>>, %arg7: memref<1x128xf32, #tpu.memory_space<vmem>>, %arg8: memref<128x256xbf16, #tpu.memory_space<vmem>>, %arg9: memref<1x256xf32, #tpu.memory_space<vmem>>, %arg10: memref<8x128xf32, #tpu.memory_space<vmem>>, %arg11: memref<8x256xf32, #tpu.memory_space<vmem>>, %arg12: memref<24x128xf32, #tpu.memory_space<vmem>>, %arg13: memref<24x128xf32, #tpu.memory_space<vmem>>, %arg14: memref<24x128xf32, #tpu.memory_space<vmem>>) attributes {dimension_semantics = [#tpu.dimension_semantics<parallel>], iteration_bounds = array<i64: 1>, scalar_prefetch = 0 : i64, scratch_operands = 3 : i64, tpu.core_type = #tpu.core_type<tc>, window_params = [{transform_indices = @transform_0, window_bounds = array<i64: 8, 128>}, {transform_indices = @transform_1, window_bounds = array<i64: 8, 128>}, {pipeline_mode = #tpu.pipeline_mode<synchronous>, transform_indices = @transform_2, window_bounds = array<i64: 3, 128, 128>}, {pipeline_mode = #tpu.pipeline_mode<synchronous>, transform_indices = @transform_3, window_bounds = array<i64: 3, 128, 128>}, {pipeline_mode = #tpu.pipeline_mode<synchronous>, transform_indices = @transform_4, window_bounds = array<i64: 1, 128>}, {pipeline_mode = #tpu.pipeline_mode<synchronous>, transform_indices = @transform_5, window_bounds = array<i64: 3, 128, 128>}, {pipeline_mode = #tpu.pipeline_mode<synchronous>, transform_indices = @transform_6, window_bounds = array<i64: 1, 128>}, {pipeline_mode = #tpu.pipeline_mode<synchronous>, transform_indices = @transform_7, window_bounds = array<i64: 128, 256>}, {pipeline_mode = #tpu.pipeline_mode<synchronous>, transform_indices = @transform_8, window_bounds = array<i64: 1, 256>}, {transform_indices = @transform_9, window_bounds = array<i64: 8, 128>}, {transform_indices = @transform_10, window_bounds = array<i64: 8, 256>}]} {
    %0 = tpu.iota {dimensions = array<i32: 0>} : vector<8x1xi32>
    %c3_i32 = arith.constant 3 : i32
    %1 = vector.broadcast %c3_i32 : i32 to vector<8x1xi32>
    %2 = arith.andi %0, %1 : vector<8x1xi32>
    %c0_i32 = arith.constant 0 : i32
    %3 = vector.broadcast %c0_i32 : i32 to vector<8x1xi32>
    %4 = arith.cmpi sgt, %2, %3 : vector<8x1xi32>
    %c3_i32_0 = arith.constant 3 : i32
    %5 = vector.broadcast %c3_i32_0 : i32 to vector<8x1xi32>
    %6 = arith.cmpi slt, %2, %5 : vector<8x1xi32>
    %c0 = arith.constant 0 : index
    %c0_1 = arith.constant 0 : index
    %7 = vector.load %arg1[%c0, %c0_1] : memref<8x128xf32, #tpu.memory_space<vmem>>, vector<8x128xf32>
    %cst = arith.constant 0.000000e+00 : f32
    %8 = vector.broadcast %cst : f32 to vector<24x128xf32>
    %c0_2 = arith.constant 0 : index
    %c0_3 = arith.constant 0 : index
    %9 = vector.load %arg12[%c0_2, %c0_3] : memref<24x128xf32, #tpu.memory_space<vmem>>, vector<24x128xf32>
    tpu.vector_store %arg12[%c0_2, %c0_3], %8 {strides = array<i32>} : memref<24x128xf32, #tpu.memory_space<vmem>>, vector<24x128xf32>,
    %c8 = arith.constant 8 : index
    %c0_4 = arith.constant 0 : index
    %10 = vector.load %arg12[%c8, %c0_4] : memref<24x128xf32, #tpu.memory_space<vmem>>, vector<8x128xf32>
    tpu.vector_store %arg12[%c8, %c0_4], %7 {strides = array<i32>} : memref<24x128xf32, #tpu.memory_space<vmem>>, vector<8x128xf32>,
    %c0_5 = arith.constant 0 : index
    %c0_6 = arith.constant 0 : index
    %11 = vector.load %arg2[%c0_5, %c0_6] : memref<8x128xf32, #tpu.memory_space<vmem>>, vector<8x128xf32>
    %cst_7 = arith.constant 0.000000e+00 : f32
    %12 = vector.broadcast %cst_7 : f32 to vector<24x128xf32>
    %c0_8 = arith.constant 0 : index
    %c0_9 = arith.constant 0 : index
    %13 = vector.load %arg13[%c0_8, %c0_9] : memref<24x128xf32, #tpu.memory_space<vmem>>, vector<24x128xf32>
    tpu.vector_store %arg13[%c0_8, %c0_9], %12 {strides = array<i32>} : memref<24x128xf32, #tpu.memory_space<vmem>>, vector<24x128xf32>,
    %c8_10 = arith.constant 8 : index
    %c0_11 = arith.constant 0 : index
    %14 = vector.load %arg13[%c8_10, %c0_11] : memref<24x128xf32, #tpu.memory_space<vmem>>, vector<8x128xf32>
    tpu.vector_store %arg13[%c8_10, %c0_11], %11 {strides = array<i32>} : memref<24x128xf32, #tpu.memory_space<vmem>>, vector<8x128xf32>,
    %c7 = arith.constant 7 : index
    %c0_12 = arith.constant 0 : index
    %15 = vector.load %arg12[%c7, %c0_12] : memref<24x128xf32, #tpu.memory_space<vmem>>, vector<8x128xf32>
    %cst_13 = arith.constant 0.000000e+00 : f32
    %16 = vector.shape_cast %4 : vector<8x1xi1> to vector<8x1xi1>
    %17 = vector.broadcast %16 : vector<8x1xi1> to vector<8x128xi1>
    %18 = vector.broadcast %cst_13 : f32 to vector<8x128xf32>
    %19 = arith.select %17, %15, %18 : vector<8x128xi1>, vector<8x128xf32>
    %20 = arith.truncf %19 : vector<8x128xf32> to vector<8x128xbf16>
    %c0_14 = arith.constant 0 : index
    %c0_15 = arith.constant 0 : index
    %c0_16 = arith.constant 0 : index
    %21 = vector.load %arg3[%c0_14, %c0_15, %c0_16] : memref<3x128x128xbf16, #tpu.memory_space<vmem>>, vector<1x128x128xbf16>
    %22 = vector.shape_cast %21 : vector<1x128x128xbf16> to vector<128x128xbf16>
    %cst_17 = arith.constant dense<0.000000e+00> : vector<8x128xf32>
    %23 = tpu.matmul %20, %22, %cst_17 {dimension_numbers = #tpu.dot_dimension_numbers<[1], [0], [0], [1], [0, 0, 1, 1], [], []>} : vector<8x128xbf16>, vector<128x128xbf16>, vector<8x128xf32> -> vector<8x128xf32>
    %c8_18 = arith.constant 8 : index
    %c0_19 = arith.constant 0 : index
    %24 = vector.load %arg12[%c8_18, %c0_19] : memref<24x128xf32, #tpu.memory_space<vmem>>, vector<8x128xf32>
    %25 = arith.truncf %24 : vector<8x128xf32> to vector<8x128xbf16>
    %c1 = arith.constant 1 : index
    %c0_20 = arith.constant 0 : index
    %c0_21 = arith.constant 0 : index
    %26 = vector.load %arg3[%c1, %c0_20, %c0_21] : memref<3x128x128xbf16, #tpu.memory_space<vmem>>, vector<1x128x128xbf16>
    %27 = vector.shape_cast %26 : vector<1x128x128xbf16> to vector<128x128xbf16>
    %cst_22 = arith.constant dense<0.000000e+00> : vector<8x128xf32>
    %28 = tpu.matmul %25, %27, %cst_22 {dimension_numbers = #tpu.dot_dimension_numbers<[1], [0], [0], [1], [0, 0, 1, 1], [], []>} : vector<8x128xbf16>, vector<128x128xbf16>, vector<8x128xf32> -> vector<8x128xf32>
    %29 = arith.addf %23, %28 : vector<8x128xf32>
    %c9 = arith.constant 9 : index
    %c0_23 = arith.constant 0 : index
    %30 = vector.load %arg12[%c9, %c0_23] : memref<24x128xf32, #tpu.memory_space<vmem>>, vector<8x128xf32>
    %cst_24 = arith.constant 0.000000e+00 : f32
    %31 = vector.shape_cast %6 : vector<8x1xi1> to vector<8x1xi1>
    %32 = vector.broadcast %31 : vector<8x1xi1> to vector<8x128xi1>
    %33 = vector.broadcast %cst_24 : f32 to vector<8x128xf32>
    %34 = arith.select %32, %30, %33 : vector<8x128xi1>, vector<8x128xf32>
    %35 = arith.truncf %34 : vector<8x128xf32> to vector<8x128xbf16>
    %c2 = arith.constant 2 : index
    %c0_25 = arith.constant 0 : index
    %c0_26 = arith.constant 0 : index
    %36 = vector.load %arg3[%c2, %c0_25, %c0_26] : memref<3x128x128xbf16, #tpu.memory_space<vmem>>, vector<1x128x128xbf16>
    %37 = vector.shape_cast %36 : vector<1x128x128xbf16> to vector<128x128xbf16>
    %cst_27 = arith.constant dense<0.000000e+00> : vector<8x128xf32>
    %38 = tpu.matmul %35, %37, %cst_27 {dimension_numbers = #tpu.dot_dimension_numbers<[1], [0], [0], [1], [0, 0, 1, 1], [], []>} : vector<8x128xbf16>, vector<128x128xbf16>, vector<8x128xf32> -> vector<8x128xf32>
    %39 = arith.addf %29, %38 : vector<8x128xf32>
    %c7_28 = arith.constant 7 : index
    %c0_29 = arith.constant 0 : index
    %40 = vector.load %arg13[%c7_28, %c0_29] : memref<24x128xf32, #tpu.memory_space<vmem>>, vector<8x128xf32>
    %cst_30 = arith.constant 0.000000e+00 : f32
    %41 = vector.shape_cast %4 : vector<8x1xi1> to vector<8x1xi1>
    %42 = vector.broadcast %41 : vector<8x1xi1> to vector<8x128xi1>
    %43 = vector.broadcast %cst_30 : f32 to vector<8x128xf32>
    %44 = arith.select %42, %40, %43 : vector<8x128xi1>, vector<8x128xf32>
    %45 = arith.truncf %44 : vector<8x128xf32> to vector<8x128xbf16>
    %c0_31 = arith.constant 0 : index
    %c0_32 = arith.constant 0 : index
    %c0_33 = arith.constant 0 : index
    %46 = vector.load %arg4[%c0_31, %c0_32, %c0_33] : memref<3x128x128xbf16, #tpu.memory_space<vmem>>, vector<1x128x128xbf16>
    %47 = vector.shape_cast %46 : vector<1x128x128xbf16> to vector<128x128xbf16>
    %cst_34 = arith.constant dense<0.000000e+00> : vector<8x128xf32>
    %48 = tpu.matmul %45, %47, %cst_34 {dimension_numbers = #tpu.dot_dimension_numbers<[1], [0], [0], [1], [0, 0, 1, 1], [], []>} : vector<8x128xbf16>, vector<128x128xbf16>, vector<8x128xf32> -> vector<8x128xf32>
    %c8_35 = arith.constant 8 : index
    %c0_36 = arith.constant 0 : index
    %49 = vector.load %arg13[%c8_35, %c0_36] : memref<24x128xf32, #tpu.memory_space<vmem>>, vector<8x128xf32>
    %50 = arith.truncf %49 : vector<8x128xf32> to vector<8x128xbf16>
    %c1_37 = arith.constant 1 : index
    %c0_38 = arith.constant 0 : index
    %c0_39 = arith.constant 0 : index
    %51 = vector.load %arg4[%c1_37, %c0_38, %c0_39] : memref<3x128x128xbf16, #tpu.memory_space<vmem>>, vector<1x128x128xbf16>
    %52 = vector.shape_cast %51 : vector<1x128x128xbf16> to vector<128x128xbf16>
    %cst_40 = arith.constant dense<0.000000e+00> : vector<8x128xf32>
    %53 = tpu.matmul %50, %52, %cst_40 {dimension_numbers = #tpu.dot_dimension_numbers<[1], [0], [0], [1], [0, 0, 1, 1], [], []>} : vector<8x128xbf16>, vector<128x128xbf16>, vector<8x128xf32> -> vector<8x128xf32>
    %54 = arith.addf %48, %53 : vector<8x128xf32>
    %c9_41 = arith.constant 9 : index
    %c0_42 = arith.constant 0 : index
    %55 = vector.load %arg13[%c9_41, %c0_42] : memref<24x128xf32, #tpu.memory_space<vmem>>, vector<8x128xf32>
    %cst_43 = arith.constant 0.000000e+00 : f32
    %56 = vector.shape_cast %6 : vector<8x1xi1> to vector<8x1xi1>
    %57 = vector.broadcast %56 : vector<8x1xi1> to vector<8x128xi1>
    %58 = vector.broadcast %cst_43 : f32 to vector<8x128xf32>
    %59 = arith.select %57, %55, %58 : vector<8x128xi1>, vector<8x128xf32>
    %60 = arith.truncf %59 : vector<8x128xf32> to vector<8x128xbf16>
    %c2_44 = arith.constant 2 : index
    %c0_45 = arith.constant 0 : index
    %c0_46 = arith.constant 0 : index
    %61 = vector.load %arg4[%c2_44, %c0_45, %c0_46] : memref<3x128x128xbf16, #tpu.memory_space<vmem>>, vector<1x128x128xbf16>
    %62 = vector.shape_cast %61 : vector<1x128x128xbf16> to vector<128x128xbf16>
    %cst_47 = arith.constant dense<0.000000e+00> : vector<8x128xf32>
    %63 = tpu.matmul %60, %62, %cst_47 {dimension_numbers = #tpu.dot_dimension_numbers<[1], [0], [0], [1], [0, 0, 1, 1], [], []>} : vector<8x128xbf16>, vector<128x128xbf16>, vector<8x128xf32> -> vector<8x128xf32>
    %64 = arith.addf %54, %63 : vector<8x128xf32>
    %65 = arith.addf %39, %64 : vector<8x128xf32>
    %c0_48 = arith.constant 0 : index
    %c0_49 = arith.constant 0 : index
    %66 = vector.load %arg5[%c0_48, %c0_49] : memref<1x128xf32, #tpu.memory_space<vmem>>, vector<1x128xf32>
    %67 = vector.broadcast %66 : vector<1x128xf32> to vector<8x128xf32>
    %68 = arith.addf %65, %67 : vector<8x128xf32>
    %cst_50 = arith.constant 0.000000e+00 : f32
    %69 = vector.broadcast %cst_50 : f32 to vector<8x128xf32>
    %70 = arith.cmpf oge, %68, %69 : vector<8x128xf32>
    %cst_51 = arith.constant 0.00999999977 : f32
    %71 = vector.broadcast %cst_51 : f32 to vector<8x128xf32>
    %72 = arith.mulf %68, %71 : vector<8x128xf32>
    %73 = arith.select %70, %68, %72 : vector<8x128xi1>, vector<8x128xf32>
    %cst_52 = arith.constant 0.000000e+00 : f32
    %74 = vector.broadcast %cst_52 : f32 to vector<24x128xf32>
    %c0_53 = arith.constant 0 : index
    %c0_54 = arith.constant 0 : index
    %75 = vector.load %arg14[%c0_53, %c0_54] : memref<24x128xf32, #tpu.memory_space<vmem>>, vector<24x128xf32>
    tpu.vector_store %arg14[%c0_53, %c0_54], %74 {strides = array<i32>} : memref<24x128xf32, #tpu.memory_space<vmem>>, vector<24x128xf32>,
    %c8_55 = arith.constant 8 : index
    %c0_56 = arith.constant 0 : index
    %76 = vector.load %arg14[%c8_55, %c0_56] : memref<24x128xf32, #tpu.memory_space<vmem>>, vector<8x128xf32>
    tpu.vector_store %arg14[%c8_55, %c0_56], %73 {strides = array<i32>} : memref<24x128xf32, #tpu.memory_space<vmem>>, vector<8x128xf32>,
    %c7_57 = arith.constant 7 : index
    %c0_58 = arith.constant 0 : index
    %77 = vector.load %arg14[%c7_57, %c0_58] : memref<24x128xf32, #tpu.memory_space<vmem>>, vector<8x128xf32>
    %cst_59 = arith.constant 0.000000e+00 : f32
    %78 = vector.shape_cast %4 : vector<8x1xi1> to vector<8x1xi1>
    %79 = vector.broadcast %78 : vector<8x1xi1> to vector<8x128xi1>
    %80 = vector.broadcast %cst_59 : f32 to vector<8x128xf32>
    %81 = arith.select %79, %77, %80 : vector<8x128xi1>, vector<8x128xf32>
    %82 = arith.truncf %81 : vector<8x128xf32> to vector<8x128xbf16>
    %c0_60 = arith.constant 0 : index
    %c0_61 = arith.constant 0 : index
    %c0_62 = arith.constant 0 : index
    %83 = vector.load %arg6[%c0_60, %c0_61, %c0_62] : memref<3x128x128xbf16, #tpu.memory_space<vmem>>, vector<1x128x128xbf16>
    %84 = vector.shape_cast %83 : vector<1x128x128xbf16> to vector<128x128xbf16>
    %cst_63 = arith.constant dense<0.000000e+00> : vector<8x128xf32>
    %85 = tpu.matmul %82, %84, %cst_63 {dimension_numbers = #tpu.dot_dimension_numbers<[1], [0], [0], [1], [0, 0, 1, 1], [], []>} : vector<8x128xbf16>, vector<128x128xbf16>, vector<8x128xf32> -> vector<8x128xf32>
    %c8_64 = arith.constant 8 : index
    %c0_65 = arith.constant 0 : index
    %86 = vector.load %arg14[%c8_64, %c0_65] : memref<24x128xf32, #tpu.memory_space<vmem>>, vector<8x128xf32>
    %87 = arith.truncf %86 : vector<8x128xf32> to vector<8x128xbf16>
    %c1_66 = arith.constant 1 : index
    %c0_67 = arith.constant 0 : index
    %c0_68 = arith.constant 0 : index
    %88 = vector.load %arg6[%c1_66, %c0_67, %c0_68] : memref<3x128x128xbf16, #tpu.memory_space<vmem>>, vector<1x128x128xbf16>
    %89 = vector.shape_cast %88 : vector<1x128x128xbf16> to vector<128x128xbf16>
    %cst_69 = arith.constant dense<0.000000e+00> : vector<8x128xf32>
    %90 = tpu.matmul %87, %89, %cst_69 {dimension_numbers = #tpu.dot_dimension_numbers<[1], [0], [0], [1], [0, 0, 1, 1], [], []>} : vector<8x128xbf16>, vector<128x128xbf16>, vector<8x128xf32> -> vector<8x128xf32>
    %91 = arith.addf %85, %90 : vector<8x128xf32>
    %c9_70 = arith.constant 9 : index
    %c0_71 = arith.constant 0 : index
    %92 = vector.load %arg14[%c9_70, %c0_71] : memref<24x128xf32, #tpu.memory_space<vmem>>, vector<8x128xf32>
    %cst_72 = arith.constant 0.000000e+00 : f32
    %93 = vector.shape_cast %6 : vector<8x1xi1> to vector<8x1xi1>
    %94 = vector.broadcast %93 : vector<8x1xi1> to vector<8x128xi1>
    %95 = vector.broadcast %cst_72 : f32 to vector<8x128xf32>
    %96 = arith.select %94, %92, %95 : vector<8x128xi1>, vector<8x128xf32>
    %97 = arith.truncf %96 : vector<8x128xf32> to vector<8x128xbf16>
    %c2_73 = arith.constant 2 : index
    %c0_74 = arith.constant 0 : index
    %c0_75 = arith.constant 0 : index
    %98 = vector.load %arg6[%c2_73, %c0_74, %c0_75] : memref<3x128x128xbf16, #tpu.memory_space<vmem>>, vector<1x128x128xbf16>
    %99 = vector.shape_cast %98 : vector<1x128x128xbf16> to vector<128x128xbf16>
    %cst_76 = arith.constant dense<0.000000e+00> : vector<8x128xf32>
    %100 = tpu.matmul %97, %99, %cst_76 {dimension_numbers = #tpu.dot_dimension_numbers<[1], [0], [0], [1], [0, 0, 1, 1], [], []>} : vector<8x128xbf16>, vector<128x128xbf16>, vector<8x128xf32> -> vector<8x128xf32>
    %101 = arith.addf %91, %100 : vector<8x128xf32>
    %c0_77 = arith.constant 0 : index
    %c0_78 = arith.constant 0 : index
    %102 = vector.load %arg7[%c0_77, %c0_78] : memref<1x128xf32, #tpu.memory_space<vmem>>, vector<1x128xf32>
    %103 = vector.broadcast %102 : vector<1x128xf32> to vector<8x128xf32>
    %104 = arith.addf %101, %103 : vector<8x128xf32>
    %cst_79 = arith.constant 0.000000e+00 : f32
    %105 = vector.broadcast %cst_79 : f32 to vector<8x128xf32>
    %106 = arith.cmpf oge, %104, %105 : vector<8x128xf32>
    %cst_80 = arith.constant 0.00999999977 : f32
    %107 = vector.broadcast %cst_80 : f32 to vector<8x128xf32>
    %108 = arith.mulf %104, %107 : vector<8x128xf32>
    %109 = arith.select %106, %104, %108 : vector<8x128xi1>, vector<8x128xf32>
    %c0_81 = arith.constant 0 : index
    %c0_82 = arith.constant 0 : index
    %110 = vector.load %arg10[%c0_81, %c0_82] : memref<8x128xf32, #tpu.memory_space<vmem>>, vector<8x128xf32>
    tpu.vector_store %arg10[%c0_81, %c0_82], %109 {strides = array<i32>} : memref<8x128xf32, #tpu.memory_space<vmem>>, vector<8x128xf32>,
    %111 = arith.truncf %109 : vector<8x128xf32> to vector<8x128xbf16>
    %c0_83 = arith.constant 0 : index
    %c0_84 = arith.constant 0 : index
    %112 = vector.load %arg8[%c0_83, %c0_84] : memref<128x256xbf16, #tpu.memory_space<vmem>>, vector<128x256xbf16>
    %cst_85 = arith.constant dense<0.000000e+00> : vector<8x256xf32>
    %113 = tpu.matmul %111, %112, %cst_85 {dimension_numbers = #tpu.dot_dimension_numbers<[1], [0], [0], [1], [0, 0, 1, 1], [], []>} : vector<8x128xbf16>, vector<128x256xbf16>, vector<8x256xf32> -> vector<8x256xf32>
    %c0_86 = arith.constant 0 : index
    %c0_87 = arith.constant 0 : index
    %114 = vector.load %arg9[%c0_86, %c0_87] : memref<1x256xf32, #tpu.memory_space<vmem>>, vector<1x256xf32>
    %115 = vector.broadcast %114 : vector<1x256xf32> to vector<8x256xf32>
    %116 = arith.addf %113, %115 : vector<8x256xf32>
    %c0_88 = arith.constant 0 : index
    %c0_89 = arith.constant 0 : index
    %117 = vector.load %arg11[%c0_88, %c0_89] : memref<8x256xf32, #tpu.memory_space<vmem>>, vector<8x256xf32>
    tpu.vector_store %arg11[%c0_88, %c0_89], %116 {strides = array<i32>} : memref<8x256xf32, #tpu.memory_space<vmem>>, vector<8x256xf32>,
    return
  }
  func.func @transform_0(%arg0: i32) -> (i32, i32) {
    %c0_i32 = arith.constant 0 : i32
    %c0_i32_0 = arith.constant 0 : i32
    return %arg0, %c0_i32 : i32, i32
  }
  func.func @transform_1(%arg0: i32) -> (i32, i32) {
    %c0_i32 = arith.constant 0 : i32
    %c0_i32_0 = arith.constant 0 : i32
    return %arg0, %c0_i32 : i32, i32
  }
  func.func @transform_2(%arg0: i32) -> (i32, i32, i32) {
    %c0_i32 = arith.constant 0 : i32
    %c0_i32_0 = arith.constant 0 : i32
    %c0_i32_1 = arith.constant 0 : i32
    %c0_i32_2 = arith.constant 0 : i32
    return %c0_i32, %c0_i32_0, %c0_i32_1 : i32, i32, i32
  }
  func.func @transform_3(%arg0: i32) -> (i32, i32, i32) {
    %c0_i32 = arith.constant 0 : i32
    %c0_i32_0 = arith.constant 0 : i32
    %c0_i32_1 = arith.constant 0 : i32
    %c0_i32_2 = arith.constant 0 : i32
    return %c0_i32, %c0_i32_0, %c0_i32_1 : i32, i32, i32
  }
  func.func @transform_4(%arg0: i32) -> (i32, i32) {
    %c0_i32 = arith.constant 0 : i32
    %c0_i32_0 = arith.constant 0 : i32
    %c0_i32_1 = arith.constant 0 : i32
    return %c0_i32, %c0_i32_0 : i32, i32
  }
  func.func @transform_5(%arg0: i32) -> (i32, i32, i32) {
    %c0_i32 = arith.constant 0 : i32
    %c0_i32_0 = arith.constant 0 : i32
    %c0_i32_1 = arith.constant 0 : i32
    %c0_i32_2 = arith.constant 0 : i32
    return %c0_i32, %c0_i32_0, %c0_i32_1 : i32, i32, i32
  }
  func.func @transform_6(%arg0: i32) -> (i32, i32) {
    %c0_i32 = arith.constant 0 : i32
    %c0_i32_0 = arith.constant 0 : i32
    %c0_i32_1 = arith.constant 0 : i32
    return %c0_i32, %c0_i32_0 : i32, i32
  }
  func.func @transform_7(%arg0: i32) -> (i32, i32) {
    %c0_i32 = arith.constant 0 : i32
    %c0_i32_0 = arith.constant 0 : i32
    %c0_i32_1 = arith.constant 0 : i32
    return %c0_i32, %c0_i32_0 : i32, i32
  }
  func.func @transform_8(%arg0: i32) -> (i32, i32) {
    %c0_i32 = arith.constant 0 : i32
    %c0_i32_0 = arith.constant 0 : i32
    %c0_i32_1 = arith.constant 0 : i32
    return %c0_i32, %c0_i32_0 : i32, i32
  }
  func.func @transform_9(%arg0: i32) -> (i32, i32) {
    %c0_i32 = arith.constant 0 : i32
    %c0_i32_0 = arith.constant 0 : i32
    return %arg0, %c0_i32 : i32, i32
  }
  func.func @transform_10(%arg0: i32) -> (i32, i32) {
    %c0_i32 = arith.constant 0 : i32
    %c0_i32_0 = arith.constant 0 : i32
    return %arg0, %c0_i32 : i32, i32
  }
}

module attributes {stable_mosaic.version = 11 : i64} {
  func.func @kernel(%arg0: i32, %arg1: memref<8x128xf32, #tpu.memory_space<vmem>>, %arg2: memref<8x128xf32, #tpu.memory_space<vmem>>, %arg3: memref<3x128x128xbf16, #tpu.memory_space<vmem>>, %arg4: memref<3x128x128xbf16, #tpu.memory_space<vmem>>, %arg5: memref<1x128xf32, #tpu.memory_space<vmem>>, %arg6: memref<3x128x128xbf16, #tpu.memory_space<vmem>>, %arg7: memref<1x128xf32, #tpu.memory_space<vmem>>, %arg8: memref<128x16xbf16, #tpu.memory_space<vmem>>, %arg9: memref<128x256xbf16, #tpu.memory_space<vmem>>, %arg10: memref<1x256xf32, #tpu.memory_space<vmem>>, %arg11: memref<8x128xf32, #tpu.memory_space<vmem>>, %arg12: memref<8x16xf32, #tpu.memory_space<vmem>>, %arg13: memref<8x256xf32, #tpu.memory_space<vmem>>, %arg14: memref<24x128xf32, #tpu.memory_space<vmem>>, %arg15: memref<24x128xf32, #tpu.memory_space<vmem>>, %arg16: memref<24x128xf32, #tpu.memory_space<vmem>>) attributes {dimension_semantics = [#tpu.dimension_semantics<parallel>], iteration_bounds = array<i64: 2>, scalar_prefetch = 0 : i64, scratch_operands = 3 : i64, tpu.core_type = #tpu.core_type<tc>, window_params = [{transform_indices = @transform_0, window_bounds = array<i64: 8, 128>}, {transform_indices = @transform_1, window_bounds = array<i64: 8, 128>}, {pipeline_mode = #tpu.pipeline_mode<synchronous>, transform_indices = @transform_2, window_bounds = array<i64: 3, 128, 128>}, {pipeline_mode = #tpu.pipeline_mode<synchronous>, transform_indices = @transform_3, window_bounds = array<i64: 3, 128, 128>}, {pipeline_mode = #tpu.pipeline_mode<synchronous>, transform_indices = @transform_4, window_bounds = array<i64: 1, 128>}, {pipeline_mode = #tpu.pipeline_mode<synchronous>, transform_indices = @transform_5, window_bounds = array<i64: 3, 128, 128>}, {pipeline_mode = #tpu.pipeline_mode<synchronous>, transform_indices = @transform_6, window_bounds = array<i64: 1, 128>}, {pipeline_mode = #tpu.pipeline_mode<synchronous>, transform_indices = @transform_7, window_bounds = array<i64: 128, 16>}, {pipeline_mode = #tpu.pipeline_mode<synchronous>, transform_indices = @transform_8, window_bounds = array<i64: 128, 256>}, {pipeline_mode = #tpu.pipeline_mode<synchronous>, transform_indices = @transform_9, window_bounds = array<i64: 1, 256>}, {transform_indices = @transform_10, window_bounds = array<i64: 8, 128>}, {transform_indices = @transform_11, window_bounds = array<i64: 8, 16>}, {transform_indices = @transform_12, window_bounds = array<i64: 8, 256>}]} {
    %0 = tpu.iota {dimensions = array<i32: 0>} : vector<8x1xi32>
    %c7_i32 = arith.constant 7 : i32
    %1 = vector.broadcast %c7_i32 : i32 to vector<8x1xi32>
    %2 = arith.andi %0, %1 : vector<8x1xi32>
    %c0_i32 = arith.constant 0 : i32
    %3 = vector.broadcast %c0_i32 : i32 to vector<8x1xi32>
    %4 = arith.cmpi sgt, %2, %3 : vector<8x1xi32>
    %c7_i32_0 = arith.constant 7 : i32
    %5 = vector.broadcast %c7_i32_0 : i32 to vector<8x1xi32>
    %6 = arith.cmpi slt, %2, %5 : vector<8x1xi32>
    %c0 = arith.constant 0 : index
    %c0_1 = arith.constant 0 : index
    %7 = vector.load %arg1[%c0, %c0_1] : memref<8x128xf32, #tpu.memory_space<vmem>>, vector<8x128xf32>
    %cst = arith.constant 0.000000e+00 : f32
    %8 = vector.broadcast %cst : f32 to vector<24x128xf32>
    %c0_2 = arith.constant 0 : index
    %c0_3 = arith.constant 0 : index
    %9 = vector.load %arg14[%c0_2, %c0_3] : memref<24x128xf32, #tpu.memory_space<vmem>>, vector<24x128xf32>
    tpu.vector_store %arg14[%c0_2, %c0_3], %8 {strides = array<i32>} : memref<24x128xf32, #tpu.memory_space<vmem>>, vector<24x128xf32>,
    %c8 = arith.constant 8 : index
    %c0_4 = arith.constant 0 : index
    %10 = vector.load %arg14[%c8, %c0_4] : memref<24x128xf32, #tpu.memory_space<vmem>>, vector<8x128xf32>
    tpu.vector_store %arg14[%c8, %c0_4], %7 {strides = array<i32>} : memref<24x128xf32, #tpu.memory_space<vmem>>, vector<8x128xf32>,
    %c0_5 = arith.constant 0 : index
    %c0_6 = arith.constant 0 : index
    %11 = vector.load %arg2[%c0_5, %c0_6] : memref<8x128xf32, #tpu.memory_space<vmem>>, vector<8x128xf32>
    %cst_7 = arith.constant 0.000000e+00 : f32
    %12 = vector.broadcast %cst_7 : f32 to vector<24x128xf32>
    %c0_8 = arith.constant 0 : index
    %c0_9 = arith.constant 0 : index
    %13 = vector.load %arg15[%c0_8, %c0_9] : memref<24x128xf32, #tpu.memory_space<vmem>>, vector<24x128xf32>
    tpu.vector_store %arg15[%c0_8, %c0_9], %12 {strides = array<i32>} : memref<24x128xf32, #tpu.memory_space<vmem>>, vector<24x128xf32>,
    %c8_10 = arith.constant 8 : index
    %c0_11 = arith.constant 0 : index
    %14 = vector.load %arg15[%c8_10, %c0_11] : memref<24x128xf32, #tpu.memory_space<vmem>>, vector<8x128xf32>
    tpu.vector_store %arg15[%c8_10, %c0_11], %11 {strides = array<i32>} : memref<24x128xf32, #tpu.memory_space<vmem>>, vector<8x128xf32>,
    %c7 = arith.constant 7 : index
    %c0_12 = arith.constant 0 : index
    %15 = vector.load %arg14[%c7, %c0_12] : memref<24x128xf32, #tpu.memory_space<vmem>>, vector<8x128xf32>
    %cst_13 = arith.constant 0.000000e+00 : f32
    %16 = vector.shape_cast %4 : vector<8x1xi1> to vector<8x1xi1>
    %17 = vector.broadcast %16 : vector<8x1xi1> to vector<8x128xi1>
    %18 = vector.broadcast %cst_13 : f32 to vector<8x128xf32>
    %19 = arith.select %17, %15, %18 : vector<8x128xi1>, vector<8x128xf32>
    %20 = arith.truncf %19 : vector<8x128xf32> to vector<8x128xbf16>
    %c0_14 = arith.constant 0 : index
    %c0_15 = arith.constant 0 : index
    %c0_16 = arith.constant 0 : index
    %21 = vector.load %arg3[%c0_14, %c0_15, %c0_16] : memref<3x128x128xbf16, #tpu.memory_space<vmem>>, vector<1x128x128xbf16>
    %22 = vector.shape_cast %21 : vector<1x128x128xbf16> to vector<128x128xbf16>
    %cst_17 = arith.constant dense<0.000000e+00> : vector<8x128xf32>
    %23 = tpu.matmul %20, %22, %cst_17 {dimension_numbers = #tpu.dot_dimension_numbers<[1], [0], [0], [1], [0, 0, 1, 1], [], []>} : vector<8x128xbf16>, vector<128x128xbf16>, vector<8x128xf32> -> vector<8x128xf32>
    %c8_18 = arith.constant 8 : index
    %c0_19 = arith.constant 0 : index
    %24 = vector.load %arg14[%c8_18, %c0_19] : memref<24x128xf32, #tpu.memory_space<vmem>>, vector<8x128xf32>
    %25 = arith.truncf %24 : vector<8x128xf32> to vector<8x128xbf16>
    %c1 = arith.constant 1 : index
    %c0_20 = arith.constant 0 : index
    %c0_21 = arith.constant 0 : index
    %26 = vector.load %arg3[%c1, %c0_20, %c0_21] : memref<3x128x128xbf16, #tpu.memory_space<vmem>>, vector<1x128x128xbf16>
    %27 = vector.shape_cast %26 : vector<1x128x128xbf16> to vector<128x128xbf16>
    %cst_22 = arith.constant dense<0.000000e+00> : vector<8x128xf32>
    %28 = tpu.matmul %25, %27, %cst_22 {dimension_numbers = #tpu.dot_dimension_numbers<[1], [0], [0], [1], [0, 0, 1, 1], [], []>} : vector<8x128xbf16>, vector<128x128xbf16>, vector<8x128xf32> -> vector<8x128xf32>
    %29 = arith.addf %23, %28 : vector<8x128xf32>
    %c9 = arith.constant 9 : index
    %c0_23 = arith.constant 0 : index
    %30 = vector.load %arg14[%c9, %c0_23] : memref<24x128xf32, #tpu.memory_space<vmem>>, vector<8x128xf32>
    %cst_24 = arith.constant 0.000000e+00 : f32
    %31 = vector.shape_cast %6 : vector<8x1xi1> to vector<8x1xi1>
    %32 = vector.broadcast %31 : vector<8x1xi1> to vector<8x128xi1>
    %33 = vector.broadcast %cst_24 : f32 to vector<8x128xf32>
    %34 = arith.select %32, %30, %33 : vector<8x128xi1>, vector<8x128xf32>
    %35 = arith.truncf %34 : vector<8x128xf32> to vector<8x128xbf16>
    %c2 = arith.constant 2 : index
    %c0_25 = arith.constant 0 : index
    %c0_26 = arith.constant 0 : index
    %36 = vector.load %arg3[%c2, %c0_25, %c0_26] : memref<3x128x128xbf16, #tpu.memory_space<vmem>>, vector<1x128x128xbf16>
    %37 = vector.shape_cast %36 : vector<1x128x128xbf16> to vector<128x128xbf16>
    %cst_27 = arith.constant dense<0.000000e+00> : vector<8x128xf32>
    %38 = tpu.matmul %35, %37, %cst_27 {dimension_numbers = #tpu.dot_dimension_numbers<[1], [0], [0], [1], [0, 0, 1, 1], [], []>} : vector<8x128xbf16>, vector<128x128xbf16>, vector<8x128xf32> -> vector<8x128xf32>
    %39 = arith.addf %29, %38 : vector<8x128xf32>
    %c7_28 = arith.constant 7 : index
    %c0_29 = arith.constant 0 : index
    %40 = vector.load %arg15[%c7_28, %c0_29] : memref<24x128xf32, #tpu.memory_space<vmem>>, vector<8x128xf32>
    %cst_30 = arith.constant 0.000000e+00 : f32
    %41 = vector.shape_cast %4 : vector<8x1xi1> to vector<8x1xi1>
    %42 = vector.broadcast %41 : vector<8x1xi1> to vector<8x128xi1>
    %43 = vector.broadcast %cst_30 : f32 to vector<8x128xf32>
    %44 = arith.select %42, %40, %43 : vector<8x128xi1>, vector<8x128xf32>
    %45 = arith.truncf %44 : vector<8x128xf32> to vector<8x128xbf16>
    %c0_31 = arith.constant 0 : index
    %c0_32 = arith.constant 0 : index
    %c0_33 = arith.constant 0 : index
    %46 = vector.load %arg4[%c0_31, %c0_32, %c0_33] : memref<3x128x128xbf16, #tpu.memory_space<vmem>>, vector<1x128x128xbf16>
    %47 = vector.shape_cast %46 : vector<1x128x128xbf16> to vector<128x128xbf16>
    %cst_34 = arith.constant dense<0.000000e+00> : vector<8x128xf32>
    %48 = tpu.matmul %45, %47, %cst_34 {dimension_numbers = #tpu.dot_dimension_numbers<[1], [0], [0], [1], [0, 0, 1, 1], [], []>} : vector<8x128xbf16>, vector<128x128xbf16>, vector<8x128xf32> -> vector<8x128xf32>
    %c8_35 = arith.constant 8 : index
    %c0_36 = arith.constant 0 : index
    %49 = vector.load %arg15[%c8_35, %c0_36] : memref<24x128xf32, #tpu.memory_space<vmem>>, vector<8x128xf32>
    %50 = arith.truncf %49 : vector<8x128xf32> to vector<8x128xbf16>
    %c1_37 = arith.constant 1 : index
    %c0_38 = arith.constant 0 : index
    %c0_39 = arith.constant 0 : index
    %51 = vector.load %arg4[%c1_37, %c0_38, %c0_39] : memref<3x128x128xbf16, #tpu.memory_space<vmem>>, vector<1x128x128xbf16>
    %52 = vector.shape_cast %51 : vector<1x128x128xbf16> to vector<128x128xbf16>
    %cst_40 = arith.constant dense<0.000000e+00> : vector<8x128xf32>
    %53 = tpu.matmul %50, %52, %cst_40 {dimension_numbers = #tpu.dot_dimension_numbers<[1], [0], [0], [1], [0, 0, 1, 1], [], []>} : vector<8x128xbf16>, vector<128x128xbf16>, vector<8x128xf32> -> vector<8x128xf32>
    %54 = arith.addf %48, %53 : vector<8x128xf32>
    %c9_41 = arith.constant 9 : index
    %c0_42 = arith.constant 0 : index
    %55 = vector.load %arg15[%c9_41, %c0_42] : memref<24x128xf32, #tpu.memory_space<vmem>>, vector<8x128xf32>
    %cst_43 = arith.constant 0.000000e+00 : f32
    %56 = vector.shape_cast %6 : vector<8x1xi1> to vector<8x1xi1>
    %57 = vector.broadcast %56 : vector<8x1xi1> to vector<8x128xi1>
    %58 = vector.broadcast %cst_43 : f32 to vector<8x128xf32>
    %59 = arith.select %57, %55, %58 : vector<8x128xi1>, vector<8x128xf32>
    %60 = arith.truncf %59 : vector<8x128xf32> to vector<8x128xbf16>
    %c2_44 = arith.constant 2 : index
    %c0_45 = arith.constant 0 : index
    %c0_46 = arith.constant 0 : index
    %61 = vector.load %arg4[%c2_44, %c0_45, %c0_46] : memref<3x128x128xbf16, #tpu.memory_space<vmem>>, vector<1x128x128xbf16>
    %62 = vector.shape_cast %61 : vector<1x128x128xbf16> to vector<128x128xbf16>
    %cst_47 = arith.constant dense<0.000000e+00> : vector<8x128xf32>
    %63 = tpu.matmul %60, %62, %cst_47 {dimension_numbers = #tpu.dot_dimension_numbers<[1], [0], [0], [1], [0, 0, 1, 1], [], []>} : vector<8x128xbf16>, vector<128x128xbf16>, vector<8x128xf32> -> vector<8x128xf32>
    %64 = arith.addf %54, %63 : vector<8x128xf32>
    %65 = arith.addf %39, %64 : vector<8x128xf32>
    %c0_48 = arith.constant 0 : index
    %c0_49 = arith.constant 0 : index
    %66 = vector.load %arg5[%c0_48, %c0_49] : memref<1x128xf32, #tpu.memory_space<vmem>>, vector<1x128xf32>
    %67 = vector.broadcast %66 : vector<1x128xf32> to vector<8x128xf32>
    %68 = arith.addf %65, %67 : vector<8x128xf32>
    %cst_50 = arith.constant 0.000000e+00 : f32
    %69 = vector.broadcast %cst_50 : f32 to vector<8x128xf32>
    %70 = arith.cmpf oge, %68, %69 : vector<8x128xf32>
    %cst_51 = arith.constant 0.00999999977 : f32
    %71 = vector.broadcast %cst_51 : f32 to vector<8x128xf32>
    %72 = arith.mulf %68, %71 : vector<8x128xf32>
    %73 = arith.select %70, %68, %72 : vector<8x128xi1>, vector<8x128xf32>
    %cst_52 = arith.constant 0.000000e+00 : f32
    %74 = vector.broadcast %cst_52 : f32 to vector<24x128xf32>
    %c0_53 = arith.constant 0 : index
    %c0_54 = arith.constant 0 : index
    %75 = vector.load %arg16[%c0_53, %c0_54] : memref<24x128xf32, #tpu.memory_space<vmem>>, vector<24x128xf32>
    tpu.vector_store %arg16[%c0_53, %c0_54], %74 {strides = array<i32>} : memref<24x128xf32, #tpu.memory_space<vmem>>, vector<24x128xf32>,
    %c8_55 = arith.constant 8 : index
    %c0_56 = arith.constant 0 : index
    %76 = vector.load %arg16[%c8_55, %c0_56] : memref<24x128xf32, #tpu.memory_space<vmem>>, vector<8x128xf32>
    tpu.vector_store %arg16[%c8_55, %c0_56], %73 {strides = array<i32>} : memref<24x128xf32, #tpu.memory_space<vmem>>, vector<8x128xf32>,
    %c7_57 = arith.constant 7 : index
    %c0_58 = arith.constant 0 : index
    %77 = vector.load %arg16[%c7_57, %c0_58] : memref<24x128xf32, #tpu.memory_space<vmem>>, vector<8x128xf32>
    %cst_59 = arith.constant 0.000000e+00 : f32
    %78 = vector.shape_cast %4 : vector<8x1xi1> to vector<8x1xi1>
    %79 = vector.broadcast %78 : vector<8x1xi1> to vector<8x128xi1>
    %80 = vector.broadcast %cst_59 : f32 to vector<8x128xf32>
    %81 = arith.select %79, %77, %80 : vector<8x128xi1>, vector<8x128xf32>
    %82 = arith.truncf %81 : vector<8x128xf32> to vector<8x128xbf16>
    %c0_60 = arith.constant 0 : index
    %c0_61 = arith.constant 0 : index
    %c0_62 = arith.constant 0 : index
    %83 = vector.load %arg6[%c0_60, %c0_61, %c0_62] : memref<3x128x128xbf16, #tpu.memory_space<vmem>>, vector<1x128x128xbf16>
    %84 = vector.shape_cast %83 : vector<1x128x128xbf16> to vector<128x128xbf16>
    %cst_63 = arith.constant dense<0.000000e+00> : vector<8x128xf32>
    %85 = tpu.matmul %82, %84, %cst_63 {dimension_numbers = #tpu.dot_dimension_numbers<[1], [0], [0], [1], [0, 0, 1, 1], [], []>} : vector<8x128xbf16>, vector<128x128xbf16>, vector<8x128xf32> -> vector<8x128xf32>
    %c8_64 = arith.constant 8 : index
    %c0_65 = arith.constant 0 : index
    %86 = vector.load %arg16[%c8_64, %c0_65] : memref<24x128xf32, #tpu.memory_space<vmem>>, vector<8x128xf32>
    %87 = arith.truncf %86 : vector<8x128xf32> to vector<8x128xbf16>
    %c1_66 = arith.constant 1 : index
    %c0_67 = arith.constant 0 : index
    %c0_68 = arith.constant 0 : index
    %88 = vector.load %arg6[%c1_66, %c0_67, %c0_68] : memref<3x128x128xbf16, #tpu.memory_space<vmem>>, vector<1x128x128xbf16>
    %89 = vector.shape_cast %88 : vector<1x128x128xbf16> to vector<128x128xbf16>
    %cst_69 = arith.constant dense<0.000000e+00> : vector<8x128xf32>
    %90 = tpu.matmul %87, %89, %cst_69 {dimension_numbers = #tpu.dot_dimension_numbers<[1], [0], [0], [1], [0, 0, 1, 1], [], []>} : vector<8x128xbf16>, vector<128x128xbf16>, vector<8x128xf32> -> vector<8x128xf32>
    %91 = arith.addf %85, %90 : vector<8x128xf32>
    %c9_70 = arith.constant 9 : index
    %c0_71 = arith.constant 0 : index
    %92 = vector.load %arg16[%c9_70, %c0_71] : memref<24x128xf32, #tpu.memory_space<vmem>>, vector<8x128xf32>
    %cst_72 = arith.constant 0.000000e+00 : f32
    %93 = vector.shape_cast %6 : vector<8x1xi1> to vector<8x1xi1>
    %94 = vector.broadcast %93 : vector<8x1xi1> to vector<8x128xi1>
    %95 = vector.broadcast %cst_72 : f32 to vector<8x128xf32>
    %96 = arith.select %94, %92, %95 : vector<8x128xi1>, vector<8x128xf32>
    %97 = arith.truncf %96 : vector<8x128xf32> to vector<8x128xbf16>
    %c2_73 = arith.constant 2 : index
    %c0_74 = arith.constant 0 : index
    %c0_75 = arith.constant 0 : index
    %98 = vector.load %arg6[%c2_73, %c0_74, %c0_75] : memref<3x128x128xbf16, #tpu.memory_space<vmem>>, vector<1x128x128xbf16>
    %99 = vector.shape_cast %98 : vector<1x128x128xbf16> to vector<128x128xbf16>
    %cst_76 = arith.constant dense<0.000000e+00> : vector<8x128xf32>
    %100 = tpu.matmul %97, %99, %cst_76 {dimension_numbers = #tpu.dot_dimension_numbers<[1], [0], [0], [1], [0, 0, 1, 1], [], []>} : vector<8x128xbf16>, vector<128x128xbf16>, vector<8x128xf32> -> vector<8x128xf32>
    %101 = arith.addf %91, %100 : vector<8x128xf32>
    %c0_77 = arith.constant 0 : index
    %c0_78 = arith.constant 0 : index
    %102 = vector.load %arg7[%c0_77, %c0_78] : memref<1x128xf32, #tpu.memory_space<vmem>>, vector<1x128xf32>
    %103 = vector.broadcast %102 : vector<1x128xf32> to vector<8x128xf32>
    %104 = arith.addf %101, %103 : vector<8x128xf32>
    %cst_79 = arith.constant 0.000000e+00 : f32
    %105 = vector.broadcast %cst_79 : f32 to vector<8x128xf32>
    %106 = arith.cmpf oge, %104, %105 : vector<8x128xf32>
    %cst_80 = arith.constant 0.00999999977 : f32
    %107 = vector.broadcast %cst_80 : f32 to vector<8x128xf32>
    %108 = arith.mulf %104, %107 : vector<8x128xf32>
    %109 = arith.select %106, %104, %108 : vector<8x128xi1>, vector<8x128xf32>
    %c0_81 = arith.constant 0 : index
    %c0_82 = arith.constant 0 : index
    %110 = vector.load %arg11[%c0_81, %c0_82] : memref<8x128xf32, #tpu.memory_space<vmem>>, vector<8x128xf32>
    tpu.vector_store %arg11[%c0_81, %c0_82], %109 {strides = array<i32>} : memref<8x128xf32, #tpu.memory_space<vmem>>, vector<8x128xf32>,
    %111 = arith.truncf %109 : vector<8x128xf32> to vector<8x128xbf16>
    %c0_83 = arith.constant 0 : index
    %c0_84 = arith.constant 0 : index
    %112 = vector.load %arg8[%c0_83, %c0_84] : memref<128x16xbf16, #tpu.memory_space<vmem>>, vector<128x16xbf16>
    %cst_85 = arith.constant dense<0.000000e+00> : vector<8x16xf32>
    %113 = tpu.matmul %111, %112, %cst_85 {dimension_numbers = #tpu.dot_dimension_numbers<[1], [0], [0], [1], [0, 0, 1, 1], [], []>} : vector<8x128xbf16>, vector<128x16xbf16>, vector<8x16xf32> -> vector<8x16xf32>
    %cst_86 = arith.constant 0.000000e+00 : f32
    %114 = vector.broadcast %cst_86 : f32 to vector<8x16xf32>
    %115 = arith.cmpf oge, %113, %114 : vector<8x16xf32>
    %cst_87 = arith.constant 0.00999999977 : f32
    %116 = vector.broadcast %cst_87 : f32 to vector<8x16xf32>
    %117 = arith.mulf %113, %116 : vector<8x16xf32>
    %118 = arith.select %115, %113, %117 : vector<8x16xi1>, vector<8x16xf32>
    %c0_88 = arith.constant 0 : index
    %c0_89 = arith.constant 0 : index
    %119 = vector.load %arg12[%c0_88, %c0_89] : memref<8x16xf32, #tpu.memory_space<vmem>>, vector<8x16xf32>
    tpu.vector_store %arg12[%c0_88, %c0_89], %118 {strides = array<i32>} : memref<8x16xf32, #tpu.memory_space<vmem>>, vector<8x16xf32>,
    %c0_90 = arith.constant 0 : index
    %c0_91 = arith.constant 0 : index
    %120 = vector.load %arg9[%c0_90, %c0_91] : memref<128x256xbf16, #tpu.memory_space<vmem>>, vector<128x256xbf16>
    %cst_92 = arith.constant dense<0.000000e+00> : vector<8x256xf32>
    %121 = tpu.matmul %111, %120, %cst_92 {dimension_numbers = #tpu.dot_dimension_numbers<[1], [0], [0], [1], [0, 0, 1, 1], [], []>} : vector<8x128xbf16>, vector<128x256xbf16>, vector<8x256xf32> -> vector<8x256xf32>
    %c0_93 = arith.constant 0 : index
    %c0_94 = arith.constant 0 : index
    %122 = vector.load %arg10[%c0_93, %c0_94] : memref<1x256xf32, #tpu.memory_space<vmem>>, vector<1x256xf32>
    %123 = vector.broadcast %122 : vector<1x256xf32> to vector<8x256xf32>
    %124 = arith.addf %121, %123 : vector<8x256xf32>
    %c0_95 = arith.constant 0 : index
    %c0_96 = arith.constant 0 : index
    %125 = vector.load %arg13[%c0_95, %c0_96] : memref<8x256xf32, #tpu.memory_space<vmem>>, vector<8x256xf32>
    tpu.vector_store %arg13[%c0_95, %c0_96], %124 {strides = array<i32>} : memref<8x256xf32, #tpu.memory_space<vmem>>, vector<8x256xf32>,
    return
  }
  func.func @transform_0(%arg0: i32) -> (i32, i32) {
    %c0_i32 = arith.constant 0 : i32
    %c0_i32_0 = arith.constant 0 : i32
    return %arg0, %c0_i32 : i32, i32
  }
  func.func @transform_1(%arg0: i32) -> (i32, i32) {
    %c0_i32 = arith.constant 0 : i32
    %c0_i32_0 = arith.constant 0 : i32
    return %arg0, %c0_i32 : i32, i32
  }
  func.func @transform_2(%arg0: i32) -> (i32, i32, i32) {
    %c0_i32 = arith.constant 0 : i32
    %c0_i32_0 = arith.constant 0 : i32
    %c0_i32_1 = arith.constant 0 : i32
    %c0_i32_2 = arith.constant 0 : i32
    return %c0_i32, %c0_i32_0, %c0_i32_1 : i32, i32, i32
  }
  func.func @transform_3(%arg0: i32) -> (i32, i32, i32) {
    %c0_i32 = arith.constant 0 : i32
    %c0_i32_0 = arith.constant 0 : i32
    %c0_i32_1 = arith.constant 0 : i32
    %c0_i32_2 = arith.constant 0 : i32
    return %c0_i32, %c0_i32_0, %c0_i32_1 : i32, i32, i32
  }
  func.func @transform_4(%arg0: i32) -> (i32, i32) {
    %c0_i32 = arith.constant 0 : i32
    %c0_i32_0 = arith.constant 0 : i32
    %c0_i32_1 = arith.constant 0 : i32
    return %c0_i32, %c0_i32_0 : i32, i32
  }
  func.func @transform_5(%arg0: i32) -> (i32, i32, i32) {
    %c0_i32 = arith.constant 0 : i32
    %c0_i32_0 = arith.constant 0 : i32
    %c0_i32_1 = arith.constant 0 : i32
    %c0_i32_2 = arith.constant 0 : i32
    return %c0_i32, %c0_i32_0, %c0_i32_1 : i32, i32, i32
  }
  func.func @transform_6(%arg0: i32) -> (i32, i32) {
    %c0_i32 = arith.constant 0 : i32
    %c0_i32_0 = arith.constant 0 : i32
    %c0_i32_1 = arith.constant 0 : i32
    return %c0_i32, %c0_i32_0 : i32, i32
  }
  func.func @transform_7(%arg0: i32) -> (i32, i32) {
    %c0_i32 = arith.constant 0 : i32
    %c0_i32_0 = arith.constant 0 : i32
    %c0_i32_1 = arith.constant 0 : i32
    return %c0_i32, %c0_i32_0 : i32, i32
  }
  func.func @transform_8(%arg0: i32) -> (i32, i32) {
    %c0_i32 = arith.constant 0 : i32
    %c0_i32_0 = arith.constant 0 : i32
    %c0_i32_1 = arith.constant 0 : i32
    return %c0_i32, %c0_i32_0 : i32, i32
  }
  func.func @transform_9(%arg0: i32) -> (i32, i32) {
    %c0_i32 = arith.constant 0 : i32
    %c0_i32_0 = arith.constant 0 : i32
    %c0_i32_1 = arith.constant 0 : i32
    return %c0_i32, %c0_i32_0 : i32, i32
  }
  func.func @transform_10(%arg0: i32) -> (i32, i32) {
    %c0_i32 = arith.constant 0 : i32
    %c0_i32_0 = arith.constant 0 : i32
    return %arg0, %c0_i32 : i32, i32
  }
  func.func @transform_11(%arg0: i32) -> (i32, i32) {
    %c0_i32 = arith.constant 0 : i32
    %c0_i32_0 = arith.constant 0 : i32
    return %arg0, %c0_i32 : i32, i32
  }
  func.func @transform_12(%arg0: i32) -> (i32, i32) {
    %c0_i32 = arith.constant 0 : i32
    %c0_i32_0 = arith.constant 0 : i32
    return %arg0, %c0_i32 : i32, i32
  }
}

module attributes {stable_mosaic.version = 11 : i64} {
  func.func @kernel(%arg0: i32, %arg1: memref<16x128xf32, #tpu.memory_space<vmem>>, %arg2: memref<16x128xf32, #tpu.memory_space<vmem>>, %arg3: memref<3x128x128xbf16, #tpu.memory_space<vmem>>, %arg4: memref<3x128x128xbf16, #tpu.memory_space<vmem>>, %arg5: memref<1x128xf32, #tpu.memory_space<vmem>>, %arg6: memref<3x128x128xbf16, #tpu.memory_space<vmem>>, %arg7: memref<1x128xf32, #tpu.memory_space<vmem>>, %arg8: memref<128x32xbf16, #tpu.memory_space<vmem>>, %arg9: memref<128x256xbf16, #tpu.memory_space<vmem>>, %arg10: memref<1x256xf32, #tpu.memory_space<vmem>>, %arg11: memref<16x128xf32, #tpu.memory_space<vmem>>, %arg12: memref<16x32xf32, #tpu.memory_space<vmem>>, %arg13: memref<16x256xf32, #tpu.memory_space<vmem>>, %arg14: memref<32x128xf32, #tpu.memory_space<vmem>>, %arg15: memref<32x128xf32, #tpu.memory_space<vmem>>, %arg16: memref<32x128xf32, #tpu.memory_space<vmem>>) attributes {dimension_semantics = [#tpu.dimension_semantics<parallel>], iteration_bounds = array<i64: 2>, scalar_prefetch = 0 : i64, scratch_operands = 3 : i64, tpu.core_type = #tpu.core_type<tc>, window_params = [{transform_indices = @transform_0, window_bounds = array<i64: 16, 128>}, {transform_indices = @transform_1, window_bounds = array<i64: 16, 128>}, {pipeline_mode = #tpu.pipeline_mode<synchronous>, transform_indices = @transform_2, window_bounds = array<i64: 3, 128, 128>}, {pipeline_mode = #tpu.pipeline_mode<synchronous>, transform_indices = @transform_3, window_bounds = array<i64: 3, 128, 128>}, {pipeline_mode = #tpu.pipeline_mode<synchronous>, transform_indices = @transform_4, window_bounds = array<i64: 1, 128>}, {pipeline_mode = #tpu.pipeline_mode<synchronous>, transform_indices = @transform_5, window_bounds = array<i64: 3, 128, 128>}, {pipeline_mode = #tpu.pipeline_mode<synchronous>, transform_indices = @transform_6, window_bounds = array<i64: 1, 128>}, {pipeline_mode = #tpu.pipeline_mode<synchronous>, transform_indices = @transform_7, window_bounds = array<i64: 128, 32>}, {pipeline_mode = #tpu.pipeline_mode<synchronous>, transform_indices = @transform_8, window_bounds = array<i64: 128, 256>}, {pipeline_mode = #tpu.pipeline_mode<synchronous>, transform_indices = @transform_9, window_bounds = array<i64: 1, 256>}, {transform_indices = @transform_10, window_bounds = array<i64: 16, 128>}, {transform_indices = @transform_11, window_bounds = array<i64: 16, 32>}, {transform_indices = @transform_12, window_bounds = array<i64: 16, 256>}]} {
    %0 = tpu.iota {dimensions = array<i32: 0>} : vector<16x1xi32>
    %c15_i32 = arith.constant 15 : i32
    %1 = vector.broadcast %c15_i32 : i32 to vector<16x1xi32>
    %2 = arith.andi %0, %1 : vector<16x1xi32>
    %c0_i32 = arith.constant 0 : i32
    %3 = vector.broadcast %c0_i32 : i32 to vector<16x1xi32>
    %4 = arith.cmpi sgt, %2, %3 : vector<16x1xi32>
    %c15_i32_0 = arith.constant 15 : i32
    %5 = vector.broadcast %c15_i32_0 : i32 to vector<16x1xi32>
    %6 = arith.cmpi slt, %2, %5 : vector<16x1xi32>
    %c0 = arith.constant 0 : index
    %c0_1 = arith.constant 0 : index
    %7 = vector.load %arg1[%c0, %c0_1] : memref<16x128xf32, #tpu.memory_space<vmem>>, vector<16x128xf32>
    %cst = arith.constant 0.000000e+00 : f32
    %8 = vector.broadcast %cst : f32 to vector<32x128xf32>
    %c0_2 = arith.constant 0 : index
    %c0_3 = arith.constant 0 : index
    %9 = vector.load %arg14[%c0_2, %c0_3] : memref<32x128xf32, #tpu.memory_space<vmem>>, vector<32x128xf32>
    tpu.vector_store %arg14[%c0_2, %c0_3], %8 {strides = array<i32>} : memref<32x128xf32, #tpu.memory_space<vmem>>, vector<32x128xf32>,
    %c8 = arith.constant 8 : index
    %c0_4 = arith.constant 0 : index
    %10 = vector.load %arg14[%c8, %c0_4] : memref<32x128xf32, #tpu.memory_space<vmem>>, vector<16x128xf32>
    tpu.vector_store %arg14[%c8, %c0_4], %7 {strides = array<i32>} : memref<32x128xf32, #tpu.memory_space<vmem>>, vector<16x128xf32>,
    %c0_5 = arith.constant 0 : index
    %c0_6 = arith.constant 0 : index
    %11 = vector.load %arg2[%c0_5, %c0_6] : memref<16x128xf32, #tpu.memory_space<vmem>>, vector<16x128xf32>
    %cst_7 = arith.constant 0.000000e+00 : f32
    %12 = vector.broadcast %cst_7 : f32 to vector<32x128xf32>
    %c0_8 = arith.constant 0 : index
    %c0_9 = arith.constant 0 : index
    %13 = vector.load %arg15[%c0_8, %c0_9] : memref<32x128xf32, #tpu.memory_space<vmem>>, vector<32x128xf32>
    tpu.vector_store %arg15[%c0_8, %c0_9], %12 {strides = array<i32>} : memref<32x128xf32, #tpu.memory_space<vmem>>, vector<32x128xf32>,
    %c8_10 = arith.constant 8 : index
    %c0_11 = arith.constant 0 : index
    %14 = vector.load %arg15[%c8_10, %c0_11] : memref<32x128xf32, #tpu.memory_space<vmem>>, vector<16x128xf32>
    tpu.vector_store %arg15[%c8_10, %c0_11], %11 {strides = array<i32>} : memref<32x128xf32, #tpu.memory_space<vmem>>, vector<16x128xf32>,
    %c7 = arith.constant 7 : index
    %c0_12 = arith.constant 0 : index
    %15 = vector.load %arg14[%c7, %c0_12] : memref<32x128xf32, #tpu.memory_space<vmem>>, vector<16x128xf32>
    %cst_13 = arith.constant 0.000000e+00 : f32
    %16 = vector.shape_cast %4 : vector<16x1xi1> to vector<16x1xi1>
    %17 = vector.broadcast %16 : vector<16x1xi1> to vector<16x128xi1>
    %18 = vector.broadcast %cst_13 : f32 to vector<16x128xf32>
    %19 = arith.select %17, %15, %18 : vector<16x128xi1>, vector<16x128xf32>
    %20 = arith.truncf %19 : vector<16x128xf32> to vector<16x128xbf16>
    %c0_14 = arith.constant 0 : index
    %c0_15 = arith.constant 0 : index
    %c0_16 = arith.constant 0 : index
    %21 = vector.load %arg3[%c0_14, %c0_15, %c0_16] : memref<3x128x128xbf16, #tpu.memory_space<vmem>>, vector<1x128x128xbf16>
    %22 = vector.shape_cast %21 : vector<1x128x128xbf16> to vector<128x128xbf16>
    %cst_17 = arith.constant dense<0.000000e+00> : vector<16x128xf32>
    %23 = tpu.matmul %20, %22, %cst_17 {dimension_numbers = #tpu.dot_dimension_numbers<[1], [0], [0], [1], [0, 0, 1, 1], [], []>} : vector<16x128xbf16>, vector<128x128xbf16>, vector<16x128xf32> -> vector<16x128xf32>
    %c8_18 = arith.constant 8 : index
    %c0_19 = arith.constant 0 : index
    %24 = vector.load %arg14[%c8_18, %c0_19] : memref<32x128xf32, #tpu.memory_space<vmem>>, vector<16x128xf32>
    %25 = arith.truncf %24 : vector<16x128xf32> to vector<16x128xbf16>
    %c1 = arith.constant 1 : index
    %c0_20 = arith.constant 0 : index
    %c0_21 = arith.constant 0 : index
    %26 = vector.load %arg3[%c1, %c0_20, %c0_21] : memref<3x128x128xbf16, #tpu.memory_space<vmem>>, vector<1x128x128xbf16>
    %27 = vector.shape_cast %26 : vector<1x128x128xbf16> to vector<128x128xbf16>
    %cst_22 = arith.constant dense<0.000000e+00> : vector<16x128xf32>
    %28 = tpu.matmul %25, %27, %cst_22 {dimension_numbers = #tpu.dot_dimension_numbers<[1], [0], [0], [1], [0, 0, 1, 1], [], []>} : vector<16x128xbf16>, vector<128x128xbf16>, vector<16x128xf32> -> vector<16x128xf32>
    %29 = arith.addf %23, %28 : vector<16x128xf32>
    %c9 = arith.constant 9 : index
    %c0_23 = arith.constant 0 : index
    %30 = vector.load %arg14[%c9, %c0_23] : memref<32x128xf32, #tpu.memory_space<vmem>>, vector<16x128xf32>
    %cst_24 = arith.constant 0.000000e+00 : f32
    %31 = vector.shape_cast %6 : vector<16x1xi1> to vector<16x1xi1>
    %32 = vector.broadcast %31 : vector<16x1xi1> to vector<16x128xi1>
    %33 = vector.broadcast %cst_24 : f32 to vector<16x128xf32>
    %34 = arith.select %32, %30, %33 : vector<16x128xi1>, vector<16x128xf32>
    %35 = arith.truncf %34 : vector<16x128xf32> to vector<16x128xbf16>
    %c2 = arith.constant 2 : index
    %c0_25 = arith.constant 0 : index
    %c0_26 = arith.constant 0 : index
    %36 = vector.load %arg3[%c2, %c0_25, %c0_26] : memref<3x128x128xbf16, #tpu.memory_space<vmem>>, vector<1x128x128xbf16>
    %37 = vector.shape_cast %36 : vector<1x128x128xbf16> to vector<128x128xbf16>
    %cst_27 = arith.constant dense<0.000000e+00> : vector<16x128xf32>
    %38 = tpu.matmul %35, %37, %cst_27 {dimension_numbers = #tpu.dot_dimension_numbers<[1], [0], [0], [1], [0, 0, 1, 1], [], []>} : vector<16x128xbf16>, vector<128x128xbf16>, vector<16x128xf32> -> vector<16x128xf32>
    %39 = arith.addf %29, %38 : vector<16x128xf32>
    %c7_28 = arith.constant 7 : index
    %c0_29 = arith.constant 0 : index
    %40 = vector.load %arg15[%c7_28, %c0_29] : memref<32x128xf32, #tpu.memory_space<vmem>>, vector<16x128xf32>
    %cst_30 = arith.constant 0.000000e+00 : f32
    %41 = vector.shape_cast %4 : vector<16x1xi1> to vector<16x1xi1>
    %42 = vector.broadcast %41 : vector<16x1xi1> to vector<16x128xi1>
    %43 = vector.broadcast %cst_30 : f32 to vector<16x128xf32>
    %44 = arith.select %42, %40, %43 : vector<16x128xi1>, vector<16x128xf32>
    %45 = arith.truncf %44 : vector<16x128xf32> to vector<16x128xbf16>
    %c0_31 = arith.constant 0 : index
    %c0_32 = arith.constant 0 : index
    %c0_33 = arith.constant 0 : index
    %46 = vector.load %arg4[%c0_31, %c0_32, %c0_33] : memref<3x128x128xbf16, #tpu.memory_space<vmem>>, vector<1x128x128xbf16>
    %47 = vector.shape_cast %46 : vector<1x128x128xbf16> to vector<128x128xbf16>
    %cst_34 = arith.constant dense<0.000000e+00> : vector<16x128xf32>
    %48 = tpu.matmul %45, %47, %cst_34 {dimension_numbers = #tpu.dot_dimension_numbers<[1], [0], [0], [1], [0, 0, 1, 1], [], []>} : vector<16x128xbf16>, vector<128x128xbf16>, vector<16x128xf32> -> vector<16x128xf32>
    %c8_35 = arith.constant 8 : index
    %c0_36 = arith.constant 0 : index
    %49 = vector.load %arg15[%c8_35, %c0_36] : memref<32x128xf32, #tpu.memory_space<vmem>>, vector<16x128xf32>
    %50 = arith.truncf %49 : vector<16x128xf32> to vector<16x128xbf16>
    %c1_37 = arith.constant 1 : index
    %c0_38 = arith.constant 0 : index
    %c0_39 = arith.constant 0 : index
    %51 = vector.load %arg4[%c1_37, %c0_38, %c0_39] : memref<3x128x128xbf16, #tpu.memory_space<vmem>>, vector<1x128x128xbf16>
    %52 = vector.shape_cast %51 : vector<1x128x128xbf16> to vector<128x128xbf16>
    %cst_40 = arith.constant dense<0.000000e+00> : vector<16x128xf32>
    %53 = tpu.matmul %50, %52, %cst_40 {dimension_numbers = #tpu.dot_dimension_numbers<[1], [0], [0], [1], [0, 0, 1, 1], [], []>} : vector<16x128xbf16>, vector<128x128xbf16>, vector<16x128xf32> -> vector<16x128xf32>
    %54 = arith.addf %48, %53 : vector<16x128xf32>
    %c9_41 = arith.constant 9 : index
    %c0_42 = arith.constant 0 : index
    %55 = vector.load %arg15[%c9_41, %c0_42] : memref<32x128xf32, #tpu.memory_space<vmem>>, vector<16x128xf32>
    %cst_43 = arith.constant 0.000000e+00 : f32
    %56 = vector.shape_cast %6 : vector<16x1xi1> to vector<16x1xi1>
    %57 = vector.broadcast %56 : vector<16x1xi1> to vector<16x128xi1>
    %58 = vector.broadcast %cst_43 : f32 to vector<16x128xf32>
    %59 = arith.select %57, %55, %58 : vector<16x128xi1>, vector<16x128xf32>
    %60 = arith.truncf %59 : vector<16x128xf32> to vector<16x128xbf16>
    %c2_44 = arith.constant 2 : index
    %c0_45 = arith.constant 0 : index
    %c0_46 = arith.constant 0 : index
    %61 = vector.load %arg4[%c2_44, %c0_45, %c0_46] : memref<3x128x128xbf16, #tpu.memory_space<vmem>>, vector<1x128x128xbf16>
    %62 = vector.shape_cast %61 : vector<1x128x128xbf16> to vector<128x128xbf16>
    %cst_47 = arith.constant dense<0.000000e+00> : vector<16x128xf32>
    %63 = tpu.matmul %60, %62, %cst_47 {dimension_numbers = #tpu.dot_dimension_numbers<[1], [0], [0], [1], [0, 0, 1, 1], [], []>} : vector<16x128xbf16>, vector<128x128xbf16>, vector<16x128xf32> -> vector<16x128xf32>
    %64 = arith.addf %54, %63 : vector<16x128xf32>
    %65 = arith.addf %39, %64 : vector<16x128xf32>
    %c0_48 = arith.constant 0 : index
    %c0_49 = arith.constant 0 : index
    %66 = vector.load %arg5[%c0_48, %c0_49] : memref<1x128xf32, #tpu.memory_space<vmem>>, vector<1x128xf32>
    %67 = vector.broadcast %66 : vector<1x128xf32> to vector<16x128xf32>
    %68 = arith.addf %65, %67 : vector<16x128xf32>
    %cst_50 = arith.constant 0.000000e+00 : f32
    %69 = vector.broadcast %cst_50 : f32 to vector<16x128xf32>
    %70 = arith.cmpf oge, %68, %69 : vector<16x128xf32>
    %cst_51 = arith.constant 0.00999999977 : f32
    %71 = vector.broadcast %cst_51 : f32 to vector<16x128xf32>
    %72 = arith.mulf %68, %71 : vector<16x128xf32>
    %73 = arith.select %70, %68, %72 : vector<16x128xi1>, vector<16x128xf32>
    %cst_52 = arith.constant 0.000000e+00 : f32
    %74 = vector.broadcast %cst_52 : f32 to vector<32x128xf32>
    %c0_53 = arith.constant 0 : index
    %c0_54 = arith.constant 0 : index
    %75 = vector.load %arg16[%c0_53, %c0_54] : memref<32x128xf32, #tpu.memory_space<vmem>>, vector<32x128xf32>
    tpu.vector_store %arg16[%c0_53, %c0_54], %74 {strides = array<i32>} : memref<32x128xf32, #tpu.memory_space<vmem>>, vector<32x128xf32>,
    %c8_55 = arith.constant 8 : index
    %c0_56 = arith.constant 0 : index
    %76 = vector.load %arg16[%c8_55, %c0_56] : memref<32x128xf32, #tpu.memory_space<vmem>>, vector<16x128xf32>
    tpu.vector_store %arg16[%c8_55, %c0_56], %73 {strides = array<i32>} : memref<32x128xf32, #tpu.memory_space<vmem>>, vector<16x128xf32>,
    %c7_57 = arith.constant 7 : index
    %c0_58 = arith.constant 0 : index
    %77 = vector.load %arg16[%c7_57, %c0_58] : memref<32x128xf32, #tpu.memory_space<vmem>>, vector<16x128xf32>
    %cst_59 = arith.constant 0.000000e+00 : f32
    %78 = vector.shape_cast %4 : vector<16x1xi1> to vector<16x1xi1>
    %79 = vector.broadcast %78 : vector<16x1xi1> to vector<16x128xi1>
    %80 = vector.broadcast %cst_59 : f32 to vector<16x128xf32>
    %81 = arith.select %79, %77, %80 : vector<16x128xi1>, vector<16x128xf32>
    %82 = arith.truncf %81 : vector<16x128xf32> to vector<16x128xbf16>
    %c0_60 = arith.constant 0 : index
    %c0_61 = arith.constant 0 : index
    %c0_62 = arith.constant 0 : index
    %83 = vector.load %arg6[%c0_60, %c0_61, %c0_62] : memref<3x128x128xbf16, #tpu.memory_space<vmem>>, vector<1x128x128xbf16>
    %84 = vector.shape_cast %83 : vector<1x128x128xbf16> to vector<128x128xbf16>
    %cst_63 = arith.constant dense<0.000000e+00> : vector<16x128xf32>
    %85 = tpu.matmul %82, %84, %cst_63 {dimension_numbers = #tpu.dot_dimension_numbers<[1], [0], [0], [1], [0, 0, 1, 1], [], []>} : vector<16x128xbf16>, vector<128x128xbf16>, vector<16x128xf32> -> vector<16x128xf32>
    %c8_64 = arith.constant 8 : index
    %c0_65 = arith.constant 0 : index
    %86 = vector.load %arg16[%c8_64, %c0_65] : memref<32x128xf32, #tpu.memory_space<vmem>>, vector<16x128xf32>
    %87 = arith.truncf %86 : vector<16x128xf32> to vector<16x128xbf16>
    %c1_66 = arith.constant 1 : index
    %c0_67 = arith.constant 0 : index
    %c0_68 = arith.constant 0 : index
    %88 = vector.load %arg6[%c1_66, %c0_67, %c0_68] : memref<3x128x128xbf16, #tpu.memory_space<vmem>>, vector<1x128x128xbf16>
    %89 = vector.shape_cast %88 : vector<1x128x128xbf16> to vector<128x128xbf16>
    %cst_69 = arith.constant dense<0.000000e+00> : vector<16x128xf32>
    %90 = tpu.matmul %87, %89, %cst_69 {dimension_numbers = #tpu.dot_dimension_numbers<[1], [0], [0], [1], [0, 0, 1, 1], [], []>} : vector<16x128xbf16>, vector<128x128xbf16>, vector<16x128xf32> -> vector<16x128xf32>
    %91 = arith.addf %85, %90 : vector<16x128xf32>
    %c9_70 = arith.constant 9 : index
    %c0_71 = arith.constant 0 : index
    %92 = vector.load %arg16[%c9_70, %c0_71] : memref<32x128xf32, #tpu.memory_space<vmem>>, vector<16x128xf32>
    %cst_72 = arith.constant 0.000000e+00 : f32
    %93 = vector.shape_cast %6 : vector<16x1xi1> to vector<16x1xi1>
    %94 = vector.broadcast %93 : vector<16x1xi1> to vector<16x128xi1>
    %95 = vector.broadcast %cst_72 : f32 to vector<16x128xf32>
    %96 = arith.select %94, %92, %95 : vector<16x128xi1>, vector<16x128xf32>
    %97 = arith.truncf %96 : vector<16x128xf32> to vector<16x128xbf16>
    %c2_73 = arith.constant 2 : index
    %c0_74 = arith.constant 0 : index
    %c0_75 = arith.constant 0 : index
    %98 = vector.load %arg6[%c2_73, %c0_74, %c0_75] : memref<3x128x128xbf16, #tpu.memory_space<vmem>>, vector<1x128x128xbf16>
    %99 = vector.shape_cast %98 : vector<1x128x128xbf16> to vector<128x128xbf16>
    %cst_76 = arith.constant dense<0.000000e+00> : vector<16x128xf32>
    %100 = tpu.matmul %97, %99, %cst_76 {dimension_numbers = #tpu.dot_dimension_numbers<[1], [0], [0], [1], [0, 0, 1, 1], [], []>} : vector<16x128xbf16>, vector<128x128xbf16>, vector<16x128xf32> -> vector<16x128xf32>
    %101 = arith.addf %91, %100 : vector<16x128xf32>
    %c0_77 = arith.constant 0 : index
    %c0_78 = arith.constant 0 : index
    %102 = vector.load %arg7[%c0_77, %c0_78] : memref<1x128xf32, #tpu.memory_space<vmem>>, vector<1x128xf32>
    %103 = vector.broadcast %102 : vector<1x128xf32> to vector<16x128xf32>
    %104 = arith.addf %101, %103 : vector<16x128xf32>
    %cst_79 = arith.constant 0.000000e+00 : f32
    %105 = vector.broadcast %cst_79 : f32 to vector<16x128xf32>
    %106 = arith.cmpf oge, %104, %105 : vector<16x128xf32>
    %cst_80 = arith.constant 0.00999999977 : f32
    %107 = vector.broadcast %cst_80 : f32 to vector<16x128xf32>
    %108 = arith.mulf %104, %107 : vector<16x128xf32>
    %109 = arith.select %106, %104, %108 : vector<16x128xi1>, vector<16x128xf32>
    %c0_81 = arith.constant 0 : index
    %c0_82 = arith.constant 0 : index
    %110 = vector.load %arg11[%c0_81, %c0_82] : memref<16x128xf32, #tpu.memory_space<vmem>>, vector<16x128xf32>
    tpu.vector_store %arg11[%c0_81, %c0_82], %109 {strides = array<i32>} : memref<16x128xf32, #tpu.memory_space<vmem>>, vector<16x128xf32>,
    %111 = arith.truncf %109 : vector<16x128xf32> to vector<16x128xbf16>
    %c0_83 = arith.constant 0 : index
    %c0_84 = arith.constant 0 : index
    %112 = vector.load %arg8[%c0_83, %c0_84] : memref<128x32xbf16, #tpu.memory_space<vmem>>, vector<128x32xbf16>
    %cst_85 = arith.constant dense<0.000000e+00> : vector<16x32xf32>
    %113 = tpu.matmul %111, %112, %cst_85 {dimension_numbers = #tpu.dot_dimension_numbers<[1], [0], [0], [1], [0, 0, 1, 1], [], []>} : vector<16x128xbf16>, vector<128x32xbf16>, vector<16x32xf32> -> vector<16x32xf32>
    %cst_86 = arith.constant 0.000000e+00 : f32
    %114 = vector.broadcast %cst_86 : f32 to vector<16x32xf32>
    %115 = arith.cmpf oge, %113, %114 : vector<16x32xf32>
    %cst_87 = arith.constant 0.00999999977 : f32
    %116 = vector.broadcast %cst_87 : f32 to vector<16x32xf32>
    %117 = arith.mulf %113, %116 : vector<16x32xf32>
    %118 = arith.select %115, %113, %117 : vector<16x32xi1>, vector<16x32xf32>
    %c0_88 = arith.constant 0 : index
    %c0_89 = arith.constant 0 : index
    %119 = vector.load %arg12[%c0_88, %c0_89] : memref<16x32xf32, #tpu.memory_space<vmem>>, vector<16x32xf32>
    tpu.vector_store %arg12[%c0_88, %c0_89], %118 {strides = array<i32>} : memref<16x32xf32, #tpu.memory_space<vmem>>, vector<16x32xf32>,
    %c0_90 = arith.constant 0 : index
    %c0_91 = arith.constant 0 : index
    %120 = vector.load %arg9[%c0_90, %c0_91] : memref<128x256xbf16, #tpu.memory_space<vmem>>, vector<128x256xbf16>
    %cst_92 = arith.constant dense<0.000000e+00> : vector<16x256xf32>
    %121 = tpu.matmul %111, %120, %cst_92 {dimension_numbers = #tpu.dot_dimension_numbers<[1], [0], [0], [1], [0, 0, 1, 1], [], []>} : vector<16x128xbf16>, vector<128x256xbf16>, vector<16x256xf32> -> vector<16x256xf32>
    %c0_93 = arith.constant 0 : index
    %c0_94 = arith.constant 0 : index
    %122 = vector.load %arg10[%c0_93, %c0_94] : memref<1x256xf32, #tpu.memory_space<vmem>>, vector<1x256xf32>
    %123 = vector.broadcast %122 : vector<1x256xf32> to vector<16x256xf32>
    %124 = arith.addf %121, %123 : vector<16x256xf32>
    %c0_95 = arith.constant 0 : index
    %c0_96 = arith.constant 0 : index
    %125 = vector.load %arg13[%c0_95, %c0_96] : memref<16x256xf32, #tpu.memory_space<vmem>>, vector<16x256xf32>
    tpu.vector_store %arg13[%c0_95, %c0_96], %124 {strides = array<i32>} : memref<16x256xf32, #tpu.memory_space<vmem>>, vector<16x256xf32>,
    return
  }
  func.func @transform_0(%arg0: i32) -> (i32, i32) {
    %c0_i32 = arith.constant 0 : i32
    %c0_i32_0 = arith.constant 0 : i32
    return %arg0, %c0_i32 : i32, i32
  }
  func.func @transform_1(%arg0: i32) -> (i32, i32) {
    %c0_i32 = arith.constant 0 : i32
    %c0_i32_0 = arith.constant 0 : i32
    return %arg0, %c0_i32 : i32, i32
  }
  func.func @transform_2(%arg0: i32) -> (i32, i32, i32) {
    %c0_i32 = arith.constant 0 : i32
    %c0_i32_0 = arith.constant 0 : i32
    %c0_i32_1 = arith.constant 0 : i32
    %c0_i32_2 = arith.constant 0 : i32
    return %c0_i32, %c0_i32_0, %c0_i32_1 : i32, i32, i32
  }
  func.func @transform_3(%arg0: i32) -> (i32, i32, i32) {
    %c0_i32 = arith.constant 0 : i32
    %c0_i32_0 = arith.constant 0 : i32
    %c0_i32_1 = arith.constant 0 : i32
    %c0_i32_2 = arith.constant 0 : i32
    return %c0_i32, %c0_i32_0, %c0_i32_1 : i32, i32, i32
  }
  func.func @transform_4(%arg0: i32) -> (i32, i32) {
    %c0_i32 = arith.constant 0 : i32
    %c0_i32_0 = arith.constant 0 : i32
    %c0_i32_1 = arith.constant 0 : i32
    return %c0_i32, %c0_i32_0 : i32, i32
  }
  func.func @transform_5(%arg0: i32) -> (i32, i32, i32) {
    %c0_i32 = arith.constant 0 : i32
    %c0_i32_0 = arith.constant 0 : i32
    %c0_i32_1 = arith.constant 0 : i32
    %c0_i32_2 = arith.constant 0 : i32
    return %c0_i32, %c0_i32_0, %c0_i32_1 : i32, i32, i32
  }
  func.func @transform_6(%arg0: i32) -> (i32, i32) {
    %c0_i32 = arith.constant 0 : i32
    %c0_i32_0 = arith.constant 0 : i32
    %c0_i32_1 = arith.constant 0 : i32
    return %c0_i32, %c0_i32_0 : i32, i32
  }
  func.func @transform_7(%arg0: i32) -> (i32, i32) {
    %c0_i32 = arith.constant 0 : i32
    %c0_i32_0 = arith.constant 0 : i32
    %c0_i32_1 = arith.constant 0 : i32
    return %c0_i32, %c0_i32_0 : i32, i32
  }
  func.func @transform_8(%arg0: i32) -> (i32, i32) {
    %c0_i32 = arith.constant 0 : i32
    %c0_i32_0 = arith.constant 0 : i32
    %c0_i32_1 = arith.constant 0 : i32
    return %c0_i32, %c0_i32_0 : i32, i32
  }
  func.func @transform_9(%arg0: i32) -> (i32, i32) {
    %c0_i32 = arith.constant 0 : i32
    %c0_i32_0 = arith.constant 0 : i32
    %c0_i32_1 = arith.constant 0 : i32
    return %c0_i32, %c0_i32_0 : i32, i32
  }
  func.func @transform_10(%arg0: i32) -> (i32, i32) {
    %c0_i32 = arith.constant 0 : i32
    %c0_i32_0 = arith.constant 0 : i32
    return %arg0, %c0_i32 : i32, i32
  }
  func.func @transform_11(%arg0: i32) -> (i32, i32) {
    %c0_i32 = arith.constant 0 : i32
    %c0_i32_0 = arith.constant 0 : i32
    return %arg0, %c0_i32 : i32, i32
  }
  func.func @transform_12(%arg0: i32) -> (i32, i32) {
    %c0_i32 = arith.constant 0 : i32
    %c0_i32_0 = arith.constant 0 : i32
    return %arg0, %c0_i32 : i32, i32
  }
}

module attributes {stable_mosaic.version = 11 : i64} {
  func.func @kernel(%arg0: i32, %arg1: memref<32x128xf32, #tpu.memory_space<vmem>>, %arg2: memref<32x128xf32, #tpu.memory_space<vmem>>, %arg3: memref<3x128x128xbf16, #tpu.memory_space<vmem>>, %arg4: memref<3x128x128xbf16, #tpu.memory_space<vmem>>, %arg5: memref<1x128xf32, #tpu.memory_space<vmem>>, %arg6: memref<3x128x128xbf16, #tpu.memory_space<vmem>>, %arg7: memref<1x128xf32, #tpu.memory_space<vmem>>, %arg8: memref<128x64xbf16, #tpu.memory_space<vmem>>, %arg9: memref<32x128xf32, #tpu.memory_space<vmem>>, %arg10: memref<32x64xf32, #tpu.memory_space<vmem>>, %arg11: memref<48x128xf32, #tpu.memory_space<vmem>>, %arg12: memref<48x128xf32, #tpu.memory_space<vmem>>, %arg13: memref<48x128xf32, #tpu.memory_space<vmem>>) attributes {dimension_semantics = [#tpu.dimension_semantics<parallel>], iteration_bounds = array<i64: 2>, scalar_prefetch = 0 : i64, scratch_operands = 3 : i64, tpu.core_type = #tpu.core_type<tc>, window_params = [{transform_indices = @transform_0, window_bounds = array<i64: 32, 128>}, {transform_indices = @transform_1, window_bounds = array<i64: 32, 128>}, {pipeline_mode = #tpu.pipeline_mode<synchronous>, transform_indices = @transform_2, window_bounds = array<i64: 3, 128, 128>}, {pipeline_mode = #tpu.pipeline_mode<synchronous>, transform_indices = @transform_3, window_bounds = array<i64: 3, 128, 128>}, {pipeline_mode = #tpu.pipeline_mode<synchronous>, transform_indices = @transform_4, window_bounds = array<i64: 1, 128>}, {pipeline_mode = #tpu.pipeline_mode<synchronous>, transform_indices = @transform_5, window_bounds = array<i64: 3, 128, 128>}, {pipeline_mode = #tpu.pipeline_mode<synchronous>, transform_indices = @transform_6, window_bounds = array<i64: 1, 128>}, {pipeline_mode = #tpu.pipeline_mode<synchronous>, transform_indices = @transform_7, window_bounds = array<i64: 128, 64>}, {transform_indices = @transform_8, window_bounds = array<i64: 32, 128>}, {transform_indices = @transform_9, window_bounds = array<i64: 32, 64>}]} {
    %0 = tpu.iota {dimensions = array<i32: 0>} : vector<32x1xi32>
    %c31_i32 = arith.constant 31 : i32
    %1 = vector.broadcast %c31_i32 : i32 to vector<32x1xi32>
    %2 = arith.andi %0, %1 : vector<32x1xi32>
    %c0_i32 = arith.constant 0 : i32
    %3 = vector.broadcast %c0_i32 : i32 to vector<32x1xi32>
    %4 = arith.cmpi sgt, %2, %3 : vector<32x1xi32>
    %c31_i32_0 = arith.constant 31 : i32
    %5 = vector.broadcast %c31_i32_0 : i32 to vector<32x1xi32>
    %6 = arith.cmpi slt, %2, %5 : vector<32x1xi32>
    %c0 = arith.constant 0 : index
    %c0_1 = arith.constant 0 : index
    %7 = vector.load %arg1[%c0, %c0_1] : memref<32x128xf32, #tpu.memory_space<vmem>>, vector<32x128xf32>
    %cst = arith.constant 0.000000e+00 : f32
    %8 = vector.broadcast %cst : f32 to vector<48x128xf32>
    %c0_2 = arith.constant 0 : index
    %c0_3 = arith.constant 0 : index
    %9 = vector.load %arg11[%c0_2, %c0_3] : memref<48x128xf32, #tpu.memory_space<vmem>>, vector<48x128xf32>
    tpu.vector_store %arg11[%c0_2, %c0_3], %8 {strides = array<i32>} : memref<48x128xf32, #tpu.memory_space<vmem>>, vector<48x128xf32>,
    %c8 = arith.constant 8 : index
    %c0_4 = arith.constant 0 : index
    %10 = vector.load %arg11[%c8, %c0_4] : memref<48x128xf32, #tpu.memory_space<vmem>>, vector<32x128xf32>
    tpu.vector_store %arg11[%c8, %c0_4], %7 {strides = array<i32>} : memref<48x128xf32, #tpu.memory_space<vmem>>, vector<32x128xf32>,
    %c0_5 = arith.constant 0 : index
    %c0_6 = arith.constant 0 : index
    %11 = vector.load %arg2[%c0_5, %c0_6] : memref<32x128xf32, #tpu.memory_space<vmem>>, vector<32x128xf32>
    %cst_7 = arith.constant 0.000000e+00 : f32
    %12 = vector.broadcast %cst_7 : f32 to vector<48x128xf32>
    %c0_8 = arith.constant 0 : index
    %c0_9 = arith.constant 0 : index
    %13 = vector.load %arg12[%c0_8, %c0_9] : memref<48x128xf32, #tpu.memory_space<vmem>>, vector<48x128xf32>
    tpu.vector_store %arg12[%c0_8, %c0_9], %12 {strides = array<i32>} : memref<48x128xf32, #tpu.memory_space<vmem>>, vector<48x128xf32>,
    %c8_10 = arith.constant 8 : index
    %c0_11 = arith.constant 0 : index
    %14 = vector.load %arg12[%c8_10, %c0_11] : memref<48x128xf32, #tpu.memory_space<vmem>>, vector<32x128xf32>
    tpu.vector_store %arg12[%c8_10, %c0_11], %11 {strides = array<i32>} : memref<48x128xf32, #tpu.memory_space<vmem>>, vector<32x128xf32>,
    %c7 = arith.constant 7 : index
    %c0_12 = arith.constant 0 : index
    %15 = vector.load %arg11[%c7, %c0_12] : memref<48x128xf32, #tpu.memory_space<vmem>>, vector<32x128xf32>
    %cst_13 = arith.constant 0.000000e+00 : f32
    %16 = vector.shape_cast %4 : vector<32x1xi1> to vector<32x1xi1>
    %17 = vector.broadcast %16 : vector<32x1xi1> to vector<32x128xi1>
    %18 = vector.broadcast %cst_13 : f32 to vector<32x128xf32>
    %19 = arith.select %17, %15, %18 : vector<32x128xi1>, vector<32x128xf32>
    %20 = arith.truncf %19 : vector<32x128xf32> to vector<32x128xbf16>
    %c0_14 = arith.constant 0 : index
    %c0_15 = arith.constant 0 : index
    %c0_16 = arith.constant 0 : index
    %21 = vector.load %arg3[%c0_14, %c0_15, %c0_16] : memref<3x128x128xbf16, #tpu.memory_space<vmem>>, vector<1x128x128xbf16>
    %22 = vector.shape_cast %21 : vector<1x128x128xbf16> to vector<128x128xbf16>
    %cst_17 = arith.constant dense<0.000000e+00> : vector<32x128xf32>
    %23 = tpu.matmul %20, %22, %cst_17 {dimension_numbers = #tpu.dot_dimension_numbers<[1], [0], [0], [1], [0, 0, 1, 1], [], []>} : vector<32x128xbf16>, vector<128x128xbf16>, vector<32x128xf32> -> vector<32x128xf32>
    %c8_18 = arith.constant 8 : index
    %c0_19 = arith.constant 0 : index
    %24 = vector.load %arg11[%c8_18, %c0_19] : memref<48x128xf32, #tpu.memory_space<vmem>>, vector<32x128xf32>
    %25 = arith.truncf %24 : vector<32x128xf32> to vector<32x128xbf16>
    %c1 = arith.constant 1 : index
    %c0_20 = arith.constant 0 : index
    %c0_21 = arith.constant 0 : index
    %26 = vector.load %arg3[%c1, %c0_20, %c0_21] : memref<3x128x128xbf16, #tpu.memory_space<vmem>>, vector<1x128x128xbf16>
    %27 = vector.shape_cast %26 : vector<1x128x128xbf16> to vector<128x128xbf16>
    %cst_22 = arith.constant dense<0.000000e+00> : vector<32x128xf32>
    %28 = tpu.matmul %25, %27, %cst_22 {dimension_numbers = #tpu.dot_dimension_numbers<[1], [0], [0], [1], [0, 0, 1, 1], [], []>} : vector<32x128xbf16>, vector<128x128xbf16>, vector<32x128xf32> -> vector<32x128xf32>
    %29 = arith.addf %23, %28 : vector<32x128xf32>
    %c9 = arith.constant 9 : index
    %c0_23 = arith.constant 0 : index
    %30 = vector.load %arg11[%c9, %c0_23] : memref<48x128xf32, #tpu.memory_space<vmem>>, vector<32x128xf32>
    %cst_24 = arith.constant 0.000000e+00 : f32
    %31 = vector.shape_cast %6 : vector<32x1xi1> to vector<32x1xi1>
    %32 = vector.broadcast %31 : vector<32x1xi1> to vector<32x128xi1>
    %33 = vector.broadcast %cst_24 : f32 to vector<32x128xf32>
    %34 = arith.select %32, %30, %33 : vector<32x128xi1>, vector<32x128xf32>
    %35 = arith.truncf %34 : vector<32x128xf32> to vector<32x128xbf16>
    %c2 = arith.constant 2 : index
    %c0_25 = arith.constant 0 : index
    %c0_26 = arith.constant 0 : index
    %36 = vector.load %arg3[%c2, %c0_25, %c0_26] : memref<3x128x128xbf16, #tpu.memory_space<vmem>>, vector<1x128x128xbf16>
    %37 = vector.shape_cast %36 : vector<1x128x128xbf16> to vector<128x128xbf16>
    %cst_27 = arith.constant dense<0.000000e+00> : vector<32x128xf32>
    %38 = tpu.matmul %35, %37, %cst_27 {dimension_numbers = #tpu.dot_dimension_numbers<[1], [0], [0], [1], [0, 0, 1, 1], [], []>} : vector<32x128xbf16>, vector<128x128xbf16>, vector<32x128xf32> -> vector<32x128xf32>
    %39 = arith.addf %29, %38 : vector<32x128xf32>
    %c7_28 = arith.constant 7 : index
    %c0_29 = arith.constant 0 : index
    %40 = vector.load %arg12[%c7_28, %c0_29] : memref<48x128xf32, #tpu.memory_space<vmem>>, vector<32x128xf32>
    %cst_30 = arith.constant 0.000000e+00 : f32
    %41 = vector.shape_cast %4 : vector<32x1xi1> to vector<32x1xi1>
    %42 = vector.broadcast %41 : vector<32x1xi1> to vector<32x128xi1>
    %43 = vector.broadcast %cst_30 : f32 to vector<32x128xf32>
    %44 = arith.select %42, %40, %43 : vector<32x128xi1>, vector<32x128xf32>
    %45 = arith.truncf %44 : vector<32x128xf32> to vector<32x128xbf16>
    %c0_31 = arith.constant 0 : index
    %c0_32 = arith.constant 0 : index
    %c0_33 = arith.constant 0 : index
    %46 = vector.load %arg4[%c0_31, %c0_32, %c0_33] : memref<3x128x128xbf16, #tpu.memory_space<vmem>>, vector<1x128x128xbf16>
    %47 = vector.shape_cast %46 : vector<1x128x128xbf16> to vector<128x128xbf16>
    %cst_34 = arith.constant dense<0.000000e+00> : vector<32x128xf32>
    %48 = tpu.matmul %45, %47, %cst_34 {dimension_numbers = #tpu.dot_dimension_numbers<[1], [0], [0], [1], [0, 0, 1, 1], [], []>} : vector<32x128xbf16>, vector<128x128xbf16>, vector<32x128xf32> -> vector<32x128xf32>
    %c8_35 = arith.constant 8 : index
    %c0_36 = arith.constant 0 : index
    %49 = vector.load %arg12[%c8_35, %c0_36] : memref<48x128xf32, #tpu.memory_space<vmem>>, vector<32x128xf32>
    %50 = arith.truncf %49 : vector<32x128xf32> to vector<32x128xbf16>
    %c1_37 = arith.constant 1 : index
    %c0_38 = arith.constant 0 : index
    %c0_39 = arith.constant 0 : index
    %51 = vector.load %arg4[%c1_37, %c0_38, %c0_39] : memref<3x128x128xbf16, #tpu.memory_space<vmem>>, vector<1x128x128xbf16>
    %52 = vector.shape_cast %51 : vector<1x128x128xbf16> to vector<128x128xbf16>
    %cst_40 = arith.constant dense<0.000000e+00> : vector<32x128xf32>
    %53 = tpu.matmul %50, %52, %cst_40 {dimension_numbers = #tpu.dot_dimension_numbers<[1], [0], [0], [1], [0, 0, 1, 1], [], []>} : vector<32x128xbf16>, vector<128x128xbf16>, vector<32x128xf32> -> vector<32x128xf32>
    %54 = arith.addf %48, %53 : vector<32x128xf32>
    %c9_41 = arith.constant 9 : index
    %c0_42 = arith.constant 0 : index
    %55 = vector.load %arg12[%c9_41, %c0_42] : memref<48x128xf32, #tpu.memory_space<vmem>>, vector<32x128xf32>
    %cst_43 = arith.constant 0.000000e+00 : f32
    %56 = vector.shape_cast %6 : vector<32x1xi1> to vector<32x1xi1>
    %57 = vector.broadcast %56 : vector<32x1xi1> to vector<32x128xi1>
    %58 = vector.broadcast %cst_43 : f32 to vector<32x128xf32>
    %59 = arith.select %57, %55, %58 : vector<32x128xi1>, vector<32x128xf32>
    %60 = arith.truncf %59 : vector<32x128xf32> to vector<32x128xbf16>
    %c2_44 = arith.constant 2 : index
    %c0_45 = arith.constant 0 : index
    %c0_46 = arith.constant 0 : index
    %61 = vector.load %arg4[%c2_44, %c0_45, %c0_46] : memref<3x128x128xbf16, #tpu.memory_space<vmem>>, vector<1x128x128xbf16>
    %62 = vector.shape_cast %61 : vector<1x128x128xbf16> to vector<128x128xbf16>
    %cst_47 = arith.constant dense<0.000000e+00> : vector<32x128xf32>
    %63 = tpu.matmul %60, %62, %cst_47 {dimension_numbers = #tpu.dot_dimension_numbers<[1], [0], [0], [1], [0, 0, 1, 1], [], []>} : vector<32x128xbf16>, vector<128x128xbf16>, vector<32x128xf32> -> vector<32x128xf32>
    %64 = arith.addf %54, %63 : vector<32x128xf32>
    %65 = arith.addf %39, %64 : vector<32x128xf32>
    %c0_48 = arith.constant 0 : index
    %c0_49 = arith.constant 0 : index
    %66 = vector.load %arg5[%c0_48, %c0_49] : memref<1x128xf32, #tpu.memory_space<vmem>>, vector<1x128xf32>
    %67 = vector.broadcast %66 : vector<1x128xf32> to vector<32x128xf32>
    %68 = arith.addf %65, %67 : vector<32x128xf32>
    %cst_50 = arith.constant 0.000000e+00 : f32
    %69 = vector.broadcast %cst_50 : f32 to vector<32x128xf32>
    %70 = arith.cmpf oge, %68, %69 : vector<32x128xf32>
    %cst_51 = arith.constant 0.00999999977 : f32
    %71 = vector.broadcast %cst_51 : f32 to vector<32x128xf32>
    %72 = arith.mulf %68, %71 : vector<32x128xf32>
    %73 = arith.select %70, %68, %72 : vector<32x128xi1>, vector<32x128xf32>
    %cst_52 = arith.constant 0.000000e+00 : f32
    %74 = vector.broadcast %cst_52 : f32 to vector<48x128xf32>
    %c0_53 = arith.constant 0 : index
    %c0_54 = arith.constant 0 : index
    %75 = vector.load %arg13[%c0_53, %c0_54] : memref<48x128xf32, #tpu.memory_space<vmem>>, vector<48x128xf32>
    tpu.vector_store %arg13[%c0_53, %c0_54], %74 {strides = array<i32>} : memref<48x128xf32, #tpu.memory_space<vmem>>, vector<48x128xf32>,
    %c8_55 = arith.constant 8 : index
    %c0_56 = arith.constant 0 : index
    %76 = vector.load %arg13[%c8_55, %c0_56] : memref<48x128xf32, #tpu.memory_space<vmem>>, vector<32x128xf32>
    tpu.vector_store %arg13[%c8_55, %c0_56], %73 {strides = array<i32>} : memref<48x128xf32, #tpu.memory_space<vmem>>, vector<32x128xf32>,
    %c7_57 = arith.constant 7 : index
    %c0_58 = arith.constant 0 : index
    %77 = vector.load %arg13[%c7_57, %c0_58] : memref<48x128xf32, #tpu.memory_space<vmem>>, vector<32x128xf32>
    %cst_59 = arith.constant 0.000000e+00 : f32
    %78 = vector.shape_cast %4 : vector<32x1xi1> to vector<32x1xi1>
    %79 = vector.broadcast %78 : vector<32x1xi1> to vector<32x128xi1>
    %80 = vector.broadcast %cst_59 : f32 to vector<32x128xf32>
    %81 = arith.select %79, %77, %80 : vector<32x128xi1>, vector<32x128xf32>
    %82 = arith.truncf %81 : vector<32x128xf32> to vector<32x128xbf16>
    %c0_60 = arith.constant 0 : index
    %c0_61 = arith.constant 0 : index
    %c0_62 = arith.constant 0 : index
    %83 = vector.load %arg6[%c0_60, %c0_61, %c0_62] : memref<3x128x128xbf16, #tpu.memory_space<vmem>>, vector<1x128x128xbf16>
    %84 = vector.shape_cast %83 : vector<1x128x128xbf16> to vector<128x128xbf16>
    %cst_63 = arith.constant dense<0.000000e+00> : vector<32x128xf32>
    %85 = tpu.matmul %82, %84, %cst_63 {dimension_numbers = #tpu.dot_dimension_numbers<[1], [0], [0], [1], [0, 0, 1, 1], [], []>} : vector<32x128xbf16>, vector<128x128xbf16>, vector<32x128xf32> -> vector<32x128xf32>
    %c8_64 = arith.constant 8 : index
    %c0_65 = arith.constant 0 : index
    %86 = vector.load %arg13[%c8_64, %c0_65] : memref<48x128xf32, #tpu.memory_space<vmem>>, vector<32x128xf32>
    %87 = arith.truncf %86 : vector<32x128xf32> to vector<32x128xbf16>
    %c1_66 = arith.constant 1 : index
    %c0_67 = arith.constant 0 : index
    %c0_68 = arith.constant 0 : index
    %88 = vector.load %arg6[%c1_66, %c0_67, %c0_68] : memref<3x128x128xbf16, #tpu.memory_space<vmem>>, vector<1x128x128xbf16>
    %89 = vector.shape_cast %88 : vector<1x128x128xbf16> to vector<128x128xbf16>
    %cst_69 = arith.constant dense<0.000000e+00> : vector<32x128xf32>
    %90 = tpu.matmul %87, %89, %cst_69 {dimension_numbers = #tpu.dot_dimension_numbers<[1], [0], [0], [1], [0, 0, 1, 1], [], []>} : vector<32x128xbf16>, vector<128x128xbf16>, vector<32x128xf32> -> vector<32x128xf32>
    %91 = arith.addf %85, %90 : vector<32x128xf32>
    %c9_70 = arith.constant 9 : index
    %c0_71 = arith.constant 0 : index
    %92 = vector.load %arg13[%c9_70, %c0_71] : memref<48x128xf32, #tpu.memory_space<vmem>>, vector<32x128xf32>
    %cst_72 = arith.constant 0.000000e+00 : f32
    %93 = vector.shape_cast %6 : vector<32x1xi1> to vector<32x1xi1>
    %94 = vector.broadcast %93 : vector<32x1xi1> to vector<32x128xi1>
    %95 = vector.broadcast %cst_72 : f32 to vector<32x128xf32>
    %96 = arith.select %94, %92, %95 : vector<32x128xi1>, vector<32x128xf32>
    %97 = arith.truncf %96 : vector<32x128xf32> to vector<32x128xbf16>
    %c2_73 = arith.constant 2 : index
    %c0_74 = arith.constant 0 : index
    %c0_75 = arith.constant 0 : index
    %98 = vector.load %arg6[%c2_73, %c0_74, %c0_75] : memref<3x128x128xbf16, #tpu.memory_space<vmem>>, vector<1x128x128xbf16>
    %99 = vector.shape_cast %98 : vector<1x128x128xbf16> to vector<128x128xbf16>
    %cst_76 = arith.constant dense<0.000000e+00> : vector<32x128xf32>
    %100 = tpu.matmul %97, %99, %cst_76 {dimension_numbers = #tpu.dot_dimension_numbers<[1], [0], [0], [1], [0, 0, 1, 1], [], []>} : vector<32x128xbf16>, vector<128x128xbf16>, vector<32x128xf32> -> vector<32x128xf32>
    %101 = arith.addf %91, %100 : vector<32x128xf32>
    %c0_77 = arith.constant 0 : index
    %c0_78 = arith.constant 0 : index
    %102 = vector.load %arg7[%c0_77, %c0_78] : memref<1x128xf32, #tpu.memory_space<vmem>>, vector<1x128xf32>
    %103 = vector.broadcast %102 : vector<1x128xf32> to vector<32x128xf32>
    %104 = arith.addf %101, %103 : vector<32x128xf32>
    %cst_79 = arith.constant 0.000000e+00 : f32
    %105 = vector.broadcast %cst_79 : f32 to vector<32x128xf32>
    %106 = arith.cmpf oge, %104, %105 : vector<32x128xf32>
    %cst_80 = arith.constant 0.00999999977 : f32
    %107 = vector.broadcast %cst_80 : f32 to vector<32x128xf32>
    %108 = arith.mulf %104, %107 : vector<32x128xf32>
    %109 = arith.select %106, %104, %108 : vector<32x128xi1>, vector<32x128xf32>
    %c0_81 = arith.constant 0 : index
    %c0_82 = arith.constant 0 : index
    %110 = vector.load %arg9[%c0_81, %c0_82] : memref<32x128xf32, #tpu.memory_space<vmem>>, vector<32x128xf32>
    tpu.vector_store %arg9[%c0_81, %c0_82], %109 {strides = array<i32>} : memref<32x128xf32, #tpu.memory_space<vmem>>, vector<32x128xf32>,
    %111 = arith.truncf %109 : vector<32x128xf32> to vector<32x128xbf16>
    %c0_83 = arith.constant 0 : index
    %c0_84 = arith.constant 0 : index
    %112 = vector.load %arg8[%c0_83, %c0_84] : memref<128x64xbf16, #tpu.memory_space<vmem>>, vector<128x64xbf16>
    %cst_85 = arith.constant dense<0.000000e+00> : vector<32x64xf32>
    %113 = tpu.matmul %111, %112, %cst_85 {dimension_numbers = #tpu.dot_dimension_numbers<[1], [0], [0], [1], [0, 0, 1, 1], [], []>} : vector<32x128xbf16>, vector<128x64xbf16>, vector<32x64xf32> -> vector<32x64xf32>
    %c0_86 = arith.constant 0 : index
    %c0_87 = arith.constant 0 : index
    %114 = vector.load %arg10[%c0_86, %c0_87] : memref<32x64xf32, #tpu.memory_space<vmem>>, vector<32x64xf32>
    tpu.vector_store %arg10[%c0_86, %c0_87], %113 {strides = array<i32>} : memref<32x64xf32, #tpu.memory_space<vmem>>, vector<32x64xf32>,
    return
  }
  func.func @transform_0(%arg0: i32) -> (i32, i32) {
    %c0_i32 = arith.constant 0 : i32
    %c0_i32_0 = arith.constant 0 : i32
    return %arg0, %c0_i32 : i32, i32
  }
  func.func @transform_1(%arg0: i32) -> (i32, i32) {
    %c0_i32 = arith.constant 0 : i32
    %c0_i32_0 = arith.constant 0 : i32
    return %arg0, %c0_i32 : i32, i32
  }
  func.func @transform_2(%arg0: i32) -> (i32, i32, i32) {
    %c0_i32 = arith.constant 0 : i32
    %c0_i32_0 = arith.constant 0 : i32
    %c0_i32_1 = arith.constant 0 : i32
    %c0_i32_2 = arith.constant 0 : i32
    return %c0_i32, %c0_i32_0, %c0_i32_1 : i32, i32, i32
  }
  func.func @transform_3(%arg0: i32) -> (i32, i32, i32) {
    %c0_i32 = arith.constant 0 : i32
    %c0_i32_0 = arith.constant 0 : i32
    %c0_i32_1 = arith.constant 0 : i32
    %c0_i32_2 = arith.constant 0 : i32
    return %c0_i32, %c0_i32_0, %c0_i32_1 : i32, i32, i32
  }
  func.func @transform_4(%arg0: i32) -> (i32, i32) {
    %c0_i32 = arith.constant 0 : i32
    %c0_i32_0 = arith.constant 0 : i32
    %c0_i32_1 = arith.constant 0 : i32
    return %c0_i32, %c0_i32_0 : i32, i32
  }
  func.func @transform_5(%arg0: i32) -> (i32, i32, i32) {
    %c0_i32 = arith.constant 0 : i32
    %c0_i32_0 = arith.constant 0 : i32
    %c0_i32_1 = arith.constant 0 : i32
    %c0_i32_2 = arith.constant 0 : i32
    return %c0_i32, %c0_i32_0, %c0_i32_1 : i32, i32, i32
  }
  func.func @transform_6(%arg0: i32) -> (i32, i32) {
    %c0_i32 = arith.constant 0 : i32
    %c0_i32_0 = arith.constant 0 : i32
    %c0_i32_1 = arith.constant 0 : i32
    return %c0_i32, %c0_i32_0 : i32, i32
  }
  func.func @transform_7(%arg0: i32) -> (i32, i32) {
    %c0_i32 = arith.constant 0 : i32
    %c0_i32_0 = arith.constant 0 : i32
    %c0_i32_1 = arith.constant 0 : i32
    return %c0_i32, %c0_i32_0 : i32, i32
  }
  func.func @transform_8(%arg0: i32) -> (i32, i32) {
    %c0_i32 = arith.constant 0 : i32
    %c0_i32_0 = arith.constant 0 : i32
    return %arg0, %c0_i32 : i32, i32
  }
  func.func @transform_9(%arg0: i32) -> (i32, i32) {
    %c0_i32 = arith.constant 0 : i32
    %c0_i32_0 = arith.constant 0 : i32
    return %arg0, %c0_i32 : i32, i32
  }
}

</mosaic_0001>

<llo_original>
// kernel: decoder_ds_forward.5
$region0: #{decoder_ds_forward.5}
  #allocation0 [shape = 'u32[]', space=smem, size = 0x4, offset = 0x4, fixed_abs, tag = 'smem constant byte address 0x4 - core index']
  #allocation1 [shape = 'u32[144,128]{1,0:T(1,128)}', space=vmem, size = 0x12000, scoped, tag = 'internal scratch']
  %s0 = inlined_call_operand.vmem [shape: f32[4,128], index: 0, kind: input, shape index: {}]
  %s1 = inlined_call_operand.vmem [shape: bf16[128,256], index: 1, kind: input, shape index: {}]
  %s2 = inlined_call_operand.vmem [shape: f32[1,256], index: 2, kind: input, shape index: {}]
  %s3 = inlined_call_operand.vmem [shape: f32[4,256], index: 3, kind: output, shape index: {}]
  %s4 = sld [smem:[#allocation0]]
  $region22: #{decoder_ds_forward.5} parent=0
    _
  %s6 = ssub.s32 1, %s4
  %s7 = scalar_select 0, %s6, %s4
  // Predicated region
  $region2: #{decoder_ds_forward.5} parent=0 // pred_check
    _
  $region3: #{decoder_ds_forward.5} parent=0 // pred_check_branch
    %9 = sbr.rel (0) target = $region5
  $region4: #{decoder_ds_forward.5} parent=0 // pred_region
    _
  $region5: #{decoder_ds_forward.5} parent=0 // pred_fallthru
    _
  // Predicated region
  $region6: #{decoder_ds_forward.5} parent=0 // pred_check
    _
  $region7: #{decoder_ds_forward.5} parent=0 // pred_check_branch
    %11 = sbr.rel (0) target = $region9
  $region8: #{decoder_ds_forward.5} parent=0 // pred_region
    _
  $region9: #{decoder_ds_forward.5} parent=0 // pred_fallthru
    _
  // Predicated region
  $region10: #{decoder_ds_forward.5} parent=0 // pred_check
    _
  $region11: #{decoder_ds_forward.5} parent=0 // pred_check_branch
    %13 = sbr.rel (0) target = $region13
  $region12: #{decoder_ds_forward.5} parent=0 // pred_region
    _
  $region13: #{decoder_ds_forward.5} parent=0 // pred_fallthru
    _
  %v15 = vld [vmem:[%s0] sm:$0xf]
  %v16 = vpack.c.bf16 %v15, %v15
  %v17 = vld [vmem:[%s1] sm:$0xff]
  %v18 = vld [vmem:[%s1 + $0x8] sm:$0xff]
  %v19 = vld [vmem:[%s1 + $0x10] sm:$0xff]
  %v20 = vld [vmem:[%s1 + $0x18] sm:$0xff]
  %v21 = vld [vmem:[%s1 + $0x20] sm:$0xff]
  %v22 = vld [vmem:[%s1 + $0x28] sm:$0xff]
  %v23 = vld [vmem:[%s1 + $0x30] sm:$0xff]
  %v24 = vld [vmem:[%s1 + $0x38] sm:$0xff]
  %v25 = vld [vmem:[%s1 + $0x40] sm:$0xff]
  %v26 = vld [vmem:[%s1 + $0x48] sm:$0xff]
  %v27 = vld [vmem:[%s1 + $0x50] sm:$0xff]
  %v28 = vld [vmem:[%s1 + $0x58] sm:$0xff]
  %v29 = vld [vmem:[%s1 + $0x60] sm:$0xff]
  %v30 = vld [vmem:[%s1 + $0x68] sm:$0xff]
  %v31 = vld [vmem:[%s1 + $0x70] sm:$0xff]
  %v32 = vld [vmem:[%s1 + $0x78] sm:$0xff]
  %v33 = vld [vmem:[%s2] sm:$0x3]
  %v35 = vlaneseq
  %v36 = vshrl.u32 %v35, 7
  %v37 = vsub.s32 0, %v36
  %v38 = vrot.slane %v33, %v37
  %v39 = vlaneseq
  %v40 = vshrl.u32 %v39, 7
  %v41 = vsub.s32 1, %v40
  %v42 = vrot.slane %v33, %v41
  %v61 = vunpack.c.l.b16 %v17
  %v62 = vunpack.c.h.b16 %v17
  %v63 = vunpack.c.l.b16 %v18
  %v64 = vunpack.c.h.b16 %v18
  %v65 = vunpack.c.l.b16 %v19
  %v66 = vunpack.c.h.b16 %v19
  %v67 = vunpack.c.l.b16 %v20
  %v68 = vunpack.c.h.b16 %v20
  %v69 = vunpack.c.l.b16 %v21
  %v70 = vunpack.c.h.b16 %v21
  %v71 = vunpack.c.l.b16 %v22
  %v72 = vunpack.c.h.b16 %v22
  %v73 = vunpack.c.l.b16 %v23
  %v74 = vunpack.c.h.b16 %v23
  %v75 = vunpack.c.l.b16 %v24
  %v76 = vunpack.c.h.b16 %v24
  %v77 = vunpack.c.l.b16 %v25
  %v78 = vunpack.c.h.b16 %v25
  %v79 = vunpack.c.l.b16 %v26
  %v80 = vunpack.c.h.b16 %v26
  %v81 = vunpack.c.l.b16 %v27
  %v82 = vunpack.c.h.b16 %v27
  %v83 = vunpack.c.l.b16 %v28
  %v84 = vunpack.c.h.b16 %v28
  %v85 = vunpack.c.l.b16 %v29
  %v86 = vunpack.c.h.b16 %v29
  %v87 = vunpack.c.l.b16 %v30
  %v88 = vunpack.c.h.b16 %v30
  %v89 = vunpack.c.l.b16 %v31
  %v90 = vunpack.c.h.b16 %v31
  %v91 = vunpack.c.l.b16 %v32
  %v92 = vunpack.c.h.b16 %v32
  %v93 = vpack.c.b16 %v63, %v61
  %v94 = vpack.c.b16 %v64, %v62
  %v95 = vpack.c.b16 %v67, %v65
  %v96 = vpack.c.b16 %v68, %v66
  %v97 = vpack.c.b16 %v71, %v69
  %v98 = vpack.c.b16 %v72, %v70
  %v99 = vpack.c.b16 %v75, %v73
  %v100 = vpack.c.b16 %v76, %v74
  %v101 = vpack.c.b16 %v79, %v77
  %v102 = vpack.c.b16 %v80, %v78
  %v103 = vpack.c.b16 %v83, %v81
  %v104 = vpack.c.b16 %v84, %v82
  %v105 = vpack.c.b16 %v87, %v85
  %v106 = vpack.c.b16 %v88, %v86
  %v107 = vpack.c.b16 %v91, %v89
  %v108 = vpack.c.b16 %v92, %v90
  %125 = vmatprep.subr.bf16.mxu0 %v94
  %126 = vmatpush1.bf16.msra.mxu0 %v93
  %127 = vmatprep.subr.bf16.mxu0 %v96
  %128 = vmatpush1.bf16.msra.mxu0 %v95
  %129 = vmatprep.subr.bf16.mxu0 %v98
  %130 = vmatpush1.bf16.msra.mxu0 %v97
  %131 = vmatprep.subr.bf16.mxu0 %v100
  %132 = vmatpush1.bf16.msra.mxu0 %v99
  %133 = vmatprep.subr.bf16.mxu0 %v102
  %134 = vmatpush1.bf16.msra.mxu0 %v101
  %135 = vmatprep.subr.bf16.mxu0 %v104
  %136 = vmatpush1.bf16.msra.mxu0 %v103
  %137 = vmatprep.subr.bf16.mxu0 %v106
  %138 = vmatpush1.bf16.msra.mxu0 %v105
  %139 = vmatprep.subr.bf16.mxu0 %v108
  %140 = vmatpush1.bf16.msra.mxu0 %v107
  %141 = vmatprep.subr.bf16.mxu0 0
  %142 = vmatpush1.bf16.msra.mxu0 0
  %143 = vmatprep.subr.bf16.mxu0 0
  %144 = vmatpush1.bf16.msra.mxu0 0
  %145 = vmatprep.subr.bf16.mxu0 0
  %146 = vmatpush1.bf16.msra.mxu0 0
  %147 = vmatprep.subr.bf16.mxu0 0
  %148 = vmatpush1.bf16.msra.mxu0 0
  %149 = vmatprep.subr.bf16.mxu0 0
  %150 = vmatpush1.bf16.msra.mxu0 0
  %151 = vmatprep.subr.bf16.mxu0 0
  %152 = vmatpush1.bf16.msra.mxu0 0
  %153 = vmatprep.subr.bf16.mxu0 0
  %154 = vmatpush1.bf16.msra.mxu0 0
  %155 = vmatprep.subr.bf16.mxu0 0
  %156 = vmatpush1.bf16.msra.mxu0 0
  %157 = vmatprep.mubr.bf16.mxu0 0
  %158 = vmatmul.mubr.bf16.gmra.mrb[0].mxu0 %v16
  %v159 = vpop.f32.mrb[0].mxu0
  %v160 = vadd.f32 %v38, %v159
  %v161 = vpop.f32.mrb[0].mxu0
  %v162 = vadd.f32 %v42, %v161
  %v163 = vpop.f32.mrb[0].mxu0
  %v164 = vpop.f32.mrb[0].mxu0
  %165 = vdwg.mxu0
  %v168 = vcombine.low %v160, %v162
  %170 = vst [vmem:[%s3] sm:$0xff] %v168
  // Predicated region
  $region14: #{decoder_ds_forward.5} parent=0 // pred_check
    _
  $region15: #{decoder_ds_forward.5} parent=0 // pred_check_branch
    %172 = sbr.rel (0) target = $region17
  $region16: #{decoder_ds_forward.5} parent=0 // pred_region
    _
  $region17: #{decoder_ds_forward.5} parent=0 // pred_fallthru
    _
  // Predicated region
  $region18: #{decoder_ds_forward.5} parent=0 // pred_check
    _
  $region19: #{decoder_ds_forward.5} parent=0 // pred_check_branch
    %174 = sbr.rel (0) target = $region21
  $region20: #{decoder_ds_forward.5} parent=0 // pred_region
    _
  $region21: #{decoder_ds_forward.5} parent=0 // pred_fallthru
    _

// kernel: decoder_ds_forward.6
$region0: #{decoder_ds_forward.6}
  #allocation0 [shape = 'u32[]', space=smem, size = 0x4, offset = 0x4, fixed_abs, tag = 'smem constant byte address 0x4 - core index']
  #allocation1 [shape = 'u32[144,128]{1,0:T(1,128)}', space=vmem, size = 0x12000, scoped, tag = 'internal scratch']
  #allocation2 [shape = 'f32[24,128]{1,0:T(8,128)}', space=vmem, size = 0x3000, scoped, tag = 'scratch operand']
  #allocation3 [shape = 'f32[24,128]{1,0:T(8,128)}', space=vmem, size = 0x3000, scoped, tag = 'scratch operand']
  #allocation4 [shape = 'f32[24,128]{1,0:T(8,128)}', space=vmem, size = 0x3000, scoped, tag = 'scratch operand']
  %s0 = inlined_call_operand.vmem [shape: f32[8,128], index: 0, kind: input, shape index: {}]
  %s1 = inlined_call_operand.vmem [shape: f32[8,128], index: 1, kind: input, shape index: {}]
  %s2 = inlined_call_operand.vmem [shape: bf16[3,128,128], index: 2, kind: input, shape index: {}]
  %s3 = inlined_call_operand.hbm [shape: bf16[3,128,128], index: 3, kind: input, shape index: {}]
  %s4 = inlined_call_operand.vmem [shape: f32[1,128], index: 4, kind: input, shape index: {}]
  %s5 = inlined_call_operand.hbm [shape: bf16[3,128,128], index: 5, kind: input, shape index: {}]
  %s6 = inlined_call_operand.vmem [shape: f32[1,128], index: 6, kind: input, shape index: {}]
  %s7 = inlined_call_operand.hbm [shape: bf16[128,256], index: 7, kind: input, shape index: {}]
  %s8 = inlined_call_operand.vmem [shape: f32[1,256], index: 8, kind: input, shape index: {}]
  %s9 = inlined_call_operand.vmem [shape: f32[8,128], index: 9, kind: output, shape index: {0}]
  %s10 = inlined_call_operand.vmem [shape: f32[8,256], index: 10, kind: output, shape index: {1}]
  %11 = xla_tuple %s9, %s10
  %s12 = sld [smem:[#allocation0]]
  $region66: #{decoder_ds_forward.6} parent=0
    _
  %s14 = ssub.s32 1, %s12
  %s15 = scalar_select 0, %s14, %s12
  $region1: #{decoder_ds_forward.6} parent=0
    #allocation5 [shape = 'u8[98304]{0}', space=vmem, size = 0x18000, scoped, tag = 'input window, operand 3, single buffered']
    #allocation6 [shape = 's32[1]{0}', space=sflag, size = 0x4, scoped, tag = 'scoped memory for decoder_ds_forward.6']
    #allocation7 [shape = 'u8[98304]{0}', space=vmem, size = 0x18000, scoped, tag = 'input window, operand 5, single buffered']
    #allocation8 [shape = 's32[1]{0}', space=sflag, size = 0x4, scoped, tag = 'scoped memory for decoder_ds_forward.6']
    #allocation9 [shape = 'u8[65536]{0}', space=vmem, size = 0x10000, scoped, tag = 'input window, operand 7, single buffered']
    %16 = vsyncpa [#allocation6], 0
    %17 = vsyncpa [#allocation8], 0
    // Predicated region
    $region2: #{decoder_ds_forward.6} parent=1 // pred_check
      _
    $region3: #{decoder_ds_forward.6} parent=1 // pred_check_branch
      %19 = sbr.rel (0) target = $region5
    $region4: #{decoder_ds_forward.6} parent=1 // pred_region
      _
    $region5: #{decoder_ds_forward.6} parent=1 // pred_fallthru
      _
    // Predicated region
    $region6: #{decoder_ds_forward.6} parent=1 // pred_check
      _
    $region7: #{decoder_ds_forward.6} parent=1 // pred_check_branch
      %21 = sbr.rel (0) target = $region9
    $region8: #{decoder_ds_forward.6} parent=1 // pred_region
      _
    $region9: #{decoder_ds_forward.6} parent=1 // pred_fallthru
      _
    // Predicated region
    $region10: #{decoder_ds_forward.6} parent=1 // pred_check
      _
    $region11: #{decoder_ds_forward.6} parent=1 // pred_check_branch
      %23 = sbr.rel (0) target = $region13
    $region12: #{decoder_ds_forward.6} parent=1 // pred_region
      _
    $region13: #{decoder_ds_forward.6} parent=1 // pred_fallthru
      _
    // Predicated region
    $region14: #{decoder_ds_forward.6} parent=1 // pred_check
      _
    $region15: #{decoder_ds_forward.6} parent=1 // pred_check_branch
      %25 = sbr.rel (0) target = $region17
    $region16: #{decoder_ds_forward.6} parent=1 // pred_region
      %s27 = ssub.s32 3072, 3072
      %28 = vsyncadd [#allocation6], %s27
      %s29 = sshll.u32 [#allocation5], 4
      %s30 = int_to_ptr.vmem [resolvable:$true] %s29
      %35 = dma.hbm_to_vmem [thread:$0]  %s3, 3072, %s30, [#allocation6], 64, 64, 4
    $region17: #{decoder_ds_forward.6} parent=1 // pred_fallthru
      _
    // Predicated region
    $region18: #{decoder_ds_forward.6} parent=1 // pred_check
      _
    $region19: #{decoder_ds_forward.6} parent=1 // pred_check_branch
      %37 = sbr.rel (0) target = $region21
    $region20: #{decoder_ds_forward.6} parent=1 // pred_region
      _
    $region21: #{decoder_ds_forward.6} parent=1 // pred_fallthru
      _
    // Predicated region
    $region22: #{decoder_ds_forward.6} parent=1 // pred_check
      _
    $region23: #{decoder_ds_forward.6} parent=1 // pred_check_branch
      %39 = sbr.rel (0) target = $region25
    $region24: #{decoder_ds_forward.6} parent=1 // pred_region
      %s41 = ssub.s32 3072, 3072
      %42 = vsyncadd [#allocation8], %s41
      %s43 = sshll.u32 [#allocation7], 4
      %s44 = int_to_ptr.vmem [resolvable:$true] %s43
      %49 = dma.hbm_to_vmem [thread:$0]  %s5, 3072, %s44, [#allocation8], 64, 64, 4
    $region25: #{decoder_ds_forward.6} parent=1 // pred_fallthru
      _
    // Predicated region
    $region26: #{decoder_ds_forward.6} parent=1 // pred_check
      _
    $region27: #{decoder_ds_forward.6} parent=1 // pred_check_branch
      %51 = sbr.rel (0) target = $region29
    $region28: #{decoder_ds_forward.6} parent=1 // pred_region
      _
    $region29: #{decoder_ds_forward.6} parent=1 // pred_fallthru
      _
    // Predicated region
    $region30: #{decoder_ds_forward.6} parent=1 // pred_check
      _
    $region31: #{decoder_ds_forward.6} parent=1 // pred_check_branch
      %53 = sbr.rel (0) target = $region33
    $region32: #{decoder_ds_forward.6} parent=1 // pred_region
      %s55 = ssub.s32 2048, 2048
      %56 = vsyncadd [#allocation8], %s55
      %s57 = sshll.u32 [#allocation9], 4
      %s58 = int_to_ptr.vmem [resolvable:$true] %s57
      %63 = dma.hbm_to_vmem [thread:$0]  %s7, 2048, %s58, [#allocation8], 128, 128, 8
    $region33: #{decoder_ds_forward.6} parent=1 // pred_fallthru
      _
    // Predicated region
    $region34: #{decoder_ds_forward.6} parent=1 // pred_check
      _
    $region35: #{decoder_ds_forward.6} parent=1 // pred_check_branch
      %65 = sbr.rel (0) target = $region37
    $region36: #{decoder_ds_forward.6} parent=1 // pred_region
      _
    $region37: #{decoder_ds_forward.6} parent=1 // pred_fallthru
      _
    // Predicated region
    $region38: #{decoder_ds_forward.6} parent=1 // pred_check
      _
    $region39: #{decoder_ds_forward.6} parent=1 // pred_check_branch
      %67 = sbr.rel (0) target = $region41
    $region40: #{decoder_ds_forward.6} parent=1 // pred_region
      %68 = dma.done [#allocation6], 3072
    $region41: #{decoder_ds_forward.6} parent=1 // pred_fallthru
      _
    // Predicated region
    $region42: #{decoder_ds_forward.6} parent=1 // pred_check
      _
    $region43: #{decoder_ds_forward.6} parent=1 // pred_check_branch
      %70 = sbr.rel (0) target = $region45
    $region44: #{decoder_ds_forward.6} parent=1 // pred_region
      %71 = dma.done [#allocation8], 3072
    $region45: #{decoder_ds_forward.6} parent=1 // pred_fallthru
      _
    // Predicated region
    $region46: #{decoder_ds_forward.6} parent=1 // pred_check
      _
    $region47: #{decoder_ds_forward.6} parent=1 // pred_check_branch
      %73 = sbr.rel (0) target = $region49
    $region48: #{decoder_ds_forward.6} parent=1 // pred_region
      %74 = dma.done [#allocation8], 2048
    $region49: #{decoder_ds_forward.6} parent=1 // pred_fallthru
      _
    %v76 = vlaneseq
    %v77 = vshrl.u32 %v76, 7
    %v78 = vand.u32 %v77, 3
    %vm79 = vcmp.gt.s32.totalorder %v78, 0
    %vm80 = vcmp.lt.s32.totalorder %v78, 3
    %v81 = vld [vmem:[%s0] sm:$0xff]
    %82 = vst [vmem:[#allocation2] sm:$0xff] 0.0
    %83 = vst [vmem:[#allocation2 + $0x8] sm:$0xff] 0.0
    %84 = vst [vmem:[#allocation2 + $0x10] sm:$0xff] 0.0
    %85 = vst [vmem:[#allocation2 + $0x8] sm:$0xff] %v81
    %v86 = vld [vmem:[%s1] sm:$0xff]
    %87 = vst [vmem:[#allocation3] sm:$0xff] 0.0
    %88 = vst [vmem:[#allocation3 + $0x8] sm:$0xff] 0.0
    %89 = vst [vmem:[#allocation3 + $0x10] sm:$0xff] 0.0
    %90 = vst [vmem:[#allocation3 + $0x8] sm:$0xff] %v86
    %v91 = vld [vmem:[#allocation2 + $0x7] sm:$0xff]
    %v92 = vsel %vm79, 1, 0
    %vm93 = vcmp.eq.s32.totalorder %v92, 1
    %v94 = vsel %vm93, %v91, 0.0
    %v95 = vpack.c.bf16 %v94, %v94
    %v96 = vld [vmem:[%s2] sm:$0xf]
    %v97 = vld [vmem:[%s2 + $0x4] sm:$0xf]
    %v98 = vld [vmem:[%s2 + $0x8] sm:$0xf]
    %v99 = vld [vmem:[%s2 + $0xc] sm:$0xf]
    %v100 = vld [vmem:[%s2 + $0x10] sm:$0xf]
    %v101 = vld [vmem:[%s2 + $0x14] sm:$0xf]
    %v102 = vld [vmem:[%s2 + $0x18] sm:$0xf]
    %v103 = vld [vmem:[%s2 + $0x1c] sm:$0xf]
    %v104 = vld [vmem:[%s2 + $0x20] sm:$0xf]
    %v105 = vld [vmem:[%s2 + $0x24] sm:$0xf]
    %v106 = vld [vmem:[%s2 + $0x28] sm:$0xf]
    %v107 = vld [vmem:[%s2 + $0x2c] sm:$0xf]
    %v108 = vld [vmem:[%s2 + $0x30] sm:$0xf]
    %v109 = vld [vmem:[%s2 + $0x34] sm:$0xf]
    %v110 = vld [vmem:[%s2 + $0x38] sm:$0xf]
    %v111 = vld [vmem:[%s2 + $0x3c] sm:$0xf]
    %v112 = vld [vmem:[#allocation2 + $0x8] sm:$0xff]
    %v113 = vpack.c.bf16 %v112, %v112
    %s114 = scalar_lea.vmem %s2, 64
    %v115 = vld [vmem:[%s114] sm:$0xf]
    %v116 = vld [vmem:[%s114 + $0x4] sm:$0xf]
    %v117 = vld [vmem:[%s114 + $0x8] sm:$0xf]
    %v118 = vld [vmem:[%s114 + $0xc] sm:$0xf]
    %v119 = vld [vmem:[%s114 + $0x10] sm:$0xf]
    %v120 = vld [vmem:[%s114 + $0x14] sm:$0xf]
    %v121 = vld [vmem:[%s114 + $0x18] sm:$0xf]
    %v122 = vld [vmem:[%s114 + $0x1c] sm:$0xf]
    %v123 = vld [vmem:[%s114 + $0x20] sm:$0xf]
    %v124 = vld [vmem:[%s114 + $0x24] sm:$0xf]
    %v125 = vld [vmem:[%s114 + $0x28] sm:$0xf]
    %v126 = vld [vmem:[%s114 + $0x2c] sm:$0xf]
    %v127 = vld [vmem:[%s114 + $0x30] sm:$0xf]
    %v128 = vld [vmem:[%s114 + $0x34] sm:$0xf]
    %v129 = vld [vmem:[%s114 + $0x38] sm:$0xf]
    %v130 = vld [vmem:[%s114 + $0x3c] sm:$0xf]
    %v147 = vunpack.c.l.b16 %v115
    %v148 = vunpack.c.l.b16 %v116
    %v149 = vunpack.c.l.b16 %v117
    %v150 = vunpack.c.l.b16 %v118
    %v151 = vunpack.c.l.b16 %v119
    %v152 = vunpack.c.l.b16 %v120
    %v153 = vunpack.c.l.b16 %v121
    %v154 = vunpack.c.l.b16 %v122
    %v155 = vunpack.c.l.b16 %v123
    %v156 = vunpack.c.l.b16 %v124
    %v157 = vunpack.c.l.b16 %v125
    %v158 = vunpack.c.l.b16 %v126
    %v159 = vunpack.c.l.b16 %v127
    %v160 = vunpack.c.l.b16 %v128
    %v161 = vunpack.c.l.b16 %v129
    %v162 = vunpack.c.l.b16 %v130
    %v163 = vpack.c.b16 %v148, %v147
    %v164 = vpack.c.b16 %v150, %v149
    %v165 = vpack.c.b16 %v152, %v151
    %v166 = vpack.c.b16 %v154, %v153
    %v167 = vpack.c.b16 %v156, %v155
    %v168 = vpack.c.b16 %v158, %v157
    %v169 = vpack.c.b16 %v160, %v159
    %v170 = vpack.c.b16 %v162, %v161
    %179 = vmatprep.subr.bf16.mxu0 0
    %180 = vmatpush1.bf16.msra.mxu0 %v163
    %181 = vmatprep.subr.bf16.mxu0 0
    %182 = vmatpush1.bf16.msra.mxu0 %v164
    %183 = vmatprep.subr.bf16.mxu0 0
    %184 = vmatpush1.bf16.msra.mxu0 %v165
    %185 = vmatprep.subr.bf16.mxu0 0
    %186 = vmatpush1.bf16.msra.mxu0 %v166
    %187 = vmatprep.subr.bf16.mxu0 0
    %188 = vmatpush1.bf16.msra.mxu0 %v167
    %189 = vmatprep.subr.bf16.mxu0 0
    %190 = vmatpush1.bf16.msra.mxu0 %v168
    %191 = vmatprep.subr.bf16.mxu0 0
    %192 = vmatpush1.bf16.msra.mxu0 %v169
    %193 = vmatprep.subr.bf16.mxu0 0
    %194 = vmatpush1.bf16.msra.mxu0 %v170
    %195 = vmatprep.subr.bf16.mxu0 0
    %196 = vmatpush1.bf16.msra.mxu0 0
    %197 = vmatprep.subr.bf16.mxu0 0
    %198 = vmatpush1.bf16.msra.mxu0 0
    %199 = vmatprep.subr.bf16.mxu0 0
    %200 = vmatpush1.bf16.msra.mxu0 0
    %201 = vmatprep.subr.bf16.mxu0 0
    %202 = vmatpush1.bf16.msra.mxu0 0
    %203 = vmatprep.subr.bf16.mxu0 0
    %204 = vmatpush1.bf16.msra.mxu0 0
    %205 = vmatprep.subr.bf16.mxu0 0
    %206 = vmatpush1.bf16.msra.mxu0 0
    %207 = vmatprep.subr.bf16.mxu0 0
    %208 = vmatpush1.bf16.msra.mxu0 0
    %209 = vmatprep.subr.bf16.mxu0 0
    %210 = vmatpush1.bf16.msra.mxu0 0
    %211 = vmatprep.mubr.bf16.mxu0 0
    %212 = vmatmul.mubr.bf16.gmra.mrb[0].mxu0 %v113
    %v213 = vpop.f32.mrb[0].mxu0
    %v214 = vadd.f32 0.0, %v213
    %v215 = vpop.f32.mrb[0].mxu0
    %v216 = vpop.f32.mrb[0].mxu0
    %v217 = vpop.f32.mrb[0].mxu0
    %218 = vdwg.mxu0
    %v235 = vunpack.c.l.b16 %v96
    %v236 = vunpack.c.l.b16 %v97
    %v237 = vunpack.c.l.b16 %v98
    %v238 = vunpack.c.l.b16 %v99
    %v239 = vunpack.c.l.b16 %v100
    %v240 = vunpack.c.l.b16 %v101
    %v241 = vunpack.c.l.b16 %v102
    %v242 = vunpack.c.l.b16 %v103
    %v243 = vunpack.c.l.b16 %v104
    %v244 = vunpack.c.l.b16 %v105
    %v245 = vunpack.c.l.b16 %v106
    %v246 = vunpack.c.l.b16 %v107
    %v247 = vunpack.c.l.b16 %v108
    %v248 = vunpack.c.l.b16 %v109
    %v249 = vunpack.c.l.b16 %v110
    %v250 = vunpack.c.l.b16 %v111
    %v251 = vpack.c.b16 %v236, %v235
    %v252 = vpack.c.b16 %v238, %v237
    %v253 = vpack.c.b16 %v240, %v239
    %v254 = vpack.c.b16 %v242, %v241
    %v255 = vpack.c.b16 %v244, %v243
    %v256 = vpack.c.b16 %v246, %v245
    %v257 = vpack.c.b16 %v248, %v247
    %v258 = vpack.c.b16 %v250, %v249
    %267 = vmatprep.subr.bf16.mxu0 0
    %268 = vmatpush1.bf16.msra.mxu0 %v251
    %269 = vmatprep.subr.bf16.mxu0 0
    %270 = vmatpush1.bf16.msra.mxu0 %v252
    %271 = vmatprep.subr.bf16.mxu0 0
    %272 = vmatpush1.bf16.msra.mxu0 %v253
    %273 = vmatprep.subr.bf16.mxu0 0
    %274 = vmatpush1.bf16.msra.mxu0 %v254
    %275 = vmatprep.subr.bf16.mxu0 0
    %276 = vmatpush1.bf16.msra.mxu0 %v255
    %277 = vmatprep.subr.bf16.mxu0 0
    %278 = vmatpush1.bf16.msra.mxu0 %v256
    %279 = vmatprep.subr.bf16.mxu0 0
    %280 = vmatpush1.bf16.msra.mxu0 %v257
    %281 = vmatprep.subr.bf16.mxu0 0
    %282 = vmatpush1.bf16.msra.mxu0 %v258
    %283 = vmatprep.subr.bf16.mxu0 0
    %284 = vmatpush1.bf16.msra.mxu0 0
    %285 = vmatprep.subr.bf16.mxu0 0
    %286 = vmatpush1.bf16.msra.mxu0 0
    %287 = vmatprep.subr.bf16.mxu0 0
    %288 = vmatpush1.bf16.msra.mxu0 0
    %289 = vmatprep.subr.bf16.mxu0 0
    %290 = vmatpush1.bf16.msra.mxu0 0
    %291 = vmatprep.subr.bf16.mxu0 0
    %292 = vmatpush1.bf16.msra.mxu0 0
    %293 = vmatprep.subr.bf16.mxu0 0
    %294 = vmatpush1.bf16.msra.mxu0 0
    %295 = vmatprep.subr.bf16.mxu0 0
    %296 = vmatpush1.bf16.msra.mxu0 0
    %297 = vmatprep.subr.bf16.mxu0 0
    %298 = vmatpush1.bf16.msra.mxu0 0
    %299 = vmatprep.mubr.bf16.mxu0 0
    %300 = vmatmul.mubr.bf16.gmra.mrb[0].mxu0 %v95
    %v301 = vpop.f32.mrb[0].mxu0
    %v302 = vadd.f32 %v214, %v301
    %v303 = vpop.f32.mrb[0].mxu0
    %v304 = vpop.f32.mrb[0].mxu0
    %v305 = vpop.f32.mrb[0].mxu0
    %306 = vdwg.mxu0
    %v307 = vld [vmem:[#allocation2 + $0x9] sm:$0xff]
    %v308 = vsel %vm80, 1, 0
    %vm309 = vcmp.eq.s32.totalorder %v308, 1
    %v310 = vsel %vm309, %v307, 0.0
    %v311 = vpack.c.bf16 %v310, %v310
    %s312 = scalar_lea.vmem %s2, 128
    %v313 = vld [vmem:[%s312] sm:$0xf]
    %v314 = vld [vmem:[%s312 + $0x4] sm:$0xf]
    %v315 = vld [vmem:[%s312 + $0x8] sm:$0xf]
    %v316 = vld [vmem:[%s312 + $0xc] sm:$0xf]
    %v317 = vld [vmem:[%s312 + $0x10] sm:$0xf]
    %v318 = vld [vmem:[%s312 + $0x14] sm:$0xf]
    %v319 = vld [vmem:[%s312 + $0x18] sm:$0xf]
    %v320 = vld [vmem:[%s312 + $0x1c] sm:$0xf]
    %v321 = vld [vmem:[%s312 + $0x20] sm:$0xf]
    %v322 = vld [vmem:[%s312 + $0x24] sm:$0xf]
    %v323 = vld [vmem:[%s312 + $0x28] sm:$0xf]
    %v324 = vld [vmem:[%s312 + $0x2c] sm:$0xf]
    %v325 = vld [vmem:[%s312 + $0x30] sm:$0xf]
    %v326 = vld [vmem:[%s312 + $0x34] sm:$0xf]
    %v327 = vld [vmem:[%s312 + $0x38] sm:$0xf]
    %v328 = vld [vmem:[%s312 + $0x3c] sm:$0xf]
    %v345 = vunpack.c.l.b16 %v313
    %v346 = vunpack.c.l.b16 %v314
    %v347 = vunpack.c.l.b16 %v315
    %v348 = vunpack.c.l.b16 %v316
    %v349 = vunpack.c.l.b16 %v317
    %v350 = vunpack.c.l.b16 %v318
    %v351 = vunpack.c.l.b16 %v319
    %v352 = vunpack.c.l.b16 %v320
    %v353 = vunpack.c.l.b16 %v321
    %v354 = vunpack.c.l.b16 %v322
    %v355 = vunpack.c.l.b16 %v323
    %v356 = vunpack.c.l.b16 %v324
    %v357 = vunpack.c.l.b16 %v325
    %v358 = vunpack.c.l.b16 %v326
    %v359 = vunpack.c.l.b16 %v327
    %v360 = vunpack.c.l.b16 %v328
    %v361 = vpack.c.b16 %v346, %v345
    %v362 = vpack.c.b16 %v348, %v347
    %v363 = vpack.c.b16 %v350, %v349
    %v364 = vpack.c.b16 %v352, %v351
    %v365 = vpack.c.b16 %v354, %v353
    %v366 = vpack.c.b16 %v356, %v355
    %v367 = vpack.c.b16 %v358, %v357
    %v368 = vpack.c.b16 %v360, %v359
    %377 = vmatprep.subr.bf16.mxu0 0
    %378 = vmatpush1.bf16.msra.mxu0 %v361
    %379 = vmatprep.subr.bf16.mxu0 0
    %380 = vmatpush1.bf16.msra.mxu0 %v362
    %381 = vmatprep.subr.bf16.mxu0 0
    %382 = vmatpush1.bf16.msra.mxu0 %v363
    %383 = vmatprep.subr.bf16.mxu0 0
    %384 = vmatpush1.bf16.msra.mxu0 %v364
    %385 = vmatprep.subr.bf16.mxu0 0
    %386 = vmatpush1.bf16.msra.mxu0 %v365
    %387 = vmatprep.subr.bf16.mxu0 0
    %388 = vmatpush1.bf16.msra.mxu0 %v366
    %389 = vmatprep.subr.bf16.mxu0 0
    %390 = vmatpush1.bf16.msra.mxu0 %v367
    %391 = vmatprep.subr.bf16.mxu0 0
    %392 = vmatpush1.bf16.msra.mxu0 %v368
    %393 = vmatprep.subr.bf16.mxu0 0
    %394 = vmatpush1.bf16.msra.mxu0 0
    %395 = vmatprep.subr.bf16.mxu0 0
    %396 = vmatpush1.bf16.msra.mxu0 0
    %397 = vmatprep.subr.bf16.mxu0 0
    %398 = vmatpush1.bf16.msra.mxu0 0
    %399 = vmatprep.subr.bf16.mxu0 0
    %400 = vmatpush1.bf16.msra.mxu0 0
    %401 = vmatprep.subr.bf16.mxu0 0
    %402 = vmatpush1.bf16.msra.mxu0 0
    %403 = vmatprep.subr.bf16.mxu0 0
    %404 = vmatpush1.bf16.msra.mxu0 0
    %405 = vmatprep.subr.bf16.mxu0 0
    %406 = vmatpush1.bf16.msra.mxu0 0
    %407 = vmatprep.subr.bf16.mxu0 0
    %408 = vmatpush1.bf16.msra.mxu0 0
    %409 = vmatprep.mubr.bf16.mxu0 0
    %410 = vmatmul.mubr.bf16.gmra.mrb[0].mxu0 %v311
    %v411 = vpop.f32.mrb[0].mxu0
    %v412 = vadd.f32 0.0, %v411
    %v413 = vpop.f32.mrb[0].mxu0
    %v414 = vpop.f32.mrb[0].mxu0
    %v415 = vpop.f32.mrb[0].mxu0
    %416 = vdwg.mxu0
    %v417 = vadd.f32 %v302, %v412
    %v418 = vld [vmem:[#allocation3 + $0x7] sm:$0xff]
    %v419 = vsel %vm93, %v418, 0.0
    %v420 = vpack.c.bf16 %v419, %v419
    %v421 = vld [vmem:[#allocation5] sm:$0xf]
    %v422 = vld [vmem:[#allocation5 + $0x4] sm:$0xf]
    %v423 = vld [vmem:[#allocation5 + $0x8] sm:$0xf]
    %v424 = vld [vmem:[#allocation5 + $0xc] sm:$0xf]
    %v425 = vld [vmem:[#allocation5 + $0x10] sm:$0xf]
    %v426 = vld [vmem:[#allocation5 + $0x14] sm:$0xf]
    %v427 = vld [vmem:[#allocation5 + $0x18] sm:$0xf]
    %v428 = vld [vmem:[#allocation5 + $0x1c] sm:$0xf]
    %v429 = vld [vmem:[#allocation5 + $0x20] sm:$0xf]
    %v430 = vld [vmem:[#allocation5 + $0x24] sm:$0xf]
    %v431 = vld [vmem:[#allocation5 + $0x28] sm:$0xf]
    %v432 = vld [vmem:[#allocation5 + $0x2c] sm:$0xf]
    %v433 = vld [vmem:[#allocation5 + $0x30] sm:$0xf]
    %v434 = vld [vmem:[#allocation5 + $0x34] sm:$0xf]
    %v435 = vld [vmem:[#allocation5 + $0x38] sm:$0xf]
    %v436 = vld [vmem:[#allocation5 + $0x3c] sm:$0xf]
    %v437 = vld [vmem:[#allocation3 + $0x8] sm:$0xff]
    %v438 = vpack.c.bf16 %v437, %v437
    %s439 = scalar_lea.vmem [#allocation5], 64
    %v440 = vld [vmem:[%s439] sm:$0xf]
    %v441 = vld [vmem:[%s439 + $0x4] sm:$0xf]
    %v442 = vld [vmem:[%s439 + $0x8] sm:$0xf]
    %v443 = vld [vmem:[%s439 + $0xc] sm:$0xf]
    %v444 = vld [vmem:[%s439 + $0x10] sm:$0xf]
    %v445 = vld [vmem:[%s439 + $0x14] sm:$0xf]
    %v446 = vld [vmem:[%s439 + $0x18] sm:$0xf]
    %v447 = vld [vmem:[%s439 + $0x1c] sm:$0xf]
    %v448 = vld [vmem:[%s439 + $0x20] sm:$0xf]
    %v449 = vld [vmem:[%s439 + $0x24] sm:$0xf]
    %v450 = vld [vmem:[%s439 + $0x28] sm:$0xf]
    %v451 = vld [vmem:[%s439 + $0x2c] sm:$0xf]
    %v452 = vld [vmem:[%s439 + $0x30] sm:$0xf]
    %v453 = vld [vmem:[%s439 + $0x34] sm:$0xf]
    %v454 = vld [vmem:[%s439 + $0x38] sm:$0xf]
    %v455 = vld [vmem:[%s439 + $0x3c] sm:$0xf]
    %v472 = vunpack.c.l.b16 %v440
    %v473 = vunpack.c.l.b16 %v441
    %v474 = vunpack.c.l.b16 %v442
    %v475 = vunpack.c.l.b16 %v443
    %v476 = vunpack.c.l.b16 %v444
    %v477 = vunpack.c.l.b16 %v445
    %v478 = vunpack.c.l.b16 %v446
    %v479 = vunpack.c.l.b16 %v447
    %v480 = vunpack.c.l.b16 %v448
    %v481 = vunpack.c.l.b16 %v449
    %v482 = vunpack.c.l.b16 %v450
    %v483 = vunpack.c.l.b16 %v451
    %v484 = vunpack.c.l.b16 %v452
    %v485 = vunpack.c.l.b16 %v453
    %v486 = vunpack.c.l.b16 %v454
    %v487 = vunpack.c.l.b16 %v455
    %v488 = vpack.c.b16 %v473, %v472
    %v489 = vpack.c.b16 %v475, %v474
    %v490 = vpack.c.b16 %v477, %v476
    %v491 = vpack.c.b16 %v479, %v478
    %v492 = vpack.c.b16 %v481, %v480
    %v493 = vpack.c.b16 %v483, %v482
    %v494 = vpack.c.b16 %v485, %v484
    %v495 = vpack.c.b16 %v487, %v486
    %504 = vmatprep.subr.bf16.mxu0 0
    %505 = vmatpush1.bf16.msra.mxu0 %v488
    %506 = vmatprep.subr.bf16.mxu0 0
    %507 = vmatpush1.bf16.msra.mxu0 %v489
    %508 = vmatprep.subr.bf16.mxu0 0
    %509 = vmatpush1.bf16.msra.mxu0 %v490
    %510 = vmatprep.subr.bf16.mxu0 0
    %511 = vmatpush1.bf16.msra.mxu0 %v491
    %512 = vmatprep.subr.bf16.mxu0 0
    %513 = vmatpush1.bf16.msra.mxu0 %v492
    %514 = vmatprep.subr.bf16.mxu0 0
    %515 = vmatpush1.bf16.msra.mxu0 %v493
    %516 = vmatprep.subr.bf16.mxu0 0
    %517 = vmatpush1.bf16.msra.mxu0 %v494
    %518 = vmatprep.subr.bf16.mxu0 0
    %519 = vmatpush1.bf16.msra.mxu0 %v495
    %520 = vmatprep.subr.bf16.mxu0 0
    %521 = vmatpush1.bf16.msra.mxu0 0
    %522 = vmatprep.subr.bf16.mxu0 0
    %523 = vmatpush1.bf16.msra.mxu0 0
    %524 = vmatprep.subr.bf16.mxu0 0
    %525 = vmatpush1.bf16.msra.mxu0 0
    %526 = vmatprep.subr.bf16.mxu0 0
    %527 = vmatpush1.bf16.msra.mxu0 0
    %528 = vmatprep.subr.bf16.mxu0 0
    %529 = vmatpush1.bf16.msra.mxu0 0
    %530 = vmatprep.subr.bf16.mxu0 0
    %531 = vmatpush1.bf16.msra.mxu0 0
    %532 = vmatprep.subr.bf16.mxu0 0
    %533 = vmatpush1.bf16.msra.mxu0 0
    %534 = vmatprep.subr.bf16.mxu0 0
    %535 = vmatpush1.bf16.msra.mxu0 0
    %536 = vmatprep.mubr.bf16.mxu0 0
    %537 = vmatmul.mubr.bf16.gmra.mrb[0].mxu0 %v438
    %v538 = vpop.f32.mrb[0].mxu0
    %v539 = vadd.f32 0.0, %v538
    %v540 = vpop.f32.mrb[0].mxu0
    %v541 = vpop.f32.mrb[0].mxu0
    %v542 = vpop.f32.mrb[0].mxu0
    %543 = vdwg.mxu0
    %v560 = vunpack.c.l.b16 %v421
    %v561 = vunpack.c.l.b16 %v422
    %v562 = vunpack.c.l.b16 %v423
    %v563 = vunpack.c.l.b16 %v424
    %v564 = vunpack.c.l.b16 %v425
    %v565 = vunpack.c.l.b16 %v426
    %v566 = vunpack.c.l.b16 %v427
    %v567 = vunpack.c.l.b16 %v428
    %v568 = vunpack.c.l.b16 %v429
    %v569 = vunpack.c.l.b16 %v430
    %v570 = vunpack.c.l.b16 %v431
    %v571 = vunpack.c.l.b16 %v432
    %v572 = vunpack.c.l.b16 %v433
    %v573 = vunpack.c.l.b16 %v434
    %v574 = vunpack.c.l.b16 %v435
    %v575 = vunpack.c.l.b16 %v436
    %v576 = vpack.c.b16 %v561, %v560
    %v577 = vpack.c.b16 %v563, %v562
    %v578 = vpack.c.b16 %v565, %v564
    %v579 = vpack.c.b16 %v567, %v566
    %v580 = vpack.c.b16 %v569, %v568
    %v581 = vpack.c.b16 %v571, %v570
    %v582 = vpack.c.b16 %v573, %v572
    %v583 = vpack.c.b16 %v575, %v574
    %592 = vmatprep.subr.bf16.mxu0 0
    %593 = vmatpush1.bf16.msra.mxu0 %v576
    %594 = vmatprep.subr.bf16.mxu0 0
    %595 = vmatpush1.bf16.msra.mxu0 %v577
    %596 = vmatprep.subr.bf16.mxu0 0
    %597 = vmatpush1.bf16.msra.mxu0 %v578
    %598 = vmatprep.subr.bf16.mxu0 0
    %599 = vmatpush1.bf16.msra.mxu0 %v579
    %600 = vmatprep.subr.bf16.mxu0 0
    %601 = vmatpush1.bf16.msra.mxu0 %v580
    %602 = vmatprep.subr.bf16.mxu0 0
    %603 = vmatpush1.bf16.msra.mxu0 %v581
    %604 = vmatprep.subr.bf16.mxu0 0
    %605 = vmatpush1.bf16.msra.mxu0 %v582
    %606 = vmatprep.subr.bf16.mxu0 0
    %607 = vmatpush1.bf16.msra.mxu0 %v583
    %608 = vmatprep.subr.bf16.mxu0 0
    %609 = vmatpush1.bf16.msra.mxu0 0
    %610 = vmatprep.subr.bf16.mxu0 0
    %611 = vmatpush1.bf16.msra.mxu0 0
    %612 = vmatprep.subr.bf16.mxu0 0
    %613 = vmatpush1.bf16.msra.mxu0 0
    %614 = vmatprep.subr.bf16.mxu0 0
    %615 = vmatpush1.bf16.msra.mxu0 0
    %616 = vmatprep.subr.bf16.mxu0 0
    %617 = vmatpush1.bf16.msra.mxu0 0
    %618 = vmatprep.subr.bf16.mxu0 0
    %619 = vmatpush1.bf16.msra.mxu0 0
    %620 = vmatprep.subr.bf16.mxu0 0
    %621 = vmatpush1.bf16.msra.mxu0 0
    %622 = vmatprep.subr.bf16.mxu0 0
    %623 = vmatpush1.bf16.msra.mxu0 0
    %624 = vmatprep.mubr.bf16.mxu0 0
    %625 = vmatmul.mubr.bf16.gmra.mrb[0].mxu0 %v420
    %v626 = vpop.f32.mrb[0].mxu0
    %v627 = vadd.f32 %v539, %v626
    %v628 = vpop.f32.mrb[0].mxu0
    %v629 = vpop.f32.mrb[0].mxu0
    %v630 = vpop.f32.mrb[0].mxu0
    %631 = vdwg.mxu0
    %v632 = vld [vmem:[#allocation3 + $0x9] sm:$0xff]
    %v633 = vsel %vm309, %v632, 0.0
    %v634 = vpack.c.bf16 %v633, %v633
    %s635 = scalar_lea.vmem [#allocation5], 128
    %v636 = vld [vmem:[%s635] sm:$0xf]
    %v637 = vld [vmem:[%s635 + $0x4] sm:$0xf]
    %v638 = vld [vmem:[%s635 + $0x8] sm:$0xf]
    %v639 = vld [vmem:[%s635 + $0xc] sm:$0xf]
    %v640 = vld [vmem:[%s635 + $0x10] sm:$0xf]
    %v641 = vld [vmem:[%s635 + $0x14] sm:$0xf]
    %v642 = vld [vmem:[%s635 + $0x18] sm:$0xf]
    %v643 = vld [vmem:[%s635 + $0x1c] sm:$0xf]
    %v644 = vld [vmem:[%s635 + $0x20] sm:$0xf]
    %v645 = vld [vmem:[%s635 + $0x24] sm:$0xf]
    %v646 = vld [vmem:[%s635 + $0x28] sm:$0xf]
    %v647 = vld [vmem:[%s635 + $0x2c] sm:$0xf]
    %v648 = vld [vmem:[%s635 + $0x30] sm:$0xf]
    %v649 = vld [vmem:[%s635 + $0x34] sm:$0xf]
    %v650 = vld [vmem:[%s635 + $0x38] sm:$0xf]
    %v651 = vld [vmem:[%s635 + $0x3c] sm:$0xf]
    %v668 = vunpack.c.l.b16 %v636
    %v669 = vunpack.c.l.b16 %v637
    %v670 = vunpack.c.l.b16 %v638
    %v671 = vunpack.c.l.b16 %v639
    %v672 = vunpack.c.l.b16 %v640
    %v673 = vunpack.c.l.b16 %v641
    %v674 = vunpack.c.l.b16 %v642
    %v675 = vunpack.c.l.b16 %v643
    %v676 = vunpack.c.l.b16 %v644
    %v677 = vunpack.c.l.b16 %v645
    %v678 = vunpack.c.l.b16 %v646
    %v679 = vunpack.c.l.b16 %v647
    %v680 = vunpack.c.l.b16 %v648
    %v681 = vunpack.c.l.b16 %v649
    %v682 = vunpack.c.l.b16 %v650
    %v683 = vunpack.c.l.b16 %v651
    %v684 = vpack.c.b16 %v669, %v668
    %v685 = vpack.c.b16 %v671, %v670
    %v686 = vpack.c.b16 %v673, %v672
    %v687 = vpack.c.b16 %v675, %v674
    %v688 = vpack.c.b16 %v677, %v676
    %v689 = vpack.c.b16 %v679, %v678
    %v690 = vpack.c.b16 %v681, %v680
    %v691 = vpack.c.b16 %v683, %v682
    %700 = vmatprep.subr.bf16.mxu0 0
    %701 = vmatpush1.bf16.msra.mxu0 %v684
    %702 = vmatprep.subr.bf16.mxu0 0
    %703 = vmatpush1.bf16.msra.mxu0 %v685
    %704 = vmatprep.subr.bf16.mxu0 0
    %705 = vmatpush1.bf16.msra.mxu0 %v686
    %706 = vmatprep.subr.bf16.mxu0 0
    %707 = vmatpush1.bf16.msra.mxu0 %v687
    %708 = vmatprep.subr.bf16.mxu0 0
    %709 = vmatpush1.bf16.msra.mxu0 %v688
    %710 = vmatprep.subr.bf16.mxu0 0
    %711 = vmatpush1.bf16.msra.mxu0 %v689
    %712 = vmatprep.subr.bf16.mxu0 0
    %713 = vmatpush1.bf16.msra.mxu0 %v690
    %714 = vmatprep.subr.bf16.mxu0 0
    %715 = vmatpush1.bf16.msra.mxu0 %v691
    %716 = vmatprep.subr.bf16.mxu0 0
    %717 = vmatpush1.bf16.msra.mxu0 0
    %718 = vmatprep.subr.bf16.mxu0 0
    %719 = vmatpush1.bf16.msra.mxu0 0
    %720 = vmatprep.subr.bf16.mxu0 0
    %721 = vmatpush1.bf16.msra.mxu0 0
    %722 = vmatprep.subr.bf16.mxu0 0
    %723 = vmatpush1.bf16.msra.mxu0 0
    %724 = vmatprep.subr.bf16.mxu0 0
    %725 = vmatpush1.bf16.msra.mxu0 0
    %726 = vmatprep.subr.bf16.mxu0 0
    %727 = vmatpush1.bf16.msra.mxu0 0
    %728 = vmatprep.subr.bf16.mxu0 0
    %729 = vmatpush1.bf16.msra.mxu0 0
    %730 = vmatprep.subr.bf16.mxu0 0
    %731 = vmatpush1.bf16.msra.mxu0 0
    %732 = vmatprep.mubr.bf16.mxu0 0
    %733 = vmatmul.mubr.bf16.gmra.mrb[0].mxu0 %v634
    %v734 = vpop.f32.mrb[0].mxu0
    %v735 = vadd.f32 0.0, %v734
    %v736 = vpop.f32.mrb[0].mxu0
    %v737 = vpop.f32.mrb[0].mxu0
    %v738 = vpop.f32.mrb[0].mxu0
    %739 = vdwg.mxu0
    %v740 = vadd.f32 %v627, %v735
    %v741 = vadd.f32 %v417, %v740
    %v742 = vld [vmem:[%s4] sm:$0x1]
    %v744 = vlaneseq
    %v745 = vshrl.u32 %v744, 7
    %v746 = vsub.s32 0, %v745
    %v747 = vrot.slane %v742, %v746
    %v749 = vadd.f32 %v741, %v747
    %vm750 = vcmp.ge.f32.partialorder %v749, 0.0
    %v751 = vmul.f32 %v749, 0.01
    %v752 = vsel %vm750, %v749, %v751
    %753 = vst [vmem:[#allocation4] sm:$0xff] 0.0
    %754 = vst [vmem:[#allocation4 + $0x8] sm:$0xff] 0.0
    %755 = vst [vmem:[#allocation4 + $0x10] sm:$0xff] 0.0
    %756 = vst [vmem:[#allocation4 + $0x8] sm:$0xff] %v752
    %v757 = vld [vmem:[#allocation4 + $0x7] sm:$0xff]
    %v758 = vsel %vm93, %v757, 0.0
    %v759 = vpack.c.bf16 %v758, %v758
    %v760 = vld [vmem:[#allocation7] sm:$0xf]
    %v761 = vld [vmem:[#allocation7 + $0x4] sm:$0xf]
    %v762 = vld [vmem:[#allocation7 + $0x8] sm:$0xf]
    %v763 = vld [vmem:[#allocation7 + $0xc] sm:$0xf]
    %v764 = vld [vmem:[#allocation7 + $0x10] sm:$0xf]
    %v765 = vld [vmem:[#allocation7 + $0x14] sm:$0xf]
    %v766 = vld [vmem:[#allocation7 + $0x18] sm:$0xf]
    %v767 = vld [vmem:[#allocation7 + $0x1c] sm:$0xf]
    %v768 = vld [vmem:[#allocation7 + $0x20] sm:$0xf]
    %v769 = vld [vmem:[#allocation7 + $0x24] sm:$0xf]
    %v770 = vld [vmem:[#allocation7 + $0x28] sm:$0xf]
    %v771 = vld [vmem:[#allocation7 + $0x2c] sm:$0xf]
    %v772 = vld [vmem:[#allocation7 + $0x30] sm:$0xf]
    %v773 = vld [vmem:[#allocation7 + $0x34] sm:$0xf]
    %v774 = vld [vmem:[#allocation7 + $0x38] sm:$0xf]
    %v775 = vld [vmem:[#allocation7 + $0x3c] sm:$0xf]
    %v776 = vld [vmem:[#allocation4 + $0x8] sm:$0xff]
    %v777 = vpack.c.bf16 %v776, %v776
    %s778 = scalar_lea.vmem [#allocation7], 64
    %v779 = vld [vmem:[%s778] sm:$0xf]
    %v780 = vld [vmem:[%s778 + $0x4] sm:$0xf]
    %v781 = vld [vmem:[%s778 + $0x8] sm:$0xf]
    %v782 = vld [vmem:[%s778 + $0xc] sm:$0xf]
    %v783 = vld [vmem:[%s778 + $0x10] sm:$0xf]
    %v784 = vld [vmem:[%s778 + $0x14] sm:$0xf]
    %v785 = vld [vmem:[%s778 + $0x18] sm:$0xf]
    %v786 = vld [vmem:[%s778 + $0x1c] sm:$0xf]
    %v787 = vld [vmem:[%s778 + $0x20] sm:$0xf]
    %v788 = vld [vmem:[%s778 + $0x24] sm:$0xf]
    %v789 = vld [vmem:[%s778 + $0x28] sm:$0xf]
    %v790 = vld [vmem:[%s778 + $0x2c] sm:$0xf]
    %v791 = vld [vmem:[%s778 + $0x30] sm:$0xf]
    %v792 = vld [vmem:[%s778 + $0x34] sm:$0xf]
    %v793 = vld [vmem:[%s778 + $0x38] sm:$0xf]
    %v794 = vld [vmem:[%s778 + $0x3c] sm:$0xf]
    %v811 = vunpack.c.l.b16 %v779
    %v812 = vunpack.c.l.b16 %v780
    %v813 = vunpack.c.l.b16 %v781
    %v814 = vunpack.c.l.b16 %v782
    %v815 = vunpack.c.l.b16 %v783
    %v816 = vunpack.c.l.b16 %v784
    %v817 = vunpack.c.l.b16 %v785
    %v818 = vunpack.c.l.b16 %v786
    %v819 = vunpack.c.l.b16 %v787
    %v820 = vunpack.c.l.b16 %v788
    %v821 = vunpack.c.l.b16 %v789
    %v822 = vunpack.c.l.b16 %v790
    %v823 = vunpack.c.l.b16 %v791
    %v824 = vunpack.c.l.b16 %v792
    %v825 = vunpack.c.l.b16 %v793
    %v826 = vunpack.c.l.b16 %v794
    %v827 = vpack.c.b16 %v812, %v811
    %v828 = vpack.c.b16 %v814, %v813
    %v829 = vpack.c.b16 %v816, %v815
    %v830 = vpack.c.b16 %v818, %v817
    %v831 = vpack.c.b16 %v820, %v819
    %v832 = vpack.c.b16 %v822, %v821
    %v833 = vpack.c.b16 %v824, %v823
    %v834 = vpack.c.b16 %v826, %v825
    %843 = vmatprep.subr.bf16.mxu0 0
    %844 = vmatpush1.bf16.msra.mxu0 %v827
    %845 = vmatprep.subr.bf16.mxu0 0
    %846 = vmatpush1.bf16.msra.mxu0 %v828
    %847 = vmatprep.subr.bf16.mxu0 0
    %848 = vmatpush1.bf16.msra.mxu0 %v829
    %849 = vmatprep.subr.bf16.mxu0 0
    %850 = vmatpush1.bf16.msra.mxu0 %v830
    %851 = vmatprep.subr.bf16.mxu0 0
    %852 = vmatpush1.bf16.msra.mxu0 %v831
    %853 = vmatprep.subr.bf16.mxu0 0
    %854 = vmatpush1.bf16.msra.mxu0 %v832
    %855 = vmatprep.subr.bf16.mxu0 0
    %856 = vmatpush1.bf16.msra.mxu0 %v833
    %857 = vmatprep.subr.bf16.mxu0 0
    %858 = vmatpush1.bf16.msra.mxu0 %v834
    %859 = vmatprep.subr.bf16.mxu0 0
    %860 = vmatpush1.bf16.msra.mxu0 0
    %861 = vmatprep.subr.bf16.mxu0 0
    %862 = vmatpush1.bf16.msra.mxu0 0
    %863 = vmatprep.subr.bf16.mxu0 0
    %864 = vmatpush1.bf16.msra.mxu0 0
    %865 = vmatprep.subr.bf16.mxu0 0
    %866 = vmatpush1.bf16.msra.mxu0 0
    %867 = vmatprep.subr.bf16.mxu0 0
    %868 = vmatpush1.bf16.msra.mxu0 0
    %869 = vmatprep.subr.bf16.mxu0 0
    %870 = vmatpush1.bf16.msra.mxu0 0
    %871 = vmatprep.subr.bf16.mxu0 0
    %872 = vmatpush1.bf16.msra.mxu0 0
    %873 = vmatprep.subr.bf16.mxu0 0
    %874 = vmatpush1.bf16.msra.mxu0 0
    %875 = vmatprep.mubr.bf16.mxu0 0
    %876 = vmatmul.mubr.bf16.gmra.mrb[0].mxu0 %v777
    %v877 = vpop.f32.mrb[0].mxu0
    %v878 = vadd.f32 0.0, %v877
    %v879 = vpop.f32.mrb[0].mxu0
    %v880 = vpop.f32.mrb[0].mxu0
    %v881 = vpop.f32.mrb[0].mxu0
    %882 = vdwg.mxu0
    %v899 = vunpack.c.l.b16 %v760
    %v900 = vunpack.c.l.b16 %v761
    %v901 = vunpack.c.l.b16 %v762
    %v902 = vunpack.c.l.b16 %v763
    %v903 = vunpack.c.l.b16 %v764
    %v904 = vunpack.c.l.b16 %v765
    %v905 = vunpack.c.l.b16 %v766
    %v906 = vunpack.c.l.b16 %v767
    %v907 = vunpack.c.l.b16 %v768
    %v908 = vunpack.c.l.b16 %v769
    %v909 = vunpack.c.l.b16 %v770
    %v910 = vunpack.c.l.b16 %v771
    %v911 = vunpack.c.l.b16 %v772
    %v912 = vunpack.c.l.b16 %v773
    %v913 = vunpack.c.l.b16 %v774
    %v914 = vunpack.c.l.b16 %v775
    %v915 = vpack.c.b16 %v900, %v899
    %v916 = vpack.c.b16 %v902, %v901
    %v917 = vpack.c.b16 %v904, %v903
    %v918 = vpack.c.b16 %v906, %v905
    %v919 = vpack.c.b16 %v908, %v907
    %v920 = vpack.c.b16 %v910, %v909
    %v921 = vpack.c.b16 %v912, %v911
    %v922 = vpack.c.b16 %v914, %v913
    %931 = vmatprep.subr.bf16.mxu0 0
    %932 = vmatpush1.bf16.msra.mxu0 %v915
    %933 = vmatprep.subr.bf16.mxu0 0
    %934 = vmatpush1.bf16.msra.mxu0 %v916
    %935 = vmatprep.subr.bf16.mxu0 0
    %936 = vmatpush1.bf16.msra.mxu0 %v917
    %937 = vmatprep.subr.bf16.mxu0 0
    %938 = vmatpush1.bf16.msra.mxu0 %v918
    %939 = vmatprep.subr.bf16.mxu0 0
    %940 = vmatpush1.bf16.msra.mxu0 %v919
    %941 = vmatprep.subr.bf16.mxu0 0
    %942 = vmatpush1.bf16.msra.mxu0 %v920
    %943 = vmatprep.subr.bf16.mxu0 0
    %944 = vmatpush1.bf16.msra.mxu0 %v921
    %945 = vmatprep.subr.bf16.mxu0 0
    %946 = vmatpush1.bf16.msra.mxu0 %v922
    %947 = vmatprep.subr.bf16.mxu0 0
    %948 = vmatpush1.bf16.msra.mxu0 0
    %949 = vmatprep.subr.bf16.mxu0 0
    %950 = vmatpush1.bf16.msra.mxu0 0
    %951 = vmatprep.subr.bf16.mxu0 0
    %952 = vmatpush1.bf16.msra.mxu0 0
    %953 = vmatprep.subr.bf16.mxu0 0
    %954 = vmatpush1.bf16.msra.mxu0 0
    %955 = vmatprep.subr.bf16.mxu0 0
    %956 = vmatpush1.bf16.msra.mxu0 0
    %957 = vmatprep.subr.bf16.mxu0 0
    %958 = vmatpush1.bf16.msra.mxu0 0
    %959 = vmatprep.subr.bf16.mxu0 0
    %960 = vmatpush1.bf16.msra.mxu0 0
    %961 = vmatprep.subr.bf16.mxu0 0
    %962 = vmatpush1.bf16.msra.mxu0 0
    %963 = vmatprep.mubr.bf16.mxu0 0
    %964 = vmatmul.mubr.bf16.gmra.mrb[0].mxu0 %v759
    %v965 = vpop.f32.mrb[0].mxu0
    %v966 = vadd.f32 %v878, %v965
    %v967 = vpop.f32.mrb[0].mxu0
    %v968 = vpop.f32.mrb[0].mxu0
    %v969 = vpop.f32.mrb[0].mxu0
    %970 = vdwg.mxu0
    %v971 = vld [vmem:[#allocation4 + $0x9] sm:$0xff]
    %v972 = vsel %vm309, %v971, 0.0
    %v973 = vpack.c.bf16 %v972, %v972
    %s974 = scalar_lea.vmem [#allocation7], 128
    %v975 = vld [vmem:[%s974] sm:$0xf]
    %v976 = vld [vmem:[%s974 + $0x4] sm:$0xf]
    %v977 = vld [vmem:[%s974 + $0x8] sm:$0xf]
    %v978 = vld [vmem:[%s974 + $0xc] sm:$0xf]
    %v979 = vld [vmem:[%s974 + $0x10] sm:$0xf]
    %v980 = vld [vmem:[%s974 + $0x14] sm:$0xf]
    %v981 = vld [vmem:[%s974 + $0x18] sm:$0xf]
    %v982 = vld [vmem:[%s974 + $0x1c] sm:$0xf]
    %v983 = vld [vmem:[%s974 + $0x20] sm:$0xf]
    %v984 = vld [vmem:[%s974 + $0x24] sm:$0xf]
    %v985 = vld [vmem:[%s974 + $0x28] sm:$0xf]
    %v986 = vld [vmem:[%s974 + $0x2c] sm:$0xf]
    %v987 = vld [vmem:[%s974 + $0x30] sm:$0xf]
    %v988 = vld [vmem:[%s974 + $0x34] sm:$0xf]
    %v989 = vld [vmem:[%s974 + $0x38] sm:$0xf]
    %v990 = vld [vmem:[%s974 + $0x3c] sm:$0xf]
    %v1007 = vunpack.c.l.b16 %v975
    %v1008 = vunpack.c.l.b16 %v976
    %v1009 = vunpack.c.l.b16 %v977
    %v1010 = vunpack.c.l.b16 %v978
    %v1011 = vunpack.c.l.b16 %v979
    %v1012 = vunpack.c.l.b16 %v980
    %v1013 = vunpack.c.l.b16 %v981
    %v1014 = vunpack.c.l.b16 %v982
    %v1015 = vunpack.c.l.b16 %v983
    %v1016 = vunpack.c.l.b16 %v984
    %v1017 = vunpack.c.l.b16 %v985
    %v1018 = vunpack.c.l.b16 %v986
    %v1019 = vunpack.c.l.b16 %v987
    %v1020 = vunpack.c.l.b16 %v988
    %v1021 = vunpack.c.l.b16 %v989
    %v1022 = vunpack.c.l.b16 %v990
    %v1023 = vpack.c.b16 %v1008, %v1007
    %v1024 = vpack.c.b16 %v1010, %v1009
    %v1025 = vpack.c.b16 %v1012, %v1011
    %v1026 = vpack.c.b16 %v1014, %v1013
    %v1027 = vpack.c.b16 %v1016, %v1015
    %v1028 = vpack.c.b16 %v1018, %v1017
    %v1029 = vpack.c.b16 %v1020, %v1019
    %v1030 = vpack.c.b16 %v1022, %v1021
    %1039 = vmatprep.subr.bf16.mxu0 0
    %1040 = vmatpush1.bf16.msra.mxu0 %v1023
    %1041 = vmatprep.subr.bf16.mxu0 0
    %1042 = vmatpush1.bf16.msra.mxu0 %v1024
    %1043 = vmatprep.subr.bf16.mxu0 0
    %1044 = vmatpush1.bf16.msra.mxu0 %v1025
    %1045 = vmatprep.subr.bf16.mxu0 0
    %1046 = vmatpush1.bf16.msra.mxu0 %v1026
    %1047 = vmatprep.subr.bf16.mxu0 0
    %1048 = vmatpush1.bf16.msra.mxu0 %v1027
    %1049 = vmatprep.subr.bf16.mxu0 0
    %1050 = vmatpush1.bf16.msra.mxu0 %v1028
    %1051 = vmatprep.subr.bf16.mxu0 0
    %1052 = vmatpush1.bf16.msra.mxu0 %v1029
    %1053 = vmatprep.subr.bf16.mxu0 0
    %1054 = vmatpush1.bf16.msra.mxu0 %v1030
    %1055 = vmatprep.subr.bf16.mxu0 0
    %1056 = vmatpush1.bf16.msra.mxu0 0
    %1057 = vmatprep.subr.bf16.mxu0 0
    %1058 = vmatpush1.bf16.msra.mxu0 0
    %1059 = vmatprep.subr.bf16.mxu0 0
    %1060 = vmatpush1.bf16.msra.mxu0 0
    %1061 = vmatprep.subr.bf16.mxu0 0
    %1062 = vmatpush1.bf16.msra.mxu0 0
    %1063 = vmatprep.subr.bf16.mxu0 0
    %1064 = vmatpush1.bf16.msra.mxu0 0
    %1065 = vmatprep.subr.bf16.mxu0 0
    %1066 = vmatpush1.bf16.msra.mxu0 0
    %1067 = vmatprep.subr.bf16.mxu0 0
    %1068 = vmatpush1.bf16.msra.mxu0 0
    %1069 = vmatprep.subr.bf16.mxu0 0
    %1070 = vmatpush1.bf16.msra.mxu0 0
    %1071 = vmatprep.mubr.bf16.mxu0 0
    %1072 = vmatmul.mubr.bf16.gmra.mrb[0].mxu0 %v973
    %v1073 = vpop.f32.mrb[0].mxu0
    %v1074 = vadd.f32 0.0, %v1073
    %v1075 = vpop.f32.mrb[0].mxu0
    %v1076 = vpop.f32.mrb[0].mxu0
    %v1077 = vpop.f32.mrb[0].mxu0
    %1078 = vdwg.mxu0
    %v1079 = vadd.f32 %v966, %v1074
    %v1080 = vld [vmem:[%s6] sm:$0x1]
    %v1082 = vlaneseq
    %v1083 = vshrl.u32 %v1082, 7
    %v1084 = vsub.s32 0, %v1083
    %v1085 = vrot.slane %v1080, %v1084
    %v1087 = vadd.f32 %v1079, %v1085
    %vm1088 = vcmp.ge.f32.partialorder %v1087, 0.0
    %v1089 = vmul.f32 %v1087, 0.01
    %v1090 = vsel %vm1088, %v1087, %v1089
    %1091 = vst [vmem:[%s9] sm:$0xff] %v1090
    %v1092 = vpack.c.bf16 %v1090, %v1090
    %v1093 = vld [vmem:[#allocation9] sm:$0xff]
    %v1094 = vld [vmem:[#allocation9 + $0x8] sm:$0xff]
    %v1095 = vld [vmem:[#allocation9 + $0x10] sm:$0xff]
    %v1096 = vld [vmem:[#allocation9 + $0x18] sm:$0xff]
    %v1097 = vld [vmem:[#allocation9 + $0x20] sm:$0xff]
    %v1098 = vld [vmem:[#allocation9 + $0x28] sm:$0xff]
    %v1099 = vld [vmem:[#allocation9 + $0x30] sm:$0xff]
    %v1100 = vld [vmem:[#allocation9 + $0x38] sm:$0xff]
    %v1101 = vld [vmem:[#allocation9 + $0x40] sm:$0xff]
    %v1102 = vld [vmem:[#allocation9 + $0x48] sm:$0xff]
    %v1103 = vld [vmem:[#allocation9 + $0x50] sm:$0xff]
    %v1104 = vld [vmem:[#allocation9 + $0x58] sm:$0xff]
    %v1105 = vld [vmem:[#allocation9 + $0x60] sm:$0xff]
    %v1106 = vld [vmem:[#allocation9 + $0x68] sm:$0xff]
    %v1107 = vld [vmem:[#allocation9 + $0x70] sm:$0xff]
    %v1108 = vld [vmem:[#allocation9 + $0x78] sm:$0xff]
    %v1109 = vld [vmem:[%s8] sm:$0x3]
    %v1111 = vlaneseq
    %v1112 = vshrl.u32 %v1111, 7
    %v1113 = vsub.s32 0, %v1112
    %v1114 = vrot.slane %v1109, %v1113
    %v1115 = vlaneseq
    %v1116 = vshrl.u32 %v1115, 7
    %v1117 = vsub.s32 1, %v1116
    %v1118 = vrot.slane %v1109, %v1117
    %v1137 = vunpack.c.l.b16 %v1093
    %v1138 = vunpack.c.h.b16 %v1093
    %v1139 = vunpack.c.l.b16 %v1094
    %v1140 = vunpack.c.h.b16 %v1094
    %v1141 = vunpack.c.l.b16 %v1095
    %v1142 = vunpack.c.h.b16 %v1095
    %v1143 = vunpack.c.l.b16 %v1096
    %v1144 = vunpack.c.h.b16 %v1096
    %v1145 = vunpack.c.l.b16 %v1097
    %v1146 = vunpack.c.h.b16 %v1097
    %v1147 = vunpack.c.l.b16 %v1098
    %v1148 = vunpack.c.h.b16 %v1098
    %v1149 = vunpack.c.l.b16 %v1099
    %v1150 = vunpack.c.h.b16 %v1099
    %v1151 = vunpack.c.l.b16 %v1100
    %v1152 = vunpack.c.h.b16 %v1100
    %v1153 = vunpack.c.l.b16 %v1101
    %v1154 = vunpack.c.h.b16 %v1101
    %v1155 = vunpack.c.l.b16 %v1102
    %v1156 = vunpack.c.h.b16 %v1102
    %v1157 = vunpack.c.l.b16 %v1103
    %v1158 = vunpack.c.h.b16 %v1103
    %v1159 = vunpack.c.l.b16 %v1104
    %v1160 = vunpack.c.h.b16 %v1104
    %v1161 = vunpack.c.l.b16 %v1105
    %v1162 = vunpack.c.h.b16 %v1105
    %v1163 = vunpack.c.l.b16 %v1106
    %v1164 = vunpack.c.h.b16 %v1106
    %v1165 = vunpack.c.l.b16 %v1107
    %v1166 = vunpack.c.h.b16 %v1107
    %v1167 = vunpack.c.l.b16 %v1108
    %v1168 = vunpack.c.h.b16 %v1108
    %v1169 = vpack.c.b16 %v1139, %v1137
    %v1170 = vpack.c.b16 %v1140, %v1138
    %v1171 = vpack.c.b16 %v1143, %v1141
    %v1172 = vpack.c.b16 %v1144, %v1142
    %v1173 = vpack.c.b16 %v1147, %v1145
    %v1174 = vpack.c.b16 %v1148, %v1146
    %v1175 = vpack.c.b16 %v1151, %v1149
    %v1176 = vpack.c.b16 %v1152, %v1150
    %v1177 = vpack.c.b16 %v1155, %v1153
    %v1178 = vpack.c.b16 %v1156, %v1154
    %v1179 = vpack.c.b16 %v1159, %v1157
    %v1180 = vpack.c.b16 %v1160, %v1158
    %v1181 = vpack.c.b16 %v1163, %v1161
    %v1182 = vpack.c.b16 %v1164, %v1162
    %v1183 = vpack.c.b16 %v1167, %v1165
    %v1184 = vpack.c.b16 %v1168, %v1166
    %1201 = vmatprep.subr.bf16.mxu0 %v1170
    %1202 = vmatpush1.bf16.msra.mxu0 %v1169
    %1203 = vmatprep.subr.bf16.mxu0 %v1172
    %1204 = vmatpush1.bf16.msra.mxu0 %v1171
    %1205 = vmatprep.subr.bf16.mxu0 %v1174
    %1206 = vmatpush1.bf16.msra.mxu0 %v1173
    %1207 = vmatprep.subr.bf16.mxu0 %v1176
    %1208 = vmatpush1.bf16.msra.mxu0 %v1175
    %1209 = vmatprep.subr.bf16.mxu0 %v1178
    %1210 = vmatpush1.bf16.msra.mxu0 %v1177
    %1211 = vmatprep.subr.bf16.mxu0 %v1180
    %1212 = vmatpush1.bf16.msra.mxu0 %v1179
    %1213 = vmatprep.subr.bf16.mxu0 %v1182
    %1214 = vmatpush1.bf16.msra.mxu0 %v1181
    %1215 = vmatprep.subr.bf16.mxu0 %v1184
    %1216 = vmatpush1.bf16.msra.mxu0 %v1183
    %1217 = vmatprep.subr.bf16.mxu0 0
    %1218 = vmatpush1.bf16.msra.mxu0 0
    %1219 = vmatprep.subr.bf16.mxu0 0
    %1220 = vmatpush1.bf16.msra.mxu0 0
    %1221 = vmatprep.subr.bf16.mxu0 0
    %1222 = vmatpush1.bf16.msra.mxu0 0
    %1223 = vmatprep.subr.bf16.mxu0 0
    %1224 = vmatpush1.bf16.msra.mxu0 0
    %1225 = vmatprep.subr.bf16.mxu0 0
    %1226 = vmatpush1.bf16.msra.mxu0 0
    %1227 = vmatprep.subr.bf16.mxu0 0
    %1228 = vmatpush1.bf16.msra.mxu0 0
    %1229 = vmatprep.subr.bf16.mxu0 0
    %1230 = vmatpush1.bf16.msra.mxu0 0
    %1231 = vmatprep.subr.bf16.mxu0 0
    %1232 = vmatpush1.bf16.msra.mxu0 0
    %1233 = vmatprep.mubr.bf16.mxu0 0
    %1234 = vmatmul.mubr.bf16.gmra.mrb[0].mxu0 %v1092
    %v1235 = vpop.f32.mrb[0].mxu0
    %v1236 = vadd.f32 %v1114, %v1235
    %v1237 = vpop.f32.mrb[0].mxu0
    %v1238 = vadd.f32 %v1118, %v1237
    %v1239 = vpop.f32.mrb[0].mxu0
    %v1240 = vpop.f32.mrb[0].mxu0
    %1241 = vdwg.mxu0
    %1242 = vst [vmem:[%s10] sm:$0xff] %v1236
    %1243 = vst [vmem:[%s10 + $0x8] sm:$0xff] %v1238
    // Predicated region
    $region50: #{decoder_ds_forward.6} parent=1 // pred_check
      _
    $region51: #{decoder_ds_forward.6} parent=1 // pred_check_branch
      %1245 = sbr.rel (0) target = $region53
    $region52: #{decoder_ds_forward.6} parent=1 // pred_region
      _
    $region53: #{decoder_ds_forward.6} parent=1 // pred_fallthru
      _
    // Predicated region
    $region54: #{decoder_ds_forward.6} parent=1 // pred_check
      _
    $region55: #{decoder_ds_forward.6} parent=1 // pred_check_branch
      %1247 = sbr.rel (0) target = $region57
    $region56: #{decoder_ds_forward.6} parent=1 // pred_region
      _
    $region57: #{decoder_ds_forward.6} parent=1 // pred_fallthru
      _
    // Predicated region
    $region58: #{decoder_ds_forward.6} parent=1 // pred_check
      _
    $region59: #{decoder_ds_forward.6} parent=1 // pred_check_branch
      %1249 = sbr.rel (0) target = $region61
    $region60: #{decoder_ds_forward.6} parent=1 // pred_region
      _
    $region61: #{decoder_ds_forward.6} parent=1 // pred_fallthru
      _
    // Predicated region
    $region62: #{decoder_ds_forward.6} parent=1 // pred_check
      _
    $region63: #{decoder_ds_forward.6} parent=1 // pred_check_branch
      %1251 = sbr.rel (0) target = $region65
    $region64: #{decoder_ds_forward.6} parent=1 // pred_region
      _
    $region65: #{decoder_ds_forward.6} parent=1 // pred_fallthru
      _
    %1252 = vsyncpa [#allocation6], 1
    %1253 = vsyncpa [#allocation8], 1

// kernel: decoder_ds_forward.7
$region0: #{decoder_ds_forward.7}
  #allocation0 [shape = 'u32[]', space=smem, size = 0x4, offset = 0x4, fixed_abs, tag = 'smem constant byte address 0x4 - core index']
  #allocation1 [shape = 'u32[144,128]{1,0:T(1,128)}', space=vmem, size = 0x12000, scoped, tag = 'internal scratch']
  #allocation2 [shape = 'f32[24,128]{1,0:T(8,128)}', space=vmem, size = 0x3000, scoped, tag = 'scratch operand']
  #allocation3 [shape = 'f32[24,128]{1,0:T(8,128)}', space=vmem, size = 0x3000, scoped, tag = 'scratch operand']
  #allocation4 [shape = 'f32[24,128]{1,0:T(8,128)}', space=vmem, size = 0x3000, scoped, tag = 'scratch operand']
  %s0 = inlined_call_operand.vmem [shape: f32[16,128], index: 0, kind: input, shape index: {}]
  %s1 = inlined_call_operand.vmem [shape: f32[16,128], index: 1, kind: input, shape index: {}]
  %s2 = inlined_call_operand.vmem [shape: bf16[3,128,128], index: 2, kind: input, shape index: {}]
  %s3 = inlined_call_operand.vmem [shape: bf16[3,128,128], index: 3, kind: input, shape index: {}]
  %s4 = inlined_call_operand.vmem [shape: f32[1,128], index: 4, kind: input, shape index: {}]
  %s5 = inlined_call_operand.vmem [shape: bf16[3,128,128], index: 5, kind: input, shape index: {}]
  %s6 = inlined_call_operand.vmem [shape: f32[1,128], index: 6, kind: input, shape index: {}]
  %s7 = inlined_call_operand.vmem [shape: bf16[128,16], index: 7, kind: input, shape index: {}]
  %s8 = inlined_call_operand.vmem [shape: bf16[128,256], index: 8, kind: input, shape index: {}]
  %s9 = inlined_call_operand.vmem [shape: f32[1,256], index: 9, kind: input, shape index: {}]
  %s10 = inlined_call_operand.vmem [shape: f32[16,128], index: 10, kind: output, shape index: {0}]
  %s11 = inlined_call_operand.vmem [shape: f32[16,16], index: 11, kind: output, shape index: {1}]
  %s12 = inlined_call_operand.vmem [shape: f32[16,256], index: 12, kind: output, shape index: {2}]
  %13 = xla_tuple %s10, %s11, %s12
  %s14 = sld [smem:[#allocation0]]
  $region89: #{decoder_ds_forward.7} parent=0
    _
  %s16 = ssub.s32 1, %s14
  %s17 = scalar_select 0, %s16, %s14
  loop: start=0, step=1, limit=4
  $region2: #{decoder_ds_forward.7} parent=0 // loop_pre_header
    _
  $region3: #{decoder_ds_forward.7} parent=0 // loop_header
    %s19 = sphi 0, %s23
    %p20 = scmp.ge.s32.totalorder %s19, 4
    %s29 = sphi 0, %s31
    %s32 = sphi 0, %s29
    %s33 = sphi 0, %s32
    %s49 = sphi 0, %s33
    %s55 = sphi 0, %s57
    %s58 = sphi 0, %s55
    %s59 = sphi 0, %s58
    %s75 = sphi 0, %s59
    %s79 = sphi 0, %s79
    %s81 = sphi 0, %s79
    %s82 = sphi 0, %s81
    %s96 = sphi 0, %s82
    %s100 = sphi 0, %s100
    %s102 = sphi 0, %s100
    %s103 = sphi 0, %s102
    %s117 = sphi 0, %s103
    %s121 = sphi 0, %s121
    %s123 = sphi 0, %s121
    %s124 = sphi 0, %s123
    %s138 = sphi 0, %s124
    %s142 = sphi 0, %s142
    %s144 = sphi 0, %s142
    %s145 = sphi 0, %s144
    %s159 = sphi 0, %s145
    %s163 = sphi 0, %s163
    %s165 = sphi 0, %s163
    %s166 = sphi 0, %s165
    %s180 = sphi 0, %s166
    %s184 = sphi 0, %s184
    %s186 = sphi 0, %s184
    %s187 = sphi 0, %s186
    %s201 = sphi 0, %s187
    %s205 = sphi 0, %s205
    %s207 = sphi 0, %s205
    %s208 = sphi 0, %s207
    %s222 = sphi 0, %s208
    %s226 = sphi 0, %s226
    %s228 = sphi 0, %s226
    %s229 = sphi 0, %s228
    %s243 = sphi 0, %s229
    %s249 = sphi 0, %s251
    %s252 = sphi 0, %s249
    %s253 = sphi 0, %s252
    %s269 = sphi 0, %s253
    %s275 = sphi 0, %s277
    %s278 = sphi 0, %s275
    %s279 = sphi 0, %s278
    %s295 = sphi 0, %s279
    %s301 = sphi 0, %s303
    %s304 = sphi 0, %s301
    %s305 = sphi 0, %s304
    %s321 = sphi 0, %s305
  $region4: #{decoder_ds_forward.7} parent=0 // loop_header_branch
    %22 = sbr.rel (%p20) target = $region8
  $region5: #{decoder_ds_forward.7} parent=0 // loop_body
    %s24 = ssub.s32 %s19, 1
    %s25 = ssub.s32 %s19, 2
    %s26 = sadd.s32 %s19, 1
    %s27 = ssub.s32 %s19, %s26
    %p28 = scmp.eq.s32.totalorder %s27, 0
    %s30 = sadd.s32 %s29, 1
    %s31 = scalar_select %p28, %s29, %s30
    %p34 = pneg %p28
    %p35 = scmp.eq.s32.totalorder %s19, 1
    %p36 = por %p34, %p35
    %p37 = scmp.ne.s32.totalorder %s29, %s32
    %p38 = scmp.eq.s32.totalorder %s19, 0
    %p39 = por %p37, %p38
    %p40 = scmp.ne.s32.totalorder %s29, %s32
    %p41 = scmp.eq.s32.totalorder %s24, 1
    %p42 = por %p40, %p41
    %p43 = scmp.ne.s32.totalorder %s32, %s33
    %p44 = scmp.eq.s32.totalorder %s24, 0
    %p45 = por %p43, %p44
    %p46 = scmp.ne.s32.totalorder %s32, %s33
    %p47 = scmp.eq.s32.totalorder %s25, 1
    %p48 = por %p46, %p47
    %p50 = scmp.ne.s32.totalorder %s33, %s49
    %p51 = scmp.eq.s32.totalorder %s25, 0
    %p52 = por %p50, %p51
    %s53 = ssub.s32 %s19, %s26
    %p54 = scmp.eq.s32.totalorder %s53, 0
    %s56 = sadd.s32 %s55, 1
    %s57 = scalar_select %p54, %s55, %s56
    %p60 = pneg %p54
    %p61 = scmp.eq.s32.totalorder %s19, 1
    %p62 = por %p60, %p61
    %p63 = scmp.ne.s32.totalorder %s55, %s58
    %p64 = scmp.eq.s32.totalorder %s19, 0
    %p65 = por %p63, %p64
    %p66 = scmp.ne.s32.totalorder %s55, %s58
    %p67 = scmp.eq.s32.totalorder %s24, 1
    %p68 = por %p66, %p67
    %p69 = scmp.ne.s32.totalorder %s58, %s59
    %p70 = scmp.eq.s32.totalorder %s24, 0
    %p71 = por %p69, %p70
    %p72 = scmp.ne.s32.totalorder %s58, %s59
    %p73 = scmp.eq.s32.totalorder %s25, 1
    %p74 = por %p72, %p73
    %p76 = scmp.ne.s32.totalorder %s59, %s75
    %p77 = scmp.eq.s32.totalorder %s25, 0
    %p78 = por %p76, %p77
    %s80 = sadd.s32 %s79, 1
    %p83 = scmp.eq.s32.totalorder %s19, 1
    %p84 = scmp.ne.s32.totalorder %s79, %s81
    %p85 = scmp.eq.s32.totalorder %s19, 0
    %p86 = por %p84, %p85
    %p87 = scmp.ne.s32.totalorder %s79, %s81
    %p88 = scmp.eq.s32.totalorder %s24, 1
    %p89 = por %p87, %p88
    %p90 = scmp.ne.s32.totalorder %s81, %s82
    %p91 = scmp.eq.s32.totalorder %s24, 0
    %p92 = por %p90, %p91
    %p93 = scmp.ne.s32.totalorder %s81, %s82
    %p94 = scmp.eq.s32.totalorder %s25, 1
    %p95 = por %p93, %p94
    %p97 = scmp.ne.s32.totalorder %s82, %s96
    %p98 = scmp.eq.s32.totalorder %s25, 0
    %p99 = por %p97, %p98
    %s101 = sadd.s32 %s100, 1
    %p104 = scmp.eq.s32.totalorder %s19, 1
    %p105 = scmp.ne.s32.totalorder %s100, %s102
    %p106 = scmp.eq.s32.totalorder %s19, 0
    %p107 = por %p105, %p106
    %p108 = scmp.ne.s32.totalorder %s100, %s102
    %p109 = scmp.eq.s32.totalorder %s24, 1
    %p110 = por %p108, %p109
    %p111 = scmp.ne.s32.totalorder %s102, %s103
    %p112 = scmp.eq.s32.totalorder %s24, 0
    %p113 = por %p111, %p112
    %p114 = scmp.ne.s32.totalorder %s102, %s103
    %p115 = scmp.eq.s32.totalorder %s25, 1
    %p116 = por %p114, %p115
    %p118 = scmp.ne.s32.totalorder %s103, %s117
    %p119 = scmp.eq.s32.totalorder %s25, 0
    %p120 = por %p118, %p119
    %s122 = sadd.s32 %s121, 1
    %p125 = scmp.eq.s32.totalorder %s19, 1
    %p126 = scmp.ne.s32.totalorder %s121, %s123
    %p127 = scmp.eq.s32.totalorder %s19, 0
    %p128 = por %p126, %p127
    %p129 = scmp.ne.s32.totalorder %s121, %s123
    %p130 = scmp.eq.s32.totalorder %s24, 1
    %p131 = por %p129, %p130
    %p132 = scmp.ne.s32.totalorder %s123, %s124
    %p133 = scmp.eq.s32.totalorder %s24, 0
    %p134 = por %p132, %p133
    %p135 = scmp.ne.s32.totalorder %s123, %s124
    %p136 = scmp.eq.s32.totalorder %s25, 1
    %p137 = por %p135, %p136
    %p139 = scmp.ne.s32.totalorder %s124, %s138
    %p140 = scmp.eq.s32.totalorder %s25, 0
    %p141 = por %p139, %p140
    %s143 = sadd.s32 %s142, 1
    %p146 = scmp.eq.s32.totalorder %s19, 1
    %p147 = scmp.ne.s32.totalorder %s142, %s144
    %p148 = scmp.eq.s32.totalorder %s19, 0
    %p149 = por %p147, %p148
    %p150 = scmp.ne.s32.totalorder %s142, %s144
    %p151 = scmp.eq.s32.totalorder %s24, 1
    %p152 = por %p150, %p151
    %p153 = scmp.ne.s32.totalorder %s144, %s145
    %p154 = scmp.eq.s32.totalorder %s24, 0
    %p155 = por %p153, %p154
    %p156 = scmp.ne.s32.totalorder %s144, %s145
    %p157 = scmp.eq.s32.totalorder %s25, 1
    %p158 = por %p156, %p157
    %p160 = scmp.ne.s32.totalorder %s145, %s159
    %p161 = scmp.eq.s32.totalorder %s25, 0
    %p162 = por %p160, %p161
    %s164 = sadd.s32 %s163, 1
    %p167 = scmp.eq.s32.totalorder %s19, 1
    %p168 = scmp.ne.s32.totalorder %s163, %s165
    %p169 = scmp.eq.s32.totalorder %s19, 0
    %p170 = por %p168, %p169
    %p171 = scmp.ne.s32.totalorder %s163, %s165
    %p172 = scmp.eq.s32.totalorder %s24, 1
    %p173 = por %p171, %p172
    %p174 = scmp.ne.s32.totalorder %s165, %s166
    %p175 = scmp.eq.s32.totalorder %s24, 0
    %p176 = por %p174, %p175
    %p177 = scmp.ne.s32.totalorder %s165, %s166
    %p178 = scmp.eq.s32.totalorder %s25, 1
    %p179 = por %p177, %p178
    %p181 = scmp.ne.s32.totalorder %s166, %s180
    %p182 = scmp.eq.s32.totalorder %s25, 0
    %p183 = por %p181, %p182
    %s185 = sadd.s32 %s184, 1
    %p188 = scmp.eq.s32.totalorder %s19, 1
    %p189 = scmp.ne.s32.totalorder %s184, %s186
    %p190 = scmp.eq.s32.totalorder %s19, 0
    %p191 = por %p189, %p190
    %p192 = scmp.ne.s32.totalorder %s184, %s186
    %p193 = scmp.eq.s32.totalorder %s24, 1
    %p194 = por %p192, %p193
    %p195 = scmp.ne.s32.totalorder %s186, %s187
    %p196 = scmp.eq.s32.totalorder %s24, 0
    %p197 = por %p195, %p196
    %p198 = scmp.ne.s32.totalorder %s186, %s187
    %p199 = scmp.eq.s32.totalorder %s25, 1
    %p200 = por %p198, %p199
    %p202 = scmp.ne.s32.totalorder %s187, %s201
    %p203 = scmp.eq.s32.totalorder %s25, 0
    %p204 = por %p202, %p203
    %s206 = sadd.s32 %s205, 1
    %p209 = scmp.eq.s32.totalorder %s19, 1
    %p210 = scmp.ne.s32.totalorder %s205, %s207
    %p211 = scmp.eq.s32.totalorder %s19, 0
    %p212 = por %p210, %p211
    %p213 = scmp.ne.s32.totalorder %s205, %s207
    %p214 = scmp.eq.s32.totalorder %s24, 1
    %p215 = por %p213, %p214
    %p216 = scmp.ne.s32.totalorder %s207, %s208
    %p217 = scmp.eq.s32.totalorder %s24, 0
    %p218 = por %p216, %p217
    %p219 = scmp.ne.s32.totalorder %s207, %s208
    %p220 = scmp.eq.s32.totalorder %s25, 1
    %p221 = por %p219, %p220
    %p223 = scmp.ne.s32.totalorder %s208, %s222
    %p224 = scmp.eq.s32.totalorder %s25, 0
    %p225 = por %p223, %p224
    %s227 = sadd.s32 %s226, 1
    %p230 = scmp.eq.s32.totalorder %s19, 1
    %p231 = scmp.ne.s32.totalorder %s226, %s228
    %p232 = scmp.eq.s32.totalorder %s19, 0
    %p233 = por %p231, %p232
    %p234 = scmp.ne.s32.totalorder %s226, %s228
    %p235 = scmp.eq.s32.totalorder %s24, 1
    %p236 = por %p234, %p235
    %p237 = scmp.ne.s32.totalorder %s228, %s229
    %p238 = scmp.eq.s32.totalorder %s24, 0
    %p239 = por %p237, %p238
    %p240 = scmp.ne.s32.totalorder %s228, %s229
    %p241 = scmp.eq.s32.totalorder %s25, 1
    %p242 = por %p240, %p241
    %p244 = scmp.ne.s32.totalorder %s229, %s243
    %p245 = scmp.eq.s32.totalorder %s25, 0
    %p246 = por %p244, %p245
    %s247 = ssub.s32 %s19, %s26
    %p248 = scmp.eq.s32.totalorder %s247, 0
    %s250 = sadd.s32 %s249, 1
    %s251 = scalar_select %p248, %s249, %s250
    %p254 = pneg %p248
    %p255 = scmp.eq.s32.totalorder %s19, 1
    %p256 = por %p254, %p255
    %p257 = scmp.ne.s32.totalorder %s249, %s252
    %p258 = scmp.eq.s32.totalorder %s19, 0
    %p259 = por %p257, %p258
    %p260 = scmp.ne.s32.totalorder %s249, %s252
    %p261 = scmp.eq.s32.totalorder %s24, 1
    %p262 = por %p260, %p261
    %p263 = scmp.ne.s32.totalorder %s252, %s253
    %p264 = scmp.eq.s32.totalorder %s24, 0
    %p265 = por %p263, %p264
    %p266 = scmp.ne.s32.totalorder %s252, %s253
    %p267 = scmp.eq.s32.totalorder %s25, 1
    %p268 = por %p266, %p267
    %p270 = scmp.ne.s32.totalorder %s253, %s269
    %p271 = scmp.eq.s32.totalorder %s25, 0
    %p272 = por %p270, %p271
    %s273 = ssub.s32 %s19, %s26
    %p274 = scmp.eq.s32.totalorder %s273, 0
    %s276 = sadd.s32 %s275, 1
    %s277 = scalar_select %p274, %s275, %s276
    %p280 = pneg %p274
    %p281 = scmp.eq.s32.totalorder %s19, 1
    %p282 = por %p280, %p281
    %p283 = scmp.ne.s32.totalorder %s275, %s278
    %p284 = scmp.eq.s32.totalorder %s19, 0
    %p285 = por %p283, %p284
    %p286 = scmp.ne.s32.totalorder %s275, %s278
    %p287 = scmp.eq.s32.totalorder %s24, 1
    %p288 = por %p286, %p287
    %p289 = scmp.ne.s32.totalorder %s278, %s279
    %p290 = scmp.eq.s32.totalorder %s24, 0
    %p291 = por %p289, %p290
    %p292 = scmp.ne.s32.totalorder %s278, %s279
    %p293 = scmp.eq.s32.totalorder %s25, 1
    %p294 = por %p292, %p293
    %p296 = scmp.ne.s32.totalorder %s279, %s295
    %p297 = scmp.eq.s32.totalorder %s25, 0
    %p298 = por %p296, %p297
    %s299 = ssub.s32 %s19, %s26
    %p300 = scmp.eq.s32.totalorder %s299, 0
    %s302 = sadd.s32 %s301, 1
    %s303 = scalar_select %p300, %s301, %s302
    %p306 = pneg %p300
    %p307 = scmp.eq.s32.totalorder %s19, 1
    %p308 = por %p306, %p307
    %p309 = scmp.ne.s32.totalorder %s301, %s304
    %p310 = scmp.eq.s32.totalorder %s19, 0
    %p311 = por %p309, %p310
    %p312 = scmp.ne.s32.totalorder %s301, %s304
    %p313 = scmp.eq.s32.totalorder %s24, 1
    %p314 = por %p312, %p313
    %p315 = scmp.ne.s32.totalorder %s304, %s305
    %p316 = scmp.eq.s32.totalorder %s24, 0
    %p317 = por %p315, %p316
    %p318 = scmp.ne.s32.totalorder %s304, %s305
    %p319 = scmp.eq.s32.totalorder %s25, 1
    %p320 = por %p318, %p319
    %p322 = scmp.ne.s32.totalorder %s305, %s321
    %p323 = scmp.eq.s32.totalorder %s25, 0
    %p324 = por %p322, %p323
    %p325 = scmp.le.s32.totalorder 1, %s19
    %p326 = scmp.lt.s32.totalorder %s19, 3
    %p327 = pnand %p325, %p326
    %p328 = pneg %p327
    // Predicated region
    $region9: #{decoder_ds_forward.7} parent=5 // pred_check
      _
    $region10: #{decoder_ds_forward.7} parent=5 // pred_check_branch
      %330 = sbr.rel (%p327) target = $region12
    $region11: #{decoder_ds_forward.7} parent=5 // pred_region
      %s331 = ssub.s32 %s19, 1
      // Predicated region
      $region13: #{decoder_ds_forward.7} parent=11 // pred_check
        %p332 = pneg %p92
      $region14: #{decoder_ds_forward.7} parent=11 // pred_check_branch
        %334 = sbr.rel (%p332) target = $region16
      $region15: #{decoder_ds_forward.7} parent=11 // pred_region
        _
      $region16: #{decoder_ds_forward.7} parent=11 // pred_fallthru
        _
      // Predicated region
      $region17: #{decoder_ds_forward.7} parent=11 // pred_check
        %p335 = pneg %p113
      $region18: #{decoder_ds_forward.7} parent=11 // pred_check_branch
        %337 = sbr.rel (%p335) target = $region20
      $region19: #{decoder_ds_forward.7} parent=11 // pred_region
        _
      $region20: #{decoder_ds_forward.7} parent=11 // pred_fallthru
        _
      // Predicated region
      $region21: #{decoder_ds_forward.7} parent=11 // pred_check
        %p338 = pneg %p134
      $region22: #{decoder_ds_forward.7} parent=11 // pred_check_branch
        %340 = sbr.rel (%p338) target = $region24
      $region23: #{decoder_ds_forward.7} parent=11 // pred_region
        _
      $region24: #{decoder_ds_forward.7} parent=11 // pred_fallthru
        _
      // Predicated region
      $region25: #{decoder_ds_forward.7} parent=11 // pred_check
        %p341 = pneg %p155
      $region26: #{decoder_ds_forward.7} parent=11 // pred_check_branch
        %343 = sbr.rel (%p341) target = $region28
      $region27: #{decoder_ds_forward.7} parent=11 // pred_region
        _
      $region28: #{decoder_ds_forward.7} parent=11 // pred_fallthru
        _
      // Predicated region
      $region29: #{decoder_ds_forward.7} parent=11 // pred_check
        %p344 = pneg %p176
      $region30: #{decoder_ds_forward.7} parent=11 // pred_check_branch
        %346 = sbr.rel (%p344) target = $region32
      $region31: #{decoder_ds_forward.7} parent=11 // pred_region
        _
      $region32: #{decoder_ds_forward.7} parent=11 // pred_fallthru
        _
      // Predicated region
      $region33: #{decoder_ds_forward.7} parent=11 // pred_check
        %p347 = pneg %p197
      $region34: #{decoder_ds_forward.7} parent=11 // pred_check_branch
        %349 = sbr.rel (%p347) target = $region36
      $region35: #{decoder_ds_forward.7} parent=11 // pred_region
        _
      $region36: #{decoder_ds_forward.7} parent=11 // pred_fallthru
        _
      // Predicated region
      $region37: #{decoder_ds_forward.7} parent=11 // pred_check
        %p350 = pneg %p218
      $region38: #{decoder_ds_forward.7} parent=11 // pred_check_branch
        %352 = sbr.rel (%p350) target = $region40
      $region39: #{decoder_ds_forward.7} parent=11 // pred_region
        _
      $region40: #{decoder_ds_forward.7} parent=11 // pred_fallthru
        _
      // Predicated region
      $region41: #{decoder_ds_forward.7} parent=11 // pred_check
        %p353 = pneg %p239
      $region42: #{decoder_ds_forward.7} parent=11 // pred_check_branch
        %355 = sbr.rel (%p353) target = $region44
      $region43: #{decoder_ds_forward.7} parent=11 // pred_region
        _
      $region44: #{decoder_ds_forward.7} parent=11 // pred_fallthru
        _
    $region12: #{decoder_ds_forward.7} parent=5 // pred_fallthru
      _
    %p356 = scmp.lt.s32.totalorder %s19, 2
    // Predicated region
    $region45: #{decoder_ds_forward.7} parent=5 // pred_check
      %p357 = pneg %p356
    $region46: #{decoder_ds_forward.7} parent=5 // pred_check_branch
      %359 = sbr.rel (%p357) target = $region48
    $region47: #{decoder_ds_forward.7} parent=5 // pred_region
      // Predicated region
      $region49: #{decoder_ds_forward.7} parent=47 // pred_check
        %p360 = pneg %p39
      $region50: #{decoder_ds_forward.7} parent=47 // pred_check_branch
        %362 = sbr.rel (%p360) target = $region52
      $region51: #{decoder_ds_forward.7} parent=47 // pred_region
        %p363 = scmp.lt.s32.totalorder %s19, 1
        %s364 = scalar_select %p363, %s19, 1
        %s365 = smul.addr %s364, 8
        %s366 = scalar_lea.vmem %s0, %s365
      $region52: #{decoder_ds_forward.7} parent=47 // pred_fallthru
        _
      // Predicated region
      $region53: #{decoder_ds_forward.7} parent=47 // pred_check
        %p367 = pneg %p65
      $region54: #{decoder_ds_forward.7} parent=47 // pred_check_branch
        %369 = sbr.rel (%p367) target = $region56
      $region55: #{decoder_ds_forward.7} parent=47 // pred_region
        %p370 = scmp.lt.s32.totalorder %s19, 1
        %s371 = scalar_select %p370, %s19, 1
        %s372 = smul.addr %s371, 8
        %s373 = scalar_lea.vmem %s1, %s372
      $region56: #{decoder_ds_forward.7} parent=47 // pred_fallthru
        _
    $region48: #{decoder_ds_forward.7} parent=5 // pred_fallthru
      _
    %p374 = scmp.le.s32.totalorder 1, %s19
    %p375 = scmp.lt.s32.totalorder %s19, 3
    %p376 = pnand %p374, %p375
    %p377 = pneg %p376
    // Predicated region
    $region57: #{decoder_ds_forward.7} parent=5 // pred_check
      _
    $region58: #{decoder_ds_forward.7} parent=5 // pred_check_branch
      %379 = sbr.rel (%p376) target = $region60
    $region59: #{decoder_ds_forward.7} parent=5 // pred_region
      %s380 = ssub.s32 %s19, 1
      %p381 = scmp.lt.s32.totalorder %s24, 1
      %s382 = scalar_select %p381, %s24, 1
      %s383 = smul.addr %s382, 8
      %s384 = scalar_lea.vmem %s0, %s383
      %p385 = pneg %p45
      %p386 = pneg %p42
      %p387 = scmp.lt.s32.totalorder %s24, 1
      %s388 = scalar_select %p387, %s24, 1
      %s389 = smul.addr %s388, 8
      %s390 = scalar_lea.vmem %s1, %s389
      %p391 = pneg %p71
      %p392 = pneg %p68
      %p393 = pneg %p92
      %p394 = pneg %p89
      %p395 = pneg %p113
      %p396 = pneg %p110
      %p397 = pneg %p134
      %p398 = pneg %p131
      %p399 = pneg %p155
      %p400 = pneg %p152
      %p401 = pneg %p176
      %p402 = pneg %p173
      %p403 = pneg %p197
      %p404 = pneg %p194
      %p405 = pneg %p218
      %p406 = pneg %p215
      %p407 = pneg %p239
      %p408 = pneg %p236
      %p409 = pneg %p265
      %p410 = pneg %p262
      %p411 = scmp.lt.s32.totalorder %s24, 1
      %s412 = scalar_select %p411, %s24, 1
      %s413 = smul.addr %s412, 8
      %s414 = scalar_lea.vmem %s10, %s413
      %p415 = pneg %p291
      %p416 = pneg %p288
      %p417 = scmp.lt.s32.totalorder %s24, 1
      %s418 = scalar_select %p417, %s24, 1
      %s419 = smul.addr %s418, 8
      %s420 = scalar_lea.vmem %s11, %s419
      %p421 = pneg %p317
      %p422 = pneg %p314
      %p423 = scmp.lt.s32.totalorder %s24, 1
      %s424 = scalar_select %p423, %s24, 1
      %s425 = smul.addr %s424, 2
      %s426 = smul.addr %s425, 8
      %s427 = scalar_lea.vmem %s12, %s426
      %p428 = scmp.lt.s32.totalorder %s24, 1
      %s429 = scalar_select %p428, %s24, 1
      %s430 = smul.addr %s429, 8
      %s431 = scalar_lea.vmem %s0, %s430
      %p432 = scmp.lt.s32.totalorder %s24, 1
      %s433 = scalar_select %p432, %s24, 1
      %s434 = smul.addr %s433, 8
      %s435 = scalar_lea.vmem %s1, %s434
      %p436 = scmp.lt.s32.totalorder %s24, 1
      %s437 = scalar_select %p436, %s24, 1
      %s438 = smul.addr %s437, 8
      %s439 = scalar_lea.vmem %s10, %s438
      %p440 = scmp.lt.s32.totalorder %s24, 1
      %s441 = scalar_select %p440, %s24, 1
      %s442 = smul.addr %s441, 8
      %s443 = scalar_lea.vmem %s11, %s442
      %p444 = scmp.lt.s32.totalorder %s24, 1
      %s445 = scalar_select %p444, %s24, 1
      %s446 = smul.addr %s445, 2
      %s447 = smul.addr %s446, 8
      %s448 = scalar_lea.vmem %s12, %s447
      %v450 = vlaneseq
      %v451 = vshrl.u32 %v450, 7
      %v452 = vand.u32 %v451, 7
      %vm453 = vcmp.gt.s32.totalorder %v452, 0
      %vm454 = vcmp.lt.s32.totalorder %v452, 7
      %v455 = vld [vmem:[%s431] sm:$0xff]
      %456 = vst [vmem:[#allocation2] sm:$0xff] 0.0
      %457 = vst [vmem:[#allocation2 + $0x8] sm:$0xff] 0.0
      %458 = vst [vmem:[#allocation2 + $0x10] sm:$0xff] 0.0
      %459 = vst [vmem:[#allocation2 + $0x8] sm:$0xff] %v455
      %v460 = vld [vmem:[%s435] sm:$0xff]
      %461 = vst [vmem:[#allocation3] sm:$0xff] 0.0
      %462 = vst [vmem:[#allocation3 + $0x8] sm:$0xff] 0.0
      %463 = vst [vmem:[#allocation3 + $0x10] sm:$0xff] 0.0
      %464 = vst [vmem:[#allocation3 + $0x8] sm:$0xff] %v460
      %v465 = vld [vmem:[#allocation2 + $0x7] sm:$0xff]
      %v466 = vsel %vm453, 1, 0
      %vm467 = vcmp.eq.s32.totalorder %v466, 1
      %v468 = vsel %vm467, %v465, 0.0
      %v469 = vpack.c.bf16 %v468, %v468
      %v470 = vld [vmem:[%s2] sm:$0xf]
      %v471 = vld [vmem:[%s2 + $0x4] sm:$0xf]
      %v472 = vld [vmem:[%s2 + $0x8] sm:$0xf]
      %v473 = vld [vmem:[%s2 + $0xc] sm:$0xf]
      %v474 = vld [vmem:[%s2 + $0x10] sm:$0xf]
      %v475 = vld [vmem:[%s2 + $0x14] sm:$0xf]
      %v476 = vld [vmem:[%s2 + $0x18] sm:$0xf]
      %v477 = vld [vmem:[%s2 + $0x1c] sm:$0xf]
      %v478 = vld [vmem:[%s2 + $0x20] sm:$0xf]
      %v479 = vld [vmem:[%s2 + $0x24] sm:$0xf]
      %v480 = vld [vmem:[%s2 + $0x28] sm:$0xf]
      %v481 = vld [vmem:[%s2 + $0x2c] sm:$0xf]
      %v482 = vld [vmem:[%s2 + $0x30] sm:$0xf]
      %v483 = vld [vmem:[%s2 + $0x34] sm:$0xf]
      %v484 = vld [vmem:[%s2 + $0x38] sm:$0xf]
      %v485 = vld [vmem:[%s2 + $0x3c] sm:$0xf]
      %v486 = vld [vmem:[#allocation2 + $0x8] sm:$0xff]
      %v487 = vpack.c.bf16 %v486, %v486
      %s488 = scalar_lea.vmem %s2, 64
      %v489 = vld [vmem:[%s488] sm:$0xf]
      %v490 = vld [vmem:[%s488 + $0x4] sm:$0xf]
      %v491 = vld [vmem:[%s488 + $0x8] sm:$0xf]
      %v492 = vld [vmem:[%s488 + $0xc] sm:$0xf]
      %v493 = vld [vmem:[%s488 + $0x10] sm:$0xf]
      %v494 = vld [vmem:[%s488 + $0x14] sm:$0xf]
      %v495 = vld [vmem:[%s488 + $0x18] sm:$0xf]
      %v496 = vld [vmem:[%s488 + $0x1c] sm:$0xf]
      %v497 = vld [vmem:[%s488 + $0x20] sm:$0xf]
      %v498 = vld [vmem:[%s488 + $0x24] sm:$0xf]
      %v499 = vld [vmem:[%s488 + $0x28] sm:$0xf]
      %v500 = vld [vmem:[%s488 + $0x2c] sm:$0xf]
      %v501 = vld [vmem:[%s488 + $0x30] sm:$0xf]
      %v502 = vld [vmem:[%s488 + $0x34] sm:$0xf]
      %v503 = vld [vmem:[%s488 + $0x38] sm:$0xf]
      %v504 = vld [vmem:[%s488 + $0x3c] sm:$0xf]
      %v521 = vunpack.c.l.b16 %v489
      %v522 = vunpack.c.l.b16 %v490
      %v523 = vunpack.c.l.b16 %v491
      %v524 = vunpack.c.l.b16 %v492
      %v525 = vunpack.c.l.b16 %v493
      %v526 = vunpack.c.l.b16 %v494
      %v527 = vunpack.c.l.b16 %v495
      %v528 = vunpack.c.l.b16 %v496
      %v529 = vunpack.c.l.b16 %v497
      %v530 = vunpack.c.l.b16 %v498
      %v531 = vunpack.c.l.b16 %v499
      %v532 = vunpack.c.l.b16 %v500
      %v533 = vunpack.c.l.b16 %v501
      %v534 = vunpack.c.l.b16 %v502
      %v535 = vunpack.c.l.b16 %v503
      %v536 = vunpack.c.l.b16 %v504
      %v537 = vpack.c.b16 %v522, %v521
      %v538 = vpack.c.b16 %v524, %v523
      %v539 = vpack.c.b16 %v526, %v525
      %v540 = vpack.c.b16 %v528, %v527
      %v541 = vpack.c.b16 %v530, %v529
      %v542 = vpack.c.b16 %v532, %v531
      %v543 = vpack.c.b16 %v534, %v533
      %v544 = vpack.c.b16 %v536, %v535
      %553 = vmatprep.subr.bf16.mxu0 0
      %554 = vmatpush1.bf16.msra.mxu0 %v537
      %555 = vmatprep.subr.bf16.mxu0 0
      %556 = vmatpush1.bf16.msra.mxu0 %v538
      %557 = vmatprep.subr.bf16.mxu0 0
      %558 = vmatpush1.bf16.msra.mxu0 %v539
      %559 = vmatprep.subr.bf16.mxu0 0
      %560 = vmatpush1.bf16.msra.mxu0 %v540
      %561 = vmatprep.subr.bf16.mxu0 0
      %562 = vmatpush1.bf16.msra.mxu0 %v541
      %563 = vmatprep.subr.bf16.mxu0 0
      %564 = vmatpush1.bf16.msra.mxu0 %v542
      %565 = vmatprep.subr.bf16.mxu0 0
      %566 = vmatpush1.bf16.msra.mxu0 %v543
      %567 = vmatprep.subr.bf16.mxu0 0
      %568 = vmatpush1.bf16.msra.mxu0 %v544
      %569 = vmatprep.subr.bf16.mxu0 0
      %570 = vmatpush1.bf16.msra.mxu0 0
      %571 = vmatprep.subr.bf16.mxu0 0
      %572 = vmatpush1.bf16.msra.mxu0 0
      %573 = vmatprep.subr.bf16.mxu0 0
      %574 = vmatpush1.bf16.msra.mxu0 0
      %575 = vmatprep.subr.bf16.mxu0 0
      %576 = vmatpush1.bf16.msra.mxu0 0
      %577 = vmatprep.subr.bf16.mxu0 0
      %578 = vmatpush1.bf16.msra.mxu0 0
      %579 = vmatprep.subr.bf16.mxu0 0
      %580 = vmatpush1.bf16.msra.mxu0 0
      %581 = vmatprep.subr.bf16.mxu0 0
      %582 = vmatpush1.bf16.msra.mxu0 0
      %583 = vmatprep.subr.bf16.mxu0 0
      %584 = vmatpush1.bf16.msra.mxu0 0
      %585 = vmatprep.mubr.bf16.mxu0 0
      %586 = vmatmul.mubr.bf16.gmra.mrb[0].mxu0 %v487
      %v587 = vpop.f32.mrb[0].mxu0
      %v588 = vadd.f32 0.0, %v587
      %v589 = vpop.f32.mrb[0].mxu0
      %v590 = vpop.f32.mrb[0].mxu0
      %v591 = vpop.f32.mrb[0].mxu0
      %592 = vdwg.mxu0
      %v609 = vunpack.c.l.b16 %v470
      %v610 = vunpack.c.l.b16 %v471
      %v611 = vunpack.c.l.b16 %v472
      %v612 = vunpack.c.l.b16 %v473
      %v613 = vunpack.c.l.b16 %v474
      %v614 = vunpack.c.l.b16 %v475
      %v615 = vunpack.c.l.b16 %v476
      %v616 = vunpack.c.l.b16 %v477
      %v617 = vunpack.c.l.b16 %v478
      %v618 = vunpack.c.l.b16 %v479
      %v619 = vunpack.c.l.b16 %v480
      %v620 = vunpack.c.l.b16 %v481
      %v621 = vunpack.c.l.b16 %v482
      %v622 = vunpack.c.l.b16 %v483
      %v623 = vunpack.c.l.b16 %v484
      %v624 = vunpack.c.l.b16 %v485
      %v625 = vpack.c.b16 %v610, %v609
      %v626 = vpack.c.b16 %v612, %v611
      %v627 = vpack.c.b16 %v614, %v613
      %v628 = vpack.c.b16 %v616, %v615
      %v629 = vpack.c.b16 %v618, %v617
      %v630 = vpack.c.b16 %v620, %v619
      %v631 = vpack.c.b16 %v622, %v621
      %v632 = vpack.c.b16 %v624, %v623
      %641 = vmatprep.subr.bf16.mxu0 0
      %642 = vmatpush1.bf16.msra.mxu0 %v625
      %643 = vmatprep.subr.bf16.mxu0 0
      %644 = vmatpush1.bf16.msra.mxu0 %v626
      %645 = vmatprep.subr.bf16.mxu0 0
      %646 = vmatpush1.bf16.msra.mxu0 %v627
      %647 = vmatprep.subr.bf16.mxu0 0
      %648 = vmatpush1.bf16.msra.mxu0 %v628
      %649 = vmatprep.subr.bf16.mxu0 0
      %650 = vmatpush1.bf16.msra.mxu0 %v629
      %651 = vmatprep.subr.bf16.mxu0 0
      %652 = vmatpush1.bf16.msra.mxu0 %v630
      %653 = vmatprep.subr.bf16.mxu0 0
      %654 = vmatpush1.bf16.msra.mxu0 %v631
      %655 = vmatprep.subr.bf16.mxu0 0
      %656 = vmatpush1.bf16.msra.mxu0 %v632
      %657 = vmatprep.subr.bf16.mxu0 0
      %658 = vmatpush1.bf16.msra.mxu0 0
      %659 = vmatprep.subr.bf16.mxu0 0
      %660 = vmatpush1.bf16.msra.mxu0 0
      %661 = vmatprep.subr.bf16.mxu0 0
      %662 = vmatpush1.bf16.msra.mxu0 0
      %663 = vmatprep.subr.bf16.mxu0 0
      %664 = vmatpush1.bf16.msra.mxu0 0
      %665 = vmatprep.subr.bf16.mxu0 0
      %666 = vmatpush1.bf16.msra.mxu0 0
      %667 = vmatprep.subr.bf16.mxu0 0
      %668 = vmatpush1.bf16.msra.mxu0 0
      %669 = vmatprep.subr.bf16.mxu0 0
      %670 = vmatpush1.bf16.msra.mxu0 0
      %671 = vmatprep.subr.bf16.mxu0 0
      %672 = vmatpush1.bf16.msra.mxu0 0
      %673 = vmatprep.mubr.bf16.mxu0 0
      %674 = vmatmul.mubr.bf16.gmra.mrb[0].mxu0 %v469
      %v675 = vpop.f32.mrb[0].mxu0
      %v676 = vadd.f32 %v588, %v675
      %v677 = vpop.f32.mrb[0].mxu0
      %v678 = vpop.f32.mrb[0].mxu0
      %v679 = vpop.f32.mrb[0].mxu0
      %680 = vdwg.mxu0
      %v681 = vld [vmem:[#allocation2 + $0x9] sm:$0xff]
      %v682 = vsel %vm454, 1, 0
      %vm683 = vcmp.eq.s32.totalorder %v682, 1
      %v684 = vsel %vm683, %v681, 0.0
      %v685 = vpack.c.bf16 %v684, %v684
      %s686 = scalar_lea.vmem %s2, 128
      %v687 = vld [vmem:[%s686] sm:$0xf]
      %v688 = vld [vmem:[%s686 + $0x4] sm:$0xf]
      %v689 = vld [vmem:[%s686 + $0x8] sm:$0xf]
      %v690 = vld [vmem:[%s686 + $0xc] sm:$0xf]
      %v691 = vld [vmem:[%s686 + $0x10] sm:$0xf]
      %v692 = vld [vmem:[%s686 + $0x14] sm:$0xf]
      %v693 = vld [vmem:[%s686 + $0x18] sm:$0xf]
      %v694 = vld [vmem:[%s686 + $0x1c] sm:$0xf]
      %v695 = vld [vmem:[%s686 + $0x20] sm:$0xf]
      %v696 = vld [vmem:[%s686 + $0x24] sm:$0xf]
      %v697 = vld [vmem:[%s686 + $0x28] sm:$0xf]
      %v698 = vld [vmem:[%s686 + $0x2c] sm:$0xf]
      %v699 = vld [vmem:[%s686 + $0x30] sm:$0xf]
      %v700 = vld [vmem:[%s686 + $0x34] sm:$0xf]
      %v701 = vld [vmem:[%s686 + $0x38] sm:$0xf]
      %v702 = vld [vmem:[%s686 + $0x3c] sm:$0xf]
      %v719 = vunpack.c.l.b16 %v687
      %v720 = vunpack.c.l.b16 %v688
      %v721 = vunpack.c.l.b16 %v689
      %v722 = vunpack.c.l.b16 %v690
      %v723 = vunpack.c.l.b16 %v691
      %v724 = vunpack.c.l.b16 %v692
      %v725 = vunpack.c.l.b16 %v693
      %v726 = vunpack.c.l.b16 %v694
      %v727 = vunpack.c.l.b16 %v695
      %v728 = vunpack.c.l.b16 %v696
      %v729 = vunpack.c.l.b16 %v697
      %v730 = vunpack.c.l.b16 %v698
      %v731 = vunpack.c.l.b16 %v699
      %v732 = vunpack.c.l.b16 %v700
      %v733 = vunpack.c.l.b16 %v701
      %v734 = vunpack.c.l.b16 %v702
      %v735 = vpack.c.b16 %v720, %v719
      %v736 = vpack.c.b16 %v722, %v721
      %v737 = vpack.c.b16 %v724, %v723
      %v738 = vpack.c.b16 %v726, %v725
      %v739 = vpack.c.b16 %v728, %v727
      %v740 = vpack.c.b16 %v730, %v729
      %v741 = vpack.c.b16 %v732, %v731
      %v742 = vpack.c.b16 %v734, %v733
      %751 = vmatprep.subr.bf16.mxu0 0
      %752 = vmatpush1.bf16.msra.mxu0 %v735
      %753 = vmatprep.subr.bf16.mxu0 0
      %754 = vmatpush1.bf16.msra.mxu0 %v736
      %755 = vmatprep.subr.bf16.mxu0 0
      %756 = vmatpush1.bf16.msra.mxu0 %v737
      %757 = vmatprep.subr.bf16.mxu0 0
      %758 = vmatpush1.bf16.msra.mxu0 %v738
      %759 = vmatprep.subr.bf16.mxu0 0
      %760 = vmatpush1.bf16.msra.mxu0 %v739
      %761 = vmatprep.subr.bf16.mxu0 0
      %762 = vmatpush1.bf16.msra.mxu0 %v740
      %763 = vmatprep.subr.bf16.mxu0 0
      %764 = vmatpush1.bf16.msra.mxu0 %v741
      %765 = vmatprep.subr.bf16.mxu0 0
      %766 = vmatpush1.bf16.msra.mxu0 %v742
      %767 = vmatprep.subr.bf16.mxu0 0
      %768 = vmatpush1.bf16.msra.mxu0 0
      %769 = vmatprep.subr.bf16.mxu0 0
      %770 = vmatpush1.bf16.msra.mxu0 0
      %771 = vmatprep.subr.bf16.mxu0 0
      %772 = vmatpush1.bf16.msra.mxu0 0
      %773 = vmatprep.subr.bf16.mxu0 0
      %774 = vmatpush1.bf16.msra.mxu0 0
      %775 = vmatprep.subr.bf16.mxu0 0
      %776 = vmatpush1.bf16.msra.mxu0 0
      %777 = vmatprep.subr.bf16.mxu0 0
      %778 = vmatpush1.bf16.msra.mxu0 0
      %779 = vmatprep.subr.bf16.mxu0 0
      %780 = vmatpush1.bf16.msra.mxu0 0
      %781 = vmatprep.subr.bf16.mxu0 0
      %782 = vmatpush1.bf16.msra.mxu0 0
      %783 = vmatprep.mubr.bf16.mxu0 0
      %784 = vmatmul.mubr.bf16.gmra.mrb[0].mxu0 %v685
      %v785 = vpop.f32.mrb[0].mxu0
      %v786 = vadd.f32 0.0, %v785
      %v787 = vpop.f32.mrb[0].mxu0
      %v788 = vpop.f32.mrb[0].mxu0
      %v789 = vpop.f32.mrb[0].mxu0
      %790 = vdwg.mxu0
      %v791 = vadd.f32 %v676, %v786
      %v792 = vld [vmem:[#allocation3 + $0x7] sm:$0xff]
      %v793 = vsel %vm467, %v792, 0.0
      %v794 = vpack.c.bf16 %v793, %v793
      %v795 = vld [vmem:[%s3] sm:$0xf]
      %v796 = vld [vmem:[%s3 + $0x4] sm:$0xf]
      %v797 = vld [vmem:[%s3 + $0x8] sm:$0xf]
      %v798 = vld [vmem:[%s3 + $0xc] sm:$0xf]
      %v799 = vld [vmem:[%s3 + $0x10] sm:$0xf]
      %v800 = vld [vmem:[%s3 + $0x14] sm:$0xf]
      %v801 = vld [vmem:[%s3 + $0x18] sm:$0xf]
      %v802 = vld [vmem:[%s3 + $0x1c] sm:$0xf]
      %v803 = vld [vmem:[%s3 + $0x20] sm:$0xf]
      %v804 = vld [vmem:[%s3 + $0x24] sm:$0xf]
      %v805 = vld [vmem:[%s3 + $0x28] sm:$0xf]
      %v806 = vld [vmem:[%s3 + $0x2c] sm:$0xf]
      %v807 = vld [vmem:[%s3 + $0x30] sm:$0xf]
      %v808 = vld [vmem:[%s3 + $0x34] sm:$0xf]
      %v809 = vld [vmem:[%s3 + $0x38] sm:$0xf]
      %v810 = vld [vmem:[%s3 + $0x3c] sm:$0xf]
      %v811 = vld [vmem:[#allocation3 + $0x8] sm:$0xff]
      %v812 = vpack.c.bf16 %v811, %v811
      %s813 = scalar_lea.vmem %s3, 64
      %v814 = vld [vmem:[%s813] sm:$0xf]
      %v815 = vld [vmem:[%s813 + $0x4] sm:$0xf]
      %v816 = vld [vmem:[%s813 + $0x8] sm:$0xf]
      %v817 = vld [vmem:[%s813 + $0xc] sm:$0xf]
      %v818 = vld [vmem:[%s813 + $0x10] sm:$0xf]
      %v819 = vld [vmem:[%s813 + $0x14] sm:$0xf]
      %v820 = vld [vmem:[%s813 + $0x18] sm:$0xf]
      %v821 = vld [vmem:[%s813 + $0x1c] sm:$0xf]
      %v822 = vld [vmem:[%s813 + $0x20] sm:$0xf]
      %v823 = vld [vmem:[%s813 + $0x24] sm:$0xf]
      %v824 = vld [vmem:[%s813 + $0x28] sm:$0xf]
      %v825 = vld [vmem:[%s813 + $0x2c] sm:$0xf]
      %v826 = vld [vmem:[%s813 + $0x30] sm:$0xf]
      %v827 = vld [vmem:[%s813 + $0x34] sm:$0xf]
      %v828 = vld [vmem:[%s813 + $0x38] sm:$0xf]
      %v829 = vld [vmem:[%s813 + $0x3c] sm:$0xf]
      %v846 = vunpack.c.l.b16 %v814
      %v847 = vunpack.c.l.b16 %v815
      %v848 = vunpack.c.l.b16 %v816
      %v849 = vunpack.c.l.b16 %v817
      %v850 = vunpack.c.l.b16 %v818
      %v851 = vunpack.c.l.b16 %v819
      %v852 = vunpack.c.l.b16 %v820
      %v853 = vunpack.c.l.b16 %v821
      %v854 = vunpack.c.l.b16 %v822
      %v855 = vunpack.c.l.b16 %v823
      %v856 = vunpack.c.l.b16 %v824
      %v857 = vunpack.c.l.b16 %v825
      %v858 = vunpack.c.l.b16 %v826
      %v859 = vunpack.c.l.b16 %v827
      %v860 = vunpack.c.l.b16 %v828
      %v861 = vunpack.c.l.b16 %v829
      %v862 = vpack.c.b16 %v847, %v846
      %v863 = vpack.c.b16 %v849, %v848
      %v864 = vpack.c.b16 %v851, %v850
      %v865 = vpack.c.b16 %v853, %v852
      %v866 = vpack.c.b16 %v855, %v854
      %v867 = vpack.c.b16 %v857, %v856
      %v868 = vpack.c.b16 %v859, %v858
      %v869 = vpack.c.b16 %v861, %v860
      %878 = vmatprep.subr.bf16.mxu0 0
      %879 = vmatpush1.bf16.msra.mxu0 %v862
      %880 = vmatprep.subr.bf16.mxu0 0
      %881 = vmatpush1.bf16.msra.mxu0 %v863
      %882 = vmatprep.subr.bf16.mxu0 0
      %883 = vmatpush1.bf16.msra.mxu0 %v864
      %884 = vmatprep.subr.bf16.mxu0 0
      %885 = vmatpush1.bf16.msra.mxu0 %v865
      %886 = vmatprep.subr.bf16.mxu0 0
      %887 = vmatpush1.bf16.msra.mxu0 %v866
      %888 = vmatprep.subr.bf16.mxu0 0
      %889 = vmatpush1.bf16.msra.mxu0 %v867
      %890 = vmatprep.subr.bf16.mxu0 0
      %891 = vmatpush1.bf16.msra.mxu0 %v868
      %892 = vmatprep.subr.bf16.mxu0 0
      %893 = vmatpush1.bf16.msra.mxu0 %v869
      %894 = vmatprep.subr.bf16.mxu0 0
      %895 = vmatpush1.bf16.msra.mxu0 0
      %896 = vmatprep.subr.bf16.mxu0 0
      %897 = vmatpush1.bf16.msra.mxu0 0
      %898 = vmatprep.subr.bf16.mxu0 0
      %899 = vmatpush1.bf16.msra.mxu0 0
      %900 = vmatprep.subr.bf16.mxu0 0
      %901 = vmatpush1.bf16.msra.mxu0 0
      %902 = vmatprep.subr.bf16.mxu0 0
      %903 = vmatpush1.bf16.msra.mxu0 0
      %904 = vmatprep.subr.bf16.mxu0 0
      %905 = vmatpush1.bf16.msra.mxu0 0
      %906 = vmatprep.subr.bf16.mxu0 0
      %907 = vmatpush1.bf16.msra.mxu0 0
      %908 = vmatprep.subr.bf16.mxu0 0
      %909 = vmatpush1.bf16.msra.mxu0 0
      %910 = vmatprep.mubr.bf16.mxu0 0
      %911 = vmatmul.mubr.bf16.gmra.mrb[0].mxu0 %v812
      %v912 = vpop.f32.mrb[0].mxu0
      %v913 = vadd.f32 0.0, %v912
      %v914 = vpop.f32.mrb[0].mxu0
      %v915 = vpop.f32.mrb[0].mxu0
      %v916 = vpop.f32.mrb[0].mxu0
      %917 = vdwg.mxu0
      %v934 = vunpack.c.l.b16 %v795
      %v935 = vunpack.c.l.b16 %v796
      %v936 = vunpack.c.l.b16 %v797
      %v937 = vunpack.c.l.b16 %v798
      %v938 = vunpack.c.l.b16 %v799
      %v939 = vunpack.c.l.b16 %v800
      %v940 = vunpack.c.l.b16 %v801
      %v941 = vunpack.c.l.b16 %v802
      %v942 = vunpack.c.l.b16 %v803
      %v943 = vunpack.c.l.b16 %v804
      %v944 = vunpack.c.l.b16 %v805
      %v945 = vunpack.c.l.b16 %v806
      %v946 = vunpack.c.l.b16 %v807
      %v947 = vunpack.c.l.b16 %v808
      %v948 = vunpack.c.l.b16 %v809
      %v949 = vunpack.c.l.b16 %v810
      %v950 = vpack.c.b16 %v935, %v934
      %v951 = vpack.c.b16 %v937, %v936
      %v952 = vpack.c.b16 %v939, %v938
      %v953 = vpack.c.b16 %v941, %v940
      %v954 = vpack.c.b16 %v943, %v942
      %v955 = vpack.c.b16 %v945, %v944
      %v956 = vpack.c.b16 %v947, %v946
      %v957 = vpack.c.b16 %v949, %v948
      %966 = vmatprep.subr.bf16.mxu0 0
      %967 = vmatpush1.bf16.msra.mxu0 %v950
      %968 = vmatprep.subr.bf16.mxu0 0
      %969 = vmatpush1.bf16.msra.mxu0 %v951
      %970 = vmatprep.subr.bf16.mxu0 0
      %971 = vmatpush1.bf16.msra.mxu0 %v952
      %972 = vmatprep.subr.bf16.mxu0 0
      %973 = vmatpush1.bf16.msra.mxu0 %v953
      %974 = vmatprep.subr.bf16.mxu0 0
      %975 = vmatpush1.bf16.msra.mxu0 %v954
      %976 = vmatprep.subr.bf16.mxu0 0
      %977 = vmatpush1.bf16.msra.mxu0 %v955
      %978 = vmatprep.subr.bf16.mxu0 0
      %979 = vmatpush1.bf16.msra.mxu0 %v956
      %980 = vmatprep.subr.bf16.mxu0 0
      %981 = vmatpush1.bf16.msra.mxu0 %v957
      %982 = vmatprep.subr.bf16.mxu0 0
      %983 = vmatpush1.bf16.msra.mxu0 0
      %984 = vmatprep.subr.bf16.mxu0 0
      %985 = vmatpush1.bf16.msra.mxu0 0
      %986 = vmatprep.subr.bf16.mxu0 0
      %987 = vmatpush1.bf16.msra.mxu0 0
      %988 = vmatprep.subr.bf16.mxu0 0
      %989 = vmatpush1.bf16.msra.mxu0 0
      %990 = vmatprep.subr.bf16.mxu0 0
      %991 = vmatpush1.bf16.msra.mxu0 0
      %992 = vmatprep.subr.bf16.mxu0 0
      %993 = vmatpush1.bf16.msra.mxu0 0
      %994 = vmatprep.subr.bf16.mxu0 0
      %995 = vmatpush1.bf16.msra.mxu0 0
      %996 = vmatprep.subr.bf16.mxu0 0
      %997 = vmatpush1.bf16.msra.mxu0 0
      %998 = vmatprep.mubr.bf16.mxu0 0
      %999 = vmatmul.mubr.bf16.gmra.mrb[0].mxu0 %v794
      %v1000 = vpop.f32.mrb[0].mxu0
      %v1001 = vadd.f32 %v913, %v1000
      %v1002 = vpop.f32.mrb[0].mxu0
      %v1003 = vpop.f32.mrb[0].mxu0
      %v1004 = vpop.f32.mrb[0].mxu0
      %1005 = vdwg.mxu0
      %v1006 = vld [vmem:[#allocation3 + $0x9] sm:$0xff]
      %v1007 = vsel %vm683, %v1006, 0.0
      %v1008 = vpack.c.bf16 %v1007, %v1007
      %s1009 = scalar_lea.vmem %s3, 128
      %v1010 = vld [vmem:[%s1009] sm:$0xf]
      %v1011 = vld [vmem:[%s1009 + $0x4] sm:$0xf]
      %v1012 = vld [vmem:[%s1009 + $0x8] sm:$0xf]
      %v1013 = vld [vmem:[%s1009 + $0xc] sm:$0xf]
      %v1014 = vld [vmem:[%s1009 + $0x10] sm:$0xf]
      %v1015 = vld [vmem:[%s1009 + $0x14] sm:$0xf]
      %v1016 = vld [vmem:[%s1009 + $0x18] sm:$0xf]
      %v1017 = vld [vmem:[%s1009 + $0x1c] sm:$0xf]
      %v1018 = vld [vmem:[%s1009 + $0x20] sm:$0xf]
      %v1019 = vld [vmem:[%s1009 + $0x24] sm:$0xf]
      %v1020 = vld [vmem:[%s1009 + $0x28] sm:$0xf]
      %v1021 = vld [vmem:[%s1009 + $0x2c] sm:$0xf]
      %v1022 = vld [vmem:[%s1009 + $0x30] sm:$0xf]
      %v1023 = vld [vmem:[%s1009 + $0x34] sm:$0xf]
      %v1024 = vld [vmem:[%s1009 + $0x38] sm:$0xf]
      %v1025 = vld [vmem:[%s1009 + $0x3c] sm:$0xf]
      %v1042 = vunpack.c.l.b16 %v1010
      %v1043 = vunpack.c.l.b16 %v1011
      %v1044 = vunpack.c.l.b16 %v1012
      %v1045 = vunpack.c.l.b16 %v1013
      %v1046 = vunpack.c.l.b16 %v1014
      %v1047 = vunpack.c.l.b16 %v1015
      %v1048 = vunpack.c.l.b16 %v1016
      %v1049 = vunpack.c.l.b16 %v1017
      %v1050 = vunpack.c.l.b16 %v1018
      %v1051 = vunpack.c.l.b16 %v1019
      %v1052 = vunpack.c.l.b16 %v1020
      %v1053 = vunpack.c.l.b16 %v1021
      %v1054 = vunpack.c.l.b16 %v1022
      %v1055 = vunpack.c.l.b16 %v1023
      %v1056 = vunpack.c.l.b16 %v1024
      %v1057 = vunpack.c.l.b16 %v1025
      %v1058 = vpack.c.b16 %v1043, %v1042
      %v1059 = vpack.c.b16 %v1045, %v1044
      %v1060 = vpack.c.b16 %v1047, %v1046
      %v1061 = vpack.c.b16 %v1049, %v1048
      %v1062 = vpack.c.b16 %v1051, %v1050
      %v1063 = vpack.c.b16 %v1053, %v1052
      %v1064 = vpack.c.b16 %v1055, %v1054
      %v1065 = vpack.c.b16 %v1057, %v1056
      %1074 = vmatprep.subr.bf16.mxu0 0
      %1075 = vmatpush1.bf16.msra.mxu0 %v1058
      %1076 = vmatprep.subr.bf16.mxu0 0
      %1077 = vmatpush1.bf16.msra.mxu0 %v1059
      %1078 = vmatprep.subr.bf16.mxu0 0
      %1079 = vmatpush1.bf16.msra.mxu0 %v1060
      %1080 = vmatprep.subr.bf16.mxu0 0
      %1081 = vmatpush1.bf16.msra.mxu0 %v1061
      %1082 = vmatprep.subr.bf16.mxu0 0
      %1083 = vmatpush1.bf16.msra.mxu0 %v1062
      %1084 = vmatprep.subr.bf16.mxu0 0
      %1085 = vmatpush1.bf16.msra.mxu0 %v1063
      %1086 = vmatprep.subr.bf16.mxu0 0
      %1087 = vmatpush1.bf16.msra.mxu0 %v1064
      %1088 = vmatprep.subr.bf16.mxu0 0
      %1089 = vmatpush1.bf16.msra.mxu0 %v1065
      %1090 = vmatprep.subr.bf16.mxu0 0
      %1091 = vmatpush1.bf16.msra.mxu0 0
      %1092 = vmatprep.subr.bf16.mxu0 0
      %1093 = vmatpush1.bf16.msra.mxu0 0
      %1094 = vmatprep.subr.bf16.mxu0 0
      %1095 = vmatpush1.bf16.msra.mxu0 0
      %1096 = vmatprep.subr.bf16.mxu0 0
      %1097 = vmatpush1.bf16.msra.mxu0 0
      %1098 = vmatprep.subr.bf16.mxu0 0
      %1099 = vmatpush1.bf16.msra.mxu0 0
      %1100 = vmatprep.subr.bf16.mxu0 0
      %1101 = vmatpush1.bf16.msra.mxu0 0
      %1102 = vmatprep.subr.bf16.mxu0 0
      %1103 = vmatpush1.bf16.msra.mxu0 0
      %1104 = vmatprep.subr.bf16.mxu0 0
      %1105 = vmatpush1.bf16.msra.mxu0 0
      %1106 = vmatprep.mubr.bf16.mxu0 0
      %1107 = vmatmul.mubr.bf16.gmra.mrb[0].mxu0 %v1008
      %v1108 = vpop.f32.mrb[0].mxu0
      %v1109 = vadd.f32 0.0, %v1108
      %v1110 = vpop.f32.mrb[0].mxu0
      %v1111 = vpop.f32.mrb[0].mxu0
      %v1112 = vpop.f32.mrb[0].mxu0
      %1113 = vdwg.mxu0
      %v1114 = vadd.f32 %v1001, %v1109
      %v1115 = vadd.f32 %v791, %v1114
      %v1116 = vld [vmem:[%s4] sm:$0x1]
      %v1118 = vlaneseq
      %v1119 = vshrl.u32 %v1118, 7
      %v1120 = vsub.s32 0, %v1119
      %v1121 = vrot.slane %v1116, %v1120
      %v1123 = vadd.f32 %v1115, %v1121
      %vm1124 = vcmp.ge.f32.partialorder %v1123, 0.0
      %v1125 = vmul.f32 %v1123, 0.01
      %v1126 = vsel %vm1124, %v1123, %v1125
      %1127 = vst [vmem:[#allocation4] sm:$0xff] 0.0
      %1128 = vst [vmem:[#allocation4 + $0x8] sm:$0xff] 0.0
      %1129 = vst [vmem:[#allocation4 + $0x10] sm:$0xff] 0.0
      %1130 = vst [vmem:[#allocation4 + $0x8] sm:$0xff] %v1126
      %v1131 = vld [vmem:[#allocation4 + $0x7] sm:$0xff]
      %v1132 = vsel %vm467, %v1131, 0.0
      %v1133 = vpack.c.bf16 %v1132, %v1132
      %v1134 = vld [vmem:[%s5] sm:$0xf]
      %v1135 = vld [vmem:[%s5 + $0x4] sm:$0xf]
      %v1136 = vld [vmem:[%s5 + $0x8] sm:$0xf]
      %v1137 = vld [vmem:[%s5 + $0xc] sm:$0xf]
      %v1138 = vld [vmem:[%s5 + $0x10] sm:$0xf]
      %v1139 = vld [vmem:[%s5 + $0x14] sm:$0xf]
      %v1140 = vld [vmem:[%s5 + $0x18] sm:$0xf]
      %v1141 = vld [vmem:[%s5 + $0x1c] sm:$0xf]
      %v1142 = vld [vmem:[%s5 + $0x20] sm:$0xf]
      %v1143 = vld [vmem:[%s5 + $0x24] sm:$0xf]
      %v1144 = vld [vmem:[%s5 + $0x28] sm:$0xf]
      %v1145 = vld [vmem:[%s5 + $0x2c] sm:$0xf]
      %v1146 = vld [vmem:[%s5 + $0x30] sm:$0xf]
      %v1147 = vld [vmem:[%s5 + $0x34] sm:$0xf]
      %v1148 = vld [vmem:[%s5 + $0x38] sm:$0xf]
      %v1149 = vld [vmem:[%s5 + $0x3c] sm:$0xf]
      %v1150 = vld [vmem:[#allocation4 + $0x8] sm:$0xff]
      %v1151 = vpack.c.bf16 %v1150, %v1150
      %s1152 = scalar_lea.vmem %s5, 64
      %v1153 = vld [vmem:[%s1152] sm:$0xf]
      %v1154 = vld [vmem:[%s1152 + $0x4] sm:$0xf]
      %v1155 = vld [vmem:[%s1152 + $0x8] sm:$0xf]
      %v1156 = vld [vmem:[%s1152 + $0xc] sm:$0xf]
      %v1157 = vld [vmem:[%s1152 + $0x10] sm:$0xf]
      %v1158 = vld [vmem:[%s1152 + $0x14] sm:$0xf]
      %v1159 = vld [vmem:[%s1152 + $0x18] sm:$0xf]
      %v1160 = vld [vmem:[%s1152 + $0x1c] sm:$0xf]
      %v1161 = vld [vmem:[%s1152 + $0x20] sm:$0xf]
      %v1162 = vld [vmem:[%s1152 + $0x24] sm:$0xf]
      %v1163 = vld [vmem:[%s1152 + $0x28] sm:$0xf]
      %v1164 = vld [vmem:[%s1152 + $0x2c] sm:$0xf]
      %v1165 = vld [vmem:[%s1152 + $0x30] sm:$0xf]
      %v1166 = vld [vmem:[%s1152 + $0x34] sm:$0xf]
      %v1167 = vld [vmem:[%s1152 + $0x38] sm:$0xf]
      %v1168 = vld [vmem:[%s1152 + $0x3c] sm:$0xf]
      %v1185 = vunpack.c.l.b16 %v1153
      %v1186 = vunpack.c.l.b16 %v1154
      %v1187 = vunpack.c.l.b16 %v1155
      %v1188 = vunpack.c.l.b16 %v1156
      %v1189 = vunpack.c.l.b16 %v1157
      %v1190 = vunpack.c.l.b16 %v1158
      %v1191 = vunpack.c.l.b16 %v1159
      %v1192 = vunpack.c.l.b16 %v1160
      %v1193 = vunpack.c.l.b16 %v1161
      %v1194 = vunpack.c.l.b16 %v1162
      %v1195 = vunpack.c.l.b16 %v1163
      %v1196 = vunpack.c.l.b16 %v1164
      %v1197 = vunpack.c.l.b16 %v1165
      %v1198 = vunpack.c.l.b16 %v1166
      %v1199 = vunpack.c.l.b16 %v1167
      %v1200 = vunpack.c.l.b16 %v1168
      %v1201 = vpack.c.b16 %v1186, %v1185
      %v1202 = vpack.c.b16 %v1188, %v1187
      %v1203 = vpack.c.b16 %v1190, %v1189
      %v1204 = vpack.c.b16 %v1192, %v1191
      %v1205 = vpack.c.b16 %v1194, %v1193
      %v1206 = vpack.c.b16 %v1196, %v1195
      %v1207 = vpack.c.b16 %v1198, %v1197
      %v1208 = vpack.c.b16 %v1200, %v1199
      %1217 = vmatprep.subr.bf16.mxu0 0
      %1218 = vmatpush1.bf16.msra.mxu0 %v1201
      %1219 = vmatprep.subr.bf16.mxu0 0
      %1220 = vmatpush1.bf16.msra.mxu0 %v1202
      %1221 = vmatprep.subr.bf16.mxu0 0
      %1222 = vmatpush1.bf16.msra.mxu0 %v1203
      %1223 = vmatprep.subr.bf16.mxu0 0
      %1224 = vmatpush1.bf16.msra.mxu0 %v1204
      %1225 = vmatprep.subr.bf16.mxu0 0
      %1226 = vmatpush1.bf16.msra.mxu0 %v1205
      %1227 = vmatprep.subr.bf16.mxu0 0
      %1228 = vmatpush1.bf16.msra.mxu0 %v1206
      %1229 = vmatprep.subr.bf16.mxu0 0
      %1230 = vmatpush1.bf16.msra.mxu0 %v1207
      %1231 = vmatprep.subr.bf16.mxu0 0
      %1232 = vmatpush1.bf16.msra.mxu0 %v1208
      %1233 = vmatprep.subr.bf16.mxu0 0
      %1234 = vmatpush1.bf16.msra.mxu0 0
      %1235 = vmatprep.subr.bf16.mxu0 0
      %1236 = vmatpush1.bf16.msra.mxu0 0
      %1237 = vmatprep.subr.bf16.mxu0 0
      %1238 = vmatpush1.bf16.msra.mxu0 0
      %1239 = vmatprep.subr.bf16.mxu0 0
      %1240 = vmatpush1.bf16.msra.mxu0 0
      %1241 = vmatprep.subr.bf16.mxu0 0
      %1242 = vmatpush1.bf16.msra.mxu0 0
      %1243 = vmatprep.subr.bf16.mxu0 0
      %1244 = vmatpush1.bf16.msra.mxu0 0
      %1245 = vmatprep.subr.bf16.mxu0 0
      %1246 = vmatpush1.bf16.msra.mxu0 0
      %1247 = vmatprep.subr.bf16.mxu0 0
      %1248 = vmatpush1.bf16.msra.mxu0 0
      %1249 = vmatprep.mubr.bf16.mxu0 0
      %1250 = vmatmul.mubr.bf16.gmra.mrb[0].mxu0 %v1151
      %v1251 = vpop.f32.mrb[0].mxu0
      %v1252 = vadd.f32 0.0, %v1251
      %v1253 = vpop.f32.mrb[0].mxu0
      %v1254 = vpop.f32.mrb[0].mxu0
      %v1255 = vpop.f32.mrb[0].mxu0
      %1256 = vdwg.mxu0
      %v1273 = vunpack.c.l.b16 %v1134
      %v1274 = vunpack.c.l.b16 %v1135
      %v1275 = vunpack.c.l.b16 %v1136
      %v1276 = vunpack.c.l.b16 %v1137
      %v1277 = vunpack.c.l.b16 %v1138
      %v1278 = vunpack.c.l.b16 %v1139
      %v1279 = vunpack.c.l.b16 %v1140
      %v1280 = vunpack.c.l.b16 %v1141
      %v1281 = vunpack.c.l.b16 %v1142
      %v1282 = vunpack.c.l.b16 %v1143
      %v1283 = vunpack.c.l.b16 %v1144
      %v1284 = vunpack.c.l.b16 %v1145
      %v1285 = vunpack.c.l.b16 %v1146
      %v1286 = vunpack.c.l.b16 %v1147
      %v1287 = vunpack.c.l.b16 %v1148
      %v1288 = vunpack.c.l.b16 %v1149
      %v1289 = vpack.c.b16 %v1274, %v1273
      %v1290 = vpack.c.b16 %v1276, %v1275
      %v1291 = vpack.c.b16 %v1278, %v1277
      %v1292 = vpack.c.b16 %v1280, %v1279
      %v1293 = vpack.c.b16 %v1282, %v1281
      %v1294 = vpack.c.b16 %v1284, %v1283
      %v1295 = vpack.c.b16 %v1286, %v1285
      %v1296 = vpack.c.b16 %v1288, %v1287
      %1305 = vmatprep.subr.bf16.mxu0 0
      %1306 = vmatpush1.bf16.msra.mxu0 %v1289
      %1307 = vmatprep.subr.bf16.mxu0 0
      %1308 = vmatpush1.bf16.msra.mxu0 %v1290
      %1309 = vmatprep.subr.bf16.mxu0 0
      %1310 = vmatpush1.bf16.msra.mxu0 %v1291
      %1311 = vmatprep.subr.bf16.mxu0 0
      %1312 = vmatpush1.bf16.msra.mxu0 %v1292
      %1313 = vmatprep.subr.bf16.mxu0 0
      %1314 = vmatpush1.bf16.msra.mxu0 %v1293
      %1315 = vmatprep.subr.bf16.mxu0 0
      %1316 = vmatpush1.bf16.msra.mxu0 %v1294
      %1317 = vmatprep.subr.bf16.mxu0 0
      %1318 = vmatpush1.bf16.msra.mxu0 %v1295
      %1319 = vmatprep.subr.bf16.mxu0 0
      %1320 = vmatpush1.bf16.msra.mxu0 %v1296
      %1321 = vmatprep.subr.bf16.mxu0 0
      %1322 = vmatpush1.bf16.msra.mxu0 0
      %1323 = vmatprep.subr.bf16.mxu0 0
      %1324 = vmatpush1.bf16.msra.mxu0 0
      %1325 = vmatprep.subr.bf16.mxu0 0
      %1326 = vmatpush1.bf16.msra.mxu0 0
      %1327 = vmatprep.subr.bf16.mxu0 0
      %1328 = vmatpush1.bf16.msra.mxu0 0
      %1329 = vmatprep.subr.bf16.mxu0 0
      %1330 = vmatpush1.bf16.msra.mxu0 0
      %1331 = vmatprep.subr.bf16.mxu0 0
      %1332 = vmatpush1.bf16.msra.mxu0 0
      %1333 = vmatprep.subr.bf16.mxu0 0
      %1334 = vmatpush1.bf16.msra.mxu0 0
      %1335 = vmatprep.subr.bf16.mxu0 0
      %1336 = vmatpush1.bf16.msra.mxu0 0
      %1337 = vmatprep.mubr.bf16.mxu0 0
      %1338 = vmatmul.mubr.bf16.gmra.mrb[0].mxu0 %v1133
      %v1339 = vpop.f32.mrb[0].mxu0
      %v1340 = vadd.f32 %v1252, %v1339
      %v1341 = vpop.f32.mrb[0].mxu0
      %v1342 = vpop.f32.mrb[0].mxu0
      %v1343 = vpop.f32.mrb[0].mxu0
      %1344 = vdwg.mxu0
      %v1345 = vld [vmem:[#allocation4 + $0x9] sm:$0xff]
      %v1346 = vsel %vm683, %v1345, 0.0
      %v1347 = vpack.c.bf16 %v1346, %v1346
      %s1348 = scalar_lea.vmem %s5, 128
      %v1349 = vld [vmem:[%s1348] sm:$0xf]
      %v1350 = vld [vmem:[%s1348 + $0x4] sm:$0xf]
      %v1351 = vld [vmem:[%s1348 + $0x8] sm:$0xf]
      %v1352 = vld [vmem:[%s1348 + $0xc] sm:$0xf]
      %v1353 = vld [vmem:[%s1348 + $0x10] sm:$0xf]
      %v1354 = vld [vmem:[%s1348 + $0x14] sm:$0xf]
      %v1355 = vld [vmem:[%s1348 + $0x18] sm:$0xf]
      %v1356 = vld [vmem:[%s1348 + $0x1c] sm:$0xf]
      %v1357 = vld [vmem:[%s1348 + $0x20] sm:$0xf]
      %v1358 = vld [vmem:[%s1348 + $0x24] sm:$0xf]
      %v1359 = vld [vmem:[%s1348 + $0x28] sm:$0xf]
      %v1360 = vld [vmem:[%s1348 + $0x2c] sm:$0xf]
      %v1361 = vld [vmem:[%s1348 + $0x30] sm:$0xf]
      %v1362 = vld [vmem:[%s1348 + $0x34] sm:$0xf]
      %v1363 = vld [vmem:[%s1348 + $0x38] sm:$0xf]
      %v1364 = vld [vmem:[%s1348 + $0x3c] sm:$0xf]
      %v1381 = vunpack.c.l.b16 %v1349
      %v1382 = vunpack.c.l.b16 %v1350
      %v1383 = vunpack.c.l.b16 %v1351
      %v1384 = vunpack.c.l.b16 %v1352
      %v1385 = vunpack.c.l.b16 %v1353
      %v1386 = vunpack.c.l.b16 %v1354
      %v1387 = vunpack.c.l.b16 %v1355
      %v1388 = vunpack.c.l.b16 %v1356
      %v1389 = vunpack.c.l.b16 %v1357
      %v1390 = vunpack.c.l.b16 %v1358
      %v1391 = vunpack.c.l.b16 %v1359
      %v1392 = vunpack.c.l.b16 %v1360
      %v1393 = vunpack.c.l.b16 %v1361
      %v1394 = vunpack.c.l.b16 %v1362
      %v1395 = vunpack.c.l.b16 %v1363
      %v1396 = vunpack.c.l.b16 %v1364
      %v1397 = vpack.c.b16 %v1382, %v1381
      %v1398 = vpack.c.b16 %v1384, %v1383
      %v1399 = vpack.c.b16 %v1386, %v1385
      %v1400 = vpack.c.b16 %v1388, %v1387
      %v1401 = vpack.c.b16 %v1390, %v1389
      %v1402 = vpack.c.b16 %v1392, %v1391
      %v1403 = vpack.c.b16 %v1394, %v1393
      %v1404 = vpack.c.b16 %v1396, %v1395
      %1413 = vmatprep.subr.bf16.mxu0 0
      %1414 = vmatpush1.bf16.msra.mxu0 %v1397
      %1415 = vmatprep.subr.bf16.mxu0 0
      %1416 = vmatpush1.bf16.msra.mxu0 %v1398
      %1417 = vmatprep.subr.bf16.mxu0 0
      %1418 = vmatpush1.bf16.msra.mxu0 %v1399
      %1419 = vmatprep.subr.bf16.mxu0 0
      %1420 = vmatpush1.bf16.msra.mxu0 %v1400
      %1421 = vmatprep.subr.bf16.mxu0 0
      %1422 = vmatpush1.bf16.msra.mxu0 %v1401
      %1423 = vmatprep.subr.bf16.mxu0 0
      %1424 = vmatpush1.bf16.msra.mxu0 %v1402
      %1425 = vmatprep.subr.bf16.mxu0 0
      %1426 = vmatpush1.bf16.msra.mxu0 %v1403
      %1427 = vmatprep.subr.bf16.mxu0 0
      %1428 = vmatpush1.bf16.msra.mxu0 %v1404
      %1429 = vmatprep.subr.bf16.mxu0 0
      %1430 = vmatpush1.bf16.msra.mxu0 0
      %1431 = vmatprep.subr.bf16.mxu0 0
      %1432 = vmatpush1.bf16.msra.mxu0 0
      %1433 = vmatprep.subr.bf16.mxu0 0
      %1434 = vmatpush1.bf16.msra.mxu0 0
      %1435 = vmatprep.subr.bf16.mxu0 0
      %1436 = vmatpush1.bf16.msra.mxu0 0
      %1437 = vmatprep.subr.bf16.mxu0 0
      %1438 = vmatpush1.bf16.msra.mxu0 0
      %1439 = vmatprep.subr.bf16.mxu0 0
      %1440 = vmatpush1.bf16.msra.mxu0 0
      %1441 = vmatprep.subr.bf16.mxu0 0
      %1442 = vmatpush1.bf16.msra.mxu0 0
      %1443 = vmatprep.subr.bf16.mxu0 0
      %1444 = vmatpush1.bf16.msra.mxu0 0
      %1445 = vmatprep.mubr.bf16.mxu0 0
      %1446 = vmatmul.mubr.bf16.gmra.mrb[0].mxu0 %v1347
      %v1447 = vpop.f32.mrb[0].mxu0
      %v1448 = vadd.f32 0.0, %v1447
      %v1449 = vpop.f32.mrb[0].mxu0
      %v1450 = vpop.f32.mrb[0].mxu0
      %v1451 = vpop.f32.mrb[0].mxu0
      %1452 = vdwg.mxu0
      %v1453 = vadd.f32 %v1340, %v1448
      %v1454 = vld [vmem:[%s6] sm:$0x1]
      %v1456 = vlaneseq
      %v1457 = vshrl.u32 %v1456, 7
      %v1458 = vsub.s32 0, %v1457
      %v1459 = vrot.slane %v1454, %v1458
      %v1461 = vadd.f32 %v1453, %v1459
      %vm1462 = vcmp.ge.f32.partialorder %v1461, 0.0
      %v1463 = vmul.f32 %v1461, 0.01
      %v1464 = vsel %vm1462, %v1461, %v1463
      %1465 = vst [vmem:[%s439] sm:$0xff] %v1464
      %v1466 = vpack.c.bf16 %v1464, %v1464
      %v1467 = vld [vmem:[%s7] sm:$0xf]
      %v1468 = vld [vmem:[%s7 + $0x4] sm:$0xf]
      %v1469 = vld [vmem:[%s7 + $0x8] sm:$0xf]
      %v1470 = vld [vmem:[%s7 + $0xc] sm:$0xf]
      %v1471 = vld [vmem:[%s7 + $0x10] sm:$0xf]
      %v1472 = vld [vmem:[%s7 + $0x14] sm:$0xf]
      %v1473 = vld [vmem:[%s7 + $0x18] sm:$0xf]
      %v1474 = vld [vmem:[%s7 + $0x1c] sm:$0xf]
      %v1475 = vld [vmem:[%s7 + $0x20] sm:$0xf]
      %v1476 = vld [vmem:[%s7 + $0x24] sm:$0xf]
      %v1477 = vld [vmem:[%s7 + $0x28] sm:$0xf]
      %v1478 = vld [vmem:[%s7 + $0x2c] sm:$0xf]
      %v1479 = vld [vmem:[%s7 + $0x30] sm:$0xf]
      %v1480 = vld [vmem:[%s7 + $0x34] sm:$0xf]
      %v1481 = vld [vmem:[%s7 + $0x38] sm:$0xf]
      %v1482 = vld [vmem:[%s7 + $0x3c] sm:$0xf]
      %v1499 = vunpack.c.l.b16 %v1467
      %v1500 = vunpack.c.l.b16 %v1468
      %v1501 = vunpack.c.l.b16 %v1469
      %v1502 = vunpack.c.l.b16 %v1470
      %v1503 = vunpack.c.l.b16 %v1471
      %v1504 = vunpack.c.l.b16 %v1472
      %v1505 = vunpack.c.l.b16 %v1473
      %v1506 = vunpack.c.l.b16 %v1474
      %v1507 = vunpack.c.l.b16 %v1475
      %v1508 = vunpack.c.l.b16 %v1476
      %v1509 = vunpack.c.l.b16 %v1477
      %v1510 = vunpack.c.l.b16 %v1478
      %v1511 = vunpack.c.l.b16 %v1479
      %v1512 = vunpack.c.l.b16 %v1480
      %v1513 = vunpack.c.l.b16 %v1481
      %v1514 = vunpack.c.l.b16 %v1482
      %v1515 = vpack.c.b16 %v1500, %v1499
      %v1516 = vpack.c.b16 %v1502, %v1501
      %v1517 = vpack.c.b16 %v1504, %v1503
      %v1518 = vpack.c.b16 %v1506, %v1505
      %v1519 = vpack.c.b16 %v1508, %v1507
      %v1520 = vpack.c.b16 %v1510, %v1509
      %v1521 = vpack.c.b16 %v1512, %v1511
      %v1522 = vpack.c.b16 %v1514, %v1513
      %1531 = vmatprep.subr.bf16.mxu0 0
      %1532 = vmatpush1.bf16.msra.mxu0 %v1515
      %1533 = vmatprep.subr.bf16.mxu0 0
      %1534 = vmatpush1.bf16.msra.mxu0 %v1516
      %1535 = vmatprep.subr.bf16.mxu0 0
      %1536 = vmatpush1.bf16.msra.mxu0 %v1517
      %1537 = vmatprep.subr.bf16.mxu0 0
      %1538 = vmatpush1.bf16.msra.mxu0 %v1518
      %1539 = vmatprep.subr.bf16.mxu0 0
      %1540 = vmatpush1.bf16.msra.mxu0 %v1519
      %1541 = vmatprep.subr.bf16.mxu0 0
      %1542 = vmatpush1.bf16.msra.mxu0 %v1520
      %1543 = vmatprep.subr.bf16.mxu0 0
      %1544 = vmatpush1.bf16.msra.mxu0 %v1521
      %1545 = vmatprep.subr.bf16.mxu0 0
      %1546 = vmatpush1.bf16.msra.mxu0 %v1522
      %1547 = vmatprep.subr.bf16.mxu0 0
      %1548 = vmatpush1.bf16.msra.mxu0 0
      %1549 = vmatprep.subr.bf16.mxu0 0
      %1550 = vmatpush1.bf16.msra.mxu0 0
      %1551 = vmatprep.subr.bf16.mxu0 0
      %1552 = vmatpush1.bf16.msra.mxu0 0
      %1553 = vmatprep.subr.bf16.mxu0 0
      %1554 = vmatpush1.bf16.msra.mxu0 0
      %1555 = vmatprep.subr.bf16.mxu0 0
      %1556 = vmatpush1.bf16.msra.mxu0 0
      %1557 = vmatprep.subr.bf16.mxu0 0
      %1558 = vmatpush1.bf16.msra.mxu0 0
      %1559 = vmatprep.subr.bf16.mxu0 0
      %1560 = vmatpush1.bf16.msra.mxu0 0
      %1561 = vmatprep.subr.bf16.mxu0 0
      %1562 = vmatpush1.bf16.msra.mxu0 0
      %1563 = vmatprep.mubr.bf16.mxu0 0
      %1564 = vmatmul.mubr.bf16.gmra.mrb[0].mxu0 %v1466
      %v1565 = vpop.f32.mrb[0].mxu0
      %v1566 = vadd.f32 0.0, %v1565
      %v1567 = vpop.f32.mrb[0].mxu0
      %v1568 = vpop.f32.mrb[0].mxu0
      %v1569 = vpop.f32.mrb[0].mxu0
      %1570 = vdwg.mxu0
      %vm1571 = vcmp.ge.f32.partialorder %v1566, 0.0
      %v1572 = vmul.f32 %v1566, 0.01
      %v1573 = vsel %vm1571, %v1566, %v1572
      %vm1574 = vcmask 130048
      %1575 = vst.msk [vmem:[%s443] sm:$0xff] %vm1574, %v1573
      %v1576 = vld [vmem:[%s8] sm:$0xff]
      %v1577 = vld [vmem:[%s8 + $0x8] sm:$0xff]
      %v1578 = vld [vmem:[%s8 + $0x10] sm:$0xff]
      %v1579 = vld [vmem:[%s8 + $0x18] sm:$0xff]
      %v1580 = vld [vmem:[%s8 + $0x20] sm:$0xff]
      %v1581 = vld [vmem:[%s8 + $0x28] sm:$0xff]
      %v1582 = vld [vmem:[%s8 + $0x30] sm:$0xff]
      %v1583 = vld [vmem:[%s8 + $0x38] sm:$0xff]
      %v1584 = vld [vmem:[%s8 + $0x40] sm:$0xff]
      %v1585 = vld [vmem:[%s8 + $0x48] sm:$0xff]
      %v1586 = vld [vmem:[%s8 + $0x50] sm:$0xff]
      %v1587 = vld [vmem:[%s8 + $0x58] sm:$0xff]
      %v1588 = vld [vmem:[%s8 + $0x60] sm:$0xff]
      %v1589 = vld [vmem:[%s8 + $0x68] sm:$0xff]
      %v1590 = vld [vmem:[%s8 + $0x70] sm:$0xff]
      %v1591 = vld [vmem:[%s8 + $0x78] sm:$0xff]
      %v1592 = vld [vmem:[%s9] sm:$0x3]
      %v1594 = vlaneseq
      %v1595 = vshrl.u32 %v1594, 7
      %v1596 = vsub.s32 0, %v1595
      %v1597 = vrot.slane %v1592, %v1596
      %v1598 = vlaneseq
      %v1599 = vshrl.u32 %v1598, 7
      %v1600 = vsub.s32 1, %v1599
      %v1601 = vrot.slane %v1592, %v1600
      %v1620 = vunpack.c.l.b16 %v1576
      %v1621 = vunpack.c.h.b16 %v1576
      %v1622 = vunpack.c.l.b16 %v1577
      %v1623 = vunpack.c.h.b16 %v1577
      %v1624 = vunpack.c.l.b16 %v1578
      %v1625 = vunpack.c.h.b16 %v1578
      %v1626 = vunpack.c.l.b16 %v1579
      %v1627 = vunpack.c.h.b16 %v1579
      %v1628 = vunpack.c.l.b16 %v1580
      %v1629 = vunpack.c.h.b16 %v1580
      %v1630 = vunpack.c.l.b16 %v1581
      %v1631 = vunpack.c.h.b16 %v1581
      %v1632 = vunpack.c.l.b16 %v1582
      %v1633 = vunpack.c.h.b16 %v1582
      %v1634 = vunpack.c.l.b16 %v1583
      %v1635 = vunpack.c.h.b16 %v1583
      %v1636 = vunpack.c.l.b16 %v1584
      %v1637 = vunpack.c.h.b16 %v1584
      %v1638 = vunpack.c.l.b16 %v1585
      %v1639 = vunpack.c.h.b16 %v1585
      %v1640 = vunpack.c.l.b16 %v1586
      %v1641 = vunpack.c.h.b16 %v1586
      %v1642 = vunpack.c.l.b16 %v1587
      %v1643 = vunpack.c.h.b16 %v1587
      %v1644 = vunpack.c.l.b16 %v1588
      %v1645 = vunpack.c.h.b16 %v1588
      %v1646 = vunpack.c.l.b16 %v1589
      %v1647 = vunpack.c.h.b16 %v1589
      %v1648 = vunpack.c.l.b16 %v1590
      %v1649 = vunpack.c.h.b16 %v1590
      %v1650 = vunpack.c.l.b16 %v1591
      %v1651 = vunpack.c.h.b16 %v1591
      %v1652 = vpack.c.b16 %v1622, %v1620
      %v1653 = vpack.c.b16 %v1623, %v1621
      %v1654 = vpack.c.b16 %v1626, %v1624
      %v1655 = vpack.c.b16 %v1627, %v1625
      %v1656 = vpack.c.b16 %v1630, %v1628
      %v1657 = vpack.c.b16 %v1631, %v1629
      %v1658 = vpack.c.b16 %v1634, %v1632
      %v1659 = vpack.c.b16 %v1635, %v1633
      %v1660 = vpack.c.b16 %v1638, %v1636
      %v1661 = vpack.c.b16 %v1639, %v1637
      %v1662 = vpack.c.b16 %v1642, %v1640
      %v1663 = vpack.c.b16 %v1643, %v1641
      %v1664 = vpack.c.b16 %v1646, %v1644
      %v1665 = vpack.c.b16 %v1647, %v1645
      %v1666 = vpack.c.b16 %v1650, %v1648
      %v1667 = vpack.c.b16 %v1651, %v1649
      %1684 = vmatprep.subr.bf16.mxu0 %v1653
      %1685 = vmatpush1.bf16.msra.mxu0 %v1652
      %1686 = vmatprep.subr.bf16.mxu0 %v1655
      %1687 = vmatpush1.bf16.msra.mxu0 %v1654
      %1688 = vmatprep.subr.bf16.mxu0 %v1657
      %1689 = vmatpush1.bf16.msra.mxu0 %v1656
      %1690 = vmatprep.subr.bf16.mxu0 %v1659
      %1691 = vmatpush1.bf16.msra.mxu0 %v1658
      %1692 = vmatprep.subr.bf16.mxu0 %v1661
      %1693 = vmatpush1.bf16.msra.mxu0 %v1660
      %1694 = vmatprep.subr.bf16.mxu0 %v1663
      %1695 = vmatpush1.bf16.msra.mxu0 %v1662
      %1696 = vmatprep.subr.bf16.mxu0 %v1665
      %1697 = vmatpush1.bf16.msra.mxu0 %v1664
      %1698 = vmatprep.subr.bf16.mxu0 %v1667
      %1699 = vmatpush1.bf16.msra.mxu0 %v1666
      %1700 = vmatprep.subr.bf16.mxu0 0
      %1701 = vmatpush1.bf16.msra.mxu0 0
      %1702 = vmatprep.subr.bf16.mxu0 0
      %1703 = vmatpush1.bf16.msra.mxu0 0
      %1704 = vmatprep.subr.bf16.mxu0 0
      %1705 = vmatpush1.bf16.msra.mxu0 0
      %1706 = vmatprep.subr.bf16.mxu0 0
      %1707 = vmatpush1.bf16.msra.mxu0 0
      %1708 = vmatprep.subr.bf16.mxu0 0
      %1709 = vmatpush1.bf16.msra.mxu0 0
      %1710 = vmatprep.subr.bf16.mxu0 0
      %1711 = vmatpush1.bf16.msra.mxu0 0
      %1712 = vmatprep.subr.bf16.mxu0 0
      %1713 = vmatpush1.bf16.msra.mxu0 0
      %1714 = vmatprep.subr.bf16.mxu0 0
      %1715 = vmatpush1.bf16.msra.mxu0 0
      %1716 = vmatprep.mubr.bf16.mxu0 0
      %1717 = vmatmul.mubr.bf16.gmra.mrb[0].mxu0 %v1466
      %v1718 = vpop.f32.mrb[0].mxu0
      %v1719 = vadd.f32 %v1597, %v1718
      %v1720 = vpop.f32.mrb[0].mxu0
      %v1721 = vadd.f32 %v1601, %v1720
      %v1722 = vpop.f32.mrb[0].mxu0
      %v1723 = vpop.f32.mrb[0].mxu0
      %1724 = vdwg.mxu0
      %1725 = vst [vmem:[%s448] sm:$0xff] %v1719
      %1726 = vst [vmem:[%s448 + $0x8] sm:$0xff] %v1721
      %p1727 = scmp.lt.s32.totalorder %s24, 1
      %s1728 = scalar_select %p1727, %s24, 1
      %s1729 = smul.addr %s1728, 8
      %s1730 = scalar_lea.vmem %s10, %s1729
      %p1731 = scmp.lt.s32.totalorder %s24, 1
      %s1732 = scalar_select %p1731, %s24, 1
      %s1733 = smul.addr %s1732, 8
      %s1734 = scalar_lea.vmem %s11, %s1733
      %p1735 = scmp.lt.s32.totalorder %s24, 1
      %s1736 = scalar_select %p1735, %s24, 1
      %s1737 = smul.addr %s1736, 2
      %s1738 = smul.addr %s1737, 8
      %s1739 = scalar_lea.vmem %s12, %s1738
      // Predicated region
      $region61: #{decoder_ds_forward.7} parent=59 // pred_check
        %p1740 = pneg %p262
      $region62: #{decoder_ds_forward.7} parent=59 // pred_check_branch
        %1742 = sbr.rel (%p1740) target = $region64
      $region63: #{decoder_ds_forward.7} parent=59 // pred_region
        _
      $region64: #{decoder_ds_forward.7} parent=59 // pred_fallthru
        _
      // Predicated region
      $region65: #{decoder_ds_forward.7} parent=59 // pred_check
        %p1743 = pneg %p288
      $region66: #{decoder_ds_forward.7} parent=59 // pred_check_branch
        %1745 = sbr.rel (%p1743) target = $region68
      $region67: #{decoder_ds_forward.7} parent=59 // pred_region
        _
      $region68: #{decoder_ds_forward.7} parent=59 // pred_fallthru
        _
      // Predicated region
      $region69: #{decoder_ds_forward.7} parent=59 // pred_check
        %p1746 = pneg %p314
      $region70: #{decoder_ds_forward.7} parent=59 // pred_check_branch
        %1748 = sbr.rel (%p1746) target = $region72
      $region71: #{decoder_ds_forward.7} parent=59 // pred_region
        _
      $region72: #{decoder_ds_forward.7} parent=59 // pred_fallthru
        _
    $region60: #{decoder_ds_forward.7} parent=5 // pred_fallthru
      _
    %p1749 = scmp.le.s32.totalorder 2, %s19
    // Predicated region
    $region73: #{decoder_ds_forward.7} parent=5 // pred_check
      %p1750 = pneg %p1749
    $region74: #{decoder_ds_forward.7} parent=5 // pred_check_branch
      %1752 = sbr.rel (%p1750) target = $region76
    $region75: #{decoder_ds_forward.7} parent=5 // pred_region
      %s1753 = ssub.s32 %s19, 2
      // Predicated region
      $region77: #{decoder_ds_forward.7} parent=75 // pred_check
        %p1754 = pneg %p268
      $region78: #{decoder_ds_forward.7} parent=75 // pred_check_branch
        %1756 = sbr.rel (%p1754) target = $region80
      $region79: #{decoder_ds_forward.7} parent=75 // pred_region
        %p1757 = scmp.lt.s32.totalorder %s25, 1
        %s1758 = scalar_select %p1757, %s25, 1
        %s1759 = smul.addr %s1758, 8
        %s1760 = scalar_lea.vmem %s10, %s1759
      $region80: #{decoder_ds_forward.7} parent=75 // pred_fallthru
        _
      // Predicated region
      $region81: #{decoder_ds_forward.7} parent=75 // pred_check
        %p1761 = pneg %p294
      $region82: #{decoder_ds_forward.7} parent=75 // pred_check_branch
        %1763 = sbr.rel (%p1761) target = $region84
      $region83: #{decoder_ds_forward.7} parent=75 // pred_region
        %p1764 = scmp.lt.s32.totalorder %s25, 1
        %s1765 = scalar_select %p1764, %s25, 1
        %s1766 = smul.addr %s1765, 8
        %s1767 = scalar_lea.vmem %s11, %s1766
      $region84: #{decoder_ds_forward.7} parent=75 // pred_fallthru
        _
      // Predicated region
      $region85: #{decoder_ds_forward.7} parent=75 // pred_check
        %p1768 = pneg %p320
      $region86: #{decoder_ds_forward.7} parent=75 // pred_check_branch
        %1770 = sbr.rel (%p1768) target = $region88
      $region87: #{decoder_ds_forward.7} parent=75 // pred_region
        %p1771 = scmp.lt.s32.totalorder %s25, 1
        %s1772 = scalar_select %p1771, %s25, 1
        %s1773 = smul.addr %s1772, 2
        %s1774 = smul.addr %s1773, 8
        %s1775 = scalar_lea.vmem %s12, %s1774
      $region88: #{decoder_ds_forward.7} parent=75 // pred_fallthru
        _
    $region76: #{decoder_ds_forward.7} parent=5 // pred_fallthru
      _
  $region6: #{decoder_ds_forward.7} parent=0 // loop_footer
    %s23 = sadd.s32 1, %s19
  $region7: #{decoder_ds_forward.7} parent=0 // loop_footer_branch
    %18 = sbr.rel target = $region3
  $region8: #{decoder_ds_forward.7} parent=0 // loop_exit
    _

// kernel: decoder_ds_forward.8
$region0: #{decoder_ds_forward.8}
  #allocation0 [shape = 'u32[]', space=smem, size = 0x4, offset = 0x4, fixed_abs, tag = 'smem constant byte address 0x4 - core index']
  #allocation1 [shape = 'u32[144,128]{1,0:T(1,128)}', space=vmem, size = 0x12000, scoped, tag = 'internal scratch']
  #allocation2 [shape = 'f32[32,128]{1,0:T(8,128)}', space=vmem, size = 0x4000, scoped, tag = 'scratch operand']
  #allocation3 [shape = 'f32[32,128]{1,0:T(8,128)}', space=vmem, size = 0x4000, scoped, tag = 'scratch operand']
  #allocation4 [shape = 'f32[32,128]{1,0:T(8,128)}', space=vmem, size = 0x4000, scoped, tag = 'scratch operand']
  %s0 = inlined_call_operand.vmem [shape: f32[32,128], index: 0, kind: input, shape index: {}]
  %s1 = inlined_call_operand.vmem [shape: f32[32,128], index: 1, kind: input, shape index: {}]
  %s2 = inlined_call_operand.vmem [shape: bf16[3,128,128], index: 2, kind: input, shape index: {}]
  %s3 = inlined_call_operand.vmem [shape: bf16[3,128,128], index: 3, kind: input, shape index: {}]
  %s4 = inlined_call_operand.vmem [shape: f32[1,128], index: 4, kind: input, shape index: {}]
  %s5 = inlined_call_operand.vmem [shape: bf16[3,128,128], index: 5, kind: input, shape index: {}]
  %s6 = inlined_call_operand.vmem [shape: f32[1,128], index: 6, kind: input, shape index: {}]
  %s7 = inlined_call_operand.vmem [shape: bf16[128,32], index: 7, kind: input, shape index: {}]
  %s8 = inlined_call_operand.vmem [shape: bf16[128,256], index: 8, kind: input, shape index: {}]
  %s9 = inlined_call_operand.vmem [shape: f32[1,256], index: 9, kind: input, shape index: {}]
  %s10 = inlined_call_operand.vmem [shape: f32[32,128], index: 10, kind: output, shape index: {0}]
  %s11 = inlined_call_operand.vmem [shape: f32[32,32], index: 11, kind: output, shape index: {1}]
  %s12 = inlined_call_operand.vmem [shape: f32[32,256], index: 12, kind: output, shape index: {2}]
  %13 = xla_tuple %s10, %s11, %s12
  %s14 = sld [smem:[#allocation0]]
  $region89: #{decoder_ds_forward.8} parent=0
    _
  %s16 = ssub.s32 1, %s14
  %s17 = scalar_select 0, %s16, %s14
  loop: start=0, step=1, limit=4
  $region2: #{decoder_ds_forward.8} parent=0 // loop_pre_header
    _
  $region3: #{decoder_ds_forward.8} parent=0 // loop_header
    %s19 = sphi 0, %s23
    %p20 = scmp.ge.s32.totalorder %s19, 4
    %s29 = sphi 0, %s31
    %s32 = sphi 0, %s29
    %s33 = sphi 0, %s32
    %s49 = sphi 0, %s33
    %s55 = sphi 0, %s57
    %s58 = sphi 0, %s55
    %s59 = sphi 0, %s58
    %s75 = sphi 0, %s59
    %s79 = sphi 0, %s79
    %s81 = sphi 0, %s79
    %s82 = sphi 0, %s81
    %s96 = sphi 0, %s82
    %s100 = sphi 0, %s100
    %s102 = sphi 0, %s100
    %s103 = sphi 0, %s102
    %s117 = sphi 0, %s103
    %s121 = sphi 0, %s121
    %s123 = sphi 0, %s121
    %s124 = sphi 0, %s123
    %s138 = sphi 0, %s124
    %s142 = sphi 0, %s142
    %s144 = sphi 0, %s142
    %s145 = sphi 0, %s144
    %s159 = sphi 0, %s145
    %s163 = sphi 0, %s163
    %s165 = sphi 0, %s163
    %s166 = sphi 0, %s165
    %s180 = sphi 0, %s166
    %s184 = sphi 0, %s184
    %s186 = sphi 0, %s184
    %s187 = sphi 0, %s186
    %s201 = sphi 0, %s187
    %s205 = sphi 0, %s205
    %s207 = sphi 0, %s205
    %s208 = sphi 0, %s207
    %s222 = sphi 0, %s208
    %s226 = sphi 0, %s226
    %s228 = sphi 0, %s226
    %s229 = sphi 0, %s228
    %s243 = sphi 0, %s229
    %s249 = sphi 0, %s251
    %s252 = sphi 0, %s249
    %s253 = sphi 0, %s252
    %s269 = sphi 0, %s253
    %s275 = sphi 0, %s277
    %s278 = sphi 0, %s275
    %s279 = sphi 0, %s278
    %s295 = sphi 0, %s279
    %s301 = sphi 0, %s303
    %s304 = sphi 0, %s301
    %s305 = sphi 0, %s304
    %s321 = sphi 0, %s305
  $region4: #{decoder_ds_forward.8} parent=0 // loop_header_branch
    %22 = sbr.rel (%p20) target = $region8
  $region5: #{decoder_ds_forward.8} parent=0 // loop_body
    %s24 = ssub.s32 %s19, 1
    %s25 = ssub.s32 %s19, 2
    %s26 = sadd.s32 %s19, 1
    %s27 = ssub.s32 %s19, %s26
    %p28 = scmp.eq.s32.totalorder %s27, 0
    %s30 = sadd.s32 %s29, 1
    %s31 = scalar_select %p28, %s29, %s30
    %p34 = pneg %p28
    %p35 = scmp.eq.s32.totalorder %s19, 1
    %p36 = por %p34, %p35
    %p37 = scmp.ne.s32.totalorder %s29, %s32
    %p38 = scmp.eq.s32.totalorder %s19, 0
    %p39 = por %p37, %p38
    %p40 = scmp.ne.s32.totalorder %s29, %s32
    %p41 = scmp.eq.s32.totalorder %s24, 1
    %p42 = por %p40, %p41
    %p43 = scmp.ne.s32.totalorder %s32, %s33
    %p44 = scmp.eq.s32.totalorder %s24, 0
    %p45 = por %p43, %p44
    %p46 = scmp.ne.s32.totalorder %s32, %s33
    %p47 = scmp.eq.s32.totalorder %s25, 1
    %p48 = por %p46, %p47
    %p50 = scmp.ne.s32.totalorder %s33, %s49
    %p51 = scmp.eq.s32.totalorder %s25, 0
    %p52 = por %p50, %p51
    %s53 = ssub.s32 %s19, %s26
    %p54 = scmp.eq.s32.totalorder %s53, 0
    %s56 = sadd.s32 %s55, 1
    %s57 = scalar_select %p54, %s55, %s56
    %p60 = pneg %p54
    %p61 = scmp.eq.s32.totalorder %s19, 1
    %p62 = por %p60, %p61
    %p63 = scmp.ne.s32.totalorder %s55, %s58
    %p64 = scmp.eq.s32.totalorder %s19, 0
    %p65 = por %p63, %p64
    %p66 = scmp.ne.s32.totalorder %s55, %s58
    %p67 = scmp.eq.s32.totalorder %s24, 1
    %p68 = por %p66, %p67
    %p69 = scmp.ne.s32.totalorder %s58, %s59
    %p70 = scmp.eq.s32.totalorder %s24, 0
    %p71 = por %p69, %p70
    %p72 = scmp.ne.s32.totalorder %s58, %s59
    %p73 = scmp.eq.s32.totalorder %s25, 1
    %p74 = por %p72, %p73
    %p76 = scmp.ne.s32.totalorder %s59, %s75
    %p77 = scmp.eq.s32.totalorder %s25, 0
    %p78 = por %p76, %p77
    %s80 = sadd.s32 %s79, 1
    %p83 = scmp.eq.s32.totalorder %s19, 1
    %p84 = scmp.ne.s32.totalorder %s79, %s81
    %p85 = scmp.eq.s32.totalorder %s19, 0
    %p86 = por %p84, %p85
    %p87 = scmp.ne.s32.totalorder %s79, %s81
    %p88 = scmp.eq.s32.totalorder %s24, 1
    %p89 = por %p87, %p88
    %p90 = scmp.ne.s32.totalorder %s81, %s82
    %p91 = scmp.eq.s32.totalorder %s24, 0
    %p92 = por %p90, %p91
    %p93 = scmp.ne.s32.totalorder %s81, %s82
    %p94 = scmp.eq.s32.totalorder %s25, 1
    %p95 = por %p93, %p94
    %p97 = scmp.ne.s32.totalorder %s82, %s96
    %p98 = scmp.eq.s32.totalorder %s25, 0
    %p99 = por %p97, %p98
    %s101 = sadd.s32 %s100, 1
    %p104 = scmp.eq.s32.totalorder %s19, 1
    %p105 = scmp.ne.s32.totalorder %s100, %s102
    %p106 = scmp.eq.s32.totalorder %s19, 0
    %p107 = por %p105, %p106
    %p108 = scmp.ne.s32.totalorder %s100, %s102
    %p109 = scmp.eq.s32.totalorder %s24, 1
    %p110 = por %p108, %p109
    %p111 = scmp.ne.s32.totalorder %s102, %s103
    %p112 = scmp.eq.s32.totalorder %s24, 0
    %p113 = por %p111, %p112
    %p114 = scmp.ne.s32.totalorder %s102, %s103
    %p115 = scmp.eq.s32.totalorder %s25, 1
    %p116 = por %p114, %p115
    %p118 = scmp.ne.s32.totalorder %s103, %s117
    %p119 = scmp.eq.s32.totalorder %s25, 0
    %p120 = por %p118, %p119
    %s122 = sadd.s32 %s121, 1
    %p125 = scmp.eq.s32.totalorder %s19, 1
    %p126 = scmp.ne.s32.totalorder %s121, %s123
    %p127 = scmp.eq.s32.totalorder %s19, 0
    %p128 = por %p126, %p127
    %p129 = scmp.ne.s32.totalorder %s121, %s123
    %p130 = scmp.eq.s32.totalorder %s24, 1
    %p131 = por %p129, %p130
    %p132 = scmp.ne.s32.totalorder %s123, %s124
    %p133 = scmp.eq.s32.totalorder %s24, 0
    %p134 = por %p132, %p133
    %p135 = scmp.ne.s32.totalorder %s123, %s124
    %p136 = scmp.eq.s32.totalorder %s25, 1
    %p137 = por %p135, %p136
    %p139 = scmp.ne.s32.totalorder %s124, %s138
    %p140 = scmp.eq.s32.totalorder %s25, 0
    %p141 = por %p139, %p140
    %s143 = sadd.s32 %s142, 1
    %p146 = scmp.eq.s32.totalorder %s19, 1
    %p147 = scmp.ne.s32.totalorder %s142, %s144
    %p148 = scmp.eq.s32.totalorder %s19, 0
    %p149 = por %p147, %p148
    %p150 = scmp.ne.s32.totalorder %s142, %s144
    %p151 = scmp.eq.s32.totalorder %s24, 1
    %p152 = por %p150, %p151
    %p153 = scmp.ne.s32.totalorder %s144, %s145
    %p154 = scmp.eq.s32.totalorder %s24, 0
    %p155 = por %p153, %p154
    %p156 = scmp.ne.s32.totalorder %s144, %s145
    %p157 = scmp.eq.s32.totalorder %s25, 1
    %p158 = por %p156, %p157
    %p160 = scmp.ne.s32.totalorder %s145, %s159
    %p161 = scmp.eq.s32.totalorder %s25, 0
    %p162 = por %p160, %p161
    %s164 = sadd.s32 %s163, 1
    %p167 = scmp.eq.s32.totalorder %s19, 1
    %p168 = scmp.ne.s32.totalorder %s163, %s165
    %p169 = scmp.eq.s32.totalorder %s19, 0
    %p170 = por %p168, %p169
    %p171 = scmp.ne.s32.totalorder %s163, %s165
    %p172 = scmp.eq.s32.totalorder %s24, 1
    %p173 = por %p171, %p172
    %p174 = scmp.ne.s32.totalorder %s165, %s166
    %p175 = scmp.eq.s32.totalorder %s24, 0
    %p176 = por %p174, %p175
    %p177 = scmp.ne.s32.totalorder %s165, %s166
    %p178 = scmp.eq.s32.totalorder %s25, 1
    %p179 = por %p177, %p178
    %p181 = scmp.ne.s32.totalorder %s166, %s180
    %p182 = scmp.eq.s32.totalorder %s25, 0
    %p183 = por %p181, %p182
    %s185 = sadd.s32 %s184, 1
    %p188 = scmp.eq.s32.totalorder %s19, 1
    %p189 = scmp.ne.s32.totalorder %s184, %s186
    %p190 = scmp.eq.s32.totalorder %s19, 0
    %p191 = por %p189, %p190
    %p192 = scmp.ne.s32.totalorder %s184, %s186
    %p193 = scmp.eq.s32.totalorder %s24, 1
    %p194 = por %p192, %p193
    %p195 = scmp.ne.s32.totalorder %s186, %s187
    %p196 = scmp.eq.s32.totalorder %s24, 0
    %p197 = por %p195, %p196
    %p198 = scmp.ne.s32.totalorder %s186, %s187
    %p199 = scmp.eq.s32.totalorder %s25, 1
    %p200 = por %p198, %p199
    %p202 = scmp.ne.s32.totalorder %s187, %s201
    %p203 = scmp.eq.s32.totalorder %s25, 0
    %p204 = por %p202, %p203
    %s206 = sadd.s32 %s205, 1
    %p209 = scmp.eq.s32.totalorder %s19, 1
    %p210 = scmp.ne.s32.totalorder %s205, %s207
    %p211 = scmp.eq.s32.totalorder %s19, 0
    %p212 = por %p210, %p211
    %p213 = scmp.ne.s32.totalorder %s205, %s207
    %p214 = scmp.eq.s32.totalorder %s24, 1
    %p215 = por %p213, %p214
    %p216 = scmp.ne.s32.totalorder %s207, %s208
    %p217 = scmp.eq.s32.totalorder %s24, 0
    %p218 = por %p216, %p217
    %p219 = scmp.ne.s32.totalorder %s207, %s208
    %p220 = scmp.eq.s32.totalorder %s25, 1
    %p221 = por %p219, %p220
    %p223 = scmp.ne.s32.totalorder %s208, %s222
    %p224 = scmp.eq.s32.totalorder %s25, 0
    %p225 = por %p223, %p224
    %s227 = sadd.s32 %s226, 1
    %p230 = scmp.eq.s32.totalorder %s19, 1
    %p231 = scmp.ne.s32.totalorder %s226, %s228
    %p232 = scmp.eq.s32.totalorder %s19, 0
    %p233 = por %p231, %p232
    %p234 = scmp.ne.s32.totalorder %s226, %s228
    %p235 = scmp.eq.s32.totalorder %s24, 1
    %p236 = por %p234, %p235
    %p237 = scmp.ne.s32.totalorder %s228, %s229
    %p238 = scmp.eq.s32.totalorder %s24, 0
    %p239 = por %p237, %p238
    %p240 = scmp.ne.s32.totalorder %s228, %s229
    %p241 = scmp.eq.s32.totalorder %s25, 1
    %p242 = por %p240, %p241
    %p244 = scmp.ne.s32.totalorder %s229, %s243
    %p245 = scmp.eq.s32.totalorder %s25, 0
    %p246 = por %p244, %p245
    %s247 = ssub.s32 %s19, %s26
    %p248 = scmp.eq.s32.totalorder %s247, 0
    %s250 = sadd.s32 %s249, 1
    %s251 = scalar_select %p248, %s249, %s250
    %p254 = pneg %p248
    %p255 = scmp.eq.s32.totalorder %s19, 1
    %p256 = por %p254, %p255
    %p257 = scmp.ne.s32.totalorder %s249, %s252
    %p258 = scmp.eq.s32.totalorder %s19, 0
    %p259 = por %p257, %p258
    %p260 = scmp.ne.s32.totalorder %s249, %s252
    %p261 = scmp.eq.s32.totalorder %s24, 1
    %p262 = por %p260, %p261
    %p263 = scmp.ne.s32.totalorder %s252, %s253
    %p264 = scmp.eq.s32.totalorder %s24, 0
    %p265 = por %p263, %p264
    %p266 = scmp.ne.s32.totalorder %s252, %s253
    %p267 = scmp.eq.s32.totalorder %s25, 1
    %p268 = por %p266, %p267
    %p270 = scmp.ne.s32.totalorder %s253, %s269
    %p271 = scmp.eq.s32.totalorder %s25, 0
    %p272 = por %p270, %p271
    %s273 = ssub.s32 %s19, %s26
    %p274 = scmp.eq.s32.totalorder %s273, 0
    %s276 = sadd.s32 %s275, 1
    %s277 = scalar_select %p274, %s275, %s276
    %p280 = pneg %p274
    %p281 = scmp.eq.s32.totalorder %s19, 1
    %p282 = por %p280, %p281
    %p283 = scmp.ne.s32.totalorder %s275, %s278
    %p284 = scmp.eq.s32.totalorder %s19, 0
    %p285 = por %p283, %p284
    %p286 = scmp.ne.s32.totalorder %s275, %s278
    %p287 = scmp.eq.s32.totalorder %s24, 1
    %p288 = por %p286, %p287
    %p289 = scmp.ne.s32.totalorder %s278, %s279
    %p290 = scmp.eq.s32.totalorder %s24, 0
    %p291 = por %p289, %p290
    %p292 = scmp.ne.s32.totalorder %s278, %s279
    %p293 = scmp.eq.s32.totalorder %s25, 1
    %p294 = por %p292, %p293
    %p296 = scmp.ne.s32.totalorder %s279, %s295
    %p297 = scmp.eq.s32.totalorder %s25, 0
    %p298 = por %p296, %p297
    %s299 = ssub.s32 %s19, %s26
    %p300 = scmp.eq.s32.totalorder %s299, 0
    %s302 = sadd.s32 %s301, 1
    %s303 = scalar_select %p300, %s301, %s302
    %p306 = pneg %p300
    %p307 = scmp.eq.s32.totalorder %s19, 1
    %p308 = por %p306, %p307
    %p309 = scmp.ne.s32.totalorder %s301, %s304
    %p310 = scmp.eq.s32.totalorder %s19, 0
    %p311 = por %p309, %p310
    %p312 = scmp.ne.s32.totalorder %s301, %s304
    %p313 = scmp.eq.s32.totalorder %s24, 1
    %p314 = por %p312, %p313
    %p315 = scmp.ne.s32.totalorder %s304, %s305
    %p316 = scmp.eq.s32.totalorder %s24, 0
    %p317 = por %p315, %p316
    %p318 = scmp.ne.s32.totalorder %s304, %s305
    %p319 = scmp.eq.s32.totalorder %s25, 1
    %p320 = por %p318, %p319
    %p322 = scmp.ne.s32.totalorder %s305, %s321
    %p323 = scmp.eq.s32.totalorder %s25, 0
    %p324 = por %p322, %p323
    %p325 = scmp.le.s32.totalorder 1, %s19
    %p326 = scmp.lt.s32.totalorder %s19, 3
    %p327 = pnand %p325, %p326
    %p328 = pneg %p327
    // Predicated region
    $region9: #{decoder_ds_forward.8} parent=5 // pred_check
      _
    $region10: #{decoder_ds_forward.8} parent=5 // pred_check_branch
      %330 = sbr.rel (%p327) target = $region12
    $region11: #{decoder_ds_forward.8} parent=5 // pred_region
      %s331 = ssub.s32 %s19, 1
      // Predicated region
      $region13: #{decoder_ds_forward.8} parent=11 // pred_check
        %p332 = pneg %p92
      $region14: #{decoder_ds_forward.8} parent=11 // pred_check_branch
        %334 = sbr.rel (%p332) target = $region16
      $region15: #{decoder_ds_forward.8} parent=11 // pred_region
        _
      $region16: #{decoder_ds_forward.8} parent=11 // pred_fallthru
        _
      // Predicated region
      $region17: #{decoder_ds_forward.8} parent=11 // pred_check
        %p335 = pneg %p113
      $region18: #{decoder_ds_forward.8} parent=11 // pred_check_branch
        %337 = sbr.rel (%p335) target = $region20
      $region19: #{decoder_ds_forward.8} parent=11 // pred_region
        _
      $region20: #{decoder_ds_forward.8} parent=11 // pred_fallthru
        _
      // Predicated region
      $region21: #{decoder_ds_forward.8} parent=11 // pred_check
        %p338 = pneg %p134
      $region22: #{decoder_ds_forward.8} parent=11 // pred_check_branch
        %340 = sbr.rel (%p338) target = $region24
      $region23: #{decoder_ds_forward.8} parent=11 // pred_region
        _
      $region24: #{decoder_ds_forward.8} parent=11 // pred_fallthru
        _
      // Predicated region
      $region25: #{decoder_ds_forward.8} parent=11 // pred_check
        %p341 = pneg %p155
      $region26: #{decoder_ds_forward.8} parent=11 // pred_check_branch
        %343 = sbr.rel (%p341) target = $region28
      $region27: #{decoder_ds_forward.8} parent=11 // pred_region
        _
      $region28: #{decoder_ds_forward.8} parent=11 // pred_fallthru
        _
      // Predicated region
      $region29: #{decoder_ds_forward.8} parent=11 // pred_check
        %p344 = pneg %p176
      $region30: #{decoder_ds_forward.8} parent=11 // pred_check_branch
        %346 = sbr.rel (%p344) target = $region32
      $region31: #{decoder_ds_forward.8} parent=11 // pred_region
        _
      $region32: #{decoder_ds_forward.8} parent=11 // pred_fallthru
        _
      // Predicated region
      $region33: #{decoder_ds_forward.8} parent=11 // pred_check
        %p347 = pneg %p197
      $region34: #{decoder_ds_forward.8} parent=11 // pred_check_branch
        %349 = sbr.rel (%p347) target = $region36
      $region35: #{decoder_ds_forward.8} parent=11 // pred_region
        _
      $region36: #{decoder_ds_forward.8} parent=11 // pred_fallthru
        _
      // Predicated region
      $region37: #{decoder_ds_forward.8} parent=11 // pred_check
        %p350 = pneg %p218
      $region38: #{decoder_ds_forward.8} parent=11 // pred_check_branch
        %352 = sbr.rel (%p350) target = $region40
      $region39: #{decoder_ds_forward.8} parent=11 // pred_region
        _
      $region40: #{decoder_ds_forward.8} parent=11 // pred_fallthru
        _
      // Predicated region
      $region41: #{decoder_ds_forward.8} parent=11 // pred_check
        %p353 = pneg %p239
      $region42: #{decoder_ds_forward.8} parent=11 // pred_check_branch
        %355 = sbr.rel (%p353) target = $region44
      $region43: #{decoder_ds_forward.8} parent=11 // pred_region
        _
      $region44: #{decoder_ds_forward.8} parent=11 // pred_fallthru
        _
    $region12: #{decoder_ds_forward.8} parent=5 // pred_fallthru
      _
    %p356 = scmp.lt.s32.totalorder %s19, 2
    // Predicated region
    $region45: #{decoder_ds_forward.8} parent=5 // pred_check
      %p357 = pneg %p356
    $region46: #{decoder_ds_forward.8} parent=5 // pred_check_branch
      %359 = sbr.rel (%p357) target = $region48
    $region47: #{decoder_ds_forward.8} parent=5 // pred_region
      // Predicated region
      $region49: #{decoder_ds_forward.8} parent=47 // pred_check
        %p360 = pneg %p39
      $region50: #{decoder_ds_forward.8} parent=47 // pred_check_branch
        %362 = sbr.rel (%p360) target = $region52
      $region51: #{decoder_ds_forward.8} parent=47 // pred_region
        %s363 = smul.u32 2, %s19
        %p364 = scmp.lt.s32.totalorder %s363, 3
        %s365 = scalar_select %p364, %s363, 3
        %s366 = smul.addr %s365, 8
        %s367 = scalar_lea.vmem %s0, %s366
        %s368 = smul.u32 2, %s19
      $region52: #{decoder_ds_forward.8} parent=47 // pred_fallthru
        _
      // Predicated region
      $region53: #{decoder_ds_forward.8} parent=47 // pred_check
        %p369 = pneg %p65
      $region54: #{decoder_ds_forward.8} parent=47 // pred_check_branch
        %371 = sbr.rel (%p369) target = $region56
      $region55: #{decoder_ds_forward.8} parent=47 // pred_region
        %s372 = smul.u32 2, %s19
        %p373 = scmp.lt.s32.totalorder %s372, 3
        %s374 = scalar_select %p373, %s372, 3
        %s375 = smul.addr %s374, 8
        %s376 = scalar_lea.vmem %s1, %s375
        %s377 = smul.u32 2, %s19
      $region56: #{decoder_ds_forward.8} parent=47 // pred_fallthru
        _
    $region48: #{decoder_ds_forward.8} parent=5 // pred_fallthru
      _
    %p378 = scmp.le.s32.totalorder 1, %s19
    %p379 = scmp.lt.s32.totalorder %s19, 3
    %p380 = pnand %p378, %p379
    %p381 = pneg %p380
    // Predicated region
    $region57: #{decoder_ds_forward.8} parent=5 // pred_check
      _
    $region58: #{decoder_ds_forward.8} parent=5 // pred_check_branch
      %383 = sbr.rel (%p380) target = $region60
    $region59: #{decoder_ds_forward.8} parent=5 // pred_region
      %s384 = ssub.s32 %s19, 1
      %s385 = smul.u32 2, %s24
      %p386 = scmp.lt.s32.totalorder %s385, 3
      %s387 = scalar_select %p386, %s385, 3
      %s388 = smul.addr %s387, 8
      %s389 = scalar_lea.vmem %s0, %s388
      %p390 = pneg %p45
      %p391 = pneg %p42
      %s392 = smul.u32 2, %s24
      %p393 = scmp.lt.s32.totalorder %s392, 3
      %s394 = scalar_select %p393, %s392, 3
      %s395 = smul.addr %s394, 8
      %s396 = scalar_lea.vmem %s1, %s395
      %p397 = pneg %p71
      %p398 = pneg %p68
      %p399 = pneg %p92
      %p400 = pneg %p89
      %p401 = pneg %p113
      %p402 = pneg %p110
      %p403 = pneg %p134
      %p404 = pneg %p131
      %p405 = pneg %p155
      %p406 = pneg %p152
      %p407 = pneg %p176
      %p408 = pneg %p173
      %p409 = pneg %p197
      %p410 = pneg %p194
      %p411 = pneg %p218
      %p412 = pneg %p215
      %p413 = pneg %p239
      %p414 = pneg %p236
      %p415 = pneg %p265
      %p416 = pneg %p262
      %s417 = smul.u32 2, %s24
      %p418 = scmp.lt.s32.totalorder %s417, 3
      %s419 = scalar_select %p418, %s417, 3
      %s420 = smul.addr %s419, 8
      %s421 = scalar_lea.vmem %s10, %s420
      %p422 = pneg %p291
      %p423 = pneg %p288
      %s424 = smul.u32 2, %s24
      %p425 = scmp.lt.s32.totalorder %s424, 3
      %s426 = scalar_select %p425, %s424, 3
      %s427 = smul.addr %s426, 8
      %s428 = scalar_lea.vmem %s11, %s427
      %p429 = pneg %p317
      %p430 = pneg %p314
      %s431 = smul.u32 2, %s24
      %p432 = scmp.lt.s32.totalorder %s431, 3
      %s433 = scalar_select %p432, %s431, 3
      %s434 = smul.addr %s433, 2
      %s435 = smul.addr %s434, 8
      %s436 = scalar_lea.vmem %s12, %s435
      %s437 = smul.u32 2, %s24
      %p438 = scmp.lt.s32.totalorder %s437, 3
      %s439 = scalar_select %p438, %s437, 3
      %s440 = smul.addr %s439, 8
      %s441 = scalar_lea.vmem %s0, %s440
      %s442 = smul.u32 2, %s24
      %s443 = smul.u32 2, %s24
      %p444 = scmp.lt.s32.totalorder %s443, 3
      %s445 = scalar_select %p444, %s443, 3
      %s446 = smul.addr %s445, 8
      %s447 = scalar_lea.vmem %s1, %s446
      %s448 = smul.u32 2, %s24
      %s449 = smul.u32 2, %s24
      %p450 = scmp.lt.s32.totalorder %s449, 3
      %s451 = scalar_select %p450, %s449, 3
      %s452 = smul.addr %s451, 8
      %s453 = scalar_lea.vmem %s10, %s452
      %s454 = smul.u32 2, %s24
      %s455 = smul.u32 2, %s24
      %p456 = scmp.lt.s32.totalorder %s455, 3
      %s457 = scalar_select %p456, %s455, 3
      %s458 = smul.addr %s457, 8
      %s459 = scalar_lea.vmem %s11, %s458
      %s460 = smul.u32 2, %s24
      %s461 = smul.u32 2, %s24
      %p462 = scmp.lt.s32.totalorder %s461, 3
      %s463 = scalar_select %p462, %s461, 3
      %s464 = smul.addr %s463, 2
      %s465 = smul.addr %s464, 8
      %s466 = scalar_lea.vmem %s12, %s465
      %s467 = smul.u32 2, %s24
      %v469 = vlaneseq
      %v470 = vshrl.u32 %v469, 7
      %v471 = vadd.s32 %v470, 8
      %v472 = vand.u32 %v470, 15
      %v473 = vand.u32 %v471, 15
      %vm474 = vcmp.gt.s32.totalorder %v472, 0
      %vm475 = vcmp.gt.s32.totalorder %v473, 0
      %vm476 = vcmp.lt.s32.totalorder %v472, 15
      %vm477 = vcmp.lt.s32.totalorder %v473, 15
      %v478 = vld [vmem:[%s441] sm:$0xff]
      %v479 = vld [vmem:[%s441 + $0x8] sm:$0xff]
      %480 = vst [vmem:[#allocation2] sm:$0xff] 0.0
      %481 = vst [vmem:[#allocation2 + $0x8] sm:$0xff] 0.0
      %482 = vst [vmem:[#allocation2 + $0x10] sm:$0xff] 0.0
      %483 = vst [vmem:[#allocation2 + $0x18] sm:$0xff] 0.0
      %484 = vst [vmem:[#allocation2 + $0x8] sm:$0xff] %v478
      %485 = vst [vmem:[#allocation2 + $0x10] sm:$0xff] %v479
      %v486 = vld [vmem:[%s447] sm:$0xff]
      %v487 = vld [vmem:[%s447 + $0x8] sm:$0xff]
      %488 = vst [vmem:[#allocation3] sm:$0xff] 0.0
      %489 = vst [vmem:[#allocation3 + $0x8] sm:$0xff] 0.0
      %490 = vst [vmem:[#allocation3 + $0x10] sm:$0xff] 0.0
      %491 = vst [vmem:[#allocation3 + $0x18] sm:$0xff] 0.0
      %492 = vst [vmem:[#allocation3 + $0x8] sm:$0xff] %v486
      %493 = vst [vmem:[#allocation3 + $0x10] sm:$0xff] %v487
      %v494 = vld [vmem:[#allocation2 + $0x7] sm:$0xff]
      %v495 = vld [vmem:[#allocation2 + $0xf] sm:$0xff]
      %v496 = vsel %vm474, 1, 0
      %v497 = vsel %vm475, 1, 0
      %vm498 = vcmp.eq.s32.totalorder %v496, 1
      %vm499 = vcmp.eq.s32.totalorder %v497, 1
      %v500 = vsel %vm498, %v494, 0.0
      %v501 = vsel %vm499, %v495, 0.0
      %v502 = vpack.c.bf16 %v501, %v500
      %v503 = vld [vmem:[%s2] sm:$0xf]
      %v504 = vld [vmem:[%s2 + $0x4] sm:$0xf]
      %v505 = vld [vmem:[%s2 + $0x8] sm:$0xf]
      %v506 = vld [vmem:[%s2 + $0xc] sm:$0xf]
      %v507 = vld [vmem:[%s2 + $0x10] sm:$0xf]
      %v508 = vld [vmem:[%s2 + $0x14] sm:$0xf]
      %v509 = vld [vmem:[%s2 + $0x18] sm:$0xf]
      %v510 = vld [vmem:[%s2 + $0x1c] sm:$0xf]
      %v511 = vld [vmem:[%s2 + $0x20] sm:$0xf]
      %v512 = vld [vmem:[%s2 + $0x24] sm:$0xf]
      %v513 = vld [vmem:[%s2 + $0x28] sm:$0xf]
      %v514 = vld [vmem:[%s2 + $0x2c] sm:$0xf]
      %v515 = vld [vmem:[%s2 + $0x30] sm:$0xf]
      %v516 = vld [vmem:[%s2 + $0x34] sm:$0xf]
      %v517 = vld [vmem:[%s2 + $0x38] sm:$0xf]
      %v518 = vld [vmem:[%s2 + $0x3c] sm:$0xf]
      %v519 = vld [vmem:[#allocation2 + $0x8] sm:$0xff]
      %v520 = vld [vmem:[#allocation2 + $0x10] sm:$0xff]
      %v521 = vpack.c.bf16 %v520, %v519
      %s522 = scalar_lea.vmem %s2, 64
      %v523 = vld [vmem:[%s522] sm:$0xf]
      %v524 = vld [vmem:[%s522 + $0x4] sm:$0xf]
      %v525 = vld [vmem:[%s522 + $0x8] sm:$0xf]
      %v526 = vld [vmem:[%s522 + $0xc] sm:$0xf]
      %v527 = vld [vmem:[%s522 + $0x10] sm:$0xf]
      %v528 = vld [vmem:[%s522 + $0x14] sm:$0xf]
      %v529 = vld [vmem:[%s522 + $0x18] sm:$0xf]
      %v530 = vld [vmem:[%s522 + $0x1c] sm:$0xf]
      %v531 = vld [vmem:[%s522 + $0x20] sm:$0xf]
      %v532 = vld [vmem:[%s522 + $0x24] sm:$0xf]
      %v533 = vld [vmem:[%s522 + $0x28] sm:$0xf]
      %v534 = vld [vmem:[%s522 + $0x2c] sm:$0xf]
      %v535 = vld [vmem:[%s522 + $0x30] sm:$0xf]
      %v536 = vld [vmem:[%s522 + $0x34] sm:$0xf]
      %v537 = vld [vmem:[%s522 + $0x38] sm:$0xf]
      %v538 = vld [vmem:[%s522 + $0x3c] sm:$0xf]
      %v555 = vunpack.c.l.b16 %v523
      %v556 = vunpack.c.l.b16 %v524
      %v557 = vunpack.c.l.b16 %v525
      %v558 = vunpack.c.l.b16 %v526
      %v559 = vunpack.c.l.b16 %v527
      %v560 = vunpack.c.l.b16 %v528
      %v561 = vunpack.c.l.b16 %v529
      %v562 = vunpack.c.l.b16 %v530
      %v563 = vunpack.c.l.b16 %v531
      %v564 = vunpack.c.l.b16 %v532
      %v565 = vunpack.c.l.b16 %v533
      %v566 = vunpack.c.l.b16 %v534
      %v567 = vunpack.c.l.b16 %v535
      %v568 = vunpack.c.l.b16 %v536
      %v569 = vunpack.c.l.b16 %v537
      %v570 = vunpack.c.l.b16 %v538
      %v571 = vpack.c.b16 %v556, %v555
      %v572 = vpack.c.b16 %v558, %v557
      %v573 = vpack.c.b16 %v560, %v559
      %v574 = vpack.c.b16 %v562, %v561
      %v575 = vpack.c.b16 %v564, %v563
      %v576 = vpack.c.b16 %v566, %v565
      %v577 = vpack.c.b16 %v568, %v567
      %v578 = vpack.c.b16 %v570, %v569
      %587 = vmatprep.subr.bf16.mxu0 0
      %588 = vmatpush1.bf16.msra.mxu0 %v571
      %589 = vmatprep.subr.bf16.mxu0 0
      %590 = vmatpush1.bf16.msra.mxu0 %v572
      %591 = vmatprep.subr.bf16.mxu0 0
      %592 = vmatpush1.bf16.msra.mxu0 %v573
      %593 = vmatprep.subr.bf16.mxu0 0
      %594 = vmatpush1.bf16.msra.mxu0 %v574
      %595 = vmatprep.subr.bf16.mxu0 0
      %596 = vmatpush1.bf16.msra.mxu0 %v575
      %597 = vmatprep.subr.bf16.mxu0 0
      %598 = vmatpush1.bf16.msra.mxu0 %v576
      %599 = vmatprep.subr.bf16.mxu0 0
      %600 = vmatpush1.bf16.msra.mxu0 %v577
      %601 = vmatprep.subr.bf16.mxu0 0
      %602 = vmatpush1.bf16.msra.mxu0 %v578
      %603 = vmatprep.subr.bf16.mxu0 0
      %604 = vmatpush1.bf16.msra.mxu0 0
      %605 = vmatprep.subr.bf16.mxu0 0
      %606 = vmatpush1.bf16.msra.mxu0 0
      %607 = vmatprep.subr.bf16.mxu0 0
      %608 = vmatpush1.bf16.msra.mxu0 0
      %609 = vmatprep.subr.bf16.mxu0 0
      %610 = vmatpush1.bf16.msra.mxu0 0
      %611 = vmatprep.subr.bf16.mxu0 0
      %612 = vmatpush1.bf16.msra.mxu0 0
      %613 = vmatprep.subr.bf16.mxu0 0
      %614 = vmatpush1.bf16.msra.mxu0 0
      %615 = vmatprep.subr.bf16.mxu0 0
      %616 = vmatpush1.bf16.msra.mxu0 0
      %617 = vmatprep.subr.bf16.mxu0 0
      %618 = vmatpush1.bf16.msra.mxu0 0
      %619 = vmatprep.mubr.bf16.mxu0 0
      %620 = vmatmul.mubr.bf16.gmra.mrb[0].mxu0 %v521
      %v621 = vpop.f32.mrb[0].mxu0
      %v622 = vadd.f32 0.0, %v621
      %v623 = vpop.f32.mrb[0].mxu0
      %v624 = vpop.f32.mrb[0].mxu0
      %v625 = vadd.f32 0.0, %v624
      %v626 = vpop.f32.mrb[0].mxu0
      %627 = vdwg.mxu0
      %v644 = vunpack.c.l.b16 %v503
      %v645 = vunpack.c.l.b16 %v504
      %v646 = vunpack.c.l.b16 %v505
      %v647 = vunpack.c.l.b16 %v506
      %v648 = vunpack.c.l.b16 %v507
      %v649 = vunpack.c.l.b16 %v508
      %v650 = vunpack.c.l.b16 %v509
      %v651 = vunpack.c.l.b16 %v510
      %v652 = vunpack.c.l.b16 %v511
      %v653 = vunpack.c.l.b16 %v512
      %v654 = vunpack.c.l.b16 %v513
      %v655 = vunpack.c.l.b16 %v514
      %v656 = vunpack.c.l.b16 %v515
      %v657 = vunpack.c.l.b16 %v516
      %v658 = vunpack.c.l.b16 %v517
      %v659 = vunpack.c.l.b16 %v518
      %v660 = vpack.c.b16 %v645, %v644
      %v661 = vpack.c.b16 %v647, %v646
      %v662 = vpack.c.b16 %v649, %v648
      %v663 = vpack.c.b16 %v651, %v650
      %v664 = vpack.c.b16 %v653, %v652
      %v665 = vpack.c.b16 %v655, %v654
      %v666 = vpack.c.b16 %v657, %v656
      %v667 = vpack.c.b16 %v659, %v658
      %676 = vmatprep.subr.bf16.mxu0 0
      %677 = vmatpush1.bf16.msra.mxu0 %v660
      %678 = vmatprep.subr.bf16.mxu0 0
      %679 = vmatpush1.bf16.msra.mxu0 %v661
      %680 = vmatprep.subr.bf16.mxu0 0
      %681 = vmatpush1.bf16.msra.mxu0 %v662
      %682 = vmatprep.subr.bf16.mxu0 0
      %683 = vmatpush1.bf16.msra.mxu0 %v663
      %684 = vmatprep.subr.bf16.mxu0 0
      %685 = vmatpush1.bf16.msra.mxu0 %v664
      %686 = vmatprep.subr.bf16.mxu0 0
      %687 = vmatpush1.bf16.msra.mxu0 %v665
      %688 = vmatprep.subr.bf16.mxu0 0
      %689 = vmatpush1.bf16.msra.mxu0 %v666
      %690 = vmatprep.subr.bf16.mxu0 0
      %691 = vmatpush1.bf16.msra.mxu0 %v667
      %692 = vmatprep.subr.bf16.mxu0 0
      %693 = vmatpush1.bf16.msra.mxu0 0
      %694 = vmatprep.subr.bf16.mxu0 0
      %695 = vmatpush1.bf16.msra.mxu0 0
      %696 = vmatprep.subr.bf16.mxu0 0
      %697 = vmatpush1.bf16.msra.mxu0 0
      %698 = vmatprep.subr.bf16.mxu0 0
      %699 = vmatpush1.bf16.msra.mxu0 0
      %700 = vmatprep.subr.bf16.mxu0 0
      %701 = vmatpush1.bf16.msra.mxu0 0
      %702 = vmatprep.subr.bf16.mxu0 0
      %703 = vmatpush1.bf16.msra.mxu0 0
      %704 = vmatprep.subr.bf16.mxu0 0
      %705 = vmatpush1.bf16.msra.mxu0 0
      %706 = vmatprep.subr.bf16.mxu0 0
      %707 = vmatpush1.bf16.msra.mxu0 0
      %708 = vmatprep.mubr.bf16.mxu0 0
      %709 = vmatmul.mubr.bf16.gmra.mrb[0].mxu0 %v502
      %v710 = vpop.f32.mrb[0].mxu0
      %v711 = vadd.f32 %v622, %v710
      %v712 = vpop.f32.mrb[0].mxu0
      %v713 = vpop.f32.mrb[0].mxu0
      %v714 = vadd.f32 %v625, %v713
      %v715 = vpop.f32.mrb[0].mxu0
      %716 = vdwg.mxu0
      %v717 = vld [vmem:[#allocation2 + $0x9] sm:$0xff]
      %v718 = vld [vmem:[#allocation2 + $0x11] sm:$0xff]
      %v719 = vsel %vm476, 1, 0
      %v720 = vsel %vm477, 1, 0
      %vm721 = vcmp.eq.s32.totalorder %v719, 1
      %vm722 = vcmp.eq.s32.totalorder %v720, 1
      %v723 = vsel %vm721, %v717, 0.0
      %v724 = vsel %vm722, %v718, 0.0
      %v725 = vpack.c.bf16 %v724, %v723
      %s726 = scalar_lea.vmem %s2, 128
      %v727 = vld [vmem:[%s726] sm:$0xf]
      %v728 = vld [vmem:[%s726 + $0x4] sm:$0xf]
      %v729 = vld [vmem:[%s726 + $0x8] sm:$0xf]
      %v730 = vld [vmem:[%s726 + $0xc] sm:$0xf]
      %v731 = vld [vmem:[%s726 + $0x10] sm:$0xf]
      %v732 = vld [vmem:[%s726 + $0x14] sm:$0xf]
      %v733 = vld [vmem:[%s726 + $0x18] sm:$0xf]
      %v734 = vld [vmem:[%s726 + $0x1c] sm:$0xf]
      %v735 = vld [vmem:[%s726 + $0x20] sm:$0xf]
      %v736 = vld [vmem:[%s726 + $0x24] sm:$0xf]
      %v737 = vld [vmem:[%s726 + $0x28] sm:$0xf]
      %v738 = vld [vmem:[%s726 + $0x2c] sm:$0xf]
      %v739 = vld [vmem:[%s726 + $0x30] sm:$0xf]
      %v740 = vld [vmem:[%s726 + $0x34] sm:$0xf]
      %v741 = vld [vmem:[%s726 + $0x38] sm:$0xf]
      %v742 = vld [vmem:[%s726 + $0x3c] sm:$0xf]
      %v759 = vunpack.c.l.b16 %v727
      %v760 = vunpack.c.l.b16 %v728
      %v761 = vunpack.c.l.b16 %v729
      %v762 = vunpack.c.l.b16 %v730
      %v763 = vunpack.c.l.b16 %v731
      %v764 = vunpack.c.l.b16 %v732
      %v765 = vunpack.c.l.b16 %v733
      %v766 = vunpack.c.l.b16 %v734
      %v767 = vunpack.c.l.b16 %v735
      %v768 = vunpack.c.l.b16 %v736
      %v769 = vunpack.c.l.b16 %v737
      %v770 = vunpack.c.l.b16 %v738
      %v771 = vunpack.c.l.b16 %v739
      %v772 = vunpack.c.l.b16 %v740
      %v773 = vunpack.c.l.b16 %v741
      %v774 = vunpack.c.l.b16 %v742
      %v775 = vpack.c.b16 %v760, %v759
      %v776 = vpack.c.b16 %v762, %v761
      %v777 = vpack.c.b16 %v764, %v763
      %v778 = vpack.c.b16 %v766, %v765
      %v779 = vpack.c.b16 %v768, %v767
      %v780 = vpack.c.b16 %v770, %v769
      %v781 = vpack.c.b16 %v772, %v771
      %v782 = vpack.c.b16 %v774, %v773
      %791 = vmatprep.subr.bf16.mxu0 0
      %792 = vmatpush1.bf16.msra.mxu0 %v775
      %793 = vmatprep.subr.bf16.mxu0 0
      %794 = vmatpush1.bf16.msra.mxu0 %v776
      %795 = vmatprep.subr.bf16.mxu0 0
      %796 = vmatpush1.bf16.msra.mxu0 %v777
      %797 = vmatprep.subr.bf16.mxu0 0
      %798 = vmatpush1.bf16.msra.mxu0 %v778
      %799 = vmatprep.subr.bf16.mxu0 0
      %800 = vmatpush1.bf16.msra.mxu0 %v779
      %801 = vmatprep.subr.bf16.mxu0 0
      %802 = vmatpush1.bf16.msra.mxu0 %v780
      %803 = vmatprep.subr.bf16.mxu0 0
      %804 = vmatpush1.bf16.msra.mxu0 %v781
      %805 = vmatprep.subr.bf16.mxu0 0
      %806 = vmatpush1.bf16.msra.mxu0 %v782
      %807 = vmatprep.subr.bf16.mxu0 0
      %808 = vmatpush1.bf16.msra.mxu0 0
      %809 = vmatprep.subr.bf16.mxu0 0
      %810 = vmatpush1.bf16.msra.mxu0 0
      %811 = vmatprep.subr.bf16.mxu0 0
      %812 = vmatpush1.bf16.msra.mxu0 0
      %813 = vmatprep.subr.bf16.mxu0 0
      %814 = vmatpush1.bf16.msra.mxu0 0
      %815 = vmatprep.subr.bf16.mxu0 0
      %816 = vmatpush1.bf16.msra.mxu0 0
      %817 = vmatprep.subr.bf16.mxu0 0
      %818 = vmatpush1.bf16.msra.mxu0 0
      %819 = vmatprep.subr.bf16.mxu0 0
      %820 = vmatpush1.bf16.msra.mxu0 0
      %821 = vmatprep.subr.bf16.mxu0 0
      %822 = vmatpush1.bf16.msra.mxu0 0
      %823 = vmatprep.mubr.bf16.mxu0 0
      %824 = vmatmul.mubr.bf16.gmra.mrb[0].mxu0 %v725
      %v825 = vpop.f32.mrb[0].mxu0
      %v826 = vadd.f32 0.0, %v825
      %v827 = vpop.f32.mrb[0].mxu0
      %v828 = vpop.f32.mrb[0].mxu0
      %v829 = vadd.f32 0.0, %v828
      %v830 = vpop.f32.mrb[0].mxu0
      %831 = vdwg.mxu0
      %v832 = vadd.f32 %v711, %v826
      %v833 = vadd.f32 %v714, %v829
      %v834 = vld [vmem:[#allocation3 + $0x7] sm:$0xff]
      %v835 = vld [vmem:[#allocation3 + $0xf] sm:$0xff]
      %v836 = vsel %vm498, %v834, 0.0
      %v837 = vsel %vm499, %v835, 0.0
      %v838 = vpack.c.bf16 %v837, %v836
      %v839 = vld [vmem:[%s3] sm:$0xf]
      %v840 = vld [vmem:[%s3 + $0x4] sm:$0xf]
      %v841 = vld [vmem:[%s3 + $0x8] sm:$0xf]
      %v842 = vld [vmem:[%s3 + $0xc] sm:$0xf]
      %v843 = vld [vmem:[%s3 + $0x10] sm:$0xf]
      %v844 = vld [vmem:[%s3 + $0x14] sm:$0xf]
      %v845 = vld [vmem:[%s3 + $0x18] sm:$0xf]
      %v846 = vld [vmem:[%s3 + $0x1c] sm:$0xf]
      %v847 = vld [vmem:[%s3 + $0x20] sm:$0xf]
      %v848 = vld [vmem:[%s3 + $0x24] sm:$0xf]
      %v849 = vld [vmem:[%s3 + $0x28] sm:$0xf]
      %v850 = vld [vmem:[%s3 + $0x2c] sm:$0xf]
      %v851 = vld [vmem:[%s3 + $0x30] sm:$0xf]
      %v852 = vld [vmem:[%s3 + $0x34] sm:$0xf]
      %v853 = vld [vmem:[%s3 + $0x38] sm:$0xf]
      %v854 = vld [vmem:[%s3 + $0x3c] sm:$0xf]
      %v855 = vld [vmem:[#allocation3 + $0x8] sm:$0xff]
      %v856 = vld [vmem:[#allocation3 + $0x10] sm:$0xff]
      %v857 = vpack.c.bf16 %v856, %v855
      %s858 = scalar_lea.vmem %s3, 64
      %v859 = vld [vmem:[%s858] sm:$0xf]
      %v860 = vld [vmem:[%s858 + $0x4] sm:$0xf]
      %v861 = vld [vmem:[%s858 + $0x8] sm:$0xf]
      %v862 = vld [vmem:[%s858 + $0xc] sm:$0xf]
      %v863 = vld [vmem:[%s858 + $0x10] sm:$0xf]
      %v864 = vld [vmem:[%s858 + $0x14] sm:$0xf]
      %v865 = vld [vmem:[%s858 + $0x18] sm:$0xf]
      %v866 = vld [vmem:[%s858 + $0x1c] sm:$0xf]
      %v867 = vld [vmem:[%s858 + $0x20] sm:$0xf]
      %v868 = vld [vmem:[%s858 + $0x24] sm:$0xf]
      %v869 = vld [vmem:[%s858 + $0x28] sm:$0xf]
      %v870 = vld [vmem:[%s858 + $0x2c] sm:$0xf]
      %v871 = vld [vmem:[%s858 + $0x30] sm:$0xf]
      %v872 = vld [vmem:[%s858 + $0x34] sm:$0xf]
      %v873 = vld [vmem:[%s858 + $0x38] sm:$0xf]
      %v874 = vld [vmem:[%s858 + $0x3c] sm:$0xf]
      %v891 = vunpack.c.l.b16 %v859
      %v892 = vunpack.c.l.b16 %v860
      %v893 = vunpack.c.l.b16 %v861
      %v894 = vunpack.c.l.b16 %v862
      %v895 = vunpack.c.l.b16 %v863
      %v896 = vunpack.c.l.b16 %v864
      %v897 = vunpack.c.l.b16 %v865
      %v898 = vunpack.c.l.b16 %v866
      %v899 = vunpack.c.l.b16 %v867
      %v900 = vunpack.c.l.b16 %v868
      %v901 = vunpack.c.l.b16 %v869
      %v902 = vunpack.c.l.b16 %v870
      %v903 = vunpack.c.l.b16 %v871
      %v904 = vunpack.c.l.b16 %v872
      %v905 = vunpack.c.l.b16 %v873
      %v906 = vunpack.c.l.b16 %v874
      %v907 = vpack.c.b16 %v892, %v891
      %v908 = vpack.c.b16 %v894, %v893
      %v909 = vpack.c.b16 %v896, %v895
      %v910 = vpack.c.b16 %v898, %v897
      %v911 = vpack.c.b16 %v900, %v899
      %v912 = vpack.c.b16 %v902, %v901
      %v913 = vpack.c.b16 %v904, %v903
      %v914 = vpack.c.b16 %v906, %v905
      %923 = vmatprep.subr.bf16.mxu0 0
      %924 = vmatpush1.bf16.msra.mxu0 %v907
      %925 = vmatprep.subr.bf16.mxu0 0
      %926 = vmatpush1.bf16.msra.mxu0 %v908
      %927 = vmatprep.subr.bf16.mxu0 0
      %928 = vmatpush1.bf16.msra.mxu0 %v909
      %929 = vmatprep.subr.bf16.mxu0 0
      %930 = vmatpush1.bf16.msra.mxu0 %v910
      %931 = vmatprep.subr.bf16.mxu0 0
      %932 = vmatpush1.bf16.msra.mxu0 %v911
      %933 = vmatprep.subr.bf16.mxu0 0
      %934 = vmatpush1.bf16.msra.mxu0 %v912
      %935 = vmatprep.subr.bf16.mxu0 0
      %936 = vmatpush1.bf16.msra.mxu0 %v913
      %937 = vmatprep.subr.bf16.mxu0 0
      %938 = vmatpush1.bf16.msra.mxu0 %v914
      %939 = vmatprep.subr.bf16.mxu0 0
      %940 = vmatpush1.bf16.msra.mxu0 0
      %941 = vmatprep.subr.bf16.mxu0 0
      %942 = vmatpush1.bf16.msra.mxu0 0
      %943 = vmatprep.subr.bf16.mxu0 0
      %944 = vmatpush1.bf16.msra.mxu0 0
      %945 = vmatprep.subr.bf16.mxu0 0
      %946 = vmatpush1.bf16.msra.mxu0 0
      %947 = vmatprep.subr.bf16.mxu0 0
      %948 = vmatpush1.bf16.msra.mxu0 0
      %949 = vmatprep.subr.bf16.mxu0 0
      %950 = vmatpush1.bf16.msra.mxu0 0
      %951 = vmatprep.subr.bf16.mxu0 0
      %952 = vmatpush1.bf16.msra.mxu0 0
      %953 = vmatprep.subr.bf16.mxu0 0
      %954 = vmatpush1.bf16.msra.mxu0 0
      %955 = vmatprep.mubr.bf16.mxu0 0
      %956 = vmatmul.mubr.bf16.gmra.mrb[0].mxu0 %v857
      %v957 = vpop.f32.mrb[0].mxu0
      %v958 = vadd.f32 0.0, %v957
      %v959 = vpop.f32.mrb[0].mxu0
      %v960 = vpop.f32.mrb[0].mxu0
      %v961 = vadd.f32 0.0, %v960
      %v962 = vpop.f32.mrb[0].mxu0
      %963 = vdwg.mxu0
      %v980 = vunpack.c.l.b16 %v839
      %v981 = vunpack.c.l.b16 %v840
      %v982 = vunpack.c.l.b16 %v841
      %v983 = vunpack.c.l.b16 %v842
      %v984 = vunpack.c.l.b16 %v843
      %v985 = vunpack.c.l.b16 %v844
      %v986 = vunpack.c.l.b16 %v845
      %v987 = vunpack.c.l.b16 %v846
      %v988 = vunpack.c.l.b16 %v847
      %v989 = vunpack.c.l.b16 %v848
      %v990 = vunpack.c.l.b16 %v849
      %v991 = vunpack.c.l.b16 %v850
      %v992 = vunpack.c.l.b16 %v851
      %v993 = vunpack.c.l.b16 %v852
      %v994 = vunpack.c.l.b16 %v853
      %v995 = vunpack.c.l.b16 %v854
      %v996 = vpack.c.b16 %v981, %v980
      %v997 = vpack.c.b16 %v983, %v982
      %v998 = vpack.c.b16 %v985, %v984
      %v999 = vpack.c.b16 %v987, %v986
      %v1000 = vpack.c.b16 %v989, %v988
      %v1001 = vpack.c.b16 %v991, %v990
      %v1002 = vpack.c.b16 %v993, %v992
      %v1003 = vpack.c.b16 %v995, %v994
      %1012 = vmatprep.subr.bf16.mxu0 0
      %1013 = vmatpush1.bf16.msra.mxu0 %v996
      %1014 = vmatprep.subr.bf16.mxu0 0
      %1015 = vmatpush1.bf16.msra.mxu0 %v997
      %1016 = vmatprep.subr.bf16.mxu0 0
      %1017 = vmatpush1.bf16.msra.mxu0 %v998
      %1018 = vmatprep.subr.bf16.mxu0 0
      %1019 = vmatpush1.bf16.msra.mxu0 %v999
      %1020 = vmatprep.subr.bf16.mxu0 0
      %1021 = vmatpush1.bf16.msra.mxu0 %v1000
      %1022 = vmatprep.subr.bf16.mxu0 0
      %1023 = vmatpush1.bf16.msra.mxu0 %v1001
      %1024 = vmatprep.subr.bf16.mxu0 0
      %1025 = vmatpush1.bf16.msra.mxu0 %v1002
      %1026 = vmatprep.subr.bf16.mxu0 0
      %1027 = vmatpush1.bf16.msra.mxu0 %v1003
      %1028 = vmatprep.subr.bf16.mxu0 0
      %1029 = vmatpush1.bf16.msra.mxu0 0
      %1030 = vmatprep.subr.bf16.mxu0 0
      %1031 = vmatpush1.bf16.msra.mxu0 0
      %1032 = vmatprep.subr.bf16.mxu0 0
      %1033 = vmatpush1.bf16.msra.mxu0 0
      %1034 = vmatprep.subr.bf16.mxu0 0
      %1035 = vmatpush1.bf16.msra.mxu0 0
      %1036 = vmatprep.subr.bf16.mxu0 0
      %1037 = vmatpush1.bf16.msra.mxu0 0
      %1038 = vmatprep.subr.bf16.mxu0 0
      %1039 = vmatpush1.bf16.msra.mxu0 0
      %1040 = vmatprep.subr.bf16.mxu0 0
      %1041 = vmatpush1.bf16.msra.mxu0 0
      %1042 = vmatprep.subr.bf16.mxu0 0
      %1043 = vmatpush1.bf16.msra.mxu0 0
      %1044 = vmatprep.mubr.bf16.mxu0 0
      %1045 = vmatmul.mubr.bf16.gmra.mrb[0].mxu0 %v838
      %v1046 = vpop.f32.mrb[0].mxu0
      %v1047 = vadd.f32 %v958, %v1046
      %v1048 = vpop.f32.mrb[0].mxu0
      %v1049 = vpop.f32.mrb[0].mxu0
      %v1050 = vadd.f32 %v961, %v1049
      %v1051 = vpop.f32.mrb[0].mxu0
      %1052 = vdwg.mxu0
      %v1053 = vld [vmem:[#allocation3 + $0x9] sm:$0xff]
      %v1054 = vld [vmem:[#allocation3 + $0x11] sm:$0xff]
      %v1055 = vsel %vm721, %v1053, 0.0
      %v1056 = vsel %vm722, %v1054, 0.0
      %v1057 = vpack.c.bf16 %v1056, %v1055
      %s1058 = scalar_lea.vmem %s3, 128
      %v1059 = vld [vmem:[%s1058] sm:$0xf]
      %v1060 = vld [vmem:[%s1058 + $0x4] sm:$0xf]
      %v1061 = vld [vmem:[%s1058 + $0x8] sm:$0xf]
      %v1062 = vld [vmem:[%s1058 + $0xc] sm:$0xf]
      %v1063 = vld [vmem:[%s1058 + $0x10] sm:$0xf]
      %v1064 = vld [vmem:[%s1058 + $0x14] sm:$0xf]
      %v1065 = vld [vmem:[%s1058 + $0x18] sm:$0xf]
      %v1066 = vld [vmem:[%s1058 + $0x1c] sm:$0xf]
      %v1067 = vld [vmem:[%s1058 + $0x20] sm:$0xf]
      %v1068 = vld [vmem:[%s1058 + $0x24] sm:$0xf]
      %v1069 = vld [vmem:[%s1058 + $0x28] sm:$0xf]
      %v1070 = vld [vmem:[%s1058 + $0x2c] sm:$0xf]
      %v1071 = vld [vmem:[%s1058 + $0x30] sm:$0xf]
      %v1072 = vld [vmem:[%s1058 + $0x34] sm:$0xf]
      %v1073 = vld [vmem:[%s1058 + $0x38] sm:$0xf]
      %v1074 = vld [vmem:[%s1058 + $0x3c] sm:$0xf]
      %v1091 = vunpack.c.l.b16 %v1059
      %v1092 = vunpack.c.l.b16 %v1060
      %v1093 = vunpack.c.l.b16 %v1061
      %v1094 = vunpack.c.l.b16 %v1062
      %v1095 = vunpack.c.l.b16 %v1063
      %v1096 = vunpack.c.l.b16 %v1064
      %v1097 = vunpack.c.l.b16 %v1065
      %v1098 = vunpack.c.l.b16 %v1066
      %v1099 = vunpack.c.l.b16 %v1067
      %v1100 = vunpack.c.l.b16 %v1068
      %v1101 = vunpack.c.l.b16 %v1069
      %v1102 = vunpack.c.l.b16 %v1070
      %v1103 = vunpack.c.l.b16 %v1071
      %v1104 = vunpack.c.l.b16 %v1072
      %v1105 = vunpack.c.l.b16 %v1073
      %v1106 = vunpack.c.l.b16 %v1074
      %v1107 = vpack.c.b16 %v1092, %v1091
      %v1108 = vpack.c.b16 %v1094, %v1093
      %v1109 = vpack.c.b16 %v1096, %v1095
      %v1110 = vpack.c.b16 %v1098, %v1097
      %v1111 = vpack.c.b16 %v1100, %v1099
      %v1112 = vpack.c.b16 %v1102, %v1101
      %v1113 = vpack.c.b16 %v1104, %v1103
      %v1114 = vpack.c.b16 %v1106, %v1105
      %1123 = vmatprep.subr.bf16.mxu0 0
      %1124 = vmatpush1.bf16.msra.mxu0 %v1107
      %1125 = vmatprep.subr.bf16.mxu0 0
      %1126 = vmatpush1.bf16.msra.mxu0 %v1108
      %1127 = vmatprep.subr.bf16.mxu0 0
      %1128 = vmatpush1.bf16.msra.mxu0 %v1109
      %1129 = vmatprep.subr.bf16.mxu0 0
      %1130 = vmatpush1.bf16.msra.mxu0 %v1110
      %1131 = vmatprep.subr.bf16.mxu0 0
      %1132 = vmatpush1.bf16.msra.mxu0 %v1111
      %1133 = vmatprep.subr.bf16.mxu0 0
      %1134 = vmatpush1.bf16.msra.mxu0 %v1112
      %1135 = vmatprep.subr.bf16.mxu0 0
      %1136 = vmatpush1.bf16.msra.mxu0 %v1113
      %1137 = vmatprep.subr.bf16.mxu0 0
      %1138 = vmatpush1.bf16.msra.mxu0 %v1114
      %1139 = vmatprep.subr.bf16.mxu0 0
      %1140 = vmatpush1.bf16.msra.mxu0 0
      %1141 = vmatprep.subr.bf16.mxu0 0
      %1142 = vmatpush1.bf16.msra.mxu0 0
      %1143 = vmatprep.subr.bf16.mxu0 0
      %1144 = vmatpush1.bf16.msra.mxu0 0
      %1145 = vmatprep.subr.bf16.mxu0 0
      %1146 = vmatpush1.bf16.msra.mxu0 0
      %1147 = vmatprep.subr.bf16.mxu0 0
      %1148 = vmatpush1.bf16.msra.mxu0 0
      %1149 = vmatprep.subr.bf16.mxu0 0
      %1150 = vmatpush1.bf16.msra.mxu0 0
      %1151 = vmatprep.subr.bf16.mxu0 0
      %1152 = vmatpush1.bf16.msra.mxu0 0
      %1153 = vmatprep.subr.bf16.mxu0 0
      %1154 = vmatpush1.bf16.msra.mxu0 0
      %1155 = vmatprep.mubr.bf16.mxu0 0
      %1156 = vmatmul.mubr.bf16.gmra.mrb[0].mxu0 %v1057
      %v1157 = vpop.f32.mrb[0].mxu0
      %v1158 = vadd.f32 0.0, %v1157
      %v1159 = vpop.f32.mrb[0].mxu0
      %v1160 = vpop.f32.mrb[0].mxu0
      %v1161 = vadd.f32 0.0, %v1160
      %v1162 = vpop.f32.mrb[0].mxu0
      %1163 = vdwg.mxu0
      %v1164 = vadd.f32 %v1047, %v1158
      %v1165 = vadd.f32 %v1050, %v1161
      %v1166 = vadd.f32 %v832, %v1164
      %v1167 = vadd.f32 %v833, %v1165
      %v1168 = vld [vmem:[%s4] sm:$0x1]
      %v1170 = vlaneseq
      %v1171 = vshrl.u32 %v1170, 7
      %v1172 = vsub.s32 0, %v1171
      %v1173 = vrot.slane %v1168, %v1172
      %v1175 = vadd.f32 %v1166, %v1173
      %v1176 = vadd.f32 %v1167, %v1173
      %vm1177 = vcmp.ge.f32.partialorder %v1175, 0.0
      %vm1178 = vcmp.ge.f32.partialorder %v1176, 0.0
      %v1179 = vmul.f32 %v1175, 0.01
      %v1180 = vmul.f32 %v1176, 0.01
      %v1181 = vsel %vm1177, %v1175, %v1179
      %v1182 = vsel %vm1178, %v1176, %v1180
      %1183 = vst [vmem:[#allocation4] sm:$0xff] 0.0
      %1184 = vst [vmem:[#allocation4 + $0x8] sm:$0xff] 0.0
      %1185 = vst [vmem:[#allocation4 + $0x10] sm:$0xff] 0.0
      %1186 = vst [vmem:[#allocation4 + $0x18] sm:$0xff] 0.0
      %1187 = vst [vmem:[#allocation4 + $0x8] sm:$0xff] %v1181
      %1188 = vst [vmem:[#allocation4 + $0x10] sm:$0xff] %v1182
      %v1189 = vld [vmem:[#allocation4 + $0x7] sm:$0xff]
      %v1190 = vld [vmem:[#allocation4 + $0xf] sm:$0xff]
      %v1191 = vsel %vm498, %v1189, 0.0
      %v1192 = vsel %vm499, %v1190, 0.0
      %v1193 = vpack.c.bf16 %v1192, %v1191
      %v1194 = vld [vmem:[%s5] sm:$0xf]
      %v1195 = vld [vmem:[%s5 + $0x4] sm:$0xf]
      %v1196 = vld [vmem:[%s5 + $0x8] sm:$0xf]
      %v1197 = vld [vmem:[%s5 + $0xc] sm:$0xf]
      %v1198 = vld [vmem:[%s5 + $0x10] sm:$0xf]
      %v1199 = vld [vmem:[%s5 + $0x14] sm:$0xf]
      %v1200 = vld [vmem:[%s5 + $0x18] sm:$0xf]
      %v1201 = vld [vmem:[%s5 + $0x1c] sm:$0xf]
      %v1202 = vld [vmem:[%s5 + $0x20] sm:$0xf]
      %v1203 = vld [vmem:[%s5 + $0x24] sm:$0xf]
      %v1204 = vld [vmem:[%s5 + $0x28] sm:$0xf]
      %v1205 = vld [vmem:[%s5 + $0x2c] sm:$0xf]
      %v1206 = vld [vmem:[%s5 + $0x30] sm:$0xf]
      %v1207 = vld [vmem:[%s5 + $0x34] sm:$0xf]
      %v1208 = vld [vmem:[%s5 + $0x38] sm:$0xf]
      %v1209 = vld [vmem:[%s5 + $0x3c] sm:$0xf]
      %v1210 = vld [vmem:[#allocation4 + $0x8] sm:$0xff]
      %v1211 = vld [vmem:[#allocation4 + $0x10] sm:$0xff]
      %v1212 = vpack.c.bf16 %v1211, %v1210
      %s1213 = scalar_lea.vmem %s5, 64
      %v1214 = vld [vmem:[%s1213] sm:$0xf]
      %v1215 = vld [vmem:[%s1213 + $0x4] sm:$0xf]
      %v1216 = vld [vmem:[%s1213 + $0x8] sm:$0xf]
      %v1217 = vld [vmem:[%s1213 + $0xc] sm:$0xf]
      %v1218 = vld [vmem:[%s1213 + $0x10] sm:$0xf]
      %v1219 = vld [vmem:[%s1213 + $0x14] sm:$0xf]
      %v1220 = vld [vmem:[%s1213 + $0x18] sm:$0xf]
      %v1221 = vld [vmem:[%s1213 + $0x1c] sm:$0xf]
      %v1222 = vld [vmem:[%s1213 + $0x20] sm:$0xf]
      %v1223 = vld [vmem:[%s1213 + $0x24] sm:$0xf]
      %v1224 = vld [vmem:[%s1213 + $0x28] sm:$0xf]
      %v1225 = vld [vmem:[%s1213 + $0x2c] sm:$0xf]
      %v1226 = vld [vmem:[%s1213 + $0x30] sm:$0xf]
      %v1227 = vld [vmem:[%s1213 + $0x34] sm:$0xf]
      %v1228 = vld [vmem:[%s1213 + $0x38] sm:$0xf]
      %v1229 = vld [vmem:[%s1213 + $0x3c] sm:$0xf]
      %v1246 = vunpack.c.l.b16 %v1214
      %v1247 = vunpack.c.l.b16 %v1215
      %v1248 = vunpack.c.l.b16 %v1216
      %v1249 = vunpack.c.l.b16 %v1217
      %v1250 = vunpack.c.l.b16 %v1218
      %v1251 = vunpack.c.l.b16 %v1219
      %v1252 = vunpack.c.l.b16 %v1220
      %v1253 = vunpack.c.l.b16 %v1221
      %v1254 = vunpack.c.l.b16 %v1222
      %v1255 = vunpack.c.l.b16 %v1223
      %v1256 = vunpack.c.l.b16 %v1224
      %v1257 = vunpack.c.l.b16 %v1225
      %v1258 = vunpack.c.l.b16 %v1226
      %v1259 = vunpack.c.l.b16 %v1227
      %v1260 = vunpack.c.l.b16 %v1228
      %v1261 = vunpack.c.l.b16 %v1229
      %v1262 = vpack.c.b16 %v1247, %v1246
      %v1263 = vpack.c.b16 %v1249, %v1248
      %v1264 = vpack.c.b16 %v1251, %v1250
      %v1265 = vpack.c.b16 %v1253, %v1252
      %v1266 = vpack.c.b16 %v1255, %v1254
      %v1267 = vpack.c.b16 %v1257, %v1256
      %v1268 = vpack.c.b16 %v1259, %v1258
      %v1269 = vpack.c.b16 %v1261, %v1260
      %1278 = vmatprep.subr.bf16.mxu0 0
      %1279 = vmatpush1.bf16.msra.mxu0 %v1262
      %1280 = vmatprep.subr.bf16.mxu0 0
      %1281 = vmatpush1.bf16.msra.mxu0 %v1263
      %1282 = vmatprep.subr.bf16.mxu0 0
      %1283 = vmatpush1.bf16.msra.mxu0 %v1264
      %1284 = vmatprep.subr.bf16.mxu0 0
      %1285 = vmatpush1.bf16.msra.mxu0 %v1265
      %1286 = vmatprep.subr.bf16.mxu0 0
      %1287 = vmatpush1.bf16.msra.mxu0 %v1266
      %1288 = vmatprep.subr.bf16.mxu0 0
      %1289 = vmatpush1.bf16.msra.mxu0 %v1267
      %1290 = vmatprep.subr.bf16.mxu0 0
      %1291 = vmatpush1.bf16.msra.mxu0 %v1268
      %1292 = vmatprep.subr.bf16.mxu0 0
      %1293 = vmatpush1.bf16.msra.mxu0 %v1269
      %1294 = vmatprep.subr.bf16.mxu0 0
      %1295 = vmatpush1.bf16.msra.mxu0 0
      %1296 = vmatprep.subr.bf16.mxu0 0
      %1297 = vmatpush1.bf16.msra.mxu0 0
      %1298 = vmatprep.subr.bf16.mxu0 0
      %1299 = vmatpush1.bf16.msra.mxu0 0
      %1300 = vmatprep.subr.bf16.mxu0 0
      %1301 = vmatpush1.bf16.msra.mxu0 0
      %1302 = vmatprep.subr.bf16.mxu0 0
      %1303 = vmatpush1.bf16.msra.mxu0 0
      %1304 = vmatprep.subr.bf16.mxu0 0
      %1305 = vmatpush1.bf16.msra.mxu0 0
      %1306 = vmatprep.subr.bf16.mxu0 0
      %1307 = vmatpush1.bf16.msra.mxu0 0
      %1308 = vmatprep.subr.bf16.mxu0 0
      %1309 = vmatpush1.bf16.msra.mxu0 0
      %1310 = vmatprep.mubr.bf16.mxu0 0
      %1311 = vmatmul.mubr.bf16.gmra.mrb[0].mxu0 %v1212
      %v1312 = vpop.f32.mrb[0].mxu0
      %v1313 = vadd.f32 0.0, %v1312
      %v1314 = vpop.f32.mrb[0].mxu0
      %v1315 = vpop.f32.mrb[0].mxu0
      %v1316 = vadd.f32 0.0, %v1315
      %v1317 = vpop.f32.mrb[0].mxu0
      %1318 = vdwg.mxu0
      %v1335 = vunpack.c.l.b16 %v1194
      %v1336 = vunpack.c.l.b16 %v1195
      %v1337 = vunpack.c.l.b16 %v1196
      %v1338 = vunpack.c.l.b16 %v1197
      %v1339 = vunpack.c.l.b16 %v1198
      %v1340 = vunpack.c.l.b16 %v1199
      %v1341 = vunpack.c.l.b16 %v1200
      %v1342 = vunpack.c.l.b16 %v1201
      %v1343 = vunpack.c.l.b16 %v1202
      %v1344 = vunpack.c.l.b16 %v1203
      %v1345 = vunpack.c.l.b16 %v1204
      %v1346 = vunpack.c.l.b16 %v1205
      %v1347 = vunpack.c.l.b16 %v1206
      %v1348 = vunpack.c.l.b16 %v1207
      %v1349 = vunpack.c.l.b16 %v1208
      %v1350 = vunpack.c.l.b16 %v1209
      %v1351 = vpack.c.b16 %v1336, %v1335
      %v1352 = vpack.c.b16 %v1338, %v1337
      %v1353 = vpack.c.b16 %v1340, %v1339
      %v1354 = vpack.c.b16 %v1342, %v1341
      %v1355 = vpack.c.b16 %v1344, %v1343
      %v1356 = vpack.c.b16 %v1346, %v1345
      %v1357 = vpack.c.b16 %v1348, %v1347
      %v1358 = vpack.c.b16 %v1350, %v1349
      %1367 = vmatprep.subr.bf16.mxu0 0
      %1368 = vmatpush1.bf16.msra.mxu0 %v1351
      %1369 = vmatprep.subr.bf16.mxu0 0
      %1370 = vmatpush1.bf16.msra.mxu0 %v1352
      %1371 = vmatprep.subr.bf16.mxu0 0
      %1372 = vmatpush1.bf16.msra.mxu0 %v1353
      %1373 = vmatprep.subr.bf16.mxu0 0
      %1374 = vmatpush1.bf16.msra.mxu0 %v1354
      %1375 = vmatprep.subr.bf16.mxu0 0
      %1376 = vmatpush1.bf16.msra.mxu0 %v1355
      %1377 = vmatprep.subr.bf16.mxu0 0
      %1378 = vmatpush1.bf16.msra.mxu0 %v1356
      %1379 = vmatprep.subr.bf16.mxu0 0
      %1380 = vmatpush1.bf16.msra.mxu0 %v1357
      %1381 = vmatprep.subr.bf16.mxu0 0
      %1382 = vmatpush1.bf16.msra.mxu0 %v1358
      %1383 = vmatprep.subr.bf16.mxu0 0
      %1384 = vmatpush1.bf16.msra.mxu0 0
      %1385 = vmatprep.subr.bf16.mxu0 0
      %1386 = vmatpush1.bf16.msra.mxu0 0
      %1387 = vmatprep.subr.bf16.mxu0 0
      %1388 = vmatpush1.bf16.msra.mxu0 0
      %1389 = vmatprep.subr.bf16.mxu0 0
      %1390 = vmatpush1.bf16.msra.mxu0 0
      %1391 = vmatprep.subr.bf16.mxu0 0
      %1392 = vmatpush1.bf16.msra.mxu0 0
      %1393 = vmatprep.subr.bf16.mxu0 0
      %1394 = vmatpush1.bf16.msra.mxu0 0
      %1395 = vmatprep.subr.bf16.mxu0 0
      %1396 = vmatpush1.bf16.msra.mxu0 0
      %1397 = vmatprep.subr.bf16.mxu0 0
      %1398 = vmatpush1.bf16.msra.mxu0 0
      %1399 = vmatprep.mubr.bf16.mxu0 0
      %1400 = vmatmul.mubr.bf16.gmra.mrb[0].mxu0 %v1193
      %v1401 = vpop.f32.mrb[0].mxu0
      %v1402 = vadd.f32 %v1313, %v1401
      %v1403 = vpop.f32.mrb[0].mxu0
      %v1404 = vpop.f32.mrb[0].mxu0
      %v1405 = vadd.f32 %v1316, %v1404
      %v1406 = vpop.f32.mrb[0].mxu0
      %1407 = vdwg.mxu0
      %v1408 = vld [vmem:[#allocation4 + $0x9] sm:$0xff]
      %v1409 = vld [vmem:[#allocation4 + $0x11] sm:$0xff]
      %v1410 = vsel %vm721, %v1408, 0.0
      %v1411 = vsel %vm722, %v1409, 0.0
      %v1412 = vpack.c.bf16 %v1411, %v1410
      %s1413 = scalar_lea.vmem %s5, 128
      %v1414 = vld [vmem:[%s1413] sm:$0xf]
      %v1415 = vld [vmem:[%s1413 + $0x4] sm:$0xf]
      %v1416 = vld [vmem:[%s1413 + $0x8] sm:$0xf]
      %v1417 = vld [vmem:[%s1413 + $0xc] sm:$0xf]
      %v1418 = vld [vmem:[%s1413 + $0x10] sm:$0xf]
      %v1419 = vld [vmem:[%s1413 + $0x14] sm:$0xf]
      %v1420 = vld [vmem:[%s1413 + $0x18] sm:$0xf]
      %v1421 = vld [vmem:[%s1413 + $0x1c] sm:$0xf]
      %v1422 = vld [vmem:[%s1413 + $0x20] sm:$0xf]
      %v1423 = vld [vmem:[%s1413 + $0x24] sm:$0xf]
      %v1424 = vld [vmem:[%s1413 + $0x28] sm:$0xf]
      %v1425 = vld [vmem:[%s1413 + $0x2c] sm:$0xf]
      %v1426 = vld [vmem:[%s1413 + $0x30] sm:$0xf]
      %v1427 = vld [vmem:[%s1413 + $0x34] sm:$0xf]
      %v1428 = vld [vmem:[%s1413 + $0x38] sm:$0xf]
      %v1429 = vld [vmem:[%s1413 + $0x3c] sm:$0xf]
      %v1446 = vunpack.c.l.b16 %v1414
      %v1447 = vunpack.c.l.b16 %v1415
      %v1448 = vunpack.c.l.b16 %v1416
      %v1449 = vunpack.c.l.b16 %v1417
      %v1450 = vunpack.c.l.b16 %v1418
      %v1451 = vunpack.c.l.b16 %v1419
      %v1452 = vunpack.c.l.b16 %v1420
      %v1453 = vunpack.c.l.b16 %v1421
      %v1454 = vunpack.c.l.b16 %v1422
      %v1455 = vunpack.c.l.b16 %v1423
      %v1456 = vunpack.c.l.b16 %v1424
      %v1457 = vunpack.c.l.b16 %v1425
      %v1458 = vunpack.c.l.b16 %v1426
      %v1459 = vunpack.c.l.b16 %v1427
      %v1460 = vunpack.c.l.b16 %v1428
      %v1461 = vunpack.c.l.b16 %v1429
      %v1462 = vpack.c.b16 %v1447, %v1446
      %v1463 = vpack.c.b16 %v1449, %v1448
      %v1464 = vpack.c.b16 %v1451, %v1450
      %v1465 = vpack.c.b16 %v1453, %v1452
      %v1466 = vpack.c.b16 %v1455, %v1454
      %v1467 = vpack.c.b16 %v1457, %v1456
      %v1468 = vpack.c.b16 %v1459, %v1458
      %v1469 = vpack.c.b16 %v1461, %v1460
      %1478 = vmatprep.subr.bf16.mxu0 0
      %1479 = vmatpush1.bf16.msra.mxu0 %v1462
      %1480 = vmatprep.subr.bf16.mxu0 0
      %1481 = vmatpush1.bf16.msra.mxu0 %v1463
      %1482 = vmatprep.subr.bf16.mxu0 0
      %1483 = vmatpush1.bf16.msra.mxu0 %v1464
      %1484 = vmatprep.subr.bf16.mxu0 0
      %1485 = vmatpush1.bf16.msra.mxu0 %v1465
      %1486 = vmatprep.subr.bf16.mxu0 0
      %1487 = vmatpush1.bf16.msra.mxu0 %v1466
      %1488 = vmatprep.subr.bf16.mxu0 0
      %1489 = vmatpush1.bf16.msra.mxu0 %v1467
      %1490 = vmatprep.subr.bf16.mxu0 0
      %1491 = vmatpush1.bf16.msra.mxu0 %v1468
      %1492 = vmatprep.subr.bf16.mxu0 0
      %1493 = vmatpush1.bf16.msra.mxu0 %v1469
      %1494 = vmatprep.subr.bf16.mxu0 0
      %1495 = vmatpush1.bf16.msra.mxu0 0
      %1496 = vmatprep.subr.bf16.mxu0 0
      %1497 = vmatpush1.bf16.msra.mxu0 0
      %1498 = vmatprep.subr.bf16.mxu0 0
      %1499 = vmatpush1.bf16.msra.mxu0 0
      %1500 = vmatprep.subr.bf16.mxu0 0
      %1501 = vmatpush1.bf16.msra.mxu0 0
      %1502 = vmatprep.subr.bf16.mxu0 0
      %1503 = vmatpush1.bf16.msra.mxu0 0
      %1504 = vmatprep.subr.bf16.mxu0 0
      %1505 = vmatpush1.bf16.msra.mxu0 0
      %1506 = vmatprep.subr.bf16.mxu0 0
      %1507 = vmatpush1.bf16.msra.mxu0 0
      %1508 = vmatprep.subr.bf16.mxu0 0
      %1509 = vmatpush1.bf16.msra.mxu0 0
      %1510 = vmatprep.mubr.bf16.mxu0 0
      %1511 = vmatmul.mubr.bf16.gmra.mrb[0].mxu0 %v1412
      %v1512 = vpop.f32.mrb[0].mxu0
      %v1513 = vadd.f32 0.0, %v1512
      %v1514 = vpop.f32.mrb[0].mxu0
      %v1515 = vpop.f32.mrb[0].mxu0
      %v1516 = vadd.f32 0.0, %v1515
      %v1517 = vpop.f32.mrb[0].mxu0
      %1518 = vdwg.mxu0
      %v1519 = vadd.f32 %v1402, %v1513
      %v1520 = vadd.f32 %v1405, %v1516
      %v1521 = vld [vmem:[%s6] sm:$0x1]
      %v1523 = vlaneseq
      %v1524 = vshrl.u32 %v1523, 7
      %v1525 = vsub.s32 0, %v1524
      %v1526 = vrot.slane %v1521, %v1525
      %v1528 = vadd.f32 %v1519, %v1526
      %v1529 = vadd.f32 %v1520, %v1526
      %vm1530 = vcmp.ge.f32.partialorder %v1528, 0.0
      %vm1531 = vcmp.ge.f32.partialorder %v1529, 0.0
      %v1532 = vmul.f32 %v1528, 0.01
      %v1533 = vmul.f32 %v1529, 0.01
      %v1534 = vsel %vm1530, %v1528, %v1532
      %v1535 = vsel %vm1531, %v1529, %v1533
      %1536 = vst [vmem:[%s453] sm:$0xff] %v1534
      %1537 = vst [vmem:[%s453 + $0x8] sm:$0xff] %v1535
      %v1538 = vpack.c.bf16 %v1535, %v1534
      %v1539 = vld [vmem:[%s7] sm:$0xf]
      %v1540 = vld [vmem:[%s7 + $0x4] sm:$0xf]
      %v1541 = vld [vmem:[%s7 + $0x8] sm:$0xf]
      %v1542 = vld [vmem:[%s7 + $0xc] sm:$0xf]
      %v1543 = vld [vmem:[%s7 + $0x10] sm:$0xf]
      %v1544 = vld [vmem:[%s7 + $0x14] sm:$0xf]
      %v1545 = vld [vmem:[%s7 + $0x18] sm:$0xf]
      %v1546 = vld [vmem:[%s7 + $0x1c] sm:$0xf]
      %v1547 = vld [vmem:[%s7 + $0x20] sm:$0xf]
      %v1548 = vld [vmem:[%s7 + $0x24] sm:$0xf]
      %v1549 = vld [vmem:[%s7 + $0x28] sm:$0xf]
      %v1550 = vld [vmem:[%s7 + $0x2c] sm:$0xf]
      %v1551 = vld [vmem:[%s7 + $0x30] sm:$0xf]
      %v1552 = vld [vmem:[%s7 + $0x34] sm:$0xf]
      %v1553 = vld [vmem:[%s7 + $0x38] sm:$0xf]
      %v1554 = vld [vmem:[%s7 + $0x3c] sm:$0xf]
      %v1571 = vunpack.c.l.b16 %v1539
      %v1572 = vunpack.c.l.b16 %v1540
      %v1573 = vunpack.c.l.b16 %v1541
      %v1574 = vunpack.c.l.b16 %v1542
      %v1575 = vunpack.c.l.b16 %v1543
      %v1576 = vunpack.c.l.b16 %v1544
      %v1577 = vunpack.c.l.b16 %v1545
      %v1578 = vunpack.c.l.b16 %v1546
      %v1579 = vunpack.c.l.b16 %v1547
      %v1580 = vunpack.c.l.b16 %v1548
      %v1581 = vunpack.c.l.b16 %v1549
      %v1582 = vunpack.c.l.b16 %v1550
      %v1583 = vunpack.c.l.b16 %v1551
      %v1584 = vunpack.c.l.b16 %v1552
      %v1585 = vunpack.c.l.b16 %v1553
      %v1586 = vunpack.c.l.b16 %v1554
      %v1587 = vpack.c.b16 %v1572, %v1571
      %v1588 = vpack.c.b16 %v1574, %v1573
      %v1589 = vpack.c.b16 %v1576, %v1575
      %v1590 = vpack.c.b16 %v1578, %v1577
      %v1591 = vpack.c.b16 %v1580, %v1579
      %v1592 = vpack.c.b16 %v1582, %v1581
      %v1593 = vpack.c.b16 %v1584, %v1583
      %v1594 = vpack.c.b16 %v1586, %v1585
      %1603 = vmatprep.subr.bf16.mxu0 0
      %1604 = vmatpush1.bf16.msra.mxu0 %v1587
      %1605 = vmatprep.subr.bf16.mxu0 0
      %1606 = vmatpush1.bf16.msra.mxu0 %v1588
      %1607 = vmatprep.subr.bf16.mxu0 0
      %1608 = vmatpush1.bf16.msra.mxu0 %v1589
      %1609 = vmatprep.subr.bf16.mxu0 0
      %1610 = vmatpush1.bf16.msra.mxu0 %v1590
      %1611 = vmatprep.subr.bf16.mxu0 0
      %1612 = vmatpush1.bf16.msra.mxu0 %v1591
      %1613 = vmatprep.subr.bf16.mxu0 0
      %1614 = vmatpush1.bf16.msra.mxu0 %v1592
      %1615 = vmatprep.subr.bf16.mxu0 0
      %1616 = vmatpush1.bf16.msra.mxu0 %v1593
      %1617 = vmatprep.subr.bf16.mxu0 0
      %1618 = vmatpush1.bf16.msra.mxu0 %v1594
      %1619 = vmatprep.subr.bf16.mxu0 0
      %1620 = vmatpush1.bf16.msra.mxu0 0
      %1621 = vmatprep.subr.bf16.mxu0 0
      %1622 = vmatpush1.bf16.msra.mxu0 0
      %1623 = vmatprep.subr.bf16.mxu0 0
      %1624 = vmatpush1.bf16.msra.mxu0 0
      %1625 = vmatprep.subr.bf16.mxu0 0
      %1626 = vmatpush1.bf16.msra.mxu0 0
      %1627 = vmatprep.subr.bf16.mxu0 0
      %1628 = vmatpush1.bf16.msra.mxu0 0
      %1629 = vmatprep.subr.bf16.mxu0 0
      %1630 = vmatpush1.bf16.msra.mxu0 0
      %1631 = vmatprep.subr.bf16.mxu0 0
      %1632 = vmatpush1.bf16.msra.mxu0 0
      %1633 = vmatprep.subr.bf16.mxu0 0
      %1634 = vmatpush1.bf16.msra.mxu0 0
      %1635 = vmatprep.mubr.bf16.mxu0 0
      %1636 = vmatmul.mubr.bf16.gmra.mrb[0].mxu0 %v1538
      %v1637 = vpop.f32.mrb[0].mxu0
      %v1638 = vadd.f32 0.0, %v1637
      %v1639 = vpop.f32.mrb[0].mxu0
      %v1640 = vpop.f32.mrb[0].mxu0
      %v1641 = vadd.f32 0.0, %v1640
      %v1642 = vpop.f32.mrb[0].mxu0
      %1643 = vdwg.mxu0
      %vm1644 = vcmp.ge.f32.partialorder %v1638, 0.0
      %vm1645 = vcmp.ge.f32.partialorder %v1641, 0.0
      %v1646 = vmul.f32 %v1638, 0.01
      %v1647 = vmul.f32 %v1641, 0.01
      %v1648 = vsel %vm1644, %v1638, %v1646
      %v1649 = vsel %vm1645, %v1641, %v1647
      %vm1650 = vcmask 261120
      %1651 = vst.msk [vmem:[%s459] sm:$0xff] %vm1650, %v1648
      %1652 = vst.msk [vmem:[%s459 + $0x8] sm:$0xff] %vm1650, %v1649
      %v1653 = vld [vmem:[%s8] sm:$0xff]
      %v1654 = vld [vmem:[%s8 + $0x8] sm:$0xff]
      %v1655 = vld [vmem:[%s8 + $0x10] sm:$0xff]
      %v1656 = vld [vmem:[%s8 + $0x18] sm:$0xff]
      %v1657 = vld [vmem:[%s8 + $0x20] sm:$0xff]
      %v1658 = vld [vmem:[%s8 + $0x28] sm:$0xff]
      %v1659 = vld [vmem:[%s8 + $0x30] sm:$0xff]
      %v1660 = vld [vmem:[%s8 + $0x38] sm:$0xff]
      %v1661 = vld [vmem:[%s8 + $0x40] sm:$0xff]
      %v1662 = vld [vmem:[%s8 + $0x48] sm:$0xff]
      %v1663 = vld [vmem:[%s8 + $0x50] sm:$0xff]
      %v1664 = vld [vmem:[%s8 + $0x58] sm:$0xff]
      %v1665 = vld [vmem:[%s8 + $0x60] sm:$0xff]
      %v1666 = vld [vmem:[%s8 + $0x68] sm:$0xff]
      %v1667 = vld [vmem:[%s8 + $0x70] sm:$0xff]
      %v1668 = vld [vmem:[%s8 + $0x78] sm:$0xff]
      %v1669 = vld [vmem:[%s9] sm:$0x3]
      %v1671 = vlaneseq
      %v1672 = vshrl.u32 %v1671, 7
      %v1673 = vsub.s32 0, %v1672
      %v1674 = vrot.slane %v1669, %v1673
      %v1675 = vlaneseq
      %v1676 = vshrl.u32 %v1675, 7
      %v1677 = vsub.s32 1, %v1676
      %v1678 = vrot.slane %v1669, %v1677
      %v1697 = vunpack.c.l.b16 %v1653
      %v1698 = vunpack.c.h.b16 %v1653
      %v1699 = vunpack.c.l.b16 %v1654
      %v1700 = vunpack.c.h.b16 %v1654
      %v1701 = vunpack.c.l.b16 %v1655
      %v1702 = vunpack.c.h.b16 %v1655
      %v1703 = vunpack.c.l.b16 %v1656
      %v1704 = vunpack.c.h.b16 %v1656
      %v1705 = vunpack.c.l.b16 %v1657
      %v1706 = vunpack.c.h.b16 %v1657
      %v1707 = vunpack.c.l.b16 %v1658
      %v1708 = vunpack.c.h.b16 %v1658
      %v1709 = vunpack.c.l.b16 %v1659
      %v1710 = vunpack.c.h.b16 %v1659
      %v1711 = vunpack.c.l.b16 %v1660
      %v1712 = vunpack.c.h.b16 %v1660
      %v1713 = vunpack.c.l.b16 %v1661
      %v1714 = vunpack.c.h.b16 %v1661
      %v1715 = vunpack.c.l.b16 %v1662
      %v1716 = vunpack.c.h.b16 %v1662
      %v1717 = vunpack.c.l.b16 %v1663
      %v1718 = vunpack.c.h.b16 %v1663
      %v1719 = vunpack.c.l.b16 %v1664
      %v1720 = vunpack.c.h.b16 %v1664
      %v1721 = vunpack.c.l.b16 %v1665
      %v1722 = vunpack.c.h.b16 %v1665
      %v1723 = vunpack.c.l.b16 %v1666
      %v1724 = vunpack.c.h.b16 %v1666
      %v1725 = vunpack.c.l.b16 %v1667
      %v1726 = vunpack.c.h.b16 %v1667
      %v1727 = vunpack.c.l.b16 %v1668
      %v1728 = vunpack.c.h.b16 %v1668
      %v1729 = vpack.c.b16 %v1699, %v1697
      %v1730 = vpack.c.b16 %v1700, %v1698
      %v1731 = vpack.c.b16 %v1703, %v1701
      %v1732 = vpack.c.b16 %v1704, %v1702
      %v1733 = vpack.c.b16 %v1707, %v1705
      %v1734 = vpack.c.b16 %v1708, %v1706
      %v1735 = vpack.c.b16 %v1711, %v1709
      %v1736 = vpack.c.b16 %v1712, %v1710
      %v1737 = vpack.c.b16 %v1715, %v1713
      %v1738 = vpack.c.b16 %v1716, %v1714
      %v1739 = vpack.c.b16 %v1719, %v1717
      %v1740 = vpack.c.b16 %v1720, %v1718
      %v1741 = vpack.c.b16 %v1723, %v1721
      %v1742 = vpack.c.b16 %v1724, %v1722
      %v1743 = vpack.c.b16 %v1727, %v1725
      %v1744 = vpack.c.b16 %v1728, %v1726
      %1761 = vmatprep.subr.bf16.mxu0 %v1730
      %1762 = vmatpush1.bf16.msra.mxu0 %v1729
      %1763 = vmatprep.subr.bf16.mxu0 %v1732
      %1764 = vmatpush1.bf16.msra.mxu0 %v1731
      %1765 = vmatprep.subr.bf16.mxu0 %v1734
      %1766 = vmatpush1.bf16.msra.mxu0 %v1733
      %1767 = vmatprep.subr.bf16.mxu0 %v1736
      %1768 = vmatpush1.bf16.msra.mxu0 %v1735
      %1769 = vmatprep.subr.bf16.mxu0 %v1738
      %1770 = vmatpush1.bf16.msra.mxu0 %v1737
      %1771 = vmatprep.subr.bf16.mxu0 %v1740
      %1772 = vmatpush1.bf16.msra.mxu0 %v1739
      %1773 = vmatprep.subr.bf16.mxu0 %v1742
      %1774 = vmatpush1.bf16.msra.mxu0 %v1741
      %1775 = vmatprep.subr.bf16.mxu0 %v1744
      %1776 = vmatpush1.bf16.msra.mxu0 %v1743
      %1777 = vmatprep.subr.bf16.mxu0 0
      %1778 = vmatpush1.bf16.msra.mxu0 0
      %1779 = vmatprep.subr.bf16.mxu0 0
      %1780 = vmatpush1.bf16.msra.mxu0 0
      %1781 = vmatprep.subr.bf16.mxu0 0
      %1782 = vmatpush1.bf16.msra.mxu0 0
      %1783 = vmatprep.subr.bf16.mxu0 0
      %1784 = vmatpush1.bf16.msra.mxu0 0
      %1785 = vmatprep.subr.bf16.mxu0 0
      %1786 = vmatpush1.bf16.msra.mxu0 0
      %1787 = vmatprep.subr.bf16.mxu0 0
      %1788 = vmatpush1.bf16.msra.mxu0 0
      %1789 = vmatprep.subr.bf16.mxu0 0
      %1790 = vmatpush1.bf16.msra.mxu0 0
      %1791 = vmatprep.subr.bf16.mxu0 0
      %1792 = vmatpush1.bf16.msra.mxu0 0
      %1793 = vmatprep.mubr.bf16.mxu0 0
      %1794 = vmatmul.mubr.bf16.gmra.mrb[0].mxu0 %v1538
      %v1795 = vpop.f32.mrb[0].mxu0
      %v1796 = vadd.f32 %v1674, %v1795
      %v1797 = vpop.f32.mrb[0].mxu0
      %v1798 = vadd.f32 %v1678, %v1797
      %v1799 = vpop.f32.mrb[0].mxu0
      %v1800 = vadd.f32 %v1674, %v1799
      %v1801 = vpop.f32.mrb[0].mxu0
      %v1802 = vadd.f32 %v1678, %v1801
      %1803 = vdwg.mxu0
      %1804 = vst [vmem:[%s466] sm:$0xff] %v1796
      %1805 = vst [vmem:[%s466 + $0x8] sm:$0xff] %v1798
      %1806 = vst [vmem:[%s466 + $0x10] sm:$0xff] %v1800
      %1807 = vst [vmem:[%s466 + $0x18] sm:$0xff] %v1802
      %s1808 = smul.u32 2, %s24
      %p1809 = scmp.lt.s32.totalorder %s1808, 3
      %s1810 = scalar_select %p1809, %s1808, 3
      %s1811 = smul.addr %s1810, 8
      %s1812 = scalar_lea.vmem %s10, %s1811
      %s1813 = smul.u32 2, %s24
      %p1814 = scmp.lt.s32.totalorder %s1813, 3
      %s1815 = scalar_select %p1814, %s1813, 3
      %s1816 = smul.addr %s1815, 8
      %s1817 = scalar_lea.vmem %s11, %s1816
      %s1818 = smul.u32 2, %s24
      %p1819 = scmp.lt.s32.totalorder %s1818, 3
      %s1820 = scalar_select %p1819, %s1818, 3
      %s1821 = smul.addr %s1820, 2
      %s1822 = smul.addr %s1821, 8
      %s1823 = scalar_lea.vmem %s12, %s1822
      // Predicated region
      $region61: #{decoder_ds_forward.8} parent=59 // pred_check
        %p1824 = pneg %p262
      $region62: #{decoder_ds_forward.8} parent=59 // pred_check_branch
        %1826 = sbr.rel (%p1824) target = $region64
      $region63: #{decoder_ds_forward.8} parent=59 // pred_region
        %s1827 = smul.u32 2, %s24
      $region64: #{decoder_ds_forward.8} parent=59 // pred_fallthru
        _
      // Predicated region
      $region65: #{decoder_ds_forward.8} parent=59 // pred_check
        %p1828 = pneg %p288
      $region66: #{decoder_ds_forward.8} parent=59 // pred_check_branch
        %1830 = sbr.rel (%p1828) target = $region68
      $region67: #{decoder_ds_forward.8} parent=59 // pred_region
        %s1831 = smul.u32 2, %s24
      $region68: #{decoder_ds_forward.8} parent=59 // pred_fallthru
        _
      // Predicated region
      $region69: #{decoder_ds_forward.8} parent=59 // pred_check
        %p1832 = pneg %p314
      $region70: #{decoder_ds_forward.8} parent=59 // pred_check_branch
        %1834 = sbr.rel (%p1832) target = $region72
      $region71: #{decoder_ds_forward.8} parent=59 // pred_region
        %s1835 = smul.u32 2, %s24
      $region72: #{decoder_ds_forward.8} parent=59 // pred_fallthru
        _
    $region60: #{decoder_ds_forward.8} parent=5 // pred_fallthru
      _
    %p1836 = scmp.le.s32.totalorder 2, %s19
    // Predicated region
    $region73: #{decoder_ds_forward.8} parent=5 // pred_check
      %p1837 = pneg %p1836
    $region74: #{decoder_ds_forward.8} parent=5 // pred_check_branch
      %1839 = sbr.rel (%p1837) target = $region76
    $region75: #{decoder_ds_forward.8} parent=5 // pred_region
      %s1840 = ssub.s32 %s19, 2
      // Predicated region
      $region77: #{decoder_ds_forward.8} parent=75 // pred_check
        %p1841 = pneg %p268
      $region78: #{decoder_ds_forward.8} parent=75 // pred_check_branch
        %1843 = sbr.rel (%p1841) target = $region80
      $region79: #{decoder_ds_forward.8} parent=75 // pred_region
        %s1844 = smul.u32 2, %s25
        %p1845 = scmp.lt.s32.totalorder %s1844, 3
        %s1846 = scalar_select %p1845, %s1844, 3
        %s1847 = smul.addr %s1846, 8
        %s1848 = scalar_lea.vmem %s10, %s1847
      $region80: #{decoder_ds_forward.8} parent=75 // pred_fallthru
        _
      // Predicated region
      $region81: #{decoder_ds_forward.8} parent=75 // pred_check
        %p1849 = pneg %p294
      $region82: #{decoder_ds_forward.8} parent=75 // pred_check_branch
        %1851 = sbr.rel (%p1849) target = $region84
      $region83: #{decoder_ds_forward.8} parent=75 // pred_region
        %s1852 = smul.u32 2, %s25
        %p1853 = scmp.lt.s32.totalorder %s1852, 3
        %s1854 = scalar_select %p1853, %s1852, 3
        %s1855 = smul.addr %s1854, 8
        %s1856 = scalar_lea.vmem %s11, %s1855
      $region84: #{decoder_ds_forward.8} parent=75 // pred_fallthru
        _
      // Predicated region
      $region85: #{decoder_ds_forward.8} parent=75 // pred_check
        %p1857 = pneg %p320
      $region86: #{decoder_ds_forward.8} parent=75 // pred_check_branch
        %1859 = sbr.rel (%p1857) target = $region88
      $region87: #{decoder_ds_forward.8} parent=75 // pred_region
        %s1860 = smul.u32 2, %s25
        %p1861 = scmp.lt.s32.totalorder %s1860, 3
        %s1862 = scalar_select %p1861, %s1860, 3
        %s1863 = smul.addr %s1862, 2
        %s1864 = smul.addr %s1863, 8
        %s1865 = scalar_lea.vmem %s12, %s1864
      $region88: #{decoder_ds_forward.8} parent=75 // pred_fallthru
        _
    $region76: #{decoder_ds_forward.8} parent=5 // pred_fallthru
      _
  $region6: #{decoder_ds_forward.8} parent=0 // loop_footer
    %s23 = sadd.s32 1, %s19
  $region7: #{decoder_ds_forward.8} parent=0 // loop_footer_branch
    %18 = sbr.rel target = $region3
  $region8: #{decoder_ds_forward.8} parent=0 // loop_exit
    _

// kernel: decoder_ds_forward.9
$region0: #{decoder_ds_forward.9}
  #allocation0 [shape = 'u32[]', space=smem, size = 0x4, offset = 0x4, fixed_abs, tag = 'smem constant byte address 0x4 - core index']
  #allocation1 [shape = 'u32[144,128]{1,0:T(1,128)}', space=vmem, size = 0x12000, scoped, tag = 'internal scratch']
  #allocation2 [shape = 'f32[48,128]{1,0:T(8,128)}', space=vmem, size = 0x6000, scoped, tag = 'scratch operand']
  #allocation3 [shape = 'f32[48,128]{1,0:T(8,128)}', space=vmem, size = 0x6000, scoped, tag = 'scratch operand']
  #allocation4 [shape = 'f32[48,128]{1,0:T(8,128)}', space=vmem, size = 0x6000, scoped, tag = 'scratch operand']
  %s0 = inlined_call_operand.vmem [shape: f32[64,128], index: 0, kind: input, shape index: {}]
  %s1 = inlined_call_operand.vmem [shape: f32[64,128], index: 1, kind: input, shape index: {}]
  %s2 = inlined_call_operand.vmem [shape: bf16[3,128,128], index: 2, kind: input, shape index: {}]
  %s3 = inlined_call_operand.vmem [shape: bf16[3,128,128], index: 3, kind: input, shape index: {}]
  %s4 = inlined_call_operand.vmem [shape: f32[1,128], index: 4, kind: input, shape index: {}]
  %s5 = inlined_call_operand.vmem [shape: bf16[3,128,128], index: 5, kind: input, shape index: {}]
  %s6 = inlined_call_operand.vmem [shape: f32[1,128], index: 6, kind: input, shape index: {}]
  %s7 = inlined_call_operand.vmem [shape: bf16[128,64], index: 7, kind: input, shape index: {}]
  %s8 = inlined_call_operand.hbm [shape: f32[64,128], index: 8, kind: output, shape index: {0}]
  %s9 = inlined_call_operand.vmem [shape: f32[64,64], index: 9, kind: output, shape index: {1}]
  %10 = xla_tuple %s8, %s9
  %s11 = sld [smem:[#allocation0]]
  $region73: #{decoder_ds_forward.9} parent=0
    _
  %s13 = ssub.s32 1, %s11
  %s14 = scalar_select 0, %s13, %s11
  $region1: #{decoder_ds_forward.9} parent=0
    #allocation5 [shape = 'u8[32768]{0}', space=vmem, size = 0x8000, scoped, tag = 'output window, operand 0']
    #allocation6 [shape = 's32[2]{0}', space=sflag, size = 0x8, scoped, tag = 'scoped memory for decoder_ds_forward.9']
    %15 = vsyncpa [#allocation6], 0
    %s16 = scalar_lea.sflag [#allocation6], 1
    %17 = vsyncpa %s16, 0
    loop: start=0, step=1, limit=4
    $region2: #{decoder_ds_forward.9} parent=1 // loop_pre_header
      _
    $region3: #{decoder_ds_forward.9} parent=1 // loop_header
      %s19 = sphi 0, %s23
      %p20 = scmp.ge.s32.totalorder %s19, 4
      %s29 = sphi 0, %s31
      %s32 = sphi 0, %s29
      %s33 = sphi 0, %s32
      %s49 = sphi 0, %s33
      %s55 = sphi 0, %s57
      %s58 = sphi 0, %s55
      %s59 = sphi 0, %s58
      %s75 = sphi 0, %s59
      %s79 = sphi 0, %s79
      %s81 = sphi 0, %s79
      %s82 = sphi 0, %s81
      %s96 = sphi 0, %s82
      %s100 = sphi 0, %s100
      %s102 = sphi 0, %s100
      %s103 = sphi 0, %s102
      %s117 = sphi 0, %s103
      %s121 = sphi 0, %s121
      %s123 = sphi 0, %s121
      %s124 = sphi 0, %s123
      %s138 = sphi 0, %s124
      %s142 = sphi 0, %s142
      %s144 = sphi 0, %s142
      %s145 = sphi 0, %s144
      %s159 = sphi 0, %s145
      %s163 = sphi 0, %s163
      %s165 = sphi 0, %s163
      %s166 = sphi 0, %s165
      %s180 = sphi 0, %s166
      %s184 = sphi 0, %s184
      %s186 = sphi 0, %s184
      %s187 = sphi 0, %s186
      %s201 = sphi 0, %s187
      %s207 = sphi 0, %s209
      %s210 = sphi 0, %s207
      %s211 = sphi 0, %s210
      %s227 = sphi 0, %s211
      %s233 = sphi 0, %s235
      %s236 = sphi 0, %s233
      %s237 = sphi 0, %s236
      %s253 = sphi 0, %s237
    $region4: #{decoder_ds_forward.9} parent=1 // loop_header_branch
      %22 = sbr.rel (%p20) target = $region8
    $region5: #{decoder_ds_forward.9} parent=1 // loop_body
      %s24 = ssub.s32 %s19, 1
      %s25 = ssub.s32 %s19, 2
      %s26 = sadd.s32 %s19, 1
      %s27 = ssub.s32 %s19, %s26
      %p28 = scmp.eq.s32.totalorder %s27, 0
      %s30 = sadd.s32 %s29, 1
      %s31 = scalar_select %p28, %s29, %s30
      %p34 = pneg %p28
      %p35 = scmp.eq.s32.totalorder %s19, 1
      %p36 = por %p34, %p35
      %p37 = scmp.ne.s32.totalorder %s29, %s32
      %p38 = scmp.eq.s32.totalorder %s19, 0
      %p39 = por %p37, %p38
      %p40 = scmp.ne.s32.totalorder %s29, %s32
      %p41 = scmp.eq.s32.totalorder %s24, 1
      %p42 = por %p40, %p41
      %p43 = scmp.ne.s32.totalorder %s32, %s33
      %p44 = scmp.eq.s32.totalorder %s24, 0
      %p45 = por %p43, %p44
      %p46 = scmp.ne.s32.totalorder %s32, %s33
      %p47 = scmp.eq.s32.totalorder %s25, 1
      %p48 = por %p46, %p47
      %p50 = scmp.ne.s32.totalorder %s33, %s49
      %p51 = scmp.eq.s32.totalorder %s25, 0
      %p52 = por %p50, %p51
      %s53 = ssub.s32 %s19, %s26
      %p54 = scmp.eq.s32.totalorder %s53, 0
      %s56 = sadd.s32 %s55, 1
      %s57 = scalar_select %p54, %s55, %s56
      %p60 = pneg %p54
      %p61 = scmp.eq.s32.totalorder %s19, 1
      %p62 = por %p60, %p61
      %p63 = scmp.ne.s32.totalorder %s55, %s58
      %p64 = scmp.eq.s32.totalorder %s19, 0
      %p65 = por %p63, %p64
      %p66 = scmp.ne.s32.totalorder %s55, %s58
      %p67 = scmp.eq.s32.totalorder %s24, 1
      %p68 = por %p66, %p67
      %p69 = scmp.ne.s32.totalorder %s58, %s59
      %p70 = scmp.eq.s32.totalorder %s24, 0
      %p71 = por %p69, %p70
      %p72 = scmp.ne.s32.totalorder %s58, %s59
      %p73 = scmp.eq.s32.totalorder %s25, 1
      %p74 = por %p72, %p73
      %p76 = scmp.ne.s32.totalorder %s59, %s75
      %p77 = scmp.eq.s32.totalorder %s25, 0
      %p78 = por %p76, %p77
      %s80 = sadd.s32 %s79, 1
      %p83 = scmp.eq.s32.totalorder %s19, 1
      %p84 = scmp.ne.s32.totalorder %s79, %s81
      %p85 = scmp.eq.s32.totalorder %s19, 0
      %p86 = por %p84, %p85
      %p87 = scmp.ne.s32.totalorder %s79, %s81
      %p88 = scmp.eq.s32.totalorder %s24, 1
      %p89 = por %p87, %p88
      %p90 = scmp.ne.s32.totalorder %s81, %s82
      %p91 = scmp.eq.s32.totalorder %s24, 0
      %p92 = por %p90, %p91
      %p93 = scmp.ne.s32.totalorder %s81, %s82
      %p94 = scmp.eq.s32.totalorder %s25, 1
      %p95 = por %p93, %p94
      %p97 = scmp.ne.s32.totalorder %s82, %s96
      %p98 = scmp.eq.s32.totalorder %s25, 0
      %p99 = por %p97, %p98
      %s101 = sadd.s32 %s100, 1
      %p104 = scmp.eq.s32.totalorder %s19, 1
      %p105 = scmp.ne.s32.totalorder %s100, %s102
      %p106 = scmp.eq.s32.totalorder %s19, 0
      %p107 = por %p105, %p106
      %p108 = scmp.ne.s32.totalorder %s100, %s102
      %p109 = scmp.eq.s32.totalorder %s24, 1
      %p110 = por %p108, %p109
      %p111 = scmp.ne.s32.totalorder %s102, %s103
      %p112 = scmp.eq.s32.totalorder %s24, 0
      %p113 = por %p111, %p112
      %p114 = scmp.ne.s32.totalorder %s102, %s103
      %p115 = scmp.eq.s32.totalorder %s25, 1
      %p116 = por %p114, %p115
      %p118 = scmp.ne.s32.totalorder %s103, %s117
      %p119 = scmp.eq.s32.totalorder %s25, 0
      %p120 = por %p118, %p119
      %s122 = sadd.s32 %s121, 1
      %p125 = scmp.eq.s32.totalorder %s19, 1
      %p126 = scmp.ne.s32.totalorder %s121, %s123
      %p127 = scmp.eq.s32.totalorder %s19, 0
      %p128 = por %p126, %p127
      %p129 = scmp.ne.s32.totalorder %s121, %s123
      %p130 = scmp.eq.s32.totalorder %s24, 1
      %p131 = por %p129, %p130
      %p132 = scmp.ne.s32.totalorder %s123, %s124
      %p133 = scmp.eq.s32.totalorder %s24, 0
      %p134 = por %p132, %p133
      %p135 = scmp.ne.s32.totalorder %s123, %s124
      %p136 = scmp.eq.s32.totalorder %s25, 1
      %p137 = por %p135, %p136
      %p139 = scmp.ne.s32.totalorder %s124, %s138
      %p140 = scmp.eq.s32.totalorder %s25, 0
      %p141 = por %p139, %p140
      %s143 = sadd.s32 %s142, 1
      %p146 = scmp.eq.s32.totalorder %s19, 1
      %p147 = scmp.ne.s32.totalorder %s142, %s144
      %p148 = scmp.eq.s32.totalorder %s19, 0
      %p149 = por %p147, %p148
      %p150 = scmp.ne.s32.totalorder %s142, %s144
      %p151 = scmp.eq.s32.totalorder %s24, 1
      %p152 = por %p150, %p151
      %p153 = scmp.ne.s32.totalorder %s144, %s145
      %p154 = scmp.eq.s32.totalorder %s24, 0
      %p155 = por %p153, %p154
      %p156 = scmp.ne.s32.totalorder %s144, %s145
      %p157 = scmp.eq.s32.totalorder %s25, 1
      %p158 = por %p156, %p157
      %p160 = scmp.ne.s32.totalorder %s145, %s159
      %p161 = scmp.eq.s32.totalorder %s25, 0
      %p162 = por %p160, %p161
      %s164 = sadd.s32 %s163, 1
      %p167 = scmp.eq.s32.totalorder %s19, 1
      %p168 = scmp.ne.s32.totalorder %s163, %s165
      %p169 = scmp.eq.s32.totalorder %s19, 0
      %p170 = por %p168, %p169
      %p171 = scmp.ne.s32.totalorder %s163, %s165
      %p172 = scmp.eq.s32.totalorder %s24, 1
      %p173 = por %p171, %p172
      %p174 = scmp.ne.s32.totalorder %s165, %s166
      %p175 = scmp.eq.s32.totalorder %s24, 0
      %p176 = por %p174, %p175
      %p177 = scmp.ne.s32.totalorder %s165, %s166
      %p178 = scmp.eq.s32.totalorder %s25, 1
      %p179 = por %p177, %p178
      %p181 = scmp.ne.s32.totalorder %s166, %s180
      %p182 = scmp.eq.s32.totalorder %s25, 0
      %p183 = por %p181, %p182
      %s185 = sadd.s32 %s184, 1
      %p188 = scmp.eq.s32.totalorder %s19, 1
      %p189 = scmp.ne.s32.totalorder %s184, %s186
      %p190 = scmp.eq.s32.totalorder %s19, 0
      %p191 = por %p189, %p190
      %p192 = scmp.ne.s32.totalorder %s184, %s186
      %p193 = scmp.eq.s32.totalorder %s24, 1
      %p194 = por %p192, %p193
      %p195 = scmp.ne.s32.totalorder %s186, %s187
      %p196 = scmp.eq.s32.totalorder %s24, 0
      %p197 = por %p195, %p196
      %p198 = scmp.ne.s32.totalorder %s186, %s187
      %p199 = scmp.eq.s32.totalorder %s25, 1
      %p200 = por %p198, %p199
      %p202 = scmp.ne.s32.totalorder %s187, %s201
      %p203 = scmp.eq.s32.totalorder %s25, 0
      %p204 = por %p202, %p203
      %s205 = ssub.s32 %s19, %s26
      %p206 = scmp.eq.s32.totalorder %s205, 0
      %s208 = sadd.s32 %s207, 1
      %s209 = scalar_select %p206, %s207, %s208
      %p212 = pneg %p206
      %p213 = scmp.eq.s32.totalorder %s19, 1
      %p214 = por %p212, %p213
      %p215 = scmp.ne.s32.totalorder %s207, %s210
      %p216 = scmp.eq.s32.totalorder %s19, 0
      %p217 = por %p215, %p216
      %p218 = scmp.ne.s32.totalorder %s207, %s210
      %p219 = scmp.eq.s32.totalorder %s24, 1
      %p220 = por %p218, %p219
      %p221 = scmp.ne.s32.totalorder %s210, %s211
      %p222 = scmp.eq.s32.totalorder %s24, 0
      %p223 = por %p221, %p222
      %p224 = scmp.ne.s32.totalorder %s210, %s211
      %p225 = scmp.eq.s32.totalorder %s25, 1
      %p226 = por %p224, %p225
      %p228 = scmp.ne.s32.totalorder %s211, %s227
      %p229 = scmp.eq.s32.totalorder %s25, 0
      %p230 = por %p228, %p229
      %s231 = ssub.s32 %s19, %s26
      %p232 = scmp.eq.s32.totalorder %s231, 0
      %s234 = sadd.s32 %s233, 1
      %s235 = scalar_select %p232, %s233, %s234
      %p238 = pneg %p232
      %p239 = scmp.eq.s32.totalorder %s19, 1
      %p240 = por %p238, %p239
      %p241 = scmp.ne.s32.totalorder %s233, %s236
      %p242 = scmp.eq.s32.totalorder %s19, 0
      %p243 = por %p241, %p242
      %p244 = scmp.ne.s32.totalorder %s233, %s236
      %p245 = scmp.eq.s32.totalorder %s24, 1
      %p246 = por %p244, %p245
      %p247 = scmp.ne.s32.totalorder %s236, %s237
      %p248 = scmp.eq.s32.totalorder %s24, 0
      %p249 = por %p247, %p248
      %p250 = scmp.ne.s32.totalorder %s236, %s237
      %p251 = scmp.eq.s32.totalorder %s25, 1
      %p252 = por %p250, %p251
      %p254 = scmp.ne.s32.totalorder %s237, %s253
      %p255 = scmp.eq.s32.totalorder %s25, 0
      %p256 = por %p254, %p255
      %p257 = scmp.le.s32.totalorder 1, %s19
      %p258 = scmp.lt.s32.totalorder %s19, 3
      %p259 = pnand %p257, %p258
      %p260 = pneg %p259
      // Predicated region
      $region9: #{decoder_ds_forward.9} parent=5 // pred_check
        _
      $region10: #{decoder_ds_forward.9} parent=5 // pred_check_branch
        %262 = sbr.rel (%p259) target = $region12
      $region11: #{decoder_ds_forward.9} parent=5 // pred_region
        %s263 = ssub.s32 %s19, 1
        // Predicated region
        $region13: #{decoder_ds_forward.9} parent=11 // pred_check
          %p264 = pneg %p92
        $region14: #{decoder_ds_forward.9} parent=11 // pred_check_branch
          %266 = sbr.rel (%p264) target = $region16
        $region15: #{decoder_ds_forward.9} parent=11 // pred_region
          _
        $region16: #{decoder_ds_forward.9} parent=11 // pred_fallthru
          _
        // Predicated region
        $region17: #{decoder_ds_forward.9} parent=11 // pred_check
          %p267 = pneg %p113
        $region18: #{decoder_ds_forward.9} parent=11 // pred_check_branch
          %269 = sbr.rel (%p267) target = $region20
        $region19: #{decoder_ds_forward.9} parent=11 // pred_region
          _
        $region20: #{decoder_ds_forward.9} parent=11 // pred_fallthru
          _
        // Predicated region
        $region21: #{decoder_ds_forward.9} parent=11 // pred_check
          %p270 = pneg %p134
        $region22: #{decoder_ds_forward.9} parent=11 // pred_check_branch
          %272 = sbr.rel (%p270) target = $region24
        $region23: #{decoder_ds_forward.9} parent=11 // pred_region
          _
        $region24: #{decoder_ds_forward.9} parent=11 // pred_fallthru
          _
        // Predicated region
        $region25: #{decoder_ds_forward.9} parent=11 // pred_check
          %p273 = pneg %p155
        $region26: #{decoder_ds_forward.9} parent=11 // pred_check_branch
          %275 = sbr.rel (%p273) target = $region28
        $region27: #{decoder_ds_forward.9} parent=11 // pred_region
          _
        $region28: #{decoder_ds_forward.9} parent=11 // pred_fallthru
          _
        // Predicated region
        $region29: #{decoder_ds_forward.9} parent=11 // pred_check
          %p276 = pneg %p176
        $region30: #{decoder_ds_forward.9} parent=11 // pred_check_branch
          %278 = sbr.rel (%p276) target = $region32
        $region31: #{decoder_ds_forward.9} parent=11 // pred_region
          _
        $region32: #{decoder_ds_forward.9} parent=11 // pred_fallthru
          _
        // Predicated region
        $region33: #{decoder_ds_forward.9} parent=11 // pred_check
          %p279 = pneg %p197
        $region34: #{decoder_ds_forward.9} parent=11 // pred_check_branch
          %281 = sbr.rel (%p279) target = $region36
        $region35: #{decoder_ds_forward.9} parent=11 // pred_region
          _
        $region36: #{decoder_ds_forward.9} parent=11 // pred_fallthru
          _
      $region12: #{decoder_ds_forward.9} parent=5 // pred_fallthru
        _
      %p282 = scmp.lt.s32.totalorder %s19, 2
      // Predicated region
      $region37: #{decoder_ds_forward.9} parent=5 // pred_check
        %p283 = pneg %p282
      $region38: #{decoder_ds_forward.9} parent=5 // pred_check_branch
        %285 = sbr.rel (%p283) target = $region40
      $region39: #{decoder_ds_forward.9} parent=5 // pred_region
        // Predicated region
        $region41: #{decoder_ds_forward.9} parent=39 // pred_check
          %p286 = pneg %p39
        $region42: #{decoder_ds_forward.9} parent=39 // pred_check_branch
          %288 = sbr.rel (%p286) target = $region44
        $region43: #{decoder_ds_forward.9} parent=39 // pred_region
          %s289 = smul.u32 4, %s19
          %p290 = scmp.lt.s32.totalorder %s289, 7
          %s291 = scalar_select %p290, %s289, 7
          %s292 = smul.addr %s291, 8
          %s293 = scalar_lea.vmem %s0, %s292
          %s294 = smul.u32 4, %s19
        $region44: #{decoder_ds_forward.9} parent=39 // pred_fallthru
          _
        // Predicated region
        $region45: #{decoder_ds_forward.9} parent=39 // pred_check
          %p295 = pneg %p65
        $region46: #{decoder_ds_forward.9} parent=39 // pred_check_branch
          %297 = sbr.rel (%p295) target = $region48
        $region47: #{decoder_ds_forward.9} parent=39 // pred_region
          %s298 = smul.u32 4, %s19
          %p299 = scmp.lt.s32.totalorder %s298, 7
          %s300 = scalar_select %p299, %s298, 7
          %s301 = smul.addr %s300, 8
          %s302 = scalar_lea.vmem %s1, %s301
          %s303 = smul.u32 4, %s19
        $region48: #{decoder_ds_forward.9} parent=39 // pred_fallthru
          _
      $region40: #{decoder_ds_forward.9} parent=5 // pred_fallthru
        _
      %p304 = scmp.le.s32.totalorder 1, %s19
      %p305 = scmp.lt.s32.totalorder %s19, 3
      %p306 = pnand %p304, %p305
      %p307 = pneg %p306
      // Predicated region
      $region49: #{decoder_ds_forward.9} parent=5 // pred_check
        _
      $region50: #{decoder_ds_forward.9} parent=5 // pred_check_branch
        %309 = sbr.rel (%p306) target = $region52
      $region51: #{decoder_ds_forward.9} parent=5 // pred_region
        %s310 = ssub.s32 %s19, 1
        %s311 = smul.u32 4, %s24
        %p312 = scmp.lt.s32.totalorder %s311, 7
        %s313 = scalar_select %p312, %s311, 7
        %s314 = smul.addr %s313, 8
        %s315 = scalar_lea.vmem %s0, %s314
        %p316 = pneg %p45
        %p317 = pneg %p42
        %s318 = smul.u32 4, %s24
        %p319 = scmp.lt.s32.totalorder %s318, 7
        %s320 = scalar_select %p319, %s318, 7
        %s321 = smul.addr %s320, 8
        %s322 = scalar_lea.vmem %s1, %s321
        %p323 = pneg %p71
        %p324 = pneg %p68
        %p325 = pneg %p92
        %p326 = pneg %p89
        %p327 = pneg %p113
        %p328 = pneg %p110
        %p329 = pneg %p134
        %p330 = pneg %p131
        %p331 = pneg %p155
        %p332 = pneg %p152
        %p333 = pneg %p176
        %p334 = pneg %p173
        %p335 = pneg %p197
        %p336 = pneg %p194
        %p337 = pneg %p223
        %p338 = pneg %p220
        %s339 = sand.u32 %s210, 1
        %s340 = scalar_lea.sflag [#allocation6], %s339
        %s341 = sand.u32 %s210, 1
        %s342 = smul.addr %s341, 32
        %s343 = scalar_lea.vmem [#allocation5], %s342
        %p344 = pneg %p249
        %p345 = pneg %p246
        %s346 = smul.u32 4, %s24
        %p347 = scmp.lt.s32.totalorder %s346, 7
        %s348 = scalar_select %p347, %s346, 7
        %s349 = smul.addr %s348, 8
        %s350 = scalar_lea.vmem %s9, %s349
        %s351 = smul.u32 4, %s24
        %p352 = scmp.lt.s32.totalorder %s351, 7
        %s353 = scalar_select %p352, %s351, 7
        %s354 = smul.addr %s353, 8
        %s355 = scalar_lea.vmem %s0, %s354
        %s356 = smul.u32 4, %s24
        %s357 = smul.u32 4, %s24
        %p358 = scmp.lt.s32.totalorder %s357, 7
        %s359 = scalar_select %p358, %s357, 7
        %s360 = smul.addr %s359, 8
        %s361 = scalar_lea.vmem %s1, %s360
        %s362 = smul.u32 4, %s24
        %s363 = smul.u32 4, %s24
        %s364 = smul.u32 4, %s24
        %p365 = scmp.lt.s32.totalorder %s364, 7
        %s366 = scalar_select %p365, %s364, 7
        %s367 = smul.addr %s366, 8
        %s368 = scalar_lea.vmem %s9, %s367
        %s369 = smul.u32 4, %s24
        %v371 = vlaneseq
        %v372 = vshrl.u32 %v371, 7
        %v373 = vadd.s32 %v372, 8
        %v374 = vadd.s32 %v372, 16
        %v375 = vadd.s32 %v372, 24
        %v376 = vand.u32 %v372, 31
        %v377 = vand.u32 %v373, 31
        %v378 = vand.u32 %v374, 31
        %v379 = vand.u32 %v375, 31
        %vm380 = vcmp.gt.s32.totalorder %v376, 0
        %vm381 = vcmp.gt.s32.totalorder %v377, 0
        %vm382 = vcmp.gt.s32.totalorder %v378, 0
        %vm383 = vcmp.gt.s32.totalorder %v379, 0
        %vm384 = vcmp.lt.s32.totalorder %v376, 31
        %vm385 = vcmp.lt.s32.totalorder %v377, 31
        %vm386 = vcmp.lt.s32.totalorder %v378, 31
        %vm387 = vcmp.lt.s32.totalorder %v379, 31
        %v388 = vld [vmem:[%s355] sm:$0xff]
        %v389 = vld [vmem:[%s355 + $0x8] sm:$0xff]
        %v390 = vld [vmem:[%s355 + $0x10] sm:$0xff]
        %v391 = vld [vmem:[%s355 + $0x18] sm:$0xff]
        %392 = vst [vmem:[#allocation2] sm:$0xff] 0.0
        %393 = vst [vmem:[#allocation2 + $0x8] sm:$0xff] 0.0
        %394 = vst [vmem:[#allocation2 + $0x10] sm:$0xff] 0.0
        %395 = vst [vmem:[#allocation2 + $0x18] sm:$0xff] 0.0
        %396 = vst [vmem:[#allocation2 + $0x20] sm:$0xff] 0.0
        %397 = vst [vmem:[#allocation2 + $0x28] sm:$0xff] 0.0
        %398 = vst [vmem:[#allocation2 + $0x8] sm:$0xff] %v388
        %399 = vst [vmem:[#allocation2 + $0x10] sm:$0xff] %v389
        %400 = vst [vmem:[#allocation2 + $0x18] sm:$0xff] %v390
        %401 = vst [vmem:[#allocation2 + $0x20] sm:$0xff] %v391
        %v402 = vld [vmem:[%s361] sm:$0xff]
        %v403 = vld [vmem:[%s361 + $0x8] sm:$0xff]
        %v404 = vld [vmem:[%s361 + $0x10] sm:$0xff]
        %v405 = vld [vmem:[%s361 + $0x18] sm:$0xff]
        %406 = vst [vmem:[#allocation3] sm:$0xff] 0.0
        %407 = vst [vmem:[#allocation3 + $0x8] sm:$0xff] 0.0
        %408 = vst [vmem:[#allocation3 + $0x10] sm:$0xff] 0.0
        %409 = vst [vmem:[#allocation3 + $0x18] sm:$0xff] 0.0
        %410 = vst [vmem:[#allocation3 + $0x20] sm:$0xff] 0.0
        %411 = vst [vmem:[#allocation3 + $0x28] sm:$0xff] 0.0
        %412 = vst [vmem:[#allocation3 + $0x8] sm:$0xff] %v402
        %413 = vst [vmem:[#allocation3 + $0x10] sm:$0xff] %v403
        %414 = vst [vmem:[#allocation3 + $0x18] sm:$0xff] %v404
        %415 = vst [vmem:[#allocation3 + $0x20] sm:$0xff] %v405
        %v416 = vld [vmem:[#allocation2 + $0x7] sm:$0xff]
        %v417 = vld [vmem:[#allocation2 + $0xf] sm:$0xff]
        %v418 = vld [vmem:[#allocation2 + $0x17] sm:$0xff]
        %v419 = vld [vmem:[#allocation2 + $0x1f] sm:$0xff]
        %v420 = vsel %vm380, 1, 0
        %v421 = vsel %vm381, 1, 0
        %v422 = vsel %vm382, 1, 0
        %v423 = vsel %vm383, 1, 0
        %vm424 = vcmp.eq.s32.totalorder %v420, 1
        %vm425 = vcmp.eq.s32.totalorder %v421, 1
        %vm426 = vcmp.eq.s32.totalorder %v422, 1
        %vm427 = vcmp.eq.s32.totalorder %v423, 1
        %v428 = vsel %vm424, %v416, 0.0
        %v429 = vsel %vm425, %v417, 0.0
        %v430 = vsel %vm426, %v418, 0.0
        %v431 = vsel %vm427, %v419, 0.0
        %v432 = vpack.c.bf16 %v429, %v428
        %v433 = vpack.c.bf16 %v431, %v430
        %v434 = vld [vmem:[%s2] sm:$0xf]
        %v435 = vld [vmem:[%s2 + $0x4] sm:$0xf]
        %v436 = vld [vmem:[%s2 + $0x8] sm:$0xf]
        %v437 = vld [vmem:[%s2 + $0xc] sm:$0xf]
        %v438 = vld [vmem:[%s2 + $0x10] sm:$0xf]
        %v439 = vld [vmem:[%s2 + $0x14] sm:$0xf]
        %v440 = vld [vmem:[%s2 + $0x18] sm:$0xf]
        %v441 = vld [vmem:[%s2 + $0x1c] sm:$0xf]
        %v442 = vld [vmem:[%s2 + $0x20] sm:$0xf]
        %v443 = vld [vmem:[%s2 + $0x24] sm:$0xf]
        %v444 = vld [vmem:[%s2 + $0x28] sm:$0xf]
        %v445 = vld [vmem:[%s2 + $0x2c] sm:$0xf]
        %v446 = vld [vmem:[%s2 + $0x30] sm:$0xf]
        %v447 = vld [vmem:[%s2 + $0x34] sm:$0xf]
        %v448 = vld [vmem:[%s2 + $0x38] sm:$0xf]
        %v449 = vld [vmem:[%s2 + $0x3c] sm:$0xf]
        %v450 = vld [vmem:[#allocation2 + $0x8] sm:$0xff]
        %v451 = vld [vmem:[#allocation2 + $0x10] sm:$0xff]
        %v452 = vld [vmem:[#allocation2 + $0x18] sm:$0xff]
        %v453 = vld [vmem:[#allocation2 + $0x20] sm:$0xff]
        %v454 = vpack.c.bf16 %v451, %v450
        %v455 = vpack.c.bf16 %v453, %v452
        %s456 = scalar_lea.vmem %s2, 64
        %v457 = vld [vmem:[%s456] sm:$0xf]
        %v458 = vld [vmem:[%s456 + $0x4] sm:$0xf]
        %v459 = vld [vmem:[%s456 + $0x8] sm:$0xf]
        %v460 = vld [vmem:[%s456 + $0xc] sm:$0xf]
        %v461 = vld [vmem:[%s456 + $0x10] sm:$0xf]
        %v462 = vld [vmem:[%s456 + $0x14] sm:$0xf]
        %v463 = vld [vmem:[%s456 + $0x18] sm:$0xf]
        %v464 = vld [vmem:[%s456 + $0x1c] sm:$0xf]
        %v465 = vld [vmem:[%s456 + $0x20] sm:$0xf]
        %v466 = vld [vmem:[%s456 + $0x24] sm:$0xf]
        %v467 = vld [vmem:[%s456 + $0x28] sm:$0xf]
        %v468 = vld [vmem:[%s456 + $0x2c] sm:$0xf]
        %v469 = vld [vmem:[%s456 + $0x30] sm:$0xf]
        %v470 = vld [vmem:[%s456 + $0x34] sm:$0xf]
        %v471 = vld [vmem:[%s456 + $0x38] sm:$0xf]
        %v472 = vld [vmem:[%s456 + $0x3c] sm:$0xf]
        %v489 = vunpack.c.l.b16 %v457
        %v490 = vunpack.c.l.b16 %v458
        %v491 = vunpack.c.l.b16 %v459
        %v492 = vunpack.c.l.b16 %v460
        %v493 = vunpack.c.l.b16 %v461
        %v494 = vunpack.c.l.b16 %v462
        %v495 = vunpack.c.l.b16 %v463
        %v496 = vunpack.c.l.b16 %v464
        %v497 = vunpack.c.l.b16 %v465
        %v498 = vunpack.c.l.b16 %v466
        %v499 = vunpack.c.l.b16 %v467
        %v500 = vunpack.c.l.b16 %v468
        %v501 = vunpack.c.l.b16 %v469
        %v502 = vunpack.c.l.b16 %v470
        %v503 = vunpack.c.l.b16 %v471
        %v504 = vunpack.c.l.b16 %v472
        %v505 = vpack.c.b16 %v490, %v489
        %v506 = vpack.c.b16 %v492, %v491
        %v507 = vpack.c.b16 %v494, %v493
        %v508 = vpack.c.b16 %v496, %v495
        %v509 = vpack.c.b16 %v498, %v497
        %v510 = vpack.c.b16 %v500, %v499
        %v511 = vpack.c.b16 %v502, %v501
        %v512 = vpack.c.b16 %v504, %v503
        %521 = vmatprep.subr.bf16.mxu0 0
        %522 = vmatpush1.bf16.msra.mxu0 %v505
        %523 = vmatprep.subr.bf16.mxu0 0
        %524 = vmatpush1.bf16.msra.mxu0 %v506
        %525 = vmatprep.subr.bf16.mxu0 0
        %526 = vmatpush1.bf16.msra.mxu0 %v507
        %527 = vmatprep.subr.bf16.mxu0 0
        %528 = vmatpush1.bf16.msra.mxu0 %v508
        %529 = vmatprep.subr.bf16.mxu0 0
        %530 = vmatpush1.bf16.msra.mxu0 %v509
        %531 = vmatprep.subr.bf16.mxu0 0
        %532 = vmatpush1.bf16.msra.mxu0 %v510
        %533 = vmatprep.subr.bf16.mxu0 0
        %534 = vmatpush1.bf16.msra.mxu0 %v511
        %535 = vmatprep.subr.bf16.mxu0 0
        %536 = vmatpush1.bf16.msra.mxu0 %v512
        %537 = vmatprep.subr.bf16.mxu0 0
        %538 = vmatpush1.bf16.msra.mxu0 0
        %539 = vmatprep.subr.bf16.mxu0 0
        %540 = vmatpush1.bf16.msra.mxu0 0
        %541 = vmatprep.subr.bf16.mxu0 0
        %542 = vmatpush1.bf16.msra.mxu0 0
        %543 = vmatprep.subr.bf16.mxu0 0
        %544 = vmatpush1.bf16.msra.mxu0 0
        %545 = vmatprep.subr.bf16.mxu0 0
        %546 = vmatpush1.bf16.msra.mxu0 0
        %547 = vmatprep.subr.bf16.mxu0 0
        %548 = vmatpush1.bf16.msra.mxu0 0
        %549 = vmatprep.subr.bf16.mxu0 0
        %550 = vmatpush1.bf16.msra.mxu0 0
        %551 = vmatprep.subr.bf16.mxu0 0
        %552 = vmatpush1.bf16.msra.mxu0 0
        %553 = vmatprep.mubr.bf16.mxu0 0
        %554 = vmatmul.mubr.bf16.gmra.mrb[0].mxu0 %v454
        %v555 = vpop.f32.mrb[0].mxu0
        %v556 = vadd.f32 0.0, %v555
        %v557 = vpop.f32.mrb[0].mxu0
        %v558 = vpop.f32.mrb[0].mxu0
        %v559 = vadd.f32 0.0, %v558
        %v560 = vpop.f32.mrb[0].mxu0
        %561 = vmatprep.mubr.bf16.mxu0 0
        %562 = vmatmul.mubr.bf16.gmra.mrb[0].mxu0 %v455
        %v563 = vpop.f32.mrb[0].mxu0
        %v564 = vadd.f32 0.0, %v563
        %v565 = vpop.f32.mrb[0].mxu0
        %v566 = vpop.f32.mrb[0].mxu0
        %v567 = vadd.f32 0.0, %v566
        %v568 = vpop.f32.mrb[0].mxu0
        %569 = vdwg.mxu0
        %v586 = vunpack.c.l.b16 %v434
        %v587 = vunpack.c.l.b16 %v435
        %v588 = vunpack.c.l.b16 %v436
        %v589 = vunpack.c.l.b16 %v437
        %v590 = vunpack.c.l.b16 %v438
        %v591 = vunpack.c.l.b16 %v439
        %v592 = vunpack.c.l.b16 %v440
        %v593 = vunpack.c.l.b16 %v441
        %v594 = vunpack.c.l.b16 %v442
        %v595 = vunpack.c.l.b16 %v443
        %v596 = vunpack.c.l.b16 %v444
        %v597 = vunpack.c.l.b16 %v445
        %v598 = vunpack.c.l.b16 %v446
        %v599 = vunpack.c.l.b16 %v447
        %v600 = vunpack.c.l.b16 %v448
        %v601 = vunpack.c.l.b16 %v449
        %v602 = vpack.c.b16 %v587, %v586
        %v603 = vpack.c.b16 %v589, %v588
        %v604 = vpack.c.b16 %v591, %v590
        %v605 = vpack.c.b16 %v593, %v592
        %v606 = vpack.c.b16 %v595, %v594
        %v607 = vpack.c.b16 %v597, %v596
        %v608 = vpack.c.b16 %v599, %v598
        %v609 = vpack.c.b16 %v601, %v600
        %618 = vmatprep.subr.bf16.mxu0 0
        %619 = vmatpush1.bf16.msra.mxu0 %v602
        %620 = vmatprep.subr.bf16.mxu0 0
        %621 = vmatpush1.bf16.msra.mxu0 %v603
        %622 = vmatprep.subr.bf16.mxu0 0
        %623 = vmatpush1.bf16.msra.mxu0 %v604
        %624 = vmatprep.subr.bf16.mxu0 0
        %625 = vmatpush1.bf16.msra.mxu0 %v605
        %626 = vmatprep.subr.bf16.mxu0 0
        %627 = vmatpush1.bf16.msra.mxu0 %v606
        %628 = vmatprep.subr.bf16.mxu0 0
        %629 = vmatpush1.bf16.msra.mxu0 %v607
        %630 = vmatprep.subr.bf16.mxu0 0
        %631 = vmatpush1.bf16.msra.mxu0 %v608
        %632 = vmatprep.subr.bf16.mxu0 0
        %633 = vmatpush1.bf16.msra.mxu0 %v609
        %634 = vmatprep.subr.bf16.mxu0 0
        %635 = vmatpush1.bf16.msra.mxu0 0
        %636 = vmatprep.subr.bf16.mxu0 0
        %637 = vmatpush1.bf16.msra.mxu0 0
        %638 = vmatprep.subr.bf16.mxu0 0
        %639 = vmatpush1.bf16.msra.mxu0 0
        %640 = vmatprep.subr.bf16.mxu0 0
        %641 = vmatpush1.bf16.msra.mxu0 0
        %642 = vmatprep.subr.bf16.mxu0 0
        %643 = vmatpush1.bf16.msra.mxu0 0
        %644 = vmatprep.subr.bf16.mxu0 0
        %645 = vmatpush1.bf16.msra.mxu0 0
        %646 = vmatprep.subr.bf16.mxu0 0
        %647 = vmatpush1.bf16.msra.mxu0 0
        %648 = vmatprep.subr.bf16.mxu0 0
        %649 = vmatpush1.bf16.msra.mxu0 0
        %650 = vmatprep.mubr.bf16.mxu0 0
        %651 = vmatmul.mubr.bf16.gmra.mrb[0].mxu0 %v432
        %v652 = vpop.f32.mrb[0].mxu0
        %v653 = vadd.f32 %v556, %v652
        %v654 = vpop.f32.mrb[0].mxu0
        %v655 = vpop.f32.mrb[0].mxu0
        %v656 = vadd.f32 %v559, %v655
        %v657 = vpop.f32.mrb[0].mxu0
        %658 = vmatprep.mubr.bf16.mxu0 0
        %659 = vmatmul.mubr.bf16.gmra.mrb[0].mxu0 %v433
        %v660 = vpop.f32.mrb[0].mxu0
        %v661 = vadd.f32 %v564, %v660
        %v662 = vpop.f32.mrb[0].mxu0
        %v663 = vpop.f32.mrb[0].mxu0
        %v664 = vadd.f32 %v567, %v663
        %v665 = vpop.f32.mrb[0].mxu0
        %666 = vdwg.mxu0
        %v667 = vld [vmem:[#allocation2 + $0x9] sm:$0xff]
        %v668 = vld [vmem:[#allocation2 + $0x11] sm:$0xff]
        %v669 = vld [vmem:[#allocation2 + $0x19] sm:$0xff]
        %v670 = vld [vmem:[#allocation2 + $0x21] sm:$0xff]
        %v671 = vsel %vm384, 1, 0
        %v672 = vsel %vm385, 1, 0
        %v673 = vsel %vm386, 1, 0
        %v674 = vsel %vm387, 1, 0
        %vm675 = vcmp.eq.s32.totalorder %v671, 1
        %vm676 = vcmp.eq.s32.totalorder %v672, 1
        %vm677 = vcmp.eq.s32.totalorder %v673, 1
        %vm678 = vcmp.eq.s32.totalorder %v674, 1
        %v679 = vsel %vm675, %v667, 0.0
        %v680 = vsel %vm676, %v668, 0.0
        %v681 = vsel %vm677, %v669, 0.0
        %v682 = vsel %vm678, %v670, 0.0
        %v683 = vpack.c.bf16 %v680, %v679
        %v684 = vpack.c.bf16 %v682, %v681
        %s685 = scalar_lea.vmem %s2, 128
        %v686 = vld [vmem:[%s685] sm:$0xf]
        %v687 = vld [vmem:[%s685 + $0x4] sm:$0xf]
        %v688 = vld [vmem:[%s685 + $0x8] sm:$0xf]
        %v689 = vld [vmem:[%s685 + $0xc] sm:$0xf]
        %v690 = vld [vmem:[%s685 + $0x10] sm:$0xf]
        %v691 = vld [vmem:[%s685 + $0x14] sm:$0xf]
        %v692 = vld [vmem:[%s685 + $0x18] sm:$0xf]
        %v693 = vld [vmem:[%s685 + $0x1c] sm:$0xf]
        %v694 = vld [vmem:[%s685 + $0x20] sm:$0xf]
        %v695 = vld [vmem:[%s685 + $0x24] sm:$0xf]
        %v696 = vld [vmem:[%s685 + $0x28] sm:$0xf]
        %v697 = vld [vmem:[%s685 + $0x2c] sm:$0xf]
        %v698 = vld [vmem:[%s685 + $0x30] sm:$0xf]
        %v699 = vld [vmem:[%s685 + $0x34] sm:$0xf]
        %v700 = vld [vmem:[%s685 + $0x38] sm:$0xf]
        %v701 = vld [vmem:[%s685 + $0x3c] sm:$0xf]
        %v718 = vunpack.c.l.b16 %v686
        %v719 = vunpack.c.l.b16 %v687
        %v720 = vunpack.c.l.b16 %v688
        %v721 = vunpack.c.l.b16 %v689
        %v722 = vunpack.c.l.b16 %v690
        %v723 = vunpack.c.l.b16 %v691
        %v724 = vunpack.c.l.b16 %v692
        %v725 = vunpack.c.l.b16 %v693
        %v726 = vunpack.c.l.b16 %v694
        %v727 = vunpack.c.l.b16 %v695
        %v728 = vunpack.c.l.b16 %v696
        %v729 = vunpack.c.l.b16 %v697
        %v730 = vunpack.c.l.b16 %v698
        %v731 = vunpack.c.l.b16 %v699
        %v732 = vunpack.c.l.b16 %v700
        %v733 = vunpack.c.l.b16 %v701
        %v734 = vpack.c.b16 %v719, %v718
        %v735 = vpack.c.b16 %v721, %v720
        %v736 = vpack.c.b16 %v723, %v722
        %v737 = vpack.c.b16 %v725, %v724
        %v738 = vpack.c.b16 %v727, %v726
        %v739 = vpack.c.b16 %v729, %v728
        %v740 = vpack.c.b16 %v731, %v730
        %v741 = vpack.c.b16 %v733, %v732
        %750 = vmatprep.subr.bf16.mxu0 0
        %751 = vmatpush1.bf16.msra.mxu0 %v734
        %752 = vmatprep.subr.bf16.mxu0 0
        %753 = vmatpush1.bf16.msra.mxu0 %v735
        %754 = vmatprep.subr.bf16.mxu0 0
        %755 = vmatpush1.bf16.msra.mxu0 %v736
        %756 = vmatprep.subr.bf16.mxu0 0
        %757 = vmatpush1.bf16.msra.mxu0 %v737
        %758 = vmatprep.subr.bf16.mxu0 0
        %759 = vmatpush1.bf16.msra.mxu0 %v738
        %760 = vmatprep.subr.bf16.mxu0 0
        %761 = vmatpush1.bf16.msra.mxu0 %v739
        %762 = vmatprep.subr.bf16.mxu0 0
        %763 = vmatpush1.bf16.msra.mxu0 %v740
        %764 = vmatprep.subr.bf16.mxu0 0
        %765 = vmatpush1.bf16.msra.mxu0 %v741
        %766 = vmatprep.subr.bf16.mxu0 0
        %767 = vmatpush1.bf16.msra.mxu0 0
        %768 = vmatprep.subr.bf16.mxu0 0
        %769 = vmatpush1.bf16.msra.mxu0 0
        %770 = vmatprep.subr.bf16.mxu0 0
        %771 = vmatpush1.bf16.msra.mxu0 0
        %772 = vmatprep.subr.bf16.mxu0 0
        %773 = vmatpush1.bf16.msra.mxu0 0
        %774 = vmatprep.subr.bf16.mxu0 0
        %775 = vmatpush1.bf16.msra.mxu0 0
        %776 = vmatprep.subr.bf16.mxu0 0
        %777 = vmatpush1.bf16.msra.mxu0 0
        %778 = vmatprep.subr.bf16.mxu0 0
        %779 = vmatpush1.bf16.msra.mxu0 0
        %780 = vmatprep.subr.bf16.mxu0 0
        %781 = vmatpush1.bf16.msra.mxu0 0
        %782 = vmatprep.mubr.bf16.mxu0 0
        %783 = vmatmul.mubr.bf16.gmra.mrb[0].mxu0 %v683
        %v784 = vpop.f32.mrb[0].mxu0
        %v785 = vadd.f32 0.0, %v784
        %v786 = vpop.f32.mrb[0].mxu0
        %v787 = vpop.f32.mrb[0].mxu0
        %v788 = vadd.f32 0.0, %v787
        %v789 = vpop.f32.mrb[0].mxu0
        %790 = vmatprep.mubr.bf16.mxu0 0
        %791 = vmatmul.mubr.bf16.gmra.mrb[0].mxu0 %v684
        %v792 = vpop.f32.mrb[0].mxu0
        %v793 = vadd.f32 0.0, %v792
        %v794 = vpop.f32.mrb[0].mxu0
        %v795 = vpop.f32.mrb[0].mxu0
        %v796 = vadd.f32 0.0, %v795
        %v797 = vpop.f32.mrb[0].mxu0
        %798 = vdwg.mxu0
        %v799 = vadd.f32 %v653, %v785
        %v800 = vadd.f32 %v656, %v788
        %v801 = vadd.f32 %v661, %v793
        %v802 = vadd.f32 %v664, %v796
        %v803 = vld [vmem:[#allocation3 + $0x7] sm:$0xff]
        %v804 = vld [vmem:[#allocation3 + $0xf] sm:$0xff]
        %v805 = vld [vmem:[#allocation3 + $0x17] sm:$0xff]
        %v806 = vld [vmem:[#allocation3 + $0x1f] sm:$0xff]
        %v807 = vsel %vm424, %v803, 0.0
        %v808 = vsel %vm425, %v804, 0.0
        %v809 = vsel %vm426, %v805, 0.0
        %v810 = vsel %vm427, %v806, 0.0
        %v811 = vpack.c.bf16 %v808, %v807
        %v812 = vpack.c.bf16 %v810, %v809
        %v813 = vld [vmem:[%s3] sm:$0xf]
        %v814 = vld [vmem:[%s3 + $0x4] sm:$0xf]
        %v815 = vld [vmem:[%s3 + $0x8] sm:$0xf]
        %v816 = vld [vmem:[%s3 + $0xc] sm:$0xf]
        %v817 = vld [vmem:[%s3 + $0x10] sm:$0xf]
        %v818 = vld [vmem:[%s3 + $0x14] sm:$0xf]
        %v819 = vld [vmem:[%s3 + $0x18] sm:$0xf]
        %v820 = vld [vmem:[%s3 + $0x1c] sm:$0xf]
        %v821 = vld [vmem:[%s3 + $0x20] sm:$0xf]
        %v822 = vld [vmem:[%s3 + $0x24] sm:$0xf]
        %v823 = vld [vmem:[%s3 + $0x28] sm:$0xf]
        %v824 = vld [vmem:[%s3 + $0x2c] sm:$0xf]
        %v825 = vld [vmem:[%s3 + $0x30] sm:$0xf]
        %v826 = vld [vmem:[%s3 + $0x34] sm:$0xf]
        %v827 = vld [vmem:[%s3 + $0x38] sm:$0xf]
        %v828 = vld [vmem:[%s3 + $0x3c] sm:$0xf]
        %v829 = vld [vmem:[#allocation3 + $0x8] sm:$0xff]
        %v830 = vld [vmem:[#allocation3 + $0x10] sm:$0xff]
        %v831 = vld [vmem:[#allocation3 + $0x18] sm:$0xff]
        %v832 = vld [vmem:[#allocation3 + $0x20] sm:$0xff]
        %v833 = vpack.c.bf16 %v830, %v829
        %v834 = vpack.c.bf16 %v832, %v831
        %s835 = scalar_lea.vmem %s3, 64
        %v836 = vld [vmem:[%s835] sm:$0xf]
        %v837 = vld [vmem:[%s835 + $0x4] sm:$0xf]
        %v838 = vld [vmem:[%s835 + $0x8] sm:$0xf]
        %v839 = vld [vmem:[%s835 + $0xc] sm:$0xf]
        %v840 = vld [vmem:[%s835 + $0x10] sm:$0xf]
        %v841 = vld [vmem:[%s835 + $0x14] sm:$0xf]
        %v842 = vld [vmem:[%s835 + $0x18] sm:$0xf]
        %v843 = vld [vmem:[%s835 + $0x1c] sm:$0xf]
        %v844 = vld [vmem:[%s835 + $0x20] sm:$0xf]
        %v845 = vld [vmem:[%s835 + $0x24] sm:$0xf]
        %v846 = vld [vmem:[%s835 + $0x28] sm:$0xf]
        %v847 = vld [vmem:[%s835 + $0x2c] sm:$0xf]
        %v848 = vld [vmem:[%s835 + $0x30] sm:$0xf]
        %v849 = vld [vmem:[%s835 + $0x34] sm:$0xf]
        %v850 = vld [vmem:[%s835 + $0x38] sm:$0xf]
        %v851 = vld [vmem:[%s835 + $0x3c] sm:$0xf]
        %v868 = vunpack.c.l.b16 %v836
        %v869 = vunpack.c.l.b16 %v837
        %v870 = vunpack.c.l.b16 %v838
        %v871 = vunpack.c.l.b16 %v839
        %v872 = vunpack.c.l.b16 %v840
        %v873 = vunpack.c.l.b16 %v841
        %v874 = vunpack.c.l.b16 %v842
        %v875 = vunpack.c.l.b16 %v843
        %v876 = vunpack.c.l.b16 %v844
        %v877 = vunpack.c.l.b16 %v845
        %v878 = vunpack.c.l.b16 %v846
        %v879 = vunpack.c.l.b16 %v847
        %v880 = vunpack.c.l.b16 %v848
        %v881 = vunpack.c.l.b16 %v849
        %v882 = vunpack.c.l.b16 %v850
        %v883 = vunpack.c.l.b16 %v851
        %v884 = vpack.c.b16 %v869, %v868
        %v885 = vpack.c.b16 %v871, %v870
        %v886 = vpack.c.b16 %v873, %v872
        %v887 = vpack.c.b16 %v875, %v874
        %v888 = vpack.c.b16 %v877, %v876
        %v889 = vpack.c.b16 %v879, %v878
        %v890 = vpack.c.b16 %v881, %v880
        %v891 = vpack.c.b16 %v883, %v882
        %900 = vmatprep.subr.bf16.mxu0 0
        %901 = vmatpush1.bf16.msra.mxu0 %v884
        %902 = vmatprep.subr.bf16.mxu0 0
        %903 = vmatpush1.bf16.msra.mxu0 %v885
        %904 = vmatprep.subr.bf16.mxu0 0
        %905 = vmatpush1.bf16.msra.mxu0 %v886
        %906 = vmatprep.subr.bf16.mxu0 0
        %907 = vmatpush1.bf16.msra.mxu0 %v887
        %908 = vmatprep.subr.bf16.mxu0 0
        %909 = vmatpush1.bf16.msra.mxu0 %v888
        %910 = vmatprep.subr.bf16.mxu0 0
        %911 = vmatpush1.bf16.msra.mxu0 %v889
        %912 = vmatprep.subr.bf16.mxu0 0
        %913 = vmatpush1.bf16.msra.mxu0 %v890
        %914 = vmatprep.subr.bf16.mxu0 0
        %915 = vmatpush1.bf16.msra.mxu0 %v891
        %916 = vmatprep.subr.bf16.mxu0 0
        %917 = vmatpush1.bf16.msra.mxu0 0
        %918 = vmatprep.subr.bf16.mxu0 0
        %919 = vmatpush1.bf16.msra.mxu0 0
        %920 = vmatprep.subr.bf16.mxu0 0
        %921 = vmatpush1.bf16.msra.mxu0 0
        %922 = vmatprep.subr.bf16.mxu0 0
        %923 = vmatpush1.bf16.msra.mxu0 0
        %924 = vmatprep.subr.bf16.mxu0 0
        %925 = vmatpush1.bf16.msra.mxu0 0
        %926 = vmatprep.subr.bf16.mxu0 0
        %927 = vmatpush1.bf16.msra.mxu0 0
        %928 = vmatprep.subr.bf16.mxu0 0
        %929 = vmatpush1.bf16.msra.mxu0 0
        %930 = vmatprep.subr.bf16.mxu0 0
        %931 = vmatpush1.bf16.msra.mxu0 0
        %932 = vmatprep.mubr.bf16.mxu0 0
        %933 = vmatmul.mubr.bf16.gmra.mrb[0].mxu0 %v833
        %v934 = vpop.f32.mrb[0].mxu0
        %v935 = vadd.f32 0.0, %v934
        %v936 = vpop.f32.mrb[0].mxu0
        %v937 = vpop.f32.mrb[0].mxu0
        %v938 = vadd.f32 0.0, %v937
        %v939 = vpop.f32.mrb[0].mxu0
        %940 = vmatprep.mubr.bf16.mxu0 0
        %941 = vmatmul.mubr.bf16.gmra.mrb[0].mxu0 %v834
        %v942 = vpop.f32.mrb[0].mxu0
        %v943 = vadd.f32 0.0, %v942
        %v944 = vpop.f32.mrb[0].mxu0
        %v945 = vpop.f32.mrb[0].mxu0
        %v946 = vadd.f32 0.0, %v945
        %v947 = vpop.f32.mrb[0].mxu0
        %948 = vdwg.mxu0
        %v965 = vunpack.c.l.b16 %v813
        %v966 = vunpack.c.l.b16 %v814
        %v967 = vunpack.c.l.b16 %v815
        %v968 = vunpack.c.l.b16 %v816
        %v969 = vunpack.c.l.b16 %v817
        %v970 = vunpack.c.l.b16 %v818
        %v971 = vunpack.c.l.b16 %v819
        %v972 = vunpack.c.l.b16 %v820
        %v973 = vunpack.c.l.b16 %v821
        %v974 = vunpack.c.l.b16 %v822
        %v975 = vunpack.c.l.b16 %v823
        %v976 = vunpack.c.l.b16 %v824
        %v977 = vunpack.c.l.b16 %v825
        %v978 = vunpack.c.l.b16 %v826
        %v979 = vunpack.c.l.b16 %v827
        %v980 = vunpack.c.l.b16 %v828
        %v981 = vpack.c.b16 %v966, %v965
        %v982 = vpack.c.b16 %v968, %v967
        %v983 = vpack.c.b16 %v970, %v969
        %v984 = vpack.c.b16 %v972, %v971
        %v985 = vpack.c.b16 %v974, %v973
        %v986 = vpack.c.b16 %v976, %v975
        %v987 = vpack.c.b16 %v978, %v977
        %v988 = vpack.c.b16 %v980, %v979
        %997 = vmatprep.subr.bf16.mxu0 0
        %998 = vmatpush1.bf16.msra.mxu0 %v981
        %999 = vmatprep.subr.bf16.mxu0 0
        %1000 = vmatpush1.bf16.msra.mxu0 %v982
        %1001 = vmatprep.subr.bf16.mxu0 0
        %1002 = vmatpush1.bf16.msra.mxu0 %v983
        %1003 = vmatprep.subr.bf16.mxu0 0
        %1004 = vmatpush1.bf16.msra.mxu0 %v984
        %1005 = vmatprep.subr.bf16.mxu0 0
        %1006 = vmatpush1.bf16.msra.mxu0 %v985
        %1007 = vmatprep.subr.bf16.mxu0 0
        %1008 = vmatpush1.bf16.msra.mxu0 %v986
        %1009 = vmatprep.subr.bf16.mxu0 0
        %1010 = vmatpush1.bf16.msra.mxu0 %v987
        %1011 = vmatprep.subr.bf16.mxu0 0
        %1012 = vmatpush1.bf16.msra.mxu0 %v988
        %1013 = vmatprep.subr.bf16.mxu0 0
        %1014 = vmatpush1.bf16.msra.mxu0 0
        %1015 = vmatprep.subr.bf16.mxu0 0
        %1016 = vmatpush1.bf16.msra.mxu0 0
        %1017 = vmatprep.subr.bf16.mxu0 0
        %1018 = vmatpush1.bf16.msra.mxu0 0
        %1019 = vmatprep.subr.bf16.mxu0 0
        %1020 = vmatpush1.bf16.msra.mxu0 0
        %1021 = vmatprep.subr.bf16.mxu0 0
        %1022 = vmatpush1.bf16.msra.mxu0 0
        %1023 = vmatprep.subr.bf16.mxu0 0
        %1024 = vmatpush1.bf16.msra.mxu0 0
        %1025 = vmatprep.subr.bf16.mxu0 0
        %1026 = vmatpush1.bf16.msra.mxu0 0
        %1027 = vmatprep.subr.bf16.mxu0 0
        %1028 = vmatpush1.bf16.msra.mxu0 0
        %1029 = vmatprep.mubr.bf16.mxu0 0
        %1030 = vmatmul.mubr.bf16.gmra.mrb[0].mxu0 %v811
        %v1031 = vpop.f32.mrb[0].mxu0
        %v1032 = vadd.f32 %v935, %v1031
        %v1033 = vpop.f32.mrb[0].mxu0
        %v1034 = vpop.f32.mrb[0].mxu0
        %v1035 = vadd.f32 %v938, %v1034
        %v1036 = vpop.f32.mrb[0].mxu0
        %1037 = vmatprep.mubr.bf16.mxu0 0
        %1038 = vmatmul.mubr.bf16.gmra.mrb[0].mxu0 %v812
        %v1039 = vpop.f32.mrb[0].mxu0
        %v1040 = vadd.f32 %v943, %v1039
        %v1041 = vpop.f32.mrb[0].mxu0
        %v1042 = vpop.f32.mrb[0].mxu0
        %v1043 = vadd.f32 %v946, %v1042
        %v1044 = vpop.f32.mrb[0].mxu0
        %1045 = vdwg.mxu0
        %v1046 = vld [vmem:[#allocation3 + $0x9] sm:$0xff]
        %v1047 = vld [vmem:[#allocation3 + $0x11] sm:$0xff]
        %v1048 = vld [vmem:[#allocation3 + $0x19] sm:$0xff]
        %v1049 = vld [vmem:[#allocation3 + $0x21] sm:$0xff]
        %v1050 = vsel %vm675, %v1046, 0.0
        %v1051 = vsel %vm676, %v1047, 0.0
        %v1052 = vsel %vm677, %v1048, 0.0
        %v1053 = vsel %vm678, %v1049, 0.0
        %v1054 = vpack.c.bf16 %v1051, %v1050
        %v1055 = vpack.c.bf16 %v1053, %v1052
        %s1056 = scalar_lea.vmem %s3, 128
        %v1057 = vld [vmem:[%s1056] sm:$0xf]
        %v1058 = vld [vmem:[%s1056 + $0x4] sm:$0xf]
        %v1059 = vld [vmem:[%s1056 + $0x8] sm:$0xf]
        %v1060 = vld [vmem:[%s1056 + $0xc] sm:$0xf]
        %v1061 = vld [vmem:[%s1056 + $0x10] sm:$0xf]
        %v1062 = vld [vmem:[%s1056 + $0x14] sm:$0xf]
        %v1063 = vld [vmem:[%s1056 + $0x18] sm:$0xf]
        %v1064 = vld [vmem:[%s1056 + $0x1c] sm:$0xf]
        %v1065 = vld [vmem:[%s1056 + $0x20] sm:$0xf]
        %v1066 = vld [vmem:[%s1056 + $0x24] sm:$0xf]
        %v1067 = vld [vmem:[%s1056 + $0x28] sm:$0xf]
        %v1068 = vld [vmem:[%s1056 + $0x2c] sm:$0xf]
        %v1069 = vld [vmem:[%s1056 + $0x30] sm:$0xf]
        %v1070 = vld [vmem:[%s1056 + $0x34] sm:$0xf]
        %v1071 = vld [vmem:[%s1056 + $0x38] sm:$0xf]
        %v1072 = vld [vmem:[%s1056 + $0x3c] sm:$0xf]
        %v1089 = vunpack.c.l.b16 %v1057
        %v1090 = vunpack.c.l.b16 %v1058
        %v1091 = vunpack.c.l.b16 %v1059
        %v1092 = vunpack.c.l.b16 %v1060
        %v1093 = vunpack.c.l.b16 %v1061
        %v1094 = vunpack.c.l.b16 %v1062
        %v1095 = vunpack.c.l.b16 %v1063
        %v1096 = vunpack.c.l.b16 %v1064
        %v1097 = vunpack.c.l.b16 %v1065
        %v1098 = vunpack.c.l.b16 %v1066
        %v1099 = vunpack.c.l.b16 %v1067
        %v1100 = vunpack.c.l.b16 %v1068
        %v1101 = vunpack.c.l.b16 %v1069
        %v1102 = vunpack.c.l.b16 %v1070
        %v1103 = vunpack.c.l.b16 %v1071
        %v1104 = vunpack.c.l.b16 %v1072
        %v1105 = vpack.c.b16 %v1090, %v1089
        %v1106 = vpack.c.b16 %v1092, %v1091
        %v1107 = vpack.c.b16 %v1094, %v1093
        %v1108 = vpack.c.b16 %v1096, %v1095
        %v1109 = vpack.c.b16 %v1098, %v1097
        %v1110 = vpack.c.b16 %v1100, %v1099
        %v1111 = vpack.c.b16 %v1102, %v1101
        %v1112 = vpack.c.b16 %v1104, %v1103
        %1121 = vmatprep.subr.bf16.mxu0 0
        %1122 = vmatpush1.bf16.msra.mxu0 %v1105
        %1123 = vmatprep.subr.bf16.mxu0 0
        %1124 = vmatpush1.bf16.msra.mxu0 %v1106
        %1125 = vmatprep.subr.bf16.mxu0 0
        %1126 = vmatpush1.bf16.msra.mxu0 %v1107
        %1127 = vmatprep.subr.bf16.mxu0 0
        %1128 = vmatpush1.bf16.msra.mxu0 %v1108
        %1129 = vmatprep.subr.bf16.mxu0 0
        %1130 = vmatpush1.bf16.msra.mxu0 %v1109
        %1131 = vmatprep.subr.bf16.mxu0 0
        %1132 = vmatpush1.bf16.msra.mxu0 %v1110
        %1133 = vmatprep.subr.bf16.mxu0 0
        %1134 = vmatpush1.bf16.msra.mxu0 %v1111
        %1135 = vmatprep.subr.bf16.mxu0 0
        %1136 = vmatpush1.bf16.msra.mxu0 %v1112
        %1137 = vmatprep.subr.bf16.mxu0 0
        %1138 = vmatpush1.bf16.msra.mxu0 0
        %1139 = vmatprep.subr.bf16.mxu0 0
        %1140 = vmatpush1.bf16.msra.mxu0 0
        %1141 = vmatprep.subr.bf16.mxu0 0
        %1142 = vmatpush1.bf16.msra.mxu0 0
        %1143 = vmatprep.subr.bf16.mxu0 0
        %1144 = vmatpush1.bf16.msra.mxu0 0
        %1145 = vmatprep.subr.bf16.mxu0 0
        %1146 = vmatpush1.bf16.msra.mxu0 0
        %1147 = vmatprep.subr.bf16.mxu0 0
        %1148 = vmatpush1.bf16.msra.mxu0 0
        %1149 = vmatprep.subr.bf16.mxu0 0
        %1150 = vmatpush1.bf16.msra.mxu0 0
        %1151 = vmatprep.subr.bf16.mxu0 0
        %1152 = vmatpush1.bf16.msra.mxu0 0
        %1153 = vmatprep.mubr.bf16.mxu0 0
        %1154 = vmatmul.mubr.bf16.gmra.mrb[0].mxu0 %v1054
        %v1155 = vpop.f32.mrb[0].mxu0
        %v1156 = vadd.f32 0.0, %v1155
        %v1157 = vpop.f32.mrb[0].mxu0
        %v1158 = vpop.f32.mrb[0].mxu0
        %v1159 = vadd.f32 0.0, %v1158
        %v1160 = vpop.f32.mrb[0].mxu0
        %1161 = vmatprep.mubr.bf16.mxu0 0
        %1162 = vmatmul.mubr.bf16.gmra.mrb[0].mxu0 %v1055
        %v1163 = vpop.f32.mrb[0].mxu0
        %v1164 = vadd.f32 0.0, %v1163
        %v1165 = vpop.f32.mrb[0].mxu0
        %v1166 = vpop.f32.mrb[0].mxu0
        %v1167 = vadd.f32 0.0, %v1166
        %v1168 = vpop.f32.mrb[0].mxu0
        %1169 = vdwg.mxu0
        %v1170 = vadd.f32 %v1032, %v1156
        %v1171 = vadd.f32 %v1035, %v1159
        %v1172 = vadd.f32 %v1040, %v1164
        %v1173 = vadd.f32 %v1043, %v1167
        %v1174 = vadd.f32 %v799, %v1170
        %v1175 = vadd.f32 %v800, %v1171
        %v1176 = vadd.f32 %v801, %v1172
        %v1177 = vadd.f32 %v802, %v1173
        %v1178 = vld [vmem:[%s4] sm:$0x1]
        %v1180 = vlaneseq
        %v1181 = vshrl.u32 %v1180, 7
        %v1182 = vsub.s32 0, %v1181
        %v1183 = vrot.slane %v1178, %v1182
        %v1185 = vadd.f32 %v1174, %v1183
        %v1186 = vadd.f32 %v1175, %v1183
        %v1187 = vadd.f32 %v1176, %v1183
        %v1188 = vadd.f32 %v1177, %v1183
        %vm1189 = vcmp.ge.f32.partialorder %v1185, 0.0
        %vm1190 = vcmp.ge.f32.partialorder %v1186, 0.0
        %vm1191 = vcmp.ge.f32.partialorder %v1187, 0.0
        %vm1192 = vcmp.ge.f32.partialorder %v1188, 0.0
        %v1193 = vmul.f32 %v1185, 0.01
        %v1194 = vmul.f32 %v1186, 0.01
        %v1195 = vmul.f32 %v1187, 0.01
        %v1196 = vmul.f32 %v1188, 0.01
        %v1197 = vsel %vm1189, %v1185, %v1193
        %v1198 = vsel %vm1190, %v1186, %v1194
        %v1199 = vsel %vm1191, %v1187, %v1195
        %v1200 = vsel %vm1192, %v1188, %v1196
        %1201 = vst [vmem:[#allocation4] sm:$0xff] 0.0
        %1202 = vst [vmem:[#allocation4 + $0x8] sm:$0xff] 0.0
        %1203 = vst [vmem:[#allocation4 + $0x10] sm:$0xff] 0.0
        %1204 = vst [vmem:[#allocation4 + $0x18] sm:$0xff] 0.0
        %1205 = vst [vmem:[#allocation4 + $0x20] sm:$0xff] 0.0
        %1206 = vst [vmem:[#allocation4 + $0x28] sm:$0xff] 0.0
        %1207 = vst [vmem:[#allocation4 + $0x8] sm:$0xff] %v1197
        %1208 = vst [vmem:[#allocation4 + $0x10] sm:$0xff] %v1198
        %1209 = vst [vmem:[#allocation4 + $0x18] sm:$0xff] %v1199
        %1210 = vst [vmem:[#allocation4 + $0x20] sm:$0xff] %v1200
        %v1211 = vld [vmem:[#allocation4 + $0x7] sm:$0xff]
        %v1212 = vld [vmem:[#allocation4 + $0xf] sm:$0xff]
        %v1213 = vld [vmem:[#allocation4 + $0x17] sm:$0xff]
        %v1214 = vld [vmem:[#allocation4 + $0x1f] sm:$0xff]
        %v1215 = vsel %vm424, %v1211, 0.0
        %v1216 = vsel %vm425, %v1212, 0.0
        %v1217 = vsel %vm426, %v1213, 0.0
        %v1218 = vsel %vm427, %v1214, 0.0
        %v1219 = vpack.c.bf16 %v1216, %v1215
        %v1220 = vpack.c.bf16 %v1218, %v1217
        %v1221 = vld [vmem:[%s5] sm:$0xf]
        %v1222 = vld [vmem:[%s5 + $0x4] sm:$0xf]
        %v1223 = vld [vmem:[%s5 + $0x8] sm:$0xf]
        %v1224 = vld [vmem:[%s5 + $0xc] sm:$0xf]
        %v1225 = vld [vmem:[%s5 + $0x10] sm:$0xf]
        %v1226 = vld [vmem:[%s5 + $0x14] sm:$0xf]
        %v1227 = vld [vmem:[%s5 + $0x18] sm:$0xf]
        %v1228 = vld [vmem:[%s5 + $0x1c] sm:$0xf]
        %v1229 = vld [vmem:[%s5 + $0x20] sm:$0xf]
        %v1230 = vld [vmem:[%s5 + $0x24] sm:$0xf]
        %v1231 = vld [vmem:[%s5 + $0x28] sm:$0xf]
        %v1232 = vld [vmem:[%s5 + $0x2c] sm:$0xf]
        %v1233 = vld [vmem:[%s5 + $0x30] sm:$0xf]
        %v1234 = vld [vmem:[%s5 + $0x34] sm:$0xf]
        %v1235 = vld [vmem:[%s5 + $0x38] sm:$0xf]
        %v1236 = vld [vmem:[%s5 + $0x3c] sm:$0xf]
        %v1237 = vld [vmem:[#allocation4 + $0x8] sm:$0xff]
        %v1238 = vld [vmem:[#allocation4 + $0x10] sm:$0xff]
        %v1239 = vld [vmem:[#allocation4 + $0x18] sm:$0xff]
        %v1240 = vld [vmem:[#allocation4 + $0x20] sm:$0xff]
        %v1241 = vpack.c.bf16 %v1238, %v1237
        %v1242 = vpack.c.bf16 %v1240, %v1239
        %s1243 = scalar_lea.vmem %s5, 64
        %v1244 = vld [vmem:[%s1243] sm:$0xf]
        %v1245 = vld [vmem:[%s1243 + $0x4] sm:$0xf]
        %v1246 = vld [vmem:[%s1243 + $0x8] sm:$0xf]
        %v1247 = vld [vmem:[%s1243 + $0xc] sm:$0xf]
        %v1248 = vld [vmem:[%s1243 + $0x10] sm:$0xf]
        %v1249 = vld [vmem:[%s1243 + $0x14] sm:$0xf]
        %v1250 = vld [vmem:[%s1243 + $0x18] sm:$0xf]
        %v1251 = vld [vmem:[%s1243 + $0x1c] sm:$0xf]
        %v1252 = vld [vmem:[%s1243 + $0x20] sm:$0xf]
        %v1253 = vld [vmem:[%s1243 + $0x24] sm:$0xf]
        %v1254 = vld [vmem:[%s1243 + $0x28] sm:$0xf]
        %v1255 = vld [vmem:[%s1243 + $0x2c] sm:$0xf]
        %v1256 = vld [vmem:[%s1243 + $0x30] sm:$0xf]
        %v1257 = vld [vmem:[%s1243 + $0x34] sm:$0xf]
        %v1258 = vld [vmem:[%s1243 + $0x38] sm:$0xf]
        %v1259 = vld [vmem:[%s1243 + $0x3c] sm:$0xf]
        %v1276 = vunpack.c.l.b16 %v1244
        %v1277 = vunpack.c.l.b16 %v1245
        %v1278 = vunpack.c.l.b16 %v1246
        %v1279 = vunpack.c.l.b16 %v1247
        %v1280 = vunpack.c.l.b16 %v1248
        %v1281 = vunpack.c.l.b16 %v1249
        %v1282 = vunpack.c.l.b16 %v1250
        %v1283 = vunpack.c.l.b16 %v1251
        %v1284 = vunpack.c.l.b16 %v1252
        %v1285 = vunpack.c.l.b16 %v1253
        %v1286 = vunpack.c.l.b16 %v1254
        %v1287 = vunpack.c.l.b16 %v1255
        %v1288 = vunpack.c.l.b16 %v1256
        %v1289 = vunpack.c.l.b16 %v1257
        %v1290 = vunpack.c.l.b16 %v1258
        %v1291 = vunpack.c.l.b16 %v1259
        %v1292 = vpack.c.b16 %v1277, %v1276
        %v1293 = vpack.c.b16 %v1279, %v1278
        %v1294 = vpack.c.b16 %v1281, %v1280
        %v1295 = vpack.c.b16 %v1283, %v1282
        %v1296 = vpack.c.b16 %v1285, %v1284
        %v1297 = vpack.c.b16 %v1287, %v1286
        %v1298 = vpack.c.b16 %v1289, %v1288
        %v1299 = vpack.c.b16 %v1291, %v1290
        %1308 = vmatprep.subr.bf16.mxu0 0
        %1309 = vmatpush1.bf16.msra.mxu0 %v1292
        %1310 = vmatprep.subr.bf16.mxu0 0
        %1311 = vmatpush1.bf16.msra.mxu0 %v1293
        %1312 = vmatprep.subr.bf16.mxu0 0
        %1313 = vmatpush1.bf16.msra.mxu0 %v1294
        %1314 = vmatprep.subr.bf16.mxu0 0
        %1315 = vmatpush1.bf16.msra.mxu0 %v1295
        %1316 = vmatprep.subr.bf16.mxu0 0
        %1317 = vmatpush1.bf16.msra.mxu0 %v1296
        %1318 = vmatprep.subr.bf16.mxu0 0
        %1319 = vmatpush1.bf16.msra.mxu0 %v1297
        %1320 = vmatprep.subr.bf16.mxu0 0
        %1321 = vmatpush1.bf16.msra.mxu0 %v1298
        %1322 = vmatprep.subr.bf16.mxu0 0
        %1323 = vmatpush1.bf16.msra.mxu0 %v1299
        %1324 = vmatprep.subr.bf16.mxu0 0
        %1325 = vmatpush1.bf16.msra.mxu0 0
        %1326 = vmatprep.subr.bf16.mxu0 0
        %1327 = vmatpush1.bf16.msra.mxu0 0
        %1328 = vmatprep.subr.bf16.mxu0 0
        %1329 = vmatpush1.bf16.msra.mxu0 0
        %1330 = vmatprep.subr.bf16.mxu0 0
        %1331 = vmatpush1.bf16.msra.mxu0 0
        %1332 = vmatprep.subr.bf16.mxu0 0
        %1333 = vmatpush1.bf16.msra.mxu0 0
        %1334 = vmatprep.subr.bf16.mxu0 0
        %1335 = vmatpush1.bf16.msra.mxu0 0
        %1336 = vmatprep.subr.bf16.mxu0 0
        %1337 = vmatpush1.bf16.msra.mxu0 0
        %1338 = vmatprep.subr.bf16.mxu0 0
        %1339 = vmatpush1.bf16.msra.mxu0 0
        %1340 = vmatprep.mubr.bf16.mxu0 0
        %1341 = vmatmul.mubr.bf16.gmra.mrb[0].mxu0 %v1241
        %v1342 = vpop.f32.mrb[0].mxu0
        %v1343 = vadd.f32 0.0, %v1342
        %v1344 = vpop.f32.mrb[0].mxu0
        %v1345 = vpop.f32.mrb[0].mxu0
        %v1346 = vadd.f32 0.0, %v1345
        %v1347 = vpop.f32.mrb[0].mxu0
        %1348 = vmatprep.mubr.bf16.mxu0 0
        %1349 = vmatmul.mubr.bf16.gmra.mrb[0].mxu0 %v1242
        %v1350 = vpop.f32.mrb[0].mxu0
        %v1351 = vadd.f32 0.0, %v1350
        %v1352 = vpop.f32.mrb[0].mxu0
        %v1353 = vpop.f32.mrb[0].mxu0
        %v1354 = vadd.f32 0.0, %v1353
        %v1355 = vpop.f32.mrb[0].mxu0
        %1356 = vdwg.mxu0
        %v1373 = vunpack.c.l.b16 %v1221
        %v1374 = vunpack.c.l.b16 %v1222
        %v1375 = vunpack.c.l.b16 %v1223
        %v1376 = vunpack.c.l.b16 %v1224
        %v1377 = vunpack.c.l.b16 %v1225
        %v1378 = vunpack.c.l.b16 %v1226
        %v1379 = vunpack.c.l.b16 %v1227
        %v1380 = vunpack.c.l.b16 %v1228
        %v1381 = vunpack.c.l.b16 %v1229
        %v1382 = vunpack.c.l.b16 %v1230
        %v1383 = vunpack.c.l.b16 %v1231
        %v1384 = vunpack.c.l.b16 %v1232
        %v1385 = vunpack.c.l.b16 %v1233
        %v1386 = vunpack.c.l.b16 %v1234
        %v1387 = vunpack.c.l.b16 %v1235
        %v1388 = vunpack.c.l.b16 %v1236
        %v1389 = vpack.c.b16 %v1374, %v1373
        %v1390 = vpack.c.b16 %v1376, %v1375
        %v1391 = vpack.c.b16 %v1378, %v1377
        %v1392 = vpack.c.b16 %v1380, %v1379
        %v1393 = vpack.c.b16 %v1382, %v1381
        %v1394 = vpack.c.b16 %v1384, %v1383
        %v1395 = vpack.c.b16 %v1386, %v1385
        %v1396 = vpack.c.b16 %v1388, %v1387
        %1405 = vmatprep.subr.bf16.mxu0 0
        %1406 = vmatpush1.bf16.msra.mxu0 %v1389
        %1407 = vmatprep.subr.bf16.mxu0 0
        %1408 = vmatpush1.bf16.msra.mxu0 %v1390
        %1409 = vmatprep.subr.bf16.mxu0 0
        %1410 = vmatpush1.bf16.msra.mxu0 %v1391
        %1411 = vmatprep.subr.bf16.mxu0 0
        %1412 = vmatpush1.bf16.msra.mxu0 %v1392
        %1413 = vmatprep.subr.bf16.mxu0 0
        %1414 = vmatpush1.bf16.msra.mxu0 %v1393
        %1415 = vmatprep.subr.bf16.mxu0 0
        %1416 = vmatpush1.bf16.msra.mxu0 %v1394
        %1417 = vmatprep.subr.bf16.mxu0 0
        %1418 = vmatpush1.bf16.msra.mxu0 %v1395
        %1419 = vmatprep.subr.bf16.mxu0 0
        %1420 = vmatpush1.bf16.msra.mxu0 %v1396
        %1421 = vmatprep.subr.bf16.mxu0 0
        %1422 = vmatpush1.bf16.msra.mxu0 0
        %1423 = vmatprep.subr.bf16.mxu0 0
        %1424 = vmatpush1.bf16.msra.mxu0 0
        %1425 = vmatprep.subr.bf16.mxu0 0
        %1426 = vmatpush1.bf16.msra.mxu0 0
        %1427 = vmatprep.subr.bf16.mxu0 0
        %1428 = vmatpush1.bf16.msra.mxu0 0
        %1429 = vmatprep.subr.bf16.mxu0 0
        %1430 = vmatpush1.bf16.msra.mxu0 0
        %1431 = vmatprep.subr.bf16.mxu0 0
        %1432 = vmatpush1.bf16.msra.mxu0 0
        %1433 = vmatprep.subr.bf16.mxu0 0
        %1434 = vmatpush1.bf16.msra.mxu0 0
        %1435 = vmatprep.subr.bf16.mxu0 0
        %1436 = vmatpush1.bf16.msra.mxu0 0
        %1437 = vmatprep.mubr.bf16.mxu0 0
        %1438 = vmatmul.mubr.bf16.gmra.mrb[0].mxu0 %v1219
        %v1439 = vpop.f32.mrb[0].mxu0
        %v1440 = vadd.f32 %v1343, %v1439
        %v1441 = vpop.f32.mrb[0].mxu0
        %v1442 = vpop.f32.mrb[0].mxu0
        %v1443 = vadd.f32 %v1346, %v1442
        %v1444 = vpop.f32.mrb[0].mxu0
        %1445 = vmatprep.mubr.bf16.mxu0 0
        %1446 = vmatmul.mubr.bf16.gmra.mrb[0].mxu0 %v1220
        %v1447 = vpop.f32.mrb[0].mxu0
        %v1448 = vadd.f32 %v1351, %v1447
        %v1449 = vpop.f32.mrb[0].mxu0
        %v1450 = vpop.f32.mrb[0].mxu0
        %v1451 = vadd.f32 %v1354, %v1450
        %v1452 = vpop.f32.mrb[0].mxu0
        %1453 = vdwg.mxu0
        %v1454 = vld [vmem:[#allocation4 + $0x9] sm:$0xff]
        %v1455 = vld [vmem:[#allocation4 + $0x11] sm:$0xff]
        %v1456 = vld [vmem:[#allocation4 + $0x19] sm:$0xff]
        %v1457 = vld [vmem:[#allocation4 + $0x21] sm:$0xff]
        %v1458 = vsel %vm675, %v1454, 0.0
        %v1459 = vsel %vm676, %v1455, 0.0
        %v1460 = vsel %vm677, %v1456, 0.0
        %v1461 = vsel %vm678, %v1457, 0.0
        %v1462 = vpack.c.bf16 %v1459, %v1458
        %v1463 = vpack.c.bf16 %v1461, %v1460
        %s1464 = scalar_lea.vmem %s5, 128
        %v1465 = vld [vmem:[%s1464] sm:$0xf]
        %v1466 = vld [vmem:[%s1464 + $0x4] sm:$0xf]
        %v1467 = vld [vmem:[%s1464 + $0x8] sm:$0xf]
        %v1468 = vld [vmem:[%s1464 + $0xc] sm:$0xf]
        %v1469 = vld [vmem:[%s1464 + $0x10] sm:$0xf]
        %v1470 = vld [vmem:[%s1464 + $0x14] sm:$0xf]
        %v1471 = vld [vmem:[%s1464 + $0x18] sm:$0xf]
        %v1472 = vld [vmem:[%s1464 + $0x1c] sm:$0xf]
        %v1473 = vld [vmem:[%s1464 + $0x20] sm:$0xf]
        %v1474 = vld [vmem:[%s1464 + $0x24] sm:$0xf]
        %v1475 = vld [vmem:[%s1464 + $0x28] sm:$0xf]
        %v1476 = vld [vmem:[%s1464 + $0x2c] sm:$0xf]
        %v1477 = vld [vmem:[%s1464 + $0x30] sm:$0xf]
        %v1478 = vld [vmem:[%s1464 + $0x34] sm:$0xf]
        %v1479 = vld [vmem:[%s1464 + $0x38] sm:$0xf]
        %v1480 = vld [vmem:[%s1464 + $0x3c] sm:$0xf]
        %v1497 = vunpack.c.l.b16 %v1465
        %v1498 = vunpack.c.l.b16 %v1466
        %v1499 = vunpack.c.l.b16 %v1467
        %v1500 = vunpack.c.l.b16 %v1468
        %v1501 = vunpack.c.l.b16 %v1469
        %v1502 = vunpack.c.l.b16 %v1470
        %v1503 = vunpack.c.l.b16 %v1471
        %v1504 = vunpack.c.l.b16 %v1472
        %v1505 = vunpack.c.l.b16 %v1473
        %v1506 = vunpack.c.l.b16 %v1474
        %v1507 = vunpack.c.l.b16 %v1475
        %v1508 = vunpack.c.l.b16 %v1476
        %v1509 = vunpack.c.l.b16 %v1477
        %v1510 = vunpack.c.l.b16 %v1478
        %v1511 = vunpack.c.l.b16 %v1479
        %v1512 = vunpack.c.l.b16 %v1480
        %v1513 = vpack.c.b16 %v1498, %v1497
        %v1514 = vpack.c.b16 %v1500, %v1499
        %v1515 = vpack.c.b16 %v1502, %v1501
        %v1516 = vpack.c.b16 %v1504, %v1503
        %v1517 = vpack.c.b16 %v1506, %v1505
        %v1518 = vpack.c.b16 %v1508, %v1507
        %v1519 = vpack.c.b16 %v1510, %v1509
        %v1520 = vpack.c.b16 %v1512, %v1511
        %1529 = vmatprep.subr.bf16.mxu0 0
        %1530 = vmatpush1.bf16.msra.mxu0 %v1513
        %1531 = vmatprep.subr.bf16.mxu0 0
        %1532 = vmatpush1.bf16.msra.mxu0 %v1514
        %1533 = vmatprep.subr.bf16.mxu0 0
        %1534 = vmatpush1.bf16.msra.mxu0 %v1515
        %1535 = vmatprep.subr.bf16.mxu0 0
        %1536 = vmatpush1.bf16.msra.mxu0 %v1516
        %1537 = vmatprep.subr.bf16.mxu0 0
        %1538 = vmatpush1.bf16.msra.mxu0 %v1517
        %1539 = vmatprep.subr.bf16.mxu0 0
        %1540 = vmatpush1.bf16.msra.mxu0 %v1518
        %1541 = vmatprep.subr.bf16.mxu0 0
        %1542 = vmatpush1.bf16.msra.mxu0 %v1519
        %1543 = vmatprep.subr.bf16.mxu0 0
        %1544 = vmatpush1.bf16.msra.mxu0 %v1520
        %1545 = vmatprep.subr.bf16.mxu0 0
        %1546 = vmatpush1.bf16.msra.mxu0 0
        %1547 = vmatprep.subr.bf16.mxu0 0
        %1548 = vmatpush1.bf16.msra.mxu0 0
        %1549 = vmatprep.subr.bf16.mxu0 0
        %1550 = vmatpush1.bf16.msra.mxu0 0
        %1551 = vmatprep.subr.bf16.mxu0 0
        %1552 = vmatpush1.bf16.msra.mxu0 0
        %1553 = vmatprep.subr.bf16.mxu0 0
        %1554 = vmatpush1.bf16.msra.mxu0 0
        %1555 = vmatprep.subr.bf16.mxu0 0
        %1556 = vmatpush1.bf16.msra.mxu0 0
        %1557 = vmatprep.subr.bf16.mxu0 0
        %1558 = vmatpush1.bf16.msra.mxu0 0
        %1559 = vmatprep.subr.bf16.mxu0 0
        %1560 = vmatpush1.bf16.msra.mxu0 0
        %1561 = vmatprep.mubr.bf16.mxu0 0
        %1562 = vmatmul.mubr.bf16.gmra.mrb[0].mxu0 %v1462
        %v1563 = vpop.f32.mrb[0].mxu0
        %v1564 = vadd.f32 0.0, %v1563
        %v1565 = vpop.f32.mrb[0].mxu0
        %v1566 = vpop.f32.mrb[0].mxu0
        %v1567 = vadd.f32 0.0, %v1566
        %v1568 = vpop.f32.mrb[0].mxu0
        %1569 = vmatprep.mubr.bf16.mxu0 0
        %1570 = vmatmul.mubr.bf16.gmra.mrb[0].mxu0 %v1463
        %v1571 = vpop.f32.mrb[0].mxu0
        %v1572 = vadd.f32 0.0, %v1571
        %v1573 = vpop.f32.mrb[0].mxu0
        %v1574 = vpop.f32.mrb[0].mxu0
        %v1575 = vadd.f32 0.0, %v1574
        %v1576 = vpop.f32.mrb[0].mxu0
        %1577 = vdwg.mxu0
        %v1578 = vadd.f32 %v1440, %v1564
        %v1579 = vadd.f32 %v1443, %v1567
        %v1580 = vadd.f32 %v1448, %v1572
        %v1581 = vadd.f32 %v1451, %v1575
        %v1582 = vld [vmem:[%s6] sm:$0x1]
        %v1584 = vlaneseq
        %v1585 = vshrl.u32 %v1584, 7
        %v1586 = vsub.s32 0, %v1585
        %v1587 = vrot.slane %v1582, %v1586
        %v1589 = vadd.f32 %v1578, %v1587
        %v1590 = vadd.f32 %v1579, %v1587
        %v1591 = vadd.f32 %v1580, %v1587
        %v1592 = vadd.f32 %v1581, %v1587
        %vm1593 = vcmp.ge.f32.partialorder %v1589, 0.0
        %vm1594 = vcmp.ge.f32.partialorder %v1590, 0.0
        %vm1595 = vcmp.ge.f32.partialorder %v1591, 0.0
        %vm1596 = vcmp.ge.f32.partialorder %v1592, 0.0
        %v1597 = vmul.f32 %v1589, 0.01
        %v1598 = vmul.f32 %v1590, 0.01
        %v1599 = vmul.f32 %v1591, 0.01
        %v1600 = vmul.f32 %v1592, 0.01
        %v1601 = vsel %vm1593, %v1589, %v1597
        %v1602 = vsel %vm1594, %v1590, %v1598
        %v1603 = vsel %vm1595, %v1591, %v1599
        %v1604 = vsel %vm1596, %v1592, %v1600
        %1605 = vst [vmem:[%s343] sm:$0xff] %v1601
        %1606 = vst [vmem:[%s343 + $0x8] sm:$0xff] %v1602
        %1607 = vst [vmem:[%s343 + $0x10] sm:$0xff] %v1603
        %1608 = vst [vmem:[%s343 + $0x18] sm:$0xff] %v1604
        %v1609 = vpack.c.bf16 %v1602, %v1601
        %v1610 = vpack.c.bf16 %v1604, %v1603
        %v1611 = vld [vmem:[%s7] sm:$0xf]
        %v1612 = vld [vmem:[%s7 + $0x4] sm:$0xf]
        %v1613 = vld [vmem:[%s7 + $0x8] sm:$0xf]
        %v1614 = vld [vmem:[%s7 + $0xc] sm:$0xf]
        %v1615 = vld [vmem:[%s7 + $0x10] sm:$0xf]
        %v1616 = vld [vmem:[%s7 + $0x14] sm:$0xf]
        %v1617 = vld [vmem:[%s7 + $0x18] sm:$0xf]
        %v1618 = vld [vmem:[%s7 + $0x1c] sm:$0xf]
        %v1619 = vld [vmem:[%s7 + $0x20] sm:$0xf]
        %v1620 = vld [vmem:[%s7 + $0x24] sm:$0xf]
        %v1621 = vld [vmem:[%s7 + $0x28] sm:$0xf]
        %v1622 = vld [vmem:[%s7 + $0x2c] sm:$0xf]
        %v1623 = vld [vmem:[%s7 + $0x30] sm:$0xf]
        %v1624 = vld [vmem:[%s7 + $0x34] sm:$0xf]
        %v1625 = vld [vmem:[%s7 + $0x38] sm:$0xf]
        %v1626 = vld [vmem:[%s7 + $0x3c] sm:$0xf]
        %v1643 = vunpack.c.l.b16 %v1611
        %v1644 = vunpack.c.l.b16 %v1612
        %v1645 = vunpack.c.l.b16 %v1613
        %v1646 = vunpack.c.l.b16 %v1614
        %v1647 = vunpack.c.l.b16 %v1615
        %v1648 = vunpack.c.l.b16 %v1616
        %v1649 = vunpack.c.l.b16 %v1617
        %v1650 = vunpack.c.l.b16 %v1618
        %v1651 = vunpack.c.l.b16 %v1619
        %v1652 = vunpack.c.l.b16 %v1620
        %v1653 = vunpack.c.l.b16 %v1621
        %v1654 = vunpack.c.l.b16 %v1622
        %v1655 = vunpack.c.l.b16 %v1623
        %v1656 = vunpack.c.l.b16 %v1624
        %v1657 = vunpack.c.l.b16 %v1625
        %v1658 = vunpack.c.l.b16 %v1626
        %v1659 = vpack.c.b16 %v1644, %v1643
        %v1660 = vpack.c.b16 %v1646, %v1645
        %v1661 = vpack.c.b16 %v1648, %v1647
        %v1662 = vpack.c.b16 %v1650, %v1649
        %v1663 = vpack.c.b16 %v1652, %v1651
        %v1664 = vpack.c.b16 %v1654, %v1653
        %v1665 = vpack.c.b16 %v1656, %v1655
        %v1666 = vpack.c.b16 %v1658, %v1657
        %1675 = vmatprep.subr.bf16.mxu0 0
        %1676 = vmatpush1.bf16.msra.mxu0 %v1659
        %1677 = vmatprep.subr.bf16.mxu0 0
        %1678 = vmatpush1.bf16.msra.mxu0 %v1660
        %1679 = vmatprep.subr.bf16.mxu0 0
        %1680 = vmatpush1.bf16.msra.mxu0 %v1661
        %1681 = vmatprep.subr.bf16.mxu0 0
        %1682 = vmatpush1.bf16.msra.mxu0 %v1662
        %1683 = vmatprep.subr.bf16.mxu0 0
        %1684 = vmatpush1.bf16.msra.mxu0 %v1663
        %1685 = vmatprep.subr.bf16.mxu0 0
        %1686 = vmatpush1.bf16.msra.mxu0 %v1664
        %1687 = vmatprep.subr.bf16.mxu0 0
        %1688 = vmatpush1.bf16.msra.mxu0 %v1665
        %1689 = vmatprep.subr.bf16.mxu0 0
        %1690 = vmatpush1.bf16.msra.mxu0 %v1666
        %1691 = vmatprep.subr.bf16.mxu0 0
        %1692 = vmatpush1.bf16.msra.mxu0 0
        %1693 = vmatprep.subr.bf16.mxu0 0
        %1694 = vmatpush1.bf16.msra.mxu0 0
        %1695 = vmatprep.subr.bf16.mxu0 0
        %1696 = vmatpush1.bf16.msra.mxu0 0
        %1697 = vmatprep.subr.bf16.mxu0 0
        %1698 = vmatpush1.bf16.msra.mxu0 0
        %1699 = vmatprep.subr.bf16.mxu0 0
        %1700 = vmatpush1.bf16.msra.mxu0 0
        %1701 = vmatprep.subr.bf16.mxu0 0
        %1702 = vmatpush1.bf16.msra.mxu0 0
        %1703 = vmatprep.subr.bf16.mxu0 0
        %1704 = vmatpush1.bf16.msra.mxu0 0
        %1705 = vmatprep.subr.bf16.mxu0 0
        %1706 = vmatpush1.bf16.msra.mxu0 0
        %1707 = vmatprep.mubr.bf16.mxu0 0
        %1708 = vmatmul.mubr.bf16.gmra.mrb[0].mxu0 %v1609
        %v1709 = vpop.f32.mrb[0].mxu0
        %v1710 = vadd.f32 0.0, %v1709
        %v1711 = vpop.f32.mrb[0].mxu0
        %v1712 = vpop.f32.mrb[0].mxu0
        %v1713 = vadd.f32 0.0, %v1712
        %v1714 = vpop.f32.mrb[0].mxu0
        %1715 = vmatprep.mubr.bf16.mxu0 0
        %1716 = vmatmul.mubr.bf16.gmra.mrb[0].mxu0 %v1610
        %v1717 = vpop.f32.mrb[0].mxu0
        %v1718 = vadd.f32 0.0, %v1717
        %v1719 = vpop.f32.mrb[0].mxu0
        %v1720 = vpop.f32.mrb[0].mxu0
        %v1721 = vadd.f32 0.0, %v1720
        %v1722 = vpop.f32.mrb[0].mxu0
        %1723 = vdwg.mxu0
        %vm1724 = vcmask 523264
        %1725 = vst.msk [vmem:[%s368] sm:$0xff] %vm1724, %v1710
        %1726 = vst.msk [vmem:[%s368 + $0x8] sm:$0xff] %vm1724, %v1713
        %1727 = vst.msk [vmem:[%s368 + $0x10] sm:$0xff] %vm1724, %v1718
        %1728 = vst.msk [vmem:[%s368 + $0x18] sm:$0xff] %vm1724, %v1721
        %s1729 = sand.u32 %s210, 1
        %s1730 = scalar_lea.sflag [#allocation6], %s1729
        %s1731 = sand.u32 %s210, 1
        %s1732 = smul.addr %s1731, 32
        %s1733 = scalar_lea.vmem [#allocation5], %s1732
        %s1734 = smul.u32 4, %s24
        %p1735 = scmp.lt.s32.totalorder %s1734, 7
        %s1736 = scalar_select %p1735, %s1734, 7
        %s1737 = smul.addr %s1736, 8
        %s1738 = scalar_lea.vmem %s9, %s1737
        // Predicated region
        $region53: #{decoder_ds_forward.9} parent=51 // pred_check
          %p1739 = pneg %p220
        $region54: #{decoder_ds_forward.9} parent=51 // pred_check_branch
          %1741 = sbr.rel (%p1739) target = $region56
        $region55: #{decoder_ds_forward.9} parent=51 // pred_region
          %s1742 = smul.u32 4, %s24
          %s1744 = ssub.s32 512, 512
          %1745 = vsyncadd %s1730, %s1744
          %s1746 = smul.addr %s1742, 128
          %s1747 = scalar_lea.hbm %s8, %s1746
          %s1748 = sshll.u32 %s1733, 4
          %s1749 = int_to_ptr.vmem [resolvable:$true] %s1748
          %1754 = dma.vmem_to_hbm [thread:$0]  %s1749, 512, %s1747, %s1730, 128, 128, 8
        $region56: #{decoder_ds_forward.9} parent=51 // pred_fallthru
          _
        // Predicated region
        $region57: #{decoder_ds_forward.9} parent=51 // pred_check
          %p1755 = pneg %p246
        $region58: #{decoder_ds_forward.9} parent=51 // pred_check_branch
          %1757 = sbr.rel (%p1755) target = $region60
        $region59: #{decoder_ds_forward.9} parent=51 // pred_region
          %s1758 = smul.u32 4, %s24
        $region60: #{decoder_ds_forward.9} parent=51 // pred_fallthru
          _
      $region52: #{decoder_ds_forward.9} parent=5 // pred_fallthru
        _
      %p1759 = scmp.le.s32.totalorder 2, %s19
      // Predicated region
      $region61: #{decoder_ds_forward.9} parent=5 // pred_check
        %p1760 = pneg %p1759
      $region62: #{decoder_ds_forward.9} parent=5 // pred_check_branch
        %1762 = sbr.rel (%p1760) target = $region64
      $region63: #{decoder_ds_forward.9} parent=5 // pred_region
        %s1763 = ssub.s32 %s19, 2
        // Predicated region
        $region65: #{decoder_ds_forward.9} parent=63 // pred_check
          %p1764 = pneg %p226
        $region66: #{decoder_ds_forward.9} parent=63 // pred_check_branch
          %1766 = sbr.rel (%p1764) target = $region68
        $region67: #{decoder_ds_forward.9} parent=63 // pred_region
          %s1767 = sand.u32 %s211, 1
          %s1768 = scalar_lea.sflag [#allocation6], %s1767
          %s1769 = sand.u32 %s211, 1
          %s1770 = smul.addr %s1769, 32
          %s1771 = scalar_lea.vmem [#allocation5], %s1770
          %1772 = dma.done %s1768, 512
        $region68: #{decoder_ds_forward.9} parent=63 // pred_fallthru
          _
        // Predicated region
        $region69: #{decoder_ds_forward.9} parent=63 // pred_check
          %p1773 = pneg %p252
        $region70: #{decoder_ds_forward.9} parent=63 // pred_check_branch
          %1775 = sbr.rel (%p1773) target = $region72
        $region71: #{decoder_ds_forward.9} parent=63 // pred_region
          %s1776 = smul.u32 4, %s25
          %p1777 = scmp.lt.s32.totalorder %s1776, 7
          %s1778 = scalar_select %p1777, %s1776, 7
          %s1779 = smul.addr %s1778, 8
          %s1780 = scalar_lea.vmem %s9, %s1779
        $region72: #{decoder_ds_forward.9} parent=63 // pred_fallthru
          _
      $region64: #{decoder_ds_forward.9} parent=5 // pred_fallthru
        _
    $region6: #{decoder_ds_forward.9} parent=1 // loop_footer
      %s23 = sadd.s32 1, %s19
    $region7: #{decoder_ds_forward.9} parent=1 // loop_footer_branch
      %18 = sbr.rel target = $region3
    $region8: #{decoder_ds_forward.9} parent=1 // loop_exit
      _
    %1781 = vsyncpa [#allocation6], 1
    %s1782 = scalar_lea.sflag [#allocation6], 1
    %1783 = vsyncpa %s1782, 1

</llo_original>
